<compile_context>
chip_gen: v7x
topology: tpu7x:2x2x1
jax: 0.10.0
libtpu: 0.0.40
codegen_flags: <defaults>
</compile_context>

<pallas_src>
import jax
import jax.numpy as jnp
from jax.experimental import pallas as pl
from jax.experimental.pallas import tpu as pltpu


# ----------------------------- fused Pallas kernel ---------------------------

def _make_fused_kernel(n):
    """Builds the fused forward kernel for batch size n (static)."""
    f32 = jnp.float32
    bf16 = jnp.bfloat16

    def kernel(xcol_ref, w1_ref, b1_ref, w2_ref, b2_ref, w3_ref, b3_ref,
               w4_ref, b4_ref, o_ref, h1_ref, p1_ref, h2_ref, p2_ref):
        # ---- conv1: im2col matmul (n*24*24, 128) @ (128, 128) + bias + relu ----
        y1 = jnp.dot(xcol_ref[...], w1_ref[...], preferred_element_type=f32)
        y1 = jnp.maximum(y1 + b1_ref[...], 0.0)                    # (n*576, 128)
        # rows are (n, h, w) row-major; split h into (h_out, h_in) for pooling
        h1_ref[...] = y1.reshape(n, 12, 2, 24, 128)

        # ---- maxpool 2x2 (stage 1): strided reads along W, pair-max along H ----
        wa = h1_ref[:, :, :, pl.ds(0, 12, 2), :]                   # even W cols
        wb = h1_ref[:, :, :, pl.ds(1, 12, 2), :]                   # odd  W cols
        wm = jnp.maximum(wa, wb)                                   # (n,12,2,12,128)
        p1_ref[...] = jnp.maximum(wm[:, :, 0, :, :], wm[:, :, 1, :, :])  # (n,12,12,128)

        # ---- conv2: in-kernel im2col as 25 accumulated tap matmuls + bias + relu ----
        # TODO(synk): nn.Dropout2d stochastic channel masking not reproduced
        # (eval-mode identity).
        acc2 = jnp.zeros((n * 64, 128), f32)
        for di in range(5):
            for dj in range(5):
                t = di * 5 + dj
                lhs = p1_ref[:, di:di + 8, dj:dj + 8, :].reshape(n * 64, 128)
                acc2 = acc2 + jnp.dot(lhs.astype(bf16), w2_ref[t],
                                      preferred_element_type=f32)
        y2 = jnp.maximum(acc2 + b2_ref[...], 0.0)                  # (n*64, 128)
        h2_ref[...] = y2.reshape(n, 4, 2, 8, 128)

        # ---- maxpool 2x2 (stage 2) ----
        wa2 = h2_ref[:, :, :, pl.ds(0, 4, 2), :]
        wb2 = h2_ref[:, :, :, pl.ds(1, 4, 2), :]
        wm2 = jnp.maximum(wa2, wb2)                                # (n,4,2,4,128)
        p2_ref[...] = jnp.maximum(wm2[:, :, 0, :, :], wm2[:, :, 1, :, :])  # (n,4,4,128)

        # ---- fc1 + relu: 16 per-position (128x128) blocks, accumulator in vregs ----
        # TODO(synk): F.dropout (training-mode) not reproduced (eval-mode identity).
        acc3 = jnp.zeros((n, 128), f32)
        for hh in range(4):
            for ww in range(4):
                lhs = p2_ref[:, hh, ww, :].astype(bf16)            # (n, 128)
                acc3 = acc3 + jnp.dot(lhs, w3_ref[hh * 4 + ww],
                                      preferred_element_type=f32)
        h3 = jnp.maximum(acc3 + b3_ref[...], 0.0)                  # (n, 128)

        # ---- fc2 + masked log_softmax over the 10 real classes ----
        logits = jnp.dot(h3.astype(bf16), w4_ref[...],
                         preferred_element_type=f32) + b4_ref[...]  # (n, 128)
        lane = jax.lax.broadcasted_iota(jnp.int32, (n, 128), 1)
        logits = jnp.where(lane < 10, logits, f32(-1e30))
        m = jnp.max(logits, axis=-1, keepdims=True)
        s = logits - m
        lse = jnp.log(jnp.sum(jnp.exp(s), axis=-1, keepdims=True))
        o_ref[...] = (s - lse).astype(o_ref.dtype)

    return kernel


# ----------------------------- wrappers ---------------------------------------

_CPARAMS = pltpu.CompilerParams(dimension_semantics=("arbitrary",))


def _full_spec(shape):
    # single-program grid: one full-array block resident in VMEM
    return pl.BlockSpec(shape, lambda i, _s=shape: (0,) * len(_s))


def _im2col_conv1(x):
    # x: (N, 1, 28, 28) f32 -> conv1 patch matrix (N*24*24, 128) bf16
    # column k = di*5 + dj holds x[n, ho+di, wo+dj]; columns 25..127 are zero.
    n = x.shape[0]
    img = x[:, 0]                                                  # (N, 28, 28)
    cols = [img[:, di:di + 24, dj:dj + 24] for di in range(5) for dj in range(5)]
    p = jnp.stack(cols, axis=-1)                                   # (N, 24, 24, 25)
    p = p.reshape(n * 576, 25)
    p = jnp.pad(p, ((0, 0), (0, 128 - 25)))
    return p.astype(jnp.bfloat16)


def net_forward(x, pp):
    n = x.shape[0]
    xcol = _im2col_conv1(x)                                        # (n*576, 128) bf16
    kernel = _make_fused_kernel(n)

    out = pl.pallas_call(
        kernel,
        grid=(1,),
        in_specs=[
            _full_spec((n * 576, 128)),
            _full_spec((128, 128)), _full_spec((1, 128)),
            _full_spec((25, 128, 128)), _full_spec((1, 128)),
            _full_spec((16, 128, 128)), _full_spec((1, 128)),
            _full_spec((128, 128)), _full_spec((1, 128)),
        ],
        out_specs=_full_spec((n, 128)),
        out_shape=jax.ShapeDtypeStruct((n, 128), jnp.float32),
        scratch_shapes=[
            pltpu.VMEM((n, 12, 2, 24, 128), jnp.float32),   # conv1 relu output
            pltpu.VMEM((n, 12, 12, 128), jnp.float32),      # pooled stage-1 activation
            pltpu.VMEM((n, 4, 2, 8, 128), jnp.float32),     # conv2 relu output
            pltpu.VMEM((n, 4, 4, 128), jnp.float32),        # pooled stage-2 activation
        ],
        compiler_params=_CPARAMS,
    )(xcol, pp["w1"], pp["b1"], pp["w2"], pp["b2"],
      pp["w3"], pp["b3"], pp["w4"], pp["b4"])

    return out[:, :10]


# ----------------------------- parameters --------------------------------------

def init_params(key):
    def uni(k, shape, fan_in):
        bound = 1.0 / float(fan_in) ** 0.5
        return jax.random.uniform(k, shape, jnp.float32, -bound, bound)
    ks = jax.random.split(key, 8)
    return {
        "conv1_w": uni(ks[0], (10, 1, 5, 5), 1 * 25),
        "conv1_b": uni(ks[1], (10,), 1 * 25),
        "conv2_w": uni(ks[2], (20, 10, 5, 5), 10 * 25),
        "conv2_b": uni(ks[3], (20,), 10 * 25),
        "fc1_w":   uni(ks[4], (320, 50), 320),   # stored (in, out)
        "fc1_b":   uni(ks[5], (50,), 320),
        "fc2_w":   uni(ks[6], (50, 10), 50),     # stored (in, out)
        "fc2_b":   uni(ks[7], (10,), 50),
    }


def prepare_params(p):
    """One-time padding / relayout of weights to lane-dense, bf16 kernel operands."""
    f32, bf16 = jnp.float32, jnp.bfloat16
    # conv1: (10,1,5,5) -> rows k=di*5+dj, cols co; pad to (128,128)
    w1 = p["conv1_w"].reshape(10, 25).T                              # (25, 10)
    w1p = jnp.zeros((128, 128), f32).at[:25, :10].set(w1).astype(bf16)
    b1p = jnp.zeros((1, 128), f32).at[0, :10].set(p["conv1_b"])
    # conv2: (20,10,5,5) -> (25 taps, ci, co), channel dims padded to 128
    w2 = p["conv2_w"].transpose(2, 3, 1, 0).reshape(25, 10, 20)      # [t, ci, co]
    w2p = jnp.zeros((25, 128, 128), f32).at[:, :10, :20].set(w2).astype(bf16)
    b2p = jnp.zeros((1, 128), f32).at[0, :20].set(p["conv2_b"])
    # fc1: torch flatten order is f = c*16 + h*4 + w  ->  16 position blocks [c, j]
    w3 = p["fc1_w"].reshape(20, 16, 50).transpose(1, 0, 2)           # [p, c, j]
    w3p = jnp.zeros((16, 128, 128), f32).at[:, :20, :50].set(w3).astype(bf16)
    b3p = jnp.zeros((1, 128), f32).at[0, :50].set(p["fc1_b"])
    # fc2
    w4p = jnp.zeros((128, 128), f32).at[:50, :10].set(p["fc2_w"]).astype(bf16)
    b4p = jnp.zeros((1, 128), f32).at[0, :10].set(p["fc2_b"])
    return {"w1": w1p, "b1": b1p, "w2": w2p, "b2": b2p,
            "w3": w3p, "b3": b3p, "w4": w4p, "b4": b4p}


# ----------------------------- pure-JAX reference ------------------------------

def reference_forward(x, p):
    def conv(x, w, b):
        y = jax.lax.conv_general_dilated(
            x, w, window_strides=(1, 1), padding="VALID",
            dimension_numbers=("NCHW", "OIHW", "NCHW"))
        return y + b[None, :, None, None]

    def pool(x):
        n, c, h, w = x.shape
        return jnp.max(x.reshape(n, c, h // 2, 2, w // 2, 2), axis=(3, 5))

    h = jax.nn.relu(pool(conv(x, p["conv1_w"], p["conv1_b"])))
    h = jax.nn.relu(pool(conv(h, p["conv2_w"], p["conv2_b"])))
    h = h.reshape(h.shape[0], -1)
    h = jax.nn.relu(h @ p["fc1_w"] + p["fc1_b"])
    logits = h @ p["fc2_w"] + p["fc2_b"]
    return jax.nn.log_softmax(logits, axis=-1)


# ----------------------------- main --------------------------------------------

if __name__ == "__main__":
    key = jax.random.PRNGKey(0)
    pkey, xkey = jax.random.split(key)
    params = init_params(pkey)
    pp = prepare_params(params)
    x = jax.random.normal(xkey, (2, 1, 28, 28), jnp.float32)  # MNIST-style NCHW input

    fwd = jax.jit(net_forward)
    out = jax.block_until_ready(fwd(x, pp))

    ref = reference_forward(x, params)
    assert out.shape == (2, 10), out.shape
    # bf16 MXU inputs (with f32 accumulation) vs. the pure-f32 reference: a few 1e-3
    # of absolute error on the log-probs is expected, so compare at 2e-2.
    assert jnp.allclose(out, ref, atol=2e-2, rtol=2e-2), (out, ref)
    print("KERNEL_OK")
</pallas_src>

<mosaic_0001>
module attributes {stable_mosaic.version = 11 : i64} {
  func.func @kernel(%arg0: i32, %arg1: memref<1152x128xbf16, #tpu.memory_space<vmem>>, %arg2: memref<128x128xbf16, #tpu.memory_space<vmem>>, %arg3: memref<1x128xf32, #tpu.memory_space<vmem>>, %arg4: memref<25x128x128xbf16, #tpu.memory_space<vmem>>, %arg5: memref<1x128xf32, #tpu.memory_space<vmem>>, %arg6: memref<16x128x128xbf16, #tpu.memory_space<vmem>>, %arg7: memref<1x128xf32, #tpu.memory_space<vmem>>, %arg8: memref<128x128xbf16, #tpu.memory_space<vmem>>, %arg9: memref<1x128xf32, #tpu.memory_space<vmem>>, %arg10: memref<2x128xf32, #tpu.memory_space<vmem>>, %arg11: memref<2x12x2x24x128xf32, #tpu.memory_space<vmem>>, %arg12: memref<2x12x12x128xf32, #tpu.memory_space<vmem>>, %arg13: memref<2x4x2x8x128xf32, #tpu.memory_space<vmem>>, %arg14: memref<2x4x4x128xf32, #tpu.memory_space<vmem>>) attributes {dimension_semantics = [#tpu.dimension_semantics<arbitrary>], iteration_bounds = array<i64: 1>, scalar_prefetch = 0 : i64, scratch_operands = 4 : i64, tpu.core_type = #tpu.core_type<tc>, window_params = [{pipeline_mode = #tpu.pipeline_mode<synchronous>, transform_indices = @transform_0, window_bounds = array<i64: 1152, 128>}, {pipeline_mode = #tpu.pipeline_mode<synchronous>, transform_indices = @transform_1, window_bounds = array<i64: 128, 128>}, {pipeline_mode = #tpu.pipeline_mode<synchronous>, transform_indices = @transform_2, window_bounds = array<i64: 1, 128>}, {pipeline_mode = #tpu.pipeline_mode<synchronous>, transform_indices = @transform_3, window_bounds = array<i64: 25, 128, 128>}, {pipeline_mode = #tpu.pipeline_mode<synchronous>, transform_indices = @transform_4, window_bounds = array<i64: 1, 128>}, {pipeline_mode = #tpu.pipeline_mode<synchronous>, transform_indices = @transform_5, window_bounds = array<i64: 16, 128, 128>}, {pipeline_mode = #tpu.pipeline_mode<synchronous>, transform_indices = @transform_6, window_bounds = array<i64: 1, 128>}, {pipeline_mode = #tpu.pipeline_mode<synchronous>, transform_indices = @transform_7, window_bounds = array<i64: 128, 128>}, {pipeline_mode = #tpu.pipeline_mode<synchronous>, transform_indices = @transform_8, window_bounds = array<i64: 1, 128>}, {pipeline_mode = #tpu.pipeline_mode<synchronous>, transform_indices = @transform_9, window_bounds = array<i64: 2, 128>}]} {
    %c0 = arith.constant 0 : index
    %c0_0 = arith.constant 0 : index
    %0 = vector.load %arg1[%c0, %c0_0] : memref<1152x128xbf16, #tpu.memory_space<vmem>>, vector<1152x128xbf16>
    %c0_1 = arith.constant 0 : index
    %c0_2 = arith.constant 0 : index
    %1 = vector.load %arg2[%c0_1, %c0_2] : memref<128x128xbf16, #tpu.memory_space<vmem>>, vector<128x128xbf16>
    %cst = arith.constant dense<0.000000e+00> : vector<1152x128xf32>
    %2 = tpu.matmul %0, %1, %cst {dimension_numbers = #tpu.dot_dimension_numbers<[1], [0], [0], [1], [0, 0, 1, 1], [], []>} : vector<1152x128xbf16>, vector<128x128xbf16>, vector<1152x128xf32> -> vector<1152x128xf32>
    %c0_3 = arith.constant 0 : index
    %c0_4 = arith.constant 0 : index
    %3 = vector.load %arg3[%c0_3, %c0_4] : memref<1x128xf32, #tpu.memory_space<vmem>>, vector<1x128xf32>
    %4 = vector.broadcast %3 : vector<1x128xf32> to vector<1152x128xf32>
    %5 = arith.addf %2, %4 : vector<1152x128xf32>
    %cst_5 = arith.constant 0.000000e+00 : f32
    %6 = vector.broadcast %cst_5 : f32 to vector<1152x128xf32>
    %7 = arith.maximumf %5, %6 : vector<1152x128xf32>
    %8 = vector.shape_cast %7 : vector<1152x128xf32> to vector<2x12x2x24x128xf32>
    %c0_6 = arith.constant 0 : index
    %c0_7 = arith.constant 0 : index
    %c0_8 = arith.constant 0 : index
    %c0_9 = arith.constant 0 : index
    %c0_10 = arith.constant 0 : index
    %9 = vector.load %arg11[%c0_6, %c0_7, %c0_8, %c0_9, %c0_10] : memref<2x12x2x24x128xf32, #tpu.memory_space<vmem>>, vector<2x12x2x24x128xf32>
    tpu.vector_store %arg11[%c0_6, %c0_7, %c0_8, %c0_9, %c0_10], %8 {strides = array<i32>} : memref<2x12x2x24x128xf32, #tpu.memory_space<vmem>>, vector<2x12x2x24x128xf32>,
    %c0_11 = arith.constant 0 : index
    %c0_12 = arith.constant 0 : index
    %c0_13 = arith.constant 0 : index
    %c0_14 = arith.constant 0 : index
    %c0_15 = arith.constant 0 : index
    %10 = tpu.strided_load %arg11[%c0_11, %c0_12, %c0_13, %c0_14, %c0_15] {strides = array<i32: 1, 1, 1, 2, 1>} : memref<2x12x2x24x128xf32, #tpu.memory_space<vmem>>, vector<2x12x2x12x128xf32>
    %c0_16 = arith.constant 0 : index
    %c0_17 = arith.constant 0 : index
    %c0_18 = arith.constant 0 : index
    %c1 = arith.constant 1 : index
    %c0_19 = arith.constant 0 : index
    %11 = tpu.strided_load %arg11[%c0_16, %c0_17, %c0_18, %c1, %c0_19] {strides = array<i32: 1, 1, 1, 2, 1>} : memref<2x12x2x24x128xf32, #tpu.memory_space<vmem>>, vector<2x12x2x12x128xf32>
    %12 = arith.maximumf %10, %11 : vector<2x12x2x12x128xf32>
    %13 = vector.extract_strided_slice %12 {offsets = [0, 0, 0, 0, 0], sizes = [2, 12, 1, 12, 128], strides = [1, 1, 1, 1, 1]} : vector<2x12x2x12x128xf32> to vector<2x12x1x12x128xf32>
    %14 = vector.shape_cast %13 : vector<2x12x1x12x128xf32> to vector<2x12x12x128xf32>
    %15 = vector.extract_strided_slice %12 {offsets = [0, 0, 1, 0, 0], sizes = [2, 12, 1, 12, 128], strides = [1, 1, 1, 1, 1]} : vector<2x12x2x12x128xf32> to vector<2x12x1x12x128xf32>
    %16 = vector.shape_cast %15 : vector<2x12x1x12x128xf32> to vector<2x12x12x128xf32>
    %17 = arith.maximumf %14, %16 : vector<2x12x12x128xf32>
    %c0_20 = arith.constant 0 : index
    %c0_21 = arith.constant 0 : index
    %c0_22 = arith.constant 0 : index
    %c0_23 = arith.constant 0 : index
    %18 = vector.load %arg12[%c0_20, %c0_21, %c0_22, %c0_23] : memref<2x12x12x128xf32, #tpu.memory_space<vmem>>, vector<2x12x12x128xf32>
    tpu.vector_store %arg12[%c0_20, %c0_21, %c0_22, %c0_23], %17 {strides = array<i32>} : memref<2x12x12x128xf32, #tpu.memory_space<vmem>>, vector<2x12x12x128xf32>,
    %cst_24 = arith.constant 0.000000e+00 : f32
    %19 = vector.broadcast %cst_24 : f32 to vector<128x128xf32>
    %c0_25 = arith.constant 0 : index
    %c0_26 = arith.constant 0 : index
    %c0_27 = arith.constant 0 : index
    %c0_28 = arith.constant 0 : index
    %20 = vector.load %arg12[%c0_25, %c0_26, %c0_27, %c0_28] : memref<2x12x12x128xf32, #tpu.memory_space<vmem>>, vector<2x8x8x128xf32>
    %21 = vector.shape_cast %20 : vector<2x8x8x128xf32> to vector<128x128xf32>
    %22 = arith.truncf %21 : vector<128x128xf32> to vector<128x128xbf16>
    %c0_29 = arith.constant 0 : index
    %c0_30 = arith.constant 0 : index
    %c0_31 = arith.constant 0 : index
    %23 = vector.load %arg4[%c0_29, %c0_30, %c0_31] : memref<25x128x128xbf16, #tpu.memory_space<vmem>>, vector<1x128x128xbf16>
    %24 = vector.shape_cast %23 : vector<1x128x128xbf16> to vector<128x128xbf16>
    %cst_32 = arith.constant dense<0.000000e+00> : vector<128x128xf32>
    %25 = tpu.matmul %22, %24, %cst_32 {dimension_numbers = #tpu.dot_dimension_numbers<[1], [0], [0], [1], [0, 0, 1, 1], [], []>} : vector<128x128xbf16>, vector<128x128xbf16>, vector<128x128xf32> -> vector<128x128xf32>
    %26 = arith.addf %19, %25 : vector<128x128xf32>
    %c0_33 = arith.constant 0 : index
    %c0_34 = arith.constant 0 : index
    %c1_35 = arith.constant 1 : index
    %c0_36 = arith.constant 0 : index
    %27 = vector.load %arg12[%c0_33, %c0_34, %c1_35, %c0_36] : memref<2x12x12x128xf32, #tpu.memory_space<vmem>>, vector<2x8x8x128xf32>
    %28 = vector.shape_cast %27 : vector<2x8x8x128xf32> to vector<128x128xf32>
    %29 = arith.truncf %28 : vector<128x128xf32> to vector<128x128xbf16>
    %c1_37 = arith.constant 1 : index
    %c0_38 = arith.constant 0 : index
    %c0_39 = arith.constant 0 : index
    %30 = vector.load %arg4[%c1_37, %c0_38, %c0_39] : memref<25x128x128xbf16, #tpu.memory_space<vmem>>, vector<1x128x128xbf16>
    %31 = vector.shape_cast %30 : vector<1x128x128xbf16> to vector<128x128xbf16>
    %cst_40 = arith.constant dense<0.000000e+00> : vector<128x128xf32>
    %32 = tpu.matmul %29, %31, %cst_40 {dimension_numbers = #tpu.dot_dimension_numbers<[1], [0], [0], [1], [0, 0, 1, 1], [], []>} : vector<128x128xbf16>, vector<128x128xbf16>, vector<128x128xf32> -> vector<128x128xf32>
    %33 = arith.addf %26, %32 : vector<128x128xf32>
    %c0_41 = arith.constant 0 : index
    %c0_42 = arith.constant 0 : index
    %c2 = arith.constant 2 : index
    %c0_43 = arith.constant 0 : index
    %34 = vector.load %arg12[%c0_41, %c0_42, %c2, %c0_43] : memref<2x12x12x128xf32, #tpu.memory_space<vmem>>, vector<2x8x8x128xf32>
    %35 = vector.shape_cast %34 : vector<2x8x8x128xf32> to vector<128x128xf32>
    %36 = arith.truncf %35 : vector<128x128xf32> to vector<128x128xbf16>
    %c2_44 = arith.constant 2 : index
    %c0_45 = arith.constant 0 : index
    %c0_46 = arith.constant 0 : index
    %37 = vector.load %arg4[%c2_44, %c0_45, %c0_46] : memref<25x128x128xbf16, #tpu.memory_space<vmem>>, vector<1x128x128xbf16>
    %38 = vector.shape_cast %37 : vector<1x128x128xbf16> to vector<128x128xbf16>
    %cst_47 = arith.constant dense<0.000000e+00> : vector<128x128xf32>
    %39 = tpu.matmul %36, %38, %cst_47 {dimension_numbers = #tpu.dot_dimension_numbers<[1], [0], [0], [1], [0, 0, 1, 1], [], []>} : vector<128x128xbf16>, vector<128x128xbf16>, vector<128x128xf32> -> vector<128x128xf32>
    %40 = arith.addf %33, %39 : vector<128x128xf32>
    %c0_48 = arith.constant 0 : index
    %c0_49 = arith.constant 0 : index
    %c3 = arith.constant 3 : index
    %c0_50 = arith.constant 0 : index
    %41 = vector.load %arg12[%c0_48, %c0_49, %c3, %c0_50] : memref<2x12x12x128xf32, #tpu.memory_space<vmem>>, vector<2x8x8x128xf32>
    %42 = vector.shape_cast %41 : vector<2x8x8x128xf32> to vector<128x128xf32>
    %43 = arith.truncf %42 : vector<128x128xf32> to vector<128x128xbf16>
    %c3_51 = arith.constant 3 : index
    %c0_52 = arith.constant 0 : index
    %c0_53 = arith.constant 0 : index
    %44 = vector.load %arg4[%c3_51, %c0_52, %c0_53] : memref<25x128x128xbf16, #tpu.memory_space<vmem>>, vector<1x128x128xbf16>
    %45 = vector.shape_cast %44 : vector<1x128x128xbf16> to vector<128x128xbf16>
    %cst_54 = arith.constant dense<0.000000e+00> : vector<128x128xf32>
    %46 = tpu.matmul %43, %45, %cst_54 {dimension_numbers = #tpu.dot_dimension_numbers<[1], [0], [0], [1], [0, 0, 1, 1], [], []>} : vector<128x128xbf16>, vector<128x128xbf16>, vector<128x128xf32> -> vector<128x128xf32>
    %47 = arith.addf %40, %46 : vector<128x128xf32>
    %c0_55 = arith.constant 0 : index
    %c0_56 = arith.constant 0 : index
    %c4 = arith.constant 4 : index
    %c0_57 = arith.constant 0 : index
    %48 = vector.load %arg12[%c0_55, %c0_56, %c4, %c0_57] : memref<2x12x12x128xf32, #tpu.memory_space<vmem>>, vector<2x8x8x128xf32>
    %49 = vector.shape_cast %48 : vector<2x8x8x128xf32> to vector<128x128xf32>
    %50 = arith.truncf %49 : vector<128x128xf32> to vector<128x128xbf16>
    %c4_58 = arith.constant 4 : index
    %c0_59 = arith.constant 0 : index
    %c0_60 = arith.constant 0 : index
    %51 = vector.load %arg4[%c4_58, %c0_59, %c0_60] : memref<25x128x128xbf16, #tpu.memory_space<vmem>>, vector<1x128x128xbf16>
    %52 = vector.shape_cast %51 : vector<1x128x128xbf16> to vector<128x128xbf16>
    %cst_61 = arith.constant dense<0.000000e+00> : vector<128x128xf32>
    %53 = tpu.matmul %50, %52, %cst_61 {dimension_numbers = #tpu.dot_dimension_numbers<[1], [0], [0], [1], [0, 0, 1, 1], [], []>} : vector<128x128xbf16>, vector<128x128xbf16>, vector<128x128xf32> -> vector<128x128xf32>
    %54 = arith.addf %47, %53 : vector<128x128xf32>
    %c0_62 = arith.constant 0 : index
    %c1_63 = arith.constant 1 : index
    %c0_64 = arith.constant 0 : index
    %c0_65 = arith.constant 0 : index
    %55 = vector.load %arg12[%c0_62, %c1_63, %c0_64, %c0_65] : memref<2x12x12x128xf32, #tpu.memory_space<vmem>>, vector<2x8x8x128xf32>
    %56 = vector.shape_cast %55 : vector<2x8x8x128xf32> to vector<128x128xf32>
    %57 = arith.truncf %56 : vector<128x128xf32> to vector<128x128xbf16>
    %c5 = arith.constant 5 : index
    %c0_66 = arith.constant 0 : index
    %c0_67 = arith.constant 0 : index
    %58 = vector.load %arg4[%c5, %c0_66, %c0_67] : memref<25x128x128xbf16, #tpu.memory_space<vmem>>, vector<1x128x128xbf16>
    %59 = vector.shape_cast %58 : vector<1x128x128xbf16> to vector<128x128xbf16>
    %cst_68 = arith.constant dense<0.000000e+00> : vector<128x128xf32>
    %60 = tpu.matmul %57, %59, %cst_68 {dimension_numbers = #tpu.dot_dimension_numbers<[1], [0], [0], [1], [0, 0, 1, 1], [], []>} : vector<128x128xbf16>, vector<128x128xbf16>, vector<128x128xf32> -> vector<128x128xf32>
    %61 = arith.addf %54, %60 : vector<128x128xf32>
    %c0_69 = arith.constant 0 : index
    %c1_70 = arith.constant 1 : index
    %c1_71 = arith.constant 1 : index
    %c0_72 = arith.constant 0 : index
    %62 = vector.load %arg12[%c0_69, %c1_70, %c1_71, %c0_72] : memref<2x12x12x128xf32, #tpu.memory_space<vmem>>, vector<2x8x8x128xf32>
    %63 = vector.shape_cast %62 : vector<2x8x8x128xf32> to vector<128x128xf32>
    %64 = arith.truncf %63 : vector<128x128xf32> to vector<128x128xbf16>
    %c6 = arith.constant 6 : index
    %c0_73 = arith.constant 0 : index
    %c0_74 = arith.constant 0 : index
    %65 = vector.load %arg4[%c6, %c0_73, %c0_74] : memref<25x128x128xbf16, #tpu.memory_space<vmem>>, vector<1x128x128xbf16>
    %66 = vector.shape_cast %65 : vector<1x128x128xbf16> to vector<128x128xbf16>
    %cst_75 = arith.constant dense<0.000000e+00> : vector<128x128xf32>
    %67 = tpu.matmul %64, %66, %cst_75 {dimension_numbers = #tpu.dot_dimension_numbers<[1], [0], [0], [1], [0, 0, 1, 1], [], []>} : vector<128x128xbf16>, vector<128x128xbf16>, vector<128x128xf32> -> vector<128x128xf32>
    %68 = arith.addf %61, %67 : vector<128x128xf32>
    %c0_76 = arith.constant 0 : index
    %c1_77 = arith.constant 1 : index
    %c2_78 = arith.constant 2 : index
    %c0_79 = arith.constant 0 : index
    %69 = vector.load %arg12[%c0_76, %c1_77, %c2_78, %c0_79] : memref<2x12x12x128xf32, #tpu.memory_space<vmem>>, vector<2x8x8x128xf32>
    %70 = vector.shape_cast %69 : vector<2x8x8x128xf32> to vector<128x128xf32>
    %71 = arith.truncf %70 : vector<128x128xf32> to vector<128x128xbf16>
    %c7 = arith.constant 7 : index
    %c0_80 = arith.constant 0 : index
    %c0_81 = arith.constant 0 : index
    %72 = vector.load %arg4[%c7, %c0_80, %c0_81] : memref<25x128x128xbf16, #tpu.memory_space<vmem>>, vector<1x128x128xbf16>
    %73 = vector.shape_cast %72 : vector<1x128x128xbf16> to vector<128x128xbf16>
    %cst_82 = arith.constant dense<0.000000e+00> : vector<128x128xf32>
    %74 = tpu.matmul %71, %73, %cst_82 {dimension_numbers = #tpu.dot_dimension_numbers<[1], [0], [0], [1], [0, 0, 1, 1], [], []>} : vector<128x128xbf16>, vector<128x128xbf16>, vector<128x128xf32> -> vector<128x128xf32>
    %75 = arith.addf %68, %74 : vector<128x128xf32>
    %c0_83 = arith.constant 0 : index
    %c1_84 = arith.constant 1 : index
    %c3_85 = arith.constant 3 : index
    %c0_86 = arith.constant 0 : index
    %76 = vector.load %arg12[%c0_83, %c1_84, %c3_85, %c0_86] : memref<2x12x12x128xf32, #tpu.memory_space<vmem>>, vector<2x8x8x128xf32>
    %77 = vector.shape_cast %76 : vector<2x8x8x128xf32> to vector<128x128xf32>
    %78 = arith.truncf %77 : vector<128x128xf32> to vector<128x128xbf16>
    %c8 = arith.constant 8 : index
    %c0_87 = arith.constant 0 : index
    %c0_88 = arith.constant 0 : index
    %79 = vector.load %arg4[%c8, %c0_87, %c0_88] : memref<25x128x128xbf16, #tpu.memory_space<vmem>>, vector<1x128x128xbf16>
    %80 = vector.shape_cast %79 : vector<1x128x128xbf16> to vector<128x128xbf16>
    %cst_89 = arith.constant dense<0.000000e+00> : vector<128x128xf32>
    %81 = tpu.matmul %78, %80, %cst_89 {dimension_numbers = #tpu.dot_dimension_numbers<[1], [0], [0], [1], [0, 0, 1, 1], [], []>} : vector<128x128xbf16>, vector<128x128xbf16>, vector<128x128xf32> -> vector<128x128xf32>
    %82 = arith.addf %75, %81 : vector<128x128xf32>
    %c0_90 = arith.constant 0 : index
    %c1_91 = arith.constant 1 : index
    %c4_92 = arith.constant 4 : index
    %c0_93 = arith.constant 0 : index
    %83 = vector.load %arg12[%c0_90, %c1_91, %c4_92, %c0_93] : memref<2x12x12x128xf32, #tpu.memory_space<vmem>>, vector<2x8x8x128xf32>
    %84 = vector.shape_cast %83 : vector<2x8x8x128xf32> to vector<128x128xf32>
    %85 = arith.truncf %84 : vector<128x128xf32> to vector<128x128xbf16>
    %c9 = arith.constant 9 : index
    %c0_94 = arith.constant 0 : index
    %c0_95 = arith.constant 0 : index
    %86 = vector.load %arg4[%c9, %c0_94, %c0_95] : memref<25x128x128xbf16, #tpu.memory_space<vmem>>, vector<1x128x128xbf16>
    %87 = vector.shape_cast %86 : vector<1x128x128xbf16> to vector<128x128xbf16>
    %cst_96 = arith.constant dense<0.000000e+00> : vector<128x128xf32>
    %88 = tpu.matmul %85, %87, %cst_96 {dimension_numbers = #tpu.dot_dimension_numbers<[1], [0], [0], [1], [0, 0, 1, 1], [], []>} : vector<128x128xbf16>, vector<128x128xbf16>, vector<128x128xf32> -> vector<128x128xf32>
    %89 = arith.addf %82, %88 : vector<128x128xf32>
    %c0_97 = arith.constant 0 : index
    %c2_98 = arith.constant 2 : index
    %c0_99 = arith.constant 0 : index
    %c0_100 = arith.constant 0 : index
    %90 = vector.load %arg12[%c0_97, %c2_98, %c0_99, %c0_100] : memref<2x12x12x128xf32, #tpu.memory_space<vmem>>, vector<2x8x8x128xf32>
    %91 = vector.shape_cast %90 : vector<2x8x8x128xf32> to vector<128x128xf32>
    %92 = arith.truncf %91 : vector<128x128xf32> to vector<128x128xbf16>
    %c10 = arith.constant 10 : index
    %c0_101 = arith.constant 0 : index
    %c0_102 = arith.constant 0 : index
    %93 = vector.load %arg4[%c10, %c0_101, %c0_102] : memref<25x128x128xbf16, #tpu.memory_space<vmem>>, vector<1x128x128xbf16>
    %94 = vector.shape_cast %93 : vector<1x128x128xbf16> to vector<128x128xbf16>
    %cst_103 = arith.constant dense<0.000000e+00> : vector<128x128xf32>
    %95 = tpu.matmul %92, %94, %cst_103 {dimension_numbers = #tpu.dot_dimension_numbers<[1], [0], [0], [1], [0, 0, 1, 1], [], []>} : vector<128x128xbf16>, vector<128x128xbf16>, vector<128x128xf32> -> vector<128x128xf32>
    %96 = arith.addf %89, %95 : vector<128x128xf32>
    %c0_104 = arith.constant 0 : index
    %c2_105 = arith.constant 2 : index
    %c1_106 = arith.constant 1 : index
    %c0_107 = arith.constant 0 : index
    %97 = vector.load %arg12[%c0_104, %c2_105, %c1_106, %c0_107] : memref<2x12x12x128xf32, #tpu.memory_space<vmem>>, vector<2x8x8x128xf32>
    %98 = vector.shape_cast %97 : vector<2x8x8x128xf32> to vector<128x128xf32>
    %99 = arith.truncf %98 : vector<128x128xf32> to vector<128x128xbf16>
    %c11 = arith.constant 11 : index
    %c0_108 = arith.constant 0 : index
    %c0_109 = arith.constant 0 : index
    %100 = vector.load %arg4[%c11, %c0_108, %c0_109] : memref<25x128x128xbf16, #tpu.memory_space<vmem>>, vector<1x128x128xbf16>
    %101 = vector.shape_cast %100 : vector<1x128x128xbf16> to vector<128x128xbf16>
    %cst_110 = arith.constant dense<0.000000e+00> : vector<128x128xf32>
    %102 = tpu.matmul %99, %101, %cst_110 {dimension_numbers = #tpu.dot_dimension_numbers<[1], [0], [0], [1], [0, 0, 1, 1], [], []>} : vector<128x128xbf16>, vector<128x128xbf16>, vector<128x128xf32> -> vector<128x128xf32>
    %103 = arith.addf %96, %102 : vector<128x128xf32>
    %c0_111 = arith.constant 0 : index
    %c2_112 = arith.constant 2 : index
    %c2_113 = arith.constant 2 : index
    %c0_114 = arith.constant 0 : index
    %104 = vector.load %arg12[%c0_111, %c2_112, %c2_113, %c0_114] : memref<2x12x12x128xf32, #tpu.memory_space<vmem>>, vector<2x8x8x128xf32>
    %105 = vector.shape_cast %104 : vector<2x8x8x128xf32> to vector<128x128xf32>
    %106 = arith.truncf %105 : vector<128x128xf32> to vector<128x128xbf16>
    %c12 = arith.constant 12 : index
    %c0_115 = arith.constant 0 : index
    %c0_116 = arith.constant 0 : index
    %107 = vector.load %arg4[%c12, %c0_115, %c0_116] : memref<25x128x128xbf16, #tpu.memory_space<vmem>>, vector<1x128x128xbf16>
    %108 = vector.shape_cast %107 : vector<1x128x128xbf16> to vector<128x128xbf16>
    %cst_117 = arith.constant dense<0.000000e+00> : vector<128x128xf32>
    %109 = tpu.matmul %106, %108, %cst_117 {dimension_numbers = #tpu.dot_dimension_numbers<[1], [0], [0], [1], [0, 0, 1, 1], [], []>} : vector<128x128xbf16>, vector<128x128xbf16>, vector<128x128xf32> -> vector<128x128xf32>
    %110 = arith.addf %103, %109 : vector<128x128xf32>
    %c0_118 = arith.constant 0 : index
    %c2_119 = arith.constant 2 : index
    %c3_120 = arith.constant 3 : index
    %c0_121 = arith.constant 0 : index
    %111 = vector.load %arg12[%c0_118, %c2_119, %c3_120, %c0_121] : memref<2x12x12x128xf32, #tpu.memory_space<vmem>>, vector<2x8x8x128xf32>
    %112 = vector.shape_cast %111 : vector<2x8x8x128xf32> to vector<128x128xf32>
    %113 = arith.truncf %112 : vector<128x128xf32> to vector<128x128xbf16>
    %c13 = arith.constant 13 : index
    %c0_122 = arith.constant 0 : index
    %c0_123 = arith.constant 0 : index
    %114 = vector.load %arg4[%c13, %c0_122, %c0_123] : memref<25x128x128xbf16, #tpu.memory_space<vmem>>, vector<1x128x128xbf16>
    %115 = vector.shape_cast %114 : vector<1x128x128xbf16> to vector<128x128xbf16>
    %cst_124 = arith.constant dense<0.000000e+00> : vector<128x128xf32>
    %116 = tpu.matmul %113, %115, %cst_124 {dimension_numbers = #tpu.dot_dimension_numbers<[1], [0], [0], [1], [0, 0, 1, 1], [], []>} : vector<128x128xbf16>, vector<128x128xbf16>, vector<128x128xf32> -> vector<128x128xf32>
    %117 = arith.addf %110, %116 : vector<128x128xf32>
    %c0_125 = arith.constant 0 : index
    %c2_126 = arith.constant 2 : index
    %c4_127 = arith.constant 4 : index
    %c0_128 = arith.constant 0 : index
    %118 = vector.load %arg12[%c0_125, %c2_126, %c4_127, %c0_128] : memref<2x12x12x128xf32, #tpu.memory_space<vmem>>, vector<2x8x8x128xf32>
    %119 = vector.shape_cast %118 : vector<2x8x8x128xf32> to vector<128x128xf32>
    %120 = arith.truncf %119 : vector<128x128xf32> to vector<128x128xbf16>
    %c14 = arith.constant 14 : index
    %c0_129 = arith.constant 0 : index
    %c0_130 = arith.constant 0 : index
    %121 = vector.load %arg4[%c14, %c0_129, %c0_130] : memref<25x128x128xbf16, #tpu.memory_space<vmem>>, vector<1x128x128xbf16>
    %122 = vector.shape_cast %121 : vector<1x128x128xbf16> to vector<128x128xbf16>
    %cst_131 = arith.constant dense<0.000000e+00> : vector<128x128xf32>
    %123 = tpu.matmul %120, %122, %cst_131 {dimension_numbers = #tpu.dot_dimension_numbers<[1], [0], [0], [1], [0, 0, 1, 1], [], []>} : vector<128x128xbf16>, vector<128x128xbf16>, vector<128x128xf32> -> vector<128x128xf32>
    %124 = arith.addf %117, %123 : vector<128x128xf32>
    %c0_132 = arith.constant 0 : index
    %c3_133 = arith.constant 3 : index
    %c0_134 = arith.constant 0 : index
    %c0_135 = arith.constant 0 : index
    %125 = vector.load %arg12[%c0_132, %c3_133, %c0_134, %c0_135] : memref<2x12x12x128xf32, #tpu.memory_space<vmem>>, vector<2x8x8x128xf32>
    %126 = vector.shape_cast %125 : vector<2x8x8x128xf32> to vector<128x128xf32>
    %127 = arith.truncf %126 : vector<128x128xf32> to vector<128x128xbf16>
    %c15 = arith.constant 15 : index
    %c0_136 = arith.constant 0 : index
    %c0_137 = arith.constant 0 : index
    %128 = vector.load %arg4[%c15, %c0_136, %c0_137] : memref<25x128x128xbf16, #tpu.memory_space<vmem>>, vector<1x128x128xbf16>
    %129 = vector.shape_cast %128 : vector<1x128x128xbf16> to vector<128x128xbf16>
    %cst_138 = arith.constant dense<0.000000e+00> : vector<128x128xf32>
    %130 = tpu.matmul %127, %129, %cst_138 {dimension_numbers = #tpu.dot_dimension_numbers<[1], [0], [0], [1], [0, 0, 1, 1], [], []>} : vector<128x128xbf16>, vector<128x128xbf16>, vector<128x128xf32> -> vector<128x128xf32>
    %131 = arith.addf %124, %130 : vector<128x128xf32>
    %c0_139 = arith.constant 0 : index
    %c3_140 = arith.constant 3 : index
    %c1_141 = arith.constant 1 : index
    %c0_142 = arith.constant 0 : index
    %132 = vector.load %arg12[%c0_139, %c3_140, %c1_141, %c0_142] : memref<2x12x12x128xf32, #tpu.memory_space<vmem>>, vector<2x8x8x128xf32>
    %133 = vector.shape_cast %132 : vector<2x8x8x128xf32> to vector<128x128xf32>
    %134 = arith.truncf %133 : vector<128x128xf32> to vector<128x128xbf16>
    %c16 = arith.constant 16 : index
    %c0_143 = arith.constant 0 : index
    %c0_144 = arith.constant 0 : index
    %135 = vector.load %arg4[%c16, %c0_143, %c0_144] : memref<25x128x128xbf16, #tpu.memory_space<vmem>>, vector<1x128x128xbf16>
    %136 = vector.shape_cast %135 : vector<1x128x128xbf16> to vector<128x128xbf16>
    %cst_145 = arith.constant dense<0.000000e+00> : vector<128x128xf32>
    %137 = tpu.matmul %134, %136, %cst_145 {dimension_numbers = #tpu.dot_dimension_numbers<[1], [0], [0], [1], [0, 0, 1, 1], [], []>} : vector<128x128xbf16>, vector<128x128xbf16>, vector<128x128xf32> -> vector<128x128xf32>
    %138 = arith.addf %131, %137 : vector<128x128xf32>
    %c0_146 = arith.constant 0 : index
    %c3_147 = arith.constant 3 : index
    %c2_148 = arith.constant 2 : index
    %c0_149 = arith.constant 0 : index
    %139 = vector.load %arg12[%c0_146, %c3_147, %c2_148, %c0_149] : memref<2x12x12x128xf32, #tpu.memory_space<vmem>>, vector<2x8x8x128xf32>
    %140 = vector.shape_cast %139 : vector<2x8x8x128xf32> to vector<128x128xf32>
    %141 = arith.truncf %140 : vector<128x128xf32> to vector<128x128xbf16>
    %c17 = arith.constant 17 : index
    %c0_150 = arith.constant 0 : index
    %c0_151 = arith.constant 0 : index
    %142 = vector.load %arg4[%c17, %c0_150, %c0_151] : memref<25x128x128xbf16, #tpu.memory_space<vmem>>, vector<1x128x128xbf16>
    %143 = vector.shape_cast %142 : vector<1x128x128xbf16> to vector<128x128xbf16>
    %cst_152 = arith.constant dense<0.000000e+00> : vector<128x128xf32>
    %144 = tpu.matmul %141, %143, %cst_152 {dimension_numbers = #tpu.dot_dimension_numbers<[1], [0], [0], [1], [0, 0, 1, 1], [], []>} : vector<128x128xbf16>, vector<128x128xbf16>, vector<128x128xf32> -> vector<128x128xf32>
    %145 = arith.addf %138, %144 : vector<128x128xf32>
    %c0_153 = arith.constant 0 : index
    %c3_154 = arith.constant 3 : index
    %c3_155 = arith.constant 3 : index
    %c0_156 = arith.constant 0 : index
    %146 = vector.load %arg12[%c0_153, %c3_154, %c3_155, %c0_156] : memref<2x12x12x128xf32, #tpu.memory_space<vmem>>, vector<2x8x8x128xf32>
    %147 = vector.shape_cast %146 : vector<2x8x8x128xf32> to vector<128x128xf32>
    %148 = arith.truncf %147 : vector<128x128xf32> to vector<128x128xbf16>
    %c18 = arith.constant 18 : index
    %c0_157 = arith.constant 0 : index
    %c0_158 = arith.constant 0 : index
    %149 = vector.load %arg4[%c18, %c0_157, %c0_158] : memref<25x128x128xbf16, #tpu.memory_space<vmem>>, vector<1x128x128xbf16>
    %150 = vector.shape_cast %149 : vector<1x128x128xbf16> to vector<128x128xbf16>
    %cst_159 = arith.constant dense<0.000000e+00> : vector<128x128xf32>
    %151 = tpu.matmul %148, %150, %cst_159 {dimension_numbers = #tpu.dot_dimension_numbers<[1], [0], [0], [1], [0, 0, 1, 1], [], []>} : vector<128x128xbf16>, vector<128x128xbf16>, vector<128x128xf32> -> vector<128x128xf32>
    %152 = arith.addf %145, %151 : vector<128x128xf32>
    %c0_160 = arith.constant 0 : index
    %c3_161 = arith.constant 3 : index
    %c4_162 = arith.constant 4 : index
    %c0_163 = arith.constant 0 : index
    %153 = vector.load %arg12[%c0_160, %c3_161, %c4_162, %c0_163] : memref<2x12x12x128xf32, #tpu.memory_space<vmem>>, vector<2x8x8x128xf32>
    %154 = vector.shape_cast %153 : vector<2x8x8x128xf32> to vector<128x128xf32>
    %155 = arith.truncf %154 : vector<128x128xf32> to vector<128x128xbf16>
    %c19 = arith.constant 19 : index
    %c0_164 = arith.constant 0 : index
    %c0_165 = arith.constant 0 : index
    %156 = vector.load %arg4[%c19, %c0_164, %c0_165] : memref<25x128x128xbf16, #tpu.memory_space<vmem>>, vector<1x128x128xbf16>
    %157 = vector.shape_cast %156 : vector<1x128x128xbf16> to vector<128x128xbf16>
    %cst_166 = arith.constant dense<0.000000e+00> : vector<128x128xf32>
    %158 = tpu.matmul %155, %157, %cst_166 {dimension_numbers = #tpu.dot_dimension_numbers<[1], [0], [0], [1], [0, 0, 1, 1], [], []>} : vector<128x128xbf16>, vector<128x128xbf16>, vector<128x128xf32> -> vector<128x128xf32>
    %159 = arith.addf %152, %158 : vector<128x128xf32>
    %c0_167 = arith.constant 0 : index
    %c4_168 = arith.constant 4 : index
    %c0_169 = arith.constant 0 : index
    %c0_170 = arith.constant 0 : index
    %160 = vector.load %arg12[%c0_167, %c4_168, %c0_169, %c0_170] : memref<2x12x12x128xf32, #tpu.memory_space<vmem>>, vector<2x8x8x128xf32>
    %161 = vector.shape_cast %160 : vector<2x8x8x128xf32> to vector<128x128xf32>
    %162 = arith.truncf %161 : vector<128x128xf32> to vector<128x128xbf16>
    %c20 = arith.constant 20 : index
    %c0_171 = arith.constant 0 : index
    %c0_172 = arith.constant 0 : index
    %163 = vector.load %arg4[%c20, %c0_171, %c0_172] : memref<25x128x128xbf16, #tpu.memory_space<vmem>>, vector<1x128x128xbf16>
    %164 = vector.shape_cast %163 : vector<1x128x128xbf16> to vector<128x128xbf16>
    %cst_173 = arith.constant dense<0.000000e+00> : vector<128x128xf32>
    %165 = tpu.matmul %162, %164, %cst_173 {dimension_numbers = #tpu.dot_dimension_numbers<[1], [0], [0], [1], [0, 0, 1, 1], [], []>} : vector<128x128xbf16>, vector<128x128xbf16>, vector<128x128xf32> -> vector<128x128xf32>
    %166 = arith.addf %159, %165 : vector<128x128xf32>
    %c0_174 = arith.constant 0 : index
    %c4_175 = arith.constant 4 : index
    %c1_176 = arith.constant 1 : index
    %c0_177 = arith.constant 0 : index
    %167 = vector.load %arg12[%c0_174, %c4_175, %c1_176, %c0_177] : memref<2x12x12x128xf32, #tpu.memory_space<vmem>>, vector<2x8x8x128xf32>
    %168 = vector.shape_cast %167 : vector<2x8x8x128xf32> to vector<128x128xf32>
    %169 = arith.truncf %168 : vector<128x128xf32> to vector<128x128xbf16>
    %c21 = arith.constant 21 : index
    %c0_178 = arith.constant 0 : index
    %c0_179 = arith.constant 0 : index
    %170 = vector.load %arg4[%c21, %c0_178, %c0_179] : memref<25x128x128xbf16, #tpu.memory_space<vmem>>, vector<1x128x128xbf16>
    %171 = vector.shape_cast %170 : vector<1x128x128xbf16> to vector<128x128xbf16>
    %cst_180 = arith.constant dense<0.000000e+00> : vector<128x128xf32>
    %172 = tpu.matmul %169, %171, %cst_180 {dimension_numbers = #tpu.dot_dimension_numbers<[1], [0], [0], [1], [0, 0, 1, 1], [], []>} : vector<128x128xbf16>, vector<128x128xbf16>, vector<128x128xf32> -> vector<128x128xf32>
    %173 = arith.addf %166, %172 : vector<128x128xf32>
    %c0_181 = arith.constant 0 : index
    %c4_182 = arith.constant 4 : index
    %c2_183 = arith.constant 2 : index
    %c0_184 = arith.constant 0 : index
    %174 = vector.load %arg12[%c0_181, %c4_182, %c2_183, %c0_184] : memref<2x12x12x128xf32, #tpu.memory_space<vmem>>, vector<2x8x8x128xf32>
    %175 = vector.shape_cast %174 : vector<2x8x8x128xf32> to vector<128x128xf32>
    %176 = arith.truncf %175 : vector<128x128xf32> to vector<128x128xbf16>
    %c22 = arith.constant 22 : index
    %c0_185 = arith.constant 0 : index
    %c0_186 = arith.constant 0 : index
    %177 = vector.load %arg4[%c22, %c0_185, %c0_186] : memref<25x128x128xbf16, #tpu.memory_space<vmem>>, vector<1x128x128xbf16>
    %178 = vector.shape_cast %177 : vector<1x128x128xbf16> to vector<128x128xbf16>
    %cst_187 = arith.constant dense<0.000000e+00> : vector<128x128xf32>
    %179 = tpu.matmul %176, %178, %cst_187 {dimension_numbers = #tpu.dot_dimension_numbers<[1], [0], [0], [1], [0, 0, 1, 1], [], []>} : vector<128x128xbf16>, vector<128x128xbf16>, vector<128x128xf32> -> vector<128x128xf32>
    %180 = arith.addf %173, %179 : vector<128x128xf32>
    %c0_188 = arith.constant 0 : index
    %c4_189 = arith.constant 4 : index
    %c3_190 = arith.constant 3 : index
    %c0_191 = arith.constant 0 : index
    %181 = vector.load %arg12[%c0_188, %c4_189, %c3_190, %c0_191] : memref<2x12x12x128xf32, #tpu.memory_space<vmem>>, vector<2x8x8x128xf32>
    %182 = vector.shape_cast %181 : vector<2x8x8x128xf32> to vector<128x128xf32>
    %183 = arith.truncf %182 : vector<128x128xf32> to vector<128x128xbf16>
    %c23 = arith.constant 23 : index
    %c0_192 = arith.constant 0 : index
    %c0_193 = arith.constant 0 : index
    %184 = vector.load %arg4[%c23, %c0_192, %c0_193] : memref<25x128x128xbf16, #tpu.memory_space<vmem>>, vector<1x128x128xbf16>
    %185 = vector.shape_cast %184 : vector<1x128x128xbf16> to vector<128x128xbf16>
    %cst_194 = arith.constant dense<0.000000e+00> : vector<128x128xf32>
    %186 = tpu.matmul %183, %185, %cst_194 {dimension_numbers = #tpu.dot_dimension_numbers<[1], [0], [0], [1], [0, 0, 1, 1], [], []>} : vector<128x128xbf16>, vector<128x128xbf16>, vector<128x128xf32> -> vector<128x128xf32>
    %187 = arith.addf %180, %186 : vector<128x128xf32>
    %c0_195 = arith.constant 0 : index
    %c4_196 = arith.constant 4 : index
    %c4_197 = arith.constant 4 : index
    %c0_198 = arith.constant 0 : index
    %188 = vector.load %arg12[%c0_195, %c4_196, %c4_197, %c0_198] : memref<2x12x12x128xf32, #tpu.memory_space<vmem>>, vector<2x8x8x128xf32>
    %189 = vector.shape_cast %188 : vector<2x8x8x128xf32> to vector<128x128xf32>
    %190 = arith.truncf %189 : vector<128x128xf32> to vector<128x128xbf16>
    %c24 = arith.constant 24 : index
    %c0_199 = arith.constant 0 : index
    %c0_200 = arith.constant 0 : index
    %191 = vector.load %arg4[%c24, %c0_199, %c0_200] : memref<25x128x128xbf16, #tpu.memory_space<vmem>>, vector<1x128x128xbf16>
    %192 = vector.shape_cast %191 : vector<1x128x128xbf16> to vector<128x128xbf16>
    %cst_201 = arith.constant dense<0.000000e+00> : vector<128x128xf32>
    %193 = tpu.matmul %190, %192, %cst_201 {dimension_numbers = #tpu.dot_dimension_numbers<[1], [0], [0], [1], [0, 0, 1, 1], [], []>} : vector<128x128xbf16>, vector<128x128xbf16>, vector<128x128xf32> -> vector<128x128xf32>
    %194 = arith.addf %187, %193 : vector<128x128xf32>
    %c0_202 = arith.constant 0 : index
    %c0_203 = arith.constant 0 : index
    %195 = vector.load %arg5[%c0_202, %c0_203] : memref<1x128xf32, #tpu.memory_space<vmem>>, vector<1x128xf32>
    %196 = vector.broadcast %195 : vector<1x128xf32> to vector<128x128xf32>
    %197 = arith.addf %194, %196 : vector<128x128xf32>
    %cst_204 = arith.constant 0.000000e+00 : f32
    %198 = vector.broadcast %cst_204 : f32 to vector<128x128xf32>
    %199 = arith.maximumf %197, %198 : vector<128x128xf32>
    %200 = vector.shape_cast %199 : vector<128x128xf32> to vector<2x4x2x8x128xf32>
    %c0_205 = arith.constant 0 : index
    %c0_206 = arith.constant 0 : index
    %c0_207 = arith.constant 0 : index
    %c0_208 = arith.constant 0 : index
    %c0_209 = arith.constant 0 : index
    %201 = vector.load %arg13[%c0_205, %c0_206, %c0_207, %c0_208, %c0_209] : memref<2x4x2x8x128xf32, #tpu.memory_space<vmem>>, vector<2x4x2x8x128xf32>
    tpu.vector_store %arg13[%c0_205, %c0_206, %c0_207, %c0_208, %c0_209], %200 {strides = array<i32>} : memref<2x4x2x8x128xf32, #tpu.memory_space<vmem>>, vector<2x4x2x8x128xf32>,
    %c0_210 = arith.constant 0 : index
    %c0_211 = arith.constant 0 : index
    %c0_212 = arith.constant 0 : index
    %c0_213 = arith.constant 0 : index
    %c0_214 = arith.constant 0 : index
    %202 = tpu.strided_load %arg13[%c0_210, %c0_211, %c0_212, %c0_213, %c0_214] {strides = array<i32: 1, 1, 1, 2, 1>} : memref<2x4x2x8x128xf32, #tpu.memory_space<vmem>>, vector<2x4x2x4x128xf32>
    %c0_215 = arith.constant 0 : index
    %c0_216 = arith.constant 0 : index
    %c0_217 = arith.constant 0 : index
    %c1_218 = arith.constant 1 : index
    %c0_219 = arith.constant 0 : index
    %203 = tpu.strided_load %arg13[%c0_215, %c0_216, %c0_217, %c1_218, %c0_219] {strides = array<i32: 1, 1, 1, 2, 1>} : memref<2x4x2x8x128xf32, #tpu.memory_space<vmem>>, vector<2x4x2x4x128xf32>
    %204 = arith.maximumf %202, %203 : vector<2x4x2x4x128xf32>
    %205 = vector.extract_strided_slice %204 {offsets = [0, 0, 0, 0, 0], sizes = [2, 4, 1, 4, 128], strides = [1, 1, 1, 1, 1]} : vector<2x4x2x4x128xf32> to vector<2x4x1x4x128xf32>
    %206 = vector.shape_cast %205 : vector<2x4x1x4x128xf32> to vector<2x4x4x128xf32>
    %207 = vector.extract_strided_slice %204 {offsets = [0, 0, 1, 0, 0], sizes = [2, 4, 1, 4, 128], strides = [1, 1, 1, 1, 1]} : vector<2x4x2x4x128xf32> to vector<2x4x1x4x128xf32>
    %208 = vector.shape_cast %207 : vector<2x4x1x4x128xf32> to vector<2x4x4x128xf32>
    %209 = arith.maximumf %206, %208 : vector<2x4x4x128xf32>
    %c0_220 = arith.constant 0 : index
    %c0_221 = arith.constant 0 : index
    %c0_222 = arith.constant 0 : index
    %c0_223 = arith.constant 0 : index
    %210 = vector.load %arg14[%c0_220, %c0_221, %c0_222, %c0_223] : memref<2x4x4x128xf32, #tpu.memory_space<vmem>>, vector<2x4x4x128xf32>
    tpu.vector_store %arg14[%c0_220, %c0_221, %c0_222, %c0_223], %209 {strides = array<i32>} : memref<2x4x4x128xf32, #tpu.memory_space<vmem>>, vector<2x4x4x128xf32>,
    %cst_224 = arith.constant 0.000000e+00 : f32
    %211 = vector.broadcast %cst_224 : f32 to vector<2x128xf32>
    %c0_225 = arith.constant 0 : index
    %c0_226 = arith.constant 0 : index
    %c0_227 = arith.constant 0 : index
    %c0_228 = arith.constant 0 : index
    %212 = vector.load %arg14[%c0_225, %c0_226, %c0_227, %c0_228] : memref<2x4x4x128xf32, #tpu.memory_space<vmem>>, vector<2x1x1x128xf32>
    %213 = vector.shape_cast %212 : vector<2x1x1x128xf32> to vector<2x128xf32>
    %214 = arith.truncf %213 : vector<2x128xf32> to vector<2x128xbf16>
    %c0_229 = arith.constant 0 : index
    %c0_230 = arith.constant 0 : index
    %c0_231 = arith.constant 0 : index
    %215 = vector.load %arg6[%c0_229, %c0_230, %c0_231] : memref<16x128x128xbf16, #tpu.memory_space<vmem>>, vector<1x128x128xbf16>
    %216 = vector.shape_cast %215 : vector<1x128x128xbf16> to vector<128x128xbf16>
    %cst_232 = arith.constant dense<0.000000e+00> : vector<2x128xf32>
    %217 = tpu.matmul %214, %216, %cst_232 {dimension_numbers = #tpu.dot_dimension_numbers<[1], [0], [0], [1], [0, 0, 1, 1], [], []>} : vector<2x128xbf16>, vector<128x128xbf16>, vector<2x128xf32> -> vector<2x128xf32>
    %218 = arith.addf %211, %217 : vector<2x128xf32>
    %c0_233 = arith.constant 0 : index
    %c0_234 = arith.constant 0 : index
    %c1_235 = arith.constant 1 : index
    %c0_236 = arith.constant 0 : index
    %219 = vector.load %arg14[%c0_233, %c0_234, %c1_235, %c0_236] : memref<2x4x4x128xf32, #tpu.memory_space<vmem>>, vector<2x1x1x128xf32>
    %220 = vector.shape_cast %219 : vector<2x1x1x128xf32> to vector<2x128xf32>
    %221 = arith.truncf %220 : vector<2x128xf32> to vector<2x128xbf16>
    %c1_237 = arith.constant 1 : index
    %c0_238 = arith.constant 0 : index
    %c0_239 = arith.constant 0 : index
    %222 = vector.load %arg6[%c1_237, %c0_238, %c0_239] : memref<16x128x128xbf16, #tpu.memory_space<vmem>>, vector<1x128x128xbf16>
    %223 = vector.shape_cast %222 : vector<1x128x128xbf16> to vector<128x128xbf16>
    %cst_240 = arith.constant dense<0.000000e+00> : vector<2x128xf32>
    %224 = tpu.matmul %221, %223, %cst_240 {dimension_numbers = #tpu.dot_dimension_numbers<[1], [0], [0], [1], [0, 0, 1, 1], [], []>} : vector<2x128xbf16>, vector<128x128xbf16>, vector<2x128xf32> -> vector<2x128xf32>
    %225 = arith.addf %218, %224 : vector<2x128xf32>
    %c0_241 = arith.constant 0 : index
    %c0_242 = arith.constant 0 : index
    %c2_243 = arith.constant 2 : index
    %c0_244 = arith.constant 0 : index
    %226 = vector.load %arg14[%c0_241, %c0_242, %c2_243, %c0_244] : memref<2x4x4x128xf32, #tpu.memory_space<vmem>>, vector<2x1x1x128xf32>
    %227 = vector.shape_cast %226 : vector<2x1x1x128xf32> to vector<2x128xf32>
    %228 = arith.truncf %227 : vector<2x128xf32> to vector<2x128xbf16>
    %c2_245 = arith.constant 2 : index
    %c0_246 = arith.constant 0 : index
    %c0_247 = arith.constant 0 : index
    %229 = vector.load %arg6[%c2_245, %c0_246, %c0_247] : memref<16x128x128xbf16, #tpu.memory_space<vmem>>, vector<1x128x128xbf16>
    %230 = vector.shape_cast %229 : vector<1x128x128xbf16> to vector<128x128xbf16>
    %cst_248 = arith.constant dense<0.000000e+00> : vector<2x128xf32>
    %231 = tpu.matmul %228, %230, %cst_248 {dimension_numbers = #tpu.dot_dimension_numbers<[1], [0], [0], [1], [0, 0, 1, 1], [], []>} : vector<2x128xbf16>, vector<128x128xbf16>, vector<2x128xf32> -> vector<2x128xf32>
    %232 = arith.addf %225, %231 : vector<2x128xf32>
    %c0_249 = arith.constant 0 : index
    %c0_250 = arith.constant 0 : index
    %c3_251 = arith.constant 3 : index
    %c0_252 = arith.constant 0 : index
    %233 = vector.load %arg14[%c0_249, %c0_250, %c3_251, %c0_252] : memref<2x4x4x128xf32, #tpu.memory_space<vmem>>, vector<2x1x1x128xf32>
    %234 = vector.shape_cast %233 : vector<2x1x1x128xf32> to vector<2x128xf32>
    %235 = arith.truncf %234 : vector<2x128xf32> to vector<2x128xbf16>
    %c3_253 = arith.constant 3 : index
    %c0_254 = arith.constant 0 : index
    %c0_255 = arith.constant 0 : index
    %236 = vector.load %arg6[%c3_253, %c0_254, %c0_255] : memref<16x128x128xbf16, #tpu.memory_space<vmem>>, vector<1x128x128xbf16>
    %237 = vector.shape_cast %236 : vector<1x128x128xbf16> to vector<128x128xbf16>
    %cst_256 = arith.constant dense<0.000000e+00> : vector<2x128xf32>
    %238 = tpu.matmul %235, %237, %cst_256 {dimension_numbers = #tpu.dot_dimension_numbers<[1], [0], [0], [1], [0, 0, 1, 1], [], []>} : vector<2x128xbf16>, vector<128x128xbf16>, vector<2x128xf32> -> vector<2x128xf32>
    %239 = arith.addf %232, %238 : vector<2x128xf32>
    %c0_257 = arith.constant 0 : index
    %c1_258 = arith.constant 1 : index
    %c0_259 = arith.constant 0 : index
    %c0_260 = arith.constant 0 : index
    %240 = vector.load %arg14[%c0_257, %c1_258, %c0_259, %c0_260] : memref<2x4x4x128xf32, #tpu.memory_space<vmem>>, vector<2x1x1x128xf32>
    %241 = vector.shape_cast %240 : vector<2x1x1x128xf32> to vector<2x128xf32>
    %242 = arith.truncf %241 : vector<2x128xf32> to vector<2x128xbf16>
    %c4_261 = arith.constant 4 : index
    %c0_262 = arith.constant 0 : index
    %c0_263 = arith.constant 0 : index
    %243 = vector.load %arg6[%c4_261, %c0_262, %c0_263] : memref<16x128x128xbf16, #tpu.memory_space<vmem>>, vector<1x128x128xbf16>
    %244 = vector.shape_cast %243 : vector<1x128x128xbf16> to vector<128x128xbf16>
    %cst_264 = arith.constant dense<0.000000e+00> : vector<2x128xf32>
    %245 = tpu.matmul %242, %244, %cst_264 {dimension_numbers = #tpu.dot_dimension_numbers<[1], [0], [0], [1], [0, 0, 1, 1], [], []>} : vector<2x128xbf16>, vector<128x128xbf16>, vector<2x128xf32> -> vector<2x128xf32>
    %246 = arith.addf %239, %245 : vector<2x128xf32>
    %c0_265 = arith.constant 0 : index
    %c1_266 = arith.constant 1 : index
    %c1_267 = arith.constant 1 : index
    %c0_268 = arith.constant 0 : index
    %247 = vector.load %arg14[%c0_265, %c1_266, %c1_267, %c0_268] : memref<2x4x4x128xf32, #tpu.memory_space<vmem>>, vector<2x1x1x128xf32>
    %248 = vector.shape_cast %247 : vector<2x1x1x128xf32> to vector<2x128xf32>
    %249 = arith.truncf %248 : vector<2x128xf32> to vector<2x128xbf16>
    %c5_269 = arith.constant 5 : index
    %c0_270 = arith.constant 0 : index
    %c0_271 = arith.constant 0 : index
    %250 = vector.load %arg6[%c5_269, %c0_270, %c0_271] : memref<16x128x128xbf16, #tpu.memory_space<vmem>>, vector<1x128x128xbf16>
    %251 = vector.shape_cast %250 : vector<1x128x128xbf16> to vector<128x128xbf16>
    %cst_272 = arith.constant dense<0.000000e+00> : vector<2x128xf32>
    %252 = tpu.matmul %249, %251, %cst_272 {dimension_numbers = #tpu.dot_dimension_numbers<[1], [0], [0], [1], [0, 0, 1, 1], [], []>} : vector<2x128xbf16>, vector<128x128xbf16>, vector<2x128xf32> -> vector<2x128xf32>
    %253 = arith.addf %246, %252 : vector<2x128xf32>
    %c0_273 = arith.constant 0 : index
    %c1_274 = arith.constant 1 : index
    %c2_275 = arith.constant 2 : index
    %c0_276 = arith.constant 0 : index
    %254 = vector.load %arg14[%c0_273, %c1_274, %c2_275, %c0_276] : memref<2x4x4x128xf32, #tpu.memory_space<vmem>>, vector<2x1x1x128xf32>
    %255 = vector.shape_cast %254 : vector<2x1x1x128xf32> to vector<2x128xf32>
    %256 = arith.truncf %255 : vector<2x128xf32> to vector<2x128xbf16>
    %c6_277 = arith.constant 6 : index
    %c0_278 = arith.constant 0 : index
    %c0_279 = arith.constant 0 : index
    %257 = vector.load %arg6[%c6_277, %c0_278, %c0_279] : memref<16x128x128xbf16, #tpu.memory_space<vmem>>, vector<1x128x128xbf16>
    %258 = vector.shape_cast %257 : vector<1x128x128xbf16> to vector<128x128xbf16>
    %cst_280 = arith.constant dense<0.000000e+00> : vector<2x128xf32>
    %259 = tpu.matmul %256, %258, %cst_280 {dimension_numbers = #tpu.dot_dimension_numbers<[1], [0], [0], [1], [0, 0, 1, 1], [], []>} : vector<2x128xbf16>, vector<128x128xbf16>, vector<2x128xf32> -> vector<2x128xf32>
    %260 = arith.addf %253, %259 : vector<2x128xf32>
    %c0_281 = arith.constant 0 : index
    %c1_282 = arith.constant 1 : index
    %c3_283 = arith.constant 3 : index
    %c0_284 = arith.constant 0 : index
    %261 = vector.load %arg14[%c0_281, %c1_282, %c3_283, %c0_284] : memref<2x4x4x128xf32, #tpu.memory_space<vmem>>, vector<2x1x1x128xf32>
    %262 = vector.shape_cast %261 : vector<2x1x1x128xf32> to vector<2x128xf32>
    %263 = arith.truncf %262 : vector<2x128xf32> to vector<2x128xbf16>
    %c7_285 = arith.constant 7 : index
    %c0_286 = arith.constant 0 : index
    %c0_287 = arith.constant 0 : index
    %264 = vector.load %arg6[%c7_285, %c0_286, %c0_287] : memref<16x128x128xbf16, #tpu.memory_space<vmem>>, vector<1x128x128xbf16>
    %265 = vector.shape_cast %264 : vector<1x128x128xbf16> to vector<128x128xbf16>
    %cst_288 = arith.constant dense<0.000000e+00> : vector<2x128xf32>
    %266 = tpu.matmul %263, %265, %cst_288 {dimension_numbers = #tpu.dot_dimension_numbers<[1], [0], [0], [1], [0, 0, 1, 1], [], []>} : vector<2x128xbf16>, vector<128x128xbf16>, vector<2x128xf32> -> vector<2x128xf32>
    %267 = arith.addf %260, %266 : vector<2x128xf32>
    %c0_289 = arith.constant 0 : index
    %c2_290 = arith.constant 2 : index
    %c0_291 = arith.constant 0 : index
    %c0_292 = arith.constant 0 : index
    %268 = vector.load %arg14[%c0_289, %c2_290, %c0_291, %c0_292] : memref<2x4x4x128xf32, #tpu.memory_space<vmem>>, vector<2x1x1x128xf32>
    %269 = vector.shape_cast %268 : vector<2x1x1x128xf32> to vector<2x128xf32>
    %270 = arith.truncf %269 : vector<2x128xf32> to vector<2x128xbf16>
    %c8_293 = arith.constant 8 : index
    %c0_294 = arith.constant 0 : index
    %c0_295 = arith.constant 0 : index
    %271 = vector.load %arg6[%c8_293, %c0_294, %c0_295] : memref<16x128x128xbf16, #tpu.memory_space<vmem>>, vector<1x128x128xbf16>
    %272 = vector.shape_cast %271 : vector<1x128x128xbf16> to vector<128x128xbf16>
    %cst_296 = arith.constant dense<0.000000e+00> : vector<2x128xf32>
    %273 = tpu.matmul %270, %272, %cst_296 {dimension_numbers = #tpu.dot_dimension_numbers<[1], [0], [0], [1], [0, 0, 1, 1], [], []>} : vector<2x128xbf16>, vector<128x128xbf16>, vector<2x128xf32> -> vector<2x128xf32>
    %274 = arith.addf %267, %273 : vector<2x128xf32>
    %c0_297 = arith.constant 0 : index
    %c2_298 = arith.constant 2 : index
    %c1_299 = arith.constant 1 : index
    %c0_300 = arith.constant 0 : index
    %275 = vector.load %arg14[%c0_297, %c2_298, %c1_299, %c0_300] : memref<2x4x4x128xf32, #tpu.memory_space<vmem>>, vector<2x1x1x128xf32>
    %276 = vector.shape_cast %275 : vector<2x1x1x128xf32> to vector<2x128xf32>
    %277 = arith.truncf %276 : vector<2x128xf32> to vector<2x128xbf16>
    %c9_301 = arith.constant 9 : index
    %c0_302 = arith.constant 0 : index
    %c0_303 = arith.constant 0 : index
    %278 = vector.load %arg6[%c9_301, %c0_302, %c0_303] : memref<16x128x128xbf16, #tpu.memory_space<vmem>>, vector<1x128x128xbf16>
    %279 = vector.shape_cast %278 : vector<1x128x128xbf16> to vector<128x128xbf16>
    %cst_304 = arith.constant dense<0.000000e+00> : vector<2x128xf32>
    %280 = tpu.matmul %277, %279, %cst_304 {dimension_numbers = #tpu.dot_dimension_numbers<[1], [0], [0], [1], [0, 0, 1, 1], [], []>} : vector<2x128xbf16>, vector<128x128xbf16>, vector<2x128xf32> -> vector<2x128xf32>
    %281 = arith.addf %274, %280 : vector<2x128xf32>
    %c0_305 = arith.constant 0 : index
    %c2_306 = arith.constant 2 : index
    %c2_307 = arith.constant 2 : index
    %c0_308 = arith.constant 0 : index
    %282 = vector.load %arg14[%c0_305, %c2_306, %c2_307, %c0_308] : memref<2x4x4x128xf32, #tpu.memory_space<vmem>>, vector<2x1x1x128xf32>
    %283 = vector.shape_cast %282 : vector<2x1x1x128xf32> to vector<2x128xf32>
    %284 = arith.truncf %283 : vector<2x128xf32> to vector<2x128xbf16>
    %c10_309 = arith.constant 10 : index
    %c0_310 = arith.constant 0 : index
    %c0_311 = arith.constant 0 : index
    %285 = vector.load %arg6[%c10_309, %c0_310, %c0_311] : memref<16x128x128xbf16, #tpu.memory_space<vmem>>, vector<1x128x128xbf16>
    %286 = vector.shape_cast %285 : vector<1x128x128xbf16> to vector<128x128xbf16>
    %cst_312 = arith.constant dense<0.000000e+00> : vector<2x128xf32>
    %287 = tpu.matmul %284, %286, %cst_312 {dimension_numbers = #tpu.dot_dimension_numbers<[1], [0], [0], [1], [0, 0, 1, 1], [], []>} : vector<2x128xbf16>, vector<128x128xbf16>, vector<2x128xf32> -> vector<2x128xf32>
    %288 = arith.addf %281, %287 : vector<2x128xf32>
    %c0_313 = arith.constant 0 : index
    %c2_314 = arith.constant 2 : index
    %c3_315 = arith.constant 3 : index
    %c0_316 = arith.constant 0 : index
    %289 = vector.load %arg14[%c0_313, %c2_314, %c3_315, %c0_316] : memref<2x4x4x128xf32, #tpu.memory_space<vmem>>, vector<2x1x1x128xf32>
    %290 = vector.shape_cast %289 : vector<2x1x1x128xf32> to vector<2x128xf32>
    %291 = arith.truncf %290 : vector<2x128xf32> to vector<2x128xbf16>
    %c11_317 = arith.constant 11 : index
    %c0_318 = arith.constant 0 : index
    %c0_319 = arith.constant 0 : index
    %292 = vector.load %arg6[%c11_317, %c0_318, %c0_319] : memref<16x128x128xbf16, #tpu.memory_space<vmem>>, vector<1x128x128xbf16>
    %293 = vector.shape_cast %292 : vector<1x128x128xbf16> to vector<128x128xbf16>
    %cst_320 = arith.constant dense<0.000000e+00> : vector<2x128xf32>
    %294 = tpu.matmul %291, %293, %cst_320 {dimension_numbers = #tpu.dot_dimension_numbers<[1], [0], [0], [1], [0, 0, 1, 1], [], []>} : vector<2x128xbf16>, vector<128x128xbf16>, vector<2x128xf32> -> vector<2x128xf32>
    %295 = arith.addf %288, %294 : vector<2x128xf32>
    %c0_321 = arith.constant 0 : index
    %c3_322 = arith.constant 3 : index
    %c0_323 = arith.constant 0 : index
    %c0_324 = arith.constant 0 : index
    %296 = vector.load %arg14[%c0_321, %c3_322, %c0_323, %c0_324] : memref<2x4x4x128xf32, #tpu.memory_space<vmem>>, vector<2x1x1x128xf32>
    %297 = vector.shape_cast %296 : vector<2x1x1x128xf32> to vector<2x128xf32>
    %298 = arith.truncf %297 : vector<2x128xf32> to vector<2x128xbf16>
    %c12_325 = arith.constant 12 : index
    %c0_326 = arith.constant 0 : index
    %c0_327 = arith.constant 0 : index
    %299 = vector.load %arg6[%c12_325, %c0_326, %c0_327] : memref<16x128x128xbf16, #tpu.memory_space<vmem>>, vector<1x128x128xbf16>
    %300 = vector.shape_cast %299 : vector<1x128x128xbf16> to vector<128x128xbf16>
    %cst_328 = arith.constant dense<0.000000e+00> : vector<2x128xf32>
    %301 = tpu.matmul %298, %300, %cst_328 {dimension_numbers = #tpu.dot_dimension_numbers<[1], [0], [0], [1], [0, 0, 1, 1], [], []>} : vector<2x128xbf16>, vector<128x128xbf16>, vector<2x128xf32> -> vector<2x128xf32>
    %302 = arith.addf %295, %301 : vector<2x128xf32>
    %c0_329 = arith.constant 0 : index
    %c3_330 = arith.constant 3 : index
    %c1_331 = arith.constant 1 : index
    %c0_332 = arith.constant 0 : index
    %303 = vector.load %arg14[%c0_329, %c3_330, %c1_331, %c0_332] : memref<2x4x4x128xf32, #tpu.memory_space<vmem>>, vector<2x1x1x128xf32>
    %304 = vector.shape_cast %303 : vector<2x1x1x128xf32> to vector<2x128xf32>
    %305 = arith.truncf %304 : vector<2x128xf32> to vector<2x128xbf16>
    %c13_333 = arith.constant 13 : index
    %c0_334 = arith.constant 0 : index
    %c0_335 = arith.constant 0 : index
    %306 = vector.load %arg6[%c13_333, %c0_334, %c0_335] : memref<16x128x128xbf16, #tpu.memory_space<vmem>>, vector<1x128x128xbf16>
    %307 = vector.shape_cast %306 : vector<1x128x128xbf16> to vector<128x128xbf16>
    %cst_336 = arith.constant dense<0.000000e+00> : vector<2x128xf32>
    %308 = tpu.matmul %305, %307, %cst_336 {dimension_numbers = #tpu.dot_dimension_numbers<[1], [0], [0], [1], [0, 0, 1, 1], [], []>} : vector<2x128xbf16>, vector<128x128xbf16>, vector<2x128xf32> -> vector<2x128xf32>
    %309 = arith.addf %302, %308 : vector<2x128xf32>
    %c0_337 = arith.constant 0 : index
    %c3_338 = arith.constant 3 : index
    %c2_339 = arith.constant 2 : index
    %c0_340 = arith.constant 0 : index
    %310 = vector.load %arg14[%c0_337, %c3_338, %c2_339, %c0_340] : memref<2x4x4x128xf32, #tpu.memory_space<vmem>>, vector<2x1x1x128xf32>
    %311 = vector.shape_cast %310 : vector<2x1x1x128xf32> to vector<2x128xf32>
    %312 = arith.truncf %311 : vector<2x128xf32> to vector<2x128xbf16>
    %c14_341 = arith.constant 14 : index
    %c0_342 = arith.constant 0 : index
    %c0_343 = arith.constant 0 : index
    %313 = vector.load %arg6[%c14_341, %c0_342, %c0_343] : memref<16x128x128xbf16, #tpu.memory_space<vmem>>, vector<1x128x128xbf16>
    %314 = vector.shape_cast %313 : vector<1x128x128xbf16> to vector<128x128xbf16>
    %cst_344 = arith.constant dense<0.000000e+00> : vector<2x128xf32>
    %315 = tpu.matmul %312, %314, %cst_344 {dimension_numbers = #tpu.dot_dimension_numbers<[1], [0], [0], [1], [0, 0, 1, 1], [], []>} : vector<2x128xbf16>, vector<128x128xbf16>, vector<2x128xf32> -> vector<2x128xf32>
    %316 = arith.addf %309, %315 : vector<2x128xf32>
    %c0_345 = arith.constant 0 : index
    %c3_346 = arith.constant 3 : index
    %c3_347 = arith.constant 3 : index
    %c0_348 = arith.constant 0 : index
    %317 = vector.load %arg14[%c0_345, %c3_346, %c3_347, %c0_348] : memref<2x4x4x128xf32, #tpu.memory_space<vmem>>, vector<2x1x1x128xf32>
    %318 = vector.shape_cast %317 : vector<2x1x1x128xf32> to vector<2x128xf32>
    %319 = arith.truncf %318 : vector<2x128xf32> to vector<2x128xbf16>
    %c15_349 = arith.constant 15 : index
    %c0_350 = arith.constant 0 : index
    %c0_351 = arith.constant 0 : index
    %320 = vector.load %arg6[%c15_349, %c0_350, %c0_351] : memref<16x128x128xbf16, #tpu.memory_space<vmem>>, vector<1x128x128xbf16>
    %321 = vector.shape_cast %320 : vector<1x128x128xbf16> to vector<128x128xbf16>
    %cst_352 = arith.constant dense<0.000000e+00> : vector<2x128xf32>
    %322 = tpu.matmul %319, %321, %cst_352 {dimension_numbers = #tpu.dot_dimension_numbers<[1], [0], [0], [1], [0, 0, 1, 1], [], []>} : vector<2x128xbf16>, vector<128x128xbf16>, vector<2x128xf32> -> vector<2x128xf32>
    %323 = arith.addf %316, %322 : vector<2x128xf32>
    %c0_353 = arith.constant 0 : index
    %c0_354 = arith.constant 0 : index
    %324 = vector.load %arg7[%c0_353, %c0_354] : memref<1x128xf32, #tpu.memory_space<vmem>>, vector<1x128xf32>
    %325 = vector.broadcast %324 : vector<1x128xf32> to vector<2x128xf32>
    %326 = arith.addf %323, %325 : vector<2x128xf32>
    %cst_355 = arith.constant 0.000000e+00 : f32
    %327 = vector.broadcast %cst_355 : f32 to vector<2x128xf32>
    %328 = arith.maximumf %326, %327 : vector<2x128xf32>
    %329 = arith.truncf %328 : vector<2x128xf32> to vector<2x128xbf16>
    %c0_356 = arith.constant 0 : index
    %c0_357 = arith.constant 0 : index
    %330 = vector.load %arg8[%c0_356, %c0_357] : memref<128x128xbf16, #tpu.memory_space<vmem>>, vector<128x128xbf16>
    %cst_358 = arith.constant dense<0.000000e+00> : vector<2x128xf32>
    %331 = tpu.matmul %329, %330, %cst_358 {dimension_numbers = #tpu.dot_dimension_numbers<[1], [0], [0], [1], [0, 0, 1, 1], [], []>} : vector<2x128xbf16>, vector<128x128xbf16>, vector<2x128xf32> -> vector<2x128xf32>
    %c0_359 = arith.constant 0 : index
    %c0_360 = arith.constant 0 : index
    %332 = vector.load %arg9[%c0_359, %c0_360] : memref<1x128xf32, #tpu.memory_space<vmem>>, vector<1x128xf32>
    %333 = vector.broadcast %332 : vector<1x128xf32> to vector<2x128xf32>
    %334 = arith.addf %331, %333 : vector<2x128xf32>
    %335 = tpu.iota {dimensions = array<i32: 1>} : vector<2x128xi32>
    %c10_i32 = arith.constant 10 : i32
    %336 = vector.broadcast %c10_i32 : i32 to vector<2x128xi32>
    %337 = arith.cmpi slt, %335, %336 : vector<2x128xi32>
    %cst_361 = arith.constant -1.000000e+30 : f32
    %338 = vector.broadcast %cst_361 : f32 to vector<2x128xf32>
    %339 = arith.select %337, %334, %338 : vector<2x128xi1>, vector<2x128xf32>
    %cst_362 = arith.constant dense<0xFF800000> : vector<2xf32>
    %340 = vector.multi_reduction <maximumf>, %339, %cst_362 [1] : vector<2x128xf32> to vector<2xf32>
    %341 = vector.shape_cast %340 : vector<2xf32> to vector<2x1xf32>
    %342 = vector.broadcast %341 : vector<2x1xf32> to vector<2x128xf32>
    %343 = arith.subf %339, %342 : vector<2x128xf32>
    %344 = math.exp %343 : vector<2x128xf32>
    %cst_363 = arith.constant dense<0.000000e+00> : vector<2xf32>
    %345 = vector.multi_reduction <add>, %344, %cst_363 [1] : vector<2x128xf32> to vector<2xf32>
    %346 = vector.shape_cast %345 : vector<2xf32> to vector<2x1xf32>
    %347 = math.log %346 : vector<2x1xf32>
    %348 = vector.broadcast %347 : vector<2x1xf32> to vector<2x128xf32>
    %349 = arith.subf %343, %348 : vector<2x128xf32>
    %c0_364 = arith.constant 0 : index
    %c0_365 = arith.constant 0 : index
    %350 = vector.load %arg10[%c0_364, %c0_365] : memref<2x128xf32, #tpu.memory_space<vmem>>, vector<2x128xf32>
    tpu.vector_store %arg10[%c0_364, %c0_365], %349 {strides = array<i32>} : memref<2x128xf32, #tpu.memory_space<vmem>>, vector<2x128xf32>,
    return
  }
  func.func @transform_0(%arg0: i32) -> (i32, i32) {
    %c0_i32 = arith.constant 0 : i32
    %c0_i32_0 = arith.constant 0 : i32
    %c0_i32_1 = arith.constant 0 : i32
    return %c0_i32, %c0_i32_0 : i32, i32
  }
  func.func @transform_1(%arg0: i32) -> (i32, i32) {
    %c0_i32 = arith.constant 0 : i32
    %c0_i32_0 = arith.constant 0 : i32
    %c0_i32_1 = arith.constant 0 : i32
    return %c0_i32, %c0_i32_0 : i32, i32
  }
  func.func @transform_2(%arg0: i32) -> (i32, i32) {
    %c0_i32 = arith.constant 0 : i32
    %c0_i32_0 = arith.constant 0 : i32
    %c0_i32_1 = arith.constant 0 : i32
    return %c0_i32, %c0_i32_0 : i32, i32
  }
  func.func @transform_3(%arg0: i32) -> (i32, i32, i32) {
    %c0_i32 = arith.constant 0 : i32
    %c0_i32_0 = arith.constant 0 : i32
    %c0_i32_1 = arith.constant 0 : i32
    %c0_i32_2 = arith.constant 0 : i32
    return %c0_i32, %c0_i32_0, %c0_i32_1 : i32, i32, i32
  }
  func.func @transform_4(%arg0: i32) -> (i32, i32) {
    %c0_i32 = arith.constant 0 : i32
    %c0_i32_0 = arith.constant 0 : i32
    %c0_i32_1 = arith.constant 0 : i32
    return %c0_i32, %c0_i32_0 : i32, i32
  }
  func.func @transform_5(%arg0: i32) -> (i32, i32, i32) {
    %c0_i32 = arith.constant 0 : i32
    %c0_i32_0 = arith.constant 0 : i32
    %c0_i32_1 = arith.constant 0 : i32
    %c0_i32_2 = arith.constant 0 : i32
    return %c0_i32, %c0_i32_0, %c0_i32_1 : i32, i32, i32
  }
  func.func @transform_6(%arg0: i32) -> (i32, i32) {
    %c0_i32 = arith.constant 0 : i32
    %c0_i32_0 = arith.constant 0 : i32
    %c0_i32_1 = arith.constant 0 : i32
    return %c0_i32, %c0_i32_0 : i32, i32
  }
  func.func @transform_7(%arg0: i32) -> (i32, i32) {
    %c0_i32 = arith.constant 0 : i32
    %c0_i32_0 = arith.constant 0 : i32
    %c0_i32_1 = arith.constant 0 : i32
    return %c0_i32, %c0_i32_0 : i32, i32
  }
  func.func @transform_8(%arg0: i32) -> (i32, i32) {
    %c0_i32 = arith.constant 0 : i32
    %c0_i32_0 = arith.constant 0 : i32
    %c0_i32_1 = arith.constant 0 : i32
    return %c0_i32, %c0_i32_0 : i32, i32
  }
  func.func @transform_9(%arg0: i32) -> (i32, i32) {
    %c0_i32 = arith.constant 0 : i32
    %c0_i32_0 = arith.constant 0 : i32
    %c0_i32_1 = arith.constant 0 : i32
    return %c0_i32, %c0_i32_0 : i32, i32
  }
}

</mosaic_0001>

<llo_original>
// kernel: net_forward.1
$region0: #{net_forward.1}
  #allocation0 [shape = 'u32[]', space=smem, size = 0x4, offset = 0x4, fixed_abs, tag = 'smem constant byte address 0x4 - core index']
  #allocation1 [shape = 'u32[144,128]{1,0:T(1,128)}', space=vmem, size = 0x12000, scoped, tag = 'internal scratch']
  #allocation2 [shape = 'f32[2,12,2,24,128]{4,3,2,1,0:T(8,128)}', space=vmem, size = 0x90000, scoped, tag = 'scratch operand']
  #allocation3 [shape = 'f32[2,12,12,128]{3,2,1,0:T(8,128)}', space=vmem, size = 0x30000, scoped, tag = 'scratch operand']
  #allocation4 [shape = 'f32[2,4,2,8,128]{4,3,2,1,0:T(8,128)}', space=vmem, size = 0x10000, scoped, tag = 'scratch operand']
  #allocation5 [shape = 'f32[2,4,4,128]{3,2,1,0:T(4,128)}', space=vmem, size = 0x4000, scoped, tag = 'scratch operand']
  %s0 = inlined_call_operand.vmem [shape: bf16[1152,128], index: 0, kind: input, shape index: {}]
  %s1 = inlined_call_operand.vmem [shape: bf16[128,128], index: 1, kind: input, shape index: {}]
  %s2 = inlined_call_operand.vmem [shape: f32[1,128], index: 2, kind: input, shape index: {}]
  %s3 = inlined_call_operand.vmem [shape: bf16[25,128,128], index: 3, kind: input, shape index: {}]
  %s4 = inlined_call_operand.vmem [shape: f32[1,128], index: 4, kind: input, shape index: {}]
  %s5 = inlined_call_operand.vmem [shape: bf16[16,128,128], index: 5, kind: input, shape index: {}]
  %s6 = inlined_call_operand.vmem [shape: f32[1,128], index: 6, kind: input, shape index: {}]
  %s7 = inlined_call_operand.vmem [shape: bf16[128,128], index: 7, kind: input, shape index: {}]
  %s8 = inlined_call_operand.vmem [shape: f32[1,128], index: 8, kind: input, shape index: {}]
  %s9 = inlined_call_operand.hbm [shape: f32[2,128], index: 9, kind: output, shape index: {}]
  %s10 = sld [smem:[#allocation0]]
  $region46: #{net_forward.1} parent=0
    _
  %s12 = ssub.s32 1, %s10
  %s13 = scalar_select 0, %s12, %s10
  $region1: #{net_forward.1} parent=0
    #allocation6 [shape = 'u8[1024]{0}', space=vmem, size = 0x400, scoped, tag = 'output window, operand 0, single buffered']
    #allocation7 [shape = 's32[1]{0}', space=sflag, size = 0x4, scoped, tag = 'scoped memory for net_forward.1']
    %14 = vsyncpa [#allocation7], 0
    // Predicated region
    $region2: #{net_forward.1} parent=1 // pred_check
      _
    $region3: #{net_forward.1} parent=1 // pred_check_branch
      %16 = sbr.rel (0) target = $region5
    $region4: #{net_forward.1} parent=1 // pred_region
      _
    $region5: #{net_forward.1} parent=1 // pred_fallthru
      _
    // Predicated region
    $region6: #{net_forward.1} parent=1 // pred_check
      _
    $region7: #{net_forward.1} parent=1 // pred_check_branch
      %18 = sbr.rel (0) target = $region9
    $region8: #{net_forward.1} parent=1 // pred_region
      _
    $region9: #{net_forward.1} parent=1 // pred_fallthru
      _
    // Predicated region
    $region10: #{net_forward.1} parent=1 // pred_check
      _
    $region11: #{net_forward.1} parent=1 // pred_check_branch
      %20 = sbr.rel (0) target = $region13
    $region12: #{net_forward.1} parent=1 // pred_region
      _
    $region13: #{net_forward.1} parent=1 // pred_fallthru
      _
    // Predicated region
    $region14: #{net_forward.1} parent=1 // pred_check
      _
    $region15: #{net_forward.1} parent=1 // pred_check_branch
      %22 = sbr.rel (0) target = $region17
    $region16: #{net_forward.1} parent=1 // pred_region
      _
    $region17: #{net_forward.1} parent=1 // pred_fallthru
      _
    // Predicated region
    $region18: #{net_forward.1} parent=1 // pred_check
      _
    $region19: #{net_forward.1} parent=1 // pred_check_branch
      %24 = sbr.rel (0) target = $region21
    $region20: #{net_forward.1} parent=1 // pred_region
      _
    $region21: #{net_forward.1} parent=1 // pred_fallthru
      _
    // Predicated region
    $region22: #{net_forward.1} parent=1 // pred_check
      _
    $region23: #{net_forward.1} parent=1 // pred_check_branch
      %26 = sbr.rel (0) target = $region25
    $region24: #{net_forward.1} parent=1 // pred_region
      _
    $region25: #{net_forward.1} parent=1 // pred_fallthru
      _
    // Predicated region
    $region26: #{net_forward.1} parent=1 // pred_check
      _
    $region27: #{net_forward.1} parent=1 // pred_check_branch
      %28 = sbr.rel (0) target = $region29
    $region28: #{net_forward.1} parent=1 // pred_region
      _
    $region29: #{net_forward.1} parent=1 // pred_fallthru
      _
    // Predicated region
    $region30: #{net_forward.1} parent=1 // pred_check
      _
    $region31: #{net_forward.1} parent=1 // pred_check_branch
      %30 = sbr.rel (0) target = $region33
    $region32: #{net_forward.1} parent=1 // pred_region
      _
    $region33: #{net_forward.1} parent=1 // pred_fallthru
      _
    // Predicated region
    $region34: #{net_forward.1} parent=1 // pred_check
      _
    $region35: #{net_forward.1} parent=1 // pred_check_branch
      %32 = sbr.rel (0) target = $region37
    $region36: #{net_forward.1} parent=1 // pred_region
      _
    $region37: #{net_forward.1} parent=1 // pred_fallthru
      _
    %v34 = vld [vmem:[%s0] sm:$0xf]
    %v35 = vld [vmem:[%s0 + $0x4] sm:$0xf]
    %v36 = vld [vmem:[%s0 + $0x8] sm:$0xf]
    %v37 = vld [vmem:[%s0 + $0xc] sm:$0xf]
    %v38 = vld [vmem:[%s0 + $0x10] sm:$0xf]
    %v39 = vld [vmem:[%s0 + $0x14] sm:$0xf]
    %v40 = vld [vmem:[%s0 + $0x18] sm:$0xf]
    %v41 = vld [vmem:[%s0 + $0x1c] sm:$0xf]
    %v42 = vld [vmem:[%s0 + $0x20] sm:$0xf]
    %v43 = vld [vmem:[%s0 + $0x24] sm:$0xf]
    %v44 = vld [vmem:[%s0 + $0x28] sm:$0xf]
    %v45 = vld [vmem:[%s0 + $0x2c] sm:$0xf]
    %v46 = vld [vmem:[%s0 + $0x30] sm:$0xf]
    %v47 = vld [vmem:[%s0 + $0x34] sm:$0xf]
    %v48 = vld [vmem:[%s0 + $0x38] sm:$0xf]
    %v49 = vld [vmem:[%s0 + $0x3c] sm:$0xf]
    %v50 = vld [vmem:[%s0 + $0x40] sm:$0xf]
    %v51 = vld [vmem:[%s0 + $0x44] sm:$0xf]
    %v52 = vld [vmem:[%s0 + $0x48] sm:$0xf]
    %v53 = vld [vmem:[%s0 + $0x4c] sm:$0xf]
    %v54 = vld [vmem:[%s0 + $0x50] sm:$0xf]
    %v55 = vld [vmem:[%s0 + $0x54] sm:$0xf]
    %v56 = vld [vmem:[%s0 + $0x58] sm:$0xf]
    %v57 = vld [vmem:[%s0 + $0x5c] sm:$0xf]
    %v58 = vld [vmem:[%s0 + $0x60] sm:$0xf]
    %v59 = vld [vmem:[%s0 + $0x64] sm:$0xf]
    %v60 = vld [vmem:[%s0 + $0x68] sm:$0xf]
    %v61 = vld [vmem:[%s0 + $0x6c] sm:$0xf]
    %v62 = vld [vmem:[%s0 + $0x70] sm:$0xf]
    %v63 = vld [vmem:[%s0 + $0x74] sm:$0xf]
    %v64 = vld [vmem:[%s0 + $0x78] sm:$0xf]
    %v65 = vld [vmem:[%s0 + $0x7c] sm:$0xf]
    %v66 = vld [vmem:[%s0 + $0x80] sm:$0xf]
    %v67 = vld [vmem:[%s0 + $0x84] sm:$0xf]
    %v68 = vld [vmem:[%s0 + $0x88] sm:$0xf]
    %v69 = vld [vmem:[%s0 + $0x8c] sm:$0xf]
    %v70 = vld [vmem:[%s0 + $0x90] sm:$0xf]
    %v71 = vld [vmem:[%s0 + $0x94] sm:$0xf]
    %v72 = vld [vmem:[%s0 + $0x98] sm:$0xf]
    %v73 = vld [vmem:[%s0 + $0x9c] sm:$0xf]
    %v74 = vld [vmem:[%s0 + $0xa0] sm:$0xf]
    %v75 = vld [vmem:[%s0 + $0xa4] sm:$0xf]
    %v76 = vld [vmem:[%s0 + $0xa8] sm:$0xf]
    %v77 = vld [vmem:[%s0 + $0xac] sm:$0xf]
    %v78 = vld [vmem:[%s0 + $0xb0] sm:$0xf]
    %v79 = vld [vmem:[%s0 + $0xb4] sm:$0xf]
    %v80 = vld [vmem:[%s0 + $0xb8] sm:$0xf]
    %v81 = vld [vmem:[%s0 + $0xbc] sm:$0xf]
    %v82 = vld [vmem:[%s0 + $0xc0] sm:$0xf]
    %v83 = vld [vmem:[%s0 + $0xc4] sm:$0xf]
    %v84 = vld [vmem:[%s0 + $0xc8] sm:$0xf]
    %v85 = vld [vmem:[%s0 + $0xcc] sm:$0xf]
    %v86 = vld [vmem:[%s0 + $0xd0] sm:$0xf]
    %v87 = vld [vmem:[%s0 + $0xd4] sm:$0xf]
    %v88 = vld [vmem:[%s0 + $0xd8] sm:$0xf]
    %v89 = vld [vmem:[%s0 + $0xdc] sm:$0xf]
    %v90 = vld [vmem:[%s0 + $0xe0] sm:$0xf]
    %v91 = vld [vmem:[%s0 + $0xe4] sm:$0xf]
    %v92 = vld [vmem:[%s0 + $0xe8] sm:$0xf]
    %v93 = vld [vmem:[%s0 + $0xec] sm:$0xf]
    %v94 = vld [vmem:[%s0 + $0xf0] sm:$0xf]
    %v95 = vld [vmem:[%s0 + $0xf4] sm:$0xf]
    %v96 = vld [vmem:[%s0 + $0xf8] sm:$0xf]
    %v97 = vld [vmem:[%s0 + $0xfc] sm:$0xf]
    %v98 = vld [vmem:[%s0 + $0x100] sm:$0xf]
    %v99 = vld [vmem:[%s0 + $0x104] sm:$0xf]
    %v100 = vld [vmem:[%s0 + $0x108] sm:$0xf]
    %v101 = vld [vmem:[%s0 + $0x10c] sm:$0xf]
    %v102 = vld [vmem:[%s0 + $0x110] sm:$0xf]
    %v103 = vld [vmem:[%s0 + $0x114] sm:$0xf]
    %v104 = vld [vmem:[%s0 + $0x118] sm:$0xf]
    %v105 = vld [vmem:[%s0 + $0x11c] sm:$0xf]
    %v106 = vld [vmem:[%s0 + $0x120] sm:$0xf]
    %v107 = vld [vmem:[%s0 + $0x124] sm:$0xf]
    %v108 = vld [vmem:[%s0 + $0x128] sm:$0xf]
    %v109 = vld [vmem:[%s0 + $0x12c] sm:$0xf]
    %v110 = vld [vmem:[%s0 + $0x130] sm:$0xf]
    %v111 = vld [vmem:[%s0 + $0x134] sm:$0xf]
    %v112 = vld [vmem:[%s0 + $0x138] sm:$0xf]
    %v113 = vld [vmem:[%s0 + $0x13c] sm:$0xf]
    %v114 = vld [vmem:[%s0 + $0x140] sm:$0xf]
    %v115 = vld [vmem:[%s0 + $0x144] sm:$0xf]
    %v116 = vld [vmem:[%s0 + $0x148] sm:$0xf]
    %v117 = vld [vmem:[%s0 + $0x14c] sm:$0xf]
    %v118 = vld [vmem:[%s0 + $0x150] sm:$0xf]
    %v119 = vld [vmem:[%s0 + $0x154] sm:$0xf]
    %v120 = vld [vmem:[%s0 + $0x158] sm:$0xf]
    %v121 = vld [vmem:[%s0 + $0x15c] sm:$0xf]
    %v122 = vld [vmem:[%s0 + $0x160] sm:$0xf]
    %v123 = vld [vmem:[%s0 + $0x164] sm:$0xf]
    %v124 = vld [vmem:[%s0 + $0x168] sm:$0xf]
    %v125 = vld [vmem:[%s0 + $0x16c] sm:$0xf]
    %v126 = vld [vmem:[%s0 + $0x170] sm:$0xf]
    %v127 = vld [vmem:[%s0 + $0x174] sm:$0xf]
    %v128 = vld [vmem:[%s0 + $0x178] sm:$0xf]
    %v129 = vld [vmem:[%s0 + $0x17c] sm:$0xf]
    %v130 = vld [vmem:[%s0 + $0x180] sm:$0xf]
    %v131 = vld [vmem:[%s0 + $0x184] sm:$0xf]
    %v132 = vld [vmem:[%s0 + $0x188] sm:$0xf]
    %v133 = vld [vmem:[%s0 + $0x18c] sm:$0xf]
    %v134 = vld [vmem:[%s0 + $0x190] sm:$0xf]
    %v135 = vld [vmem:[%s0 + $0x194] sm:$0xf]
    %v136 = vld [vmem:[%s0 + $0x198] sm:$0xf]
    %v137 = vld [vmem:[%s0 + $0x19c] sm:$0xf]
    %v138 = vld [vmem:[%s0 + $0x1a0] sm:$0xf]
    %v139 = vld [vmem:[%s0 + $0x1a4] sm:$0xf]
    %v140 = vld [vmem:[%s0 + $0x1a8] sm:$0xf]
    %v141 = vld [vmem:[%s0 + $0x1ac] sm:$0xf]
    %v142 = vld [vmem:[%s0 + $0x1b0] sm:$0xf]
    %v143 = vld [vmem:[%s0 + $0x1b4] sm:$0xf]
    %v144 = vld [vmem:[%s0 + $0x1b8] sm:$0xf]
    %v145 = vld [vmem:[%s0 + $0x1bc] sm:$0xf]
    %v146 = vld [vmem:[%s0 + $0x1c0] sm:$0xf]
    %v147 = vld [vmem:[%s0 + $0x1c4] sm:$0xf]
    %v148 = vld [vmem:[%s0 + $0x1c8] sm:$0xf]
    %v149 = vld [vmem:[%s0 + $0x1cc] sm:$0xf]
    %v150 = vld [vmem:[%s0 + $0x1d0] sm:$0xf]
    %v151 = vld [vmem:[%s0 + $0x1d4] sm:$0xf]
    %v152 = vld [vmem:[%s0 + $0x1d8] sm:$0xf]
    %v153 = vld [vmem:[%s0 + $0x1dc] sm:$0xf]
    %v154 = vld [vmem:[%s0 + $0x1e0] sm:$0xf]
    %v155 = vld [vmem:[%s0 + $0x1e4] sm:$0xf]
    %v156 = vld [vmem:[%s0 + $0x1e8] sm:$0xf]
    %v157 = vld [vmem:[%s0 + $0x1ec] sm:$0xf]
    %v158 = vld [vmem:[%s0 + $0x1f0] sm:$0xf]
    %v159 = vld [vmem:[%s0 + $0x1f4] sm:$0xf]
    %v160 = vld [vmem:[%s0 + $0x1f8] sm:$0xf]
    %v161 = vld [vmem:[%s0 + $0x1fc] sm:$0xf]
    %v162 = vld [vmem:[%s0 + $0x200] sm:$0xf]
    %v163 = vld [vmem:[%s0 + $0x204] sm:$0xf]
    %v164 = vld [vmem:[%s0 + $0x208] sm:$0xf]
    %v165 = vld [vmem:[%s0 + $0x20c] sm:$0xf]
    %v166 = vld [vmem:[%s0 + $0x210] sm:$0xf]
    %v167 = vld [vmem:[%s0 + $0x214] sm:$0xf]
    %v168 = vld [vmem:[%s0 + $0x218] sm:$0xf]
    %v169 = vld [vmem:[%s0 + $0x21c] sm:$0xf]
    %v170 = vld [vmem:[%s0 + $0x220] sm:$0xf]
    %v171 = vld [vmem:[%s0 + $0x224] sm:$0xf]
    %v172 = vld [vmem:[%s0 + $0x228] sm:$0xf]
    %v173 = vld [vmem:[%s0 + $0x22c] sm:$0xf]
    %v174 = vld [vmem:[%s0 + $0x230] sm:$0xf]
    %v175 = vld [vmem:[%s0 + $0x234] sm:$0xf]
    %v176 = vld [vmem:[%s0 + $0x238] sm:$0xf]
    %v177 = vld [vmem:[%s0 + $0x23c] sm:$0xf]
    %v178 = vld [vmem:[%s1] sm:$0xf]
    %v179 = vld [vmem:[%s1 + $0x4] sm:$0xf]
    %v180 = vld [vmem:[%s1 + $0x8] sm:$0xf]
    %v181 = vld [vmem:[%s1 + $0xc] sm:$0xf]
    %v182 = vld [vmem:[%s1 + $0x10] sm:$0xf]
    %v183 = vld [vmem:[%s1 + $0x14] sm:$0xf]
    %v184 = vld [vmem:[%s1 + $0x18] sm:$0xf]
    %v185 = vld [vmem:[%s1 + $0x1c] sm:$0xf]
    %v186 = vld [vmem:[%s1 + $0x20] sm:$0xf]
    %v187 = vld [vmem:[%s1 + $0x24] sm:$0xf]
    %v188 = vld [vmem:[%s1 + $0x28] sm:$0xf]
    %v189 = vld [vmem:[%s1 + $0x2c] sm:$0xf]
    %v190 = vld [vmem:[%s1 + $0x30] sm:$0xf]
    %v191 = vld [vmem:[%s1 + $0x34] sm:$0xf]
    %v192 = vld [vmem:[%s1 + $0x38] sm:$0xf]
    %v193 = vld [vmem:[%s1 + $0x3c] sm:$0xf]
    %v194 = vld [vmem:[%s2] sm:$0x1]
    %v196 = vlaneseq
    %v197 = vshrl.u32 %v196, 7
    %v198 = vsub.s32 0, %v197
    %v199 = vrot.slane %v194, %v198
    %v345 = vunpack.c.l.b16 %v34
    %v346 = vunpack.c.l.b16 %v35
    %v347 = vunpack.c.l.b16 %v36
    %v348 = vunpack.c.l.b16 %v37
    %v349 = vunpack.c.l.b16 %v38
    %v350 = vunpack.c.l.b16 %v39
    %v351 = vunpack.c.l.b16 %v40
    %v352 = vunpack.c.l.b16 %v41
    %v353 = vunpack.c.l.b16 %v42
    %v354 = vunpack.c.l.b16 %v43
    %v355 = vunpack.c.l.b16 %v44
    %v356 = vunpack.c.l.b16 %v45
    %v357 = vunpack.c.l.b16 %v46
    %v358 = vunpack.c.l.b16 %v47
    %v359 = vunpack.c.l.b16 %v48
    %v360 = vunpack.c.l.b16 %v49
    %v361 = vunpack.c.l.b16 %v50
    %v362 = vunpack.c.l.b16 %v51
    %v363 = vunpack.c.l.b16 %v52
    %v364 = vunpack.c.l.b16 %v53
    %v365 = vunpack.c.l.b16 %v54
    %v366 = vunpack.c.l.b16 %v55
    %v367 = vunpack.c.l.b16 %v56
    %v368 = vunpack.c.l.b16 %v57
    %v369 = vunpack.c.l.b16 %v58
    %v370 = vunpack.c.l.b16 %v59
    %v371 = vunpack.c.l.b16 %v60
    %v372 = vunpack.c.l.b16 %v61
    %v373 = vunpack.c.l.b16 %v62
    %v374 = vunpack.c.l.b16 %v63
    %v375 = vunpack.c.l.b16 %v64
    %v376 = vunpack.c.l.b16 %v65
    %v377 = vunpack.c.l.b16 %v66
    %v378 = vunpack.c.l.b16 %v67
    %v379 = vunpack.c.l.b16 %v68
    %v380 = vunpack.c.l.b16 %v69
    %v381 = vunpack.c.l.b16 %v70
    %v382 = vunpack.c.l.b16 %v71
    %v383 = vunpack.c.l.b16 %v72
    %v384 = vunpack.c.l.b16 %v73
    %v385 = vunpack.c.l.b16 %v74
    %v386 = vunpack.c.l.b16 %v75
    %v387 = vunpack.c.l.b16 %v76
    %v388 = vunpack.c.l.b16 %v77
    %v389 = vunpack.c.l.b16 %v78
    %v390 = vunpack.c.l.b16 %v79
    %v391 = vunpack.c.l.b16 %v80
    %v392 = vunpack.c.l.b16 %v81
    %v393 = vunpack.c.l.b16 %v82
    %v394 = vunpack.c.l.b16 %v83
    %v395 = vunpack.c.l.b16 %v84
    %v396 = vunpack.c.l.b16 %v85
    %v397 = vunpack.c.l.b16 %v86
    %v398 = vunpack.c.l.b16 %v87
    %v399 = vunpack.c.l.b16 %v88
    %v400 = vunpack.c.l.b16 %v89
    %v401 = vunpack.c.l.b16 %v90
    %v402 = vunpack.c.l.b16 %v91
    %v403 = vunpack.c.l.b16 %v92
    %v404 = vunpack.c.l.b16 %v93
    %v405 = vunpack.c.l.b16 %v94
    %v406 = vunpack.c.l.b16 %v95
    %v407 = vunpack.c.l.b16 %v96
    %v408 = vunpack.c.l.b16 %v97
    %v409 = vunpack.c.l.b16 %v98
    %v410 = vunpack.c.l.b16 %v99
    %v411 = vunpack.c.l.b16 %v100
    %v412 = vunpack.c.l.b16 %v101
    %v413 = vunpack.c.l.b16 %v102
    %v414 = vunpack.c.l.b16 %v103
    %v415 = vunpack.c.l.b16 %v104
    %v416 = vunpack.c.l.b16 %v105
    %v417 = vunpack.c.l.b16 %v106
    %v418 = vunpack.c.l.b16 %v107
    %v419 = vunpack.c.l.b16 %v108
    %v420 = vunpack.c.l.b16 %v109
    %v421 = vunpack.c.l.b16 %v110
    %v422 = vunpack.c.l.b16 %v111
    %v423 = vunpack.c.l.b16 %v112
    %v424 = vunpack.c.l.b16 %v113
    %v425 = vunpack.c.l.b16 %v114
    %v426 = vunpack.c.l.b16 %v115
    %v427 = vunpack.c.l.b16 %v116
    %v428 = vunpack.c.l.b16 %v117
    %v429 = vunpack.c.l.b16 %v118
    %v430 = vunpack.c.l.b16 %v119
    %v431 = vunpack.c.l.b16 %v120
    %v432 = vunpack.c.l.b16 %v121
    %v433 = vunpack.c.l.b16 %v122
    %v434 = vunpack.c.l.b16 %v123
    %v435 = vunpack.c.l.b16 %v124
    %v436 = vunpack.c.l.b16 %v125
    %v437 = vunpack.c.l.b16 %v126
    %v438 = vunpack.c.l.b16 %v127
    %v439 = vunpack.c.l.b16 %v128
    %v440 = vunpack.c.l.b16 %v129
    %v441 = vunpack.c.l.b16 %v130
    %v442 = vunpack.c.l.b16 %v131
    %v443 = vunpack.c.l.b16 %v132
    %v444 = vunpack.c.l.b16 %v133
    %v445 = vunpack.c.l.b16 %v134
    %v446 = vunpack.c.l.b16 %v135
    %v447 = vunpack.c.l.b16 %v136
    %v448 = vunpack.c.l.b16 %v137
    %v449 = vunpack.c.l.b16 %v138
    %v450 = vunpack.c.l.b16 %v139
    %v451 = vunpack.c.l.b16 %v140
    %v452 = vunpack.c.l.b16 %v141
    %v453 = vunpack.c.l.b16 %v142
    %v454 = vunpack.c.l.b16 %v143
    %v455 = vunpack.c.l.b16 %v144
    %v456 = vunpack.c.l.b16 %v145
    %v457 = vunpack.c.l.b16 %v146
    %v458 = vunpack.c.l.b16 %v147
    %v459 = vunpack.c.l.b16 %v148
    %v460 = vunpack.c.l.b16 %v149
    %v461 = vunpack.c.l.b16 %v150
    %v462 = vunpack.c.l.b16 %v151
    %v463 = vunpack.c.l.b16 %v152
    %v464 = vunpack.c.l.b16 %v153
    %v465 = vunpack.c.l.b16 %v154
    %v466 = vunpack.c.l.b16 %v155
    %v467 = vunpack.c.l.b16 %v156
    %v468 = vunpack.c.l.b16 %v157
    %v469 = vunpack.c.l.b16 %v158
    %v470 = vunpack.c.l.b16 %v159
    %v471 = vunpack.c.l.b16 %v160
    %v472 = vunpack.c.l.b16 %v161
    %v473 = vunpack.c.l.b16 %v162
    %v474 = vunpack.c.l.b16 %v163
    %v475 = vunpack.c.l.b16 %v164
    %v476 = vunpack.c.l.b16 %v165
    %v477 = vunpack.c.l.b16 %v166
    %v478 = vunpack.c.l.b16 %v167
    %v479 = vunpack.c.l.b16 %v168
    %v480 = vunpack.c.l.b16 %v169
    %v481 = vunpack.c.l.b16 %v170
    %v482 = vunpack.c.l.b16 %v171
    %v483 = vunpack.c.l.b16 %v172
    %v484 = vunpack.c.l.b16 %v173
    %v485 = vunpack.c.l.b16 %v174
    %v486 = vunpack.c.l.b16 %v175
    %v487 = vunpack.c.l.b16 %v176
    %v488 = vunpack.c.l.b16 %v177
    %v489 = vpack.c.b16 %v346, %v345
    %v490 = vpack.c.b16 %v348, %v347
    %v491 = vpack.c.b16 %v350, %v349
    %v492 = vpack.c.b16 %v352, %v351
    %v493 = vpack.c.b16 %v354, %v353
    %v494 = vpack.c.b16 %v356, %v355
    %v495 = vpack.c.b16 %v358, %v357
    %v496 = vpack.c.b16 %v360, %v359
    %v497 = vpack.c.b16 %v362, %v361
    %v498 = vpack.c.b16 %v364, %v363
    %v499 = vpack.c.b16 %v366, %v365
    %v500 = vpack.c.b16 %v368, %v367
    %v501 = vpack.c.b16 %v370, %v369
    %v502 = vpack.c.b16 %v372, %v371
    %v503 = vpack.c.b16 %v374, %v373
    %v504 = vpack.c.b16 %v376, %v375
    %v505 = vpack.c.b16 %v378, %v377
    %v506 = vpack.c.b16 %v380, %v379
    %v507 = vpack.c.b16 %v382, %v381
    %v508 = vpack.c.b16 %v384, %v383
    %v509 = vpack.c.b16 %v386, %v385
    %v510 = vpack.c.b16 %v388, %v387
    %v511 = vpack.c.b16 %v390, %v389
    %v512 = vpack.c.b16 %v392, %v391
    %v513 = vpack.c.b16 %v394, %v393
    %v514 = vpack.c.b16 %v396, %v395
    %v515 = vpack.c.b16 %v398, %v397
    %v516 = vpack.c.b16 %v400, %v399
    %v517 = vpack.c.b16 %v402, %v401
    %v518 = vpack.c.b16 %v404, %v403
    %v519 = vpack.c.b16 %v406, %v405
    %v520 = vpack.c.b16 %v408, %v407
    %v521 = vpack.c.b16 %v410, %v409
    %v522 = vpack.c.b16 %v412, %v411
    %v523 = vpack.c.b16 %v414, %v413
    %v524 = vpack.c.b16 %v416, %v415
    %v525 = vpack.c.b16 %v418, %v417
    %v526 = vpack.c.b16 %v420, %v419
    %v527 = vpack.c.b16 %v422, %v421
    %v528 = vpack.c.b16 %v424, %v423
    %v529 = vpack.c.b16 %v426, %v425
    %v530 = vpack.c.b16 %v428, %v427
    %v531 = vpack.c.b16 %v430, %v429
    %v532 = vpack.c.b16 %v432, %v431
    %v533 = vpack.c.b16 %v434, %v433
    %v534 = vpack.c.b16 %v436, %v435
    %v535 = vpack.c.b16 %v438, %v437
    %v536 = vpack.c.b16 %v440, %v439
    %v537 = vpack.c.b16 %v442, %v441
    %v538 = vpack.c.b16 %v444, %v443
    %v539 = vpack.c.b16 %v446, %v445
    %v540 = vpack.c.b16 %v448, %v447
    %v541 = vpack.c.b16 %v450, %v449
    %v542 = vpack.c.b16 %v452, %v451
    %v543 = vpack.c.b16 %v454, %v453
    %v544 = vpack.c.b16 %v456, %v455
    %v545 = vpack.c.b16 %v458, %v457
    %v546 = vpack.c.b16 %v460, %v459
    %v547 = vpack.c.b16 %v462, %v461
    %v548 = vpack.c.b16 %v464, %v463
    %v549 = vpack.c.b16 %v466, %v465
    %v550 = vpack.c.b16 %v468, %v467
    %v551 = vpack.c.b16 %v470, %v469
    %v552 = vpack.c.b16 %v472, %v471
    %v553 = vpack.c.b16 %v474, %v473
    %v554 = vpack.c.b16 %v476, %v475
    %v555 = vpack.c.b16 %v478, %v477
    %v556 = vpack.c.b16 %v480, %v479
    %v557 = vpack.c.b16 %v482, %v481
    %v558 = vpack.c.b16 %v484, %v483
    %v559 = vpack.c.b16 %v486, %v485
    %v560 = vpack.c.b16 %v488, %v487
    %v649 = vunpack.c.l.b16 %v178
    %v650 = vunpack.c.l.b16 %v179
    %v651 = vunpack.c.l.b16 %v180
    %v652 = vunpack.c.l.b16 %v181
    %v653 = vunpack.c.l.b16 %v182
    %v654 = vunpack.c.l.b16 %v183
    %v655 = vunpack.c.l.b16 %v184
    %v656 = vunpack.c.l.b16 %v185
    %v657 = vunpack.c.l.b16 %v186
    %v658 = vunpack.c.l.b16 %v187
    %v659 = vunpack.c.l.b16 %v188
    %v660 = vunpack.c.l.b16 %v189
    %v661 = vunpack.c.l.b16 %v190
    %v662 = vunpack.c.l.b16 %v191
    %v663 = vunpack.c.l.b16 %v192
    %v664 = vunpack.c.l.b16 %v193
    %v665 = vpack.c.b16 %v650, %v649
    %v666 = vpack.c.b16 %v652, %v651
    %v667 = vpack.c.b16 %v654, %v653
    %v668 = vpack.c.b16 %v656, %v655
    %v669 = vpack.c.b16 %v658, %v657
    %v670 = vpack.c.b16 %v660, %v659
    %v671 = vpack.c.b16 %v662, %v661
    %v672 = vpack.c.b16 %v664, %v663
    %681 = vmatprep.subr.bf16.mxu0 0
    %682 = vmatpush1.bf16.msra.mxu0 %v665
    %683 = vmatprep.subr.bf16.mxu0 0
    %684 = vmatpush1.bf16.msra.mxu0 %v666
    %685 = vmatprep.subr.bf16.mxu0 0
    %686 = vmatpush1.bf16.msra.mxu0 %v667
    %687 = vmatprep.subr.bf16.mxu0 0
    %688 = vmatpush1.bf16.msra.mxu0 %v668
    %689 = vmatprep.subr.bf16.mxu0 0
    %690 = vmatpush1.bf16.msra.mxu0 %v669
    %691 = vmatprep.subr.bf16.mxu0 0
    %692 = vmatpush1.bf16.msra.mxu0 %v670
    %693 = vmatprep.subr.bf16.mxu0 0
    %694 = vmatpush1.bf16.msra.mxu0 %v671
    %695 = vmatprep.subr.bf16.mxu0 0
    %696 = vmatpush1.bf16.msra.mxu0 %v672
    %697 = vmatprep.subr.bf16.mxu0 0
    %698 = vmatpush1.bf16.msra.mxu0 0
    %699 = vmatprep.subr.bf16.mxu0 0
    %700 = vmatpush1.bf16.msra.mxu0 0
    %701 = vmatprep.subr.bf16.mxu0 0
    %702 = vmatpush1.bf16.msra.mxu0 0
    %703 = vmatprep.subr.bf16.mxu0 0
    %704 = vmatpush1.bf16.msra.mxu0 0
    %705 = vmatprep.subr.bf16.mxu0 0
    %706 = vmatpush1.bf16.msra.mxu0 0
    %707 = vmatprep.subr.bf16.mxu0 0
    %708 = vmatpush1.bf16.msra.mxu0 0
    %709 = vmatprep.subr.bf16.mxu0 0
    %710 = vmatpush1.bf16.msra.mxu0 0
    %711 = vmatprep.subr.bf16.mxu0 0
    %712 = vmatpush1.bf16.msra.mxu0 0
    %713 = vmatprep.mubr.bf16.mxu0 0
    %714 = vmatmul.mubr.bf16.gmra.mrb[0].mxu0 %v489
    %v715 = vpop.f32.mrb[0].mxu0
    %v716 = vadd.f32 %v199, %v715
    %v717 = vpop.f32.mrb[0].mxu0
    %v718 = vpop.f32.mrb[0].mxu0
    %v719 = vadd.f32 %v199, %v718
    %v720 = vpop.f32.mrb[0].mxu0
    %721 = vmatprep.mubr.bf16.mxu0 0
    %722 = vmatmul.mubr.bf16.gmra.mrb[0].mxu0 %v490
    %v723 = vpop.f32.mrb[0].mxu0
    %v724 = vadd.f32 %v199, %v723
    %v725 = vpop.f32.mrb[0].mxu0
    %v726 = vpop.f32.mrb[0].mxu0
    %v727 = vadd.f32 %v199, %v726
    %v728 = vpop.f32.mrb[0].mxu0
    %729 = vmatprep.mubr.bf16.mxu0 0
    %730 = vmatmul.mubr.bf16.gmra.mrb[0].mxu0 %v491
    %v731 = vpop.f32.mrb[0].mxu0
    %v732 = vadd.f32 %v199, %v731
    %v733 = vpop.f32.mrb[0].mxu0
    %v734 = vpop.f32.mrb[0].mxu0
    %v735 = vadd.f32 %v199, %v734
    %v736 = vpop.f32.mrb[0].mxu0
    %737 = vmatprep.mubr.bf16.mxu0 0
    %738 = vmatmul.mubr.bf16.gmra.mrb[0].mxu0 %v492
    %v739 = vpop.f32.mrb[0].mxu0
    %v740 = vadd.f32 %v199, %v739
    %v741 = vpop.f32.mrb[0].mxu0
    %v742 = vpop.f32.mrb[0].mxu0
    %v743 = vadd.f32 %v199, %v742
    %v744 = vpop.f32.mrb[0].mxu0
    %745 = vmatprep.mubr.bf16.mxu0 0
    %746 = vmatmul.mubr.bf16.gmra.mrb[0].mxu0 %v493
    %v747 = vpop.f32.mrb[0].mxu0
    %v748 = vadd.f32 %v199, %v747
    %v749 = vpop.f32.mrb[0].mxu0
    %v750 = vpop.f32.mrb[0].mxu0
    %v751 = vadd.f32 %v199, %v750
    %v752 = vpop.f32.mrb[0].mxu0
    %753 = vmatprep.mubr.bf16.mxu0 0
    %754 = vmatmul.mubr.bf16.gmra.mrb[0].mxu0 %v494
    %v755 = vpop.f32.mrb[0].mxu0
    %v756 = vadd.f32 %v199, %v755
    %v757 = vpop.f32.mrb[0].mxu0
    %v758 = vpop.f32.mrb[0].mxu0
    %v759 = vadd.f32 %v199, %v758
    %v760 = vpop.f32.mrb[0].mxu0
    %761 = vmatprep.mubr.bf16.mxu0 0
    %762 = vmatmul.mubr.bf16.gmra.mrb[0].mxu0 %v495
    %v763 = vpop.f32.mrb[0].mxu0
    %v764 = vadd.f32 %v199, %v763
    %v765 = vpop.f32.mrb[0].mxu0
    %v766 = vpop.f32.mrb[0].mxu0
    %v767 = vadd.f32 %v199, %v766
    %v768 = vpop.f32.mrb[0].mxu0
    %769 = vmatprep.mubr.bf16.mxu0 0
    %770 = vmatmul.mubr.bf16.gmra.mrb[0].mxu0 %v496
    %v771 = vpop.f32.mrb[0].mxu0
    %v772 = vadd.f32 %v199, %v771
    %v773 = vpop.f32.mrb[0].mxu0
    %v774 = vpop.f32.mrb[0].mxu0
    %v775 = vadd.f32 %v199, %v774
    %v776 = vpop.f32.mrb[0].mxu0
    %777 = vmatprep.mubr.bf16.mxu0 0
    %778 = vmatmul.mubr.bf16.gmra.mrb[0].mxu0 %v497
    %v779 = vpop.f32.mrb[0].mxu0
    %v780 = vadd.f32 %v199, %v779
    %v781 = vpop.f32.mrb[0].mxu0
    %v782 = vpop.f32.mrb[0].mxu0
    %v783 = vadd.f32 %v199, %v782
    %v784 = vpop.f32.mrb[0].mxu0
    %785 = vmatprep.mubr.bf16.mxu0 0
    %786 = vmatmul.mubr.bf16.gmra.mrb[0].mxu0 %v498
    %v787 = vpop.f32.mrb[0].mxu0
    %v788 = vadd.f32 %v199, %v787
    %v789 = vpop.f32.mrb[0].mxu0
    %v790 = vpop.f32.mrb[0].mxu0
    %v791 = vadd.f32 %v199, %v790
    %v792 = vpop.f32.mrb[0].mxu0
    %793 = vmatprep.mubr.bf16.mxu0 0
    %794 = vmatmul.mubr.bf16.gmra.mrb[0].mxu0 %v499
    %v795 = vpop.f32.mrb[0].mxu0
    %v796 = vadd.f32 %v199, %v795
    %v797 = vpop.f32.mrb[0].mxu0
    %v798 = vpop.f32.mrb[0].mxu0
    %v799 = vadd.f32 %v199, %v798
    %v800 = vpop.f32.mrb[0].mxu0
    %801 = vmatprep.mubr.bf16.mxu0 0
    %802 = vmatmul.mubr.bf16.gmra.mrb[0].mxu0 %v500
    %v803 = vpop.f32.mrb[0].mxu0
    %v804 = vadd.f32 %v199, %v803
    %v805 = vpop.f32.mrb[0].mxu0
    %v806 = vpop.f32.mrb[0].mxu0
    %v807 = vadd.f32 %v199, %v806
    %v808 = vpop.f32.mrb[0].mxu0
    %809 = vmatprep.mubr.bf16.mxu0 0
    %810 = vmatmul.mubr.bf16.gmra.mrb[0].mxu0 %v501
    %v811 = vpop.f32.mrb[0].mxu0
    %v812 = vadd.f32 %v199, %v811
    %v813 = vpop.f32.mrb[0].mxu0
    %v814 = vpop.f32.mrb[0].mxu0
    %v815 = vadd.f32 %v199, %v814
    %v816 = vpop.f32.mrb[0].mxu0
    %817 = vmatprep.mubr.bf16.mxu0 0
    %818 = vmatmul.mubr.bf16.gmra.mrb[0].mxu0 %v502
    %v819 = vpop.f32.mrb[0].mxu0
    %v820 = vadd.f32 %v199, %v819
    %v821 = vpop.f32.mrb[0].mxu0
    %v822 = vpop.f32.mrb[0].mxu0
    %v823 = vadd.f32 %v199, %v822
    %v824 = vpop.f32.mrb[0].mxu0
    %825 = vmatprep.mubr.bf16.mxu0 0
    %826 = vmatmul.mubr.bf16.gmra.mrb[0].mxu0 %v503
    %v827 = vpop.f32.mrb[0].mxu0
    %v828 = vadd.f32 %v199, %v827
    %v829 = vpop.f32.mrb[0].mxu0
    %v830 = vpop.f32.mrb[0].mxu0
    %v831 = vadd.f32 %v199, %v830
    %v832 = vpop.f32.mrb[0].mxu0
    %833 = vmatprep.mubr.bf16.mxu0 0
    %834 = vmatmul.mubr.bf16.gmra.mrb[0].mxu0 %v504
    %v835 = vpop.f32.mrb[0].mxu0
    %v836 = vadd.f32 %v199, %v835
    %v837 = vpop.f32.mrb[0].mxu0
    %v838 = vpop.f32.mrb[0].mxu0
    %v839 = vadd.f32 %v199, %v838
    %v840 = vpop.f32.mrb[0].mxu0
    %841 = vmatprep.mubr.bf16.mxu0 0
    %842 = vmatmul.mubr.bf16.gmra.mrb[0].mxu0 %v505
    %v843 = vpop.f32.mrb[0].mxu0
    %v844 = vadd.f32 %v199, %v843
    %v845 = vpop.f32.mrb[0].mxu0
    %v846 = vpop.f32.mrb[0].mxu0
    %v847 = vadd.f32 %v199, %v846
    %v848 = vpop.f32.mrb[0].mxu0
    %849 = vmatprep.mubr.bf16.mxu0 0
    %850 = vmatmul.mubr.bf16.gmra.mrb[0].mxu0 %v506
    %v851 = vpop.f32.mrb[0].mxu0
    %v852 = vadd.f32 %v199, %v851
    %v853 = vpop.f32.mrb[0].mxu0
    %v854 = vpop.f32.mrb[0].mxu0
    %v855 = vadd.f32 %v199, %v854
    %v856 = vpop.f32.mrb[0].mxu0
    %857 = vmatprep.mubr.bf16.mxu0 0
    %858 = vmatmul.mubr.bf16.gmra.mrb[0].mxu0 %v507
    %v859 = vpop.f32.mrb[0].mxu0
    %v860 = vadd.f32 %v199, %v859
    %v861 = vpop.f32.mrb[0].mxu0
    %v862 = vpop.f32.mrb[0].mxu0
    %v863 = vadd.f32 %v199, %v862
    %v864 = vpop.f32.mrb[0].mxu0
    %865 = vmatprep.mubr.bf16.mxu0 0
    %866 = vmatmul.mubr.bf16.gmra.mrb[0].mxu0 %v508
    %v867 = vpop.f32.mrb[0].mxu0
    %v868 = vadd.f32 %v199, %v867
    %v869 = vpop.f32.mrb[0].mxu0
    %v870 = vpop.f32.mrb[0].mxu0
    %v871 = vadd.f32 %v199, %v870
    %v872 = vpop.f32.mrb[0].mxu0
    %873 = vmatprep.mubr.bf16.mxu0 0
    %874 = vmatmul.mubr.bf16.gmra.mrb[0].mxu0 %v509
    %v875 = vpop.f32.mrb[0].mxu0
    %v876 = vadd.f32 %v199, %v875
    %v877 = vpop.f32.mrb[0].mxu0
    %v878 = vpop.f32.mrb[0].mxu0
    %v879 = vadd.f32 %v199, %v878
    %v880 = vpop.f32.mrb[0].mxu0
    %881 = vmatprep.mubr.bf16.mxu0 0
    %882 = vmatmul.mubr.bf16.gmra.mrb[0].mxu0 %v510
    %v883 = vpop.f32.mrb[0].mxu0
    %v884 = vadd.f32 %v199, %v883
    %v885 = vpop.f32.mrb[0].mxu0
    %v886 = vpop.f32.mrb[0].mxu0
    %v887 = vadd.f32 %v199, %v886
    %v888 = vpop.f32.mrb[0].mxu0
    %889 = vmatprep.mubr.bf16.mxu0 0
    %890 = vmatmul.mubr.bf16.gmra.mrb[0].mxu0 %v511
    %v891 = vpop.f32.mrb[0].mxu0
    %v892 = vadd.f32 %v199, %v891
    %v893 = vpop.f32.mrb[0].mxu0
    %v894 = vpop.f32.mrb[0].mxu0
    %v895 = vadd.f32 %v199, %v894
    %v896 = vpop.f32.mrb[0].mxu0
    %897 = vmatprep.mubr.bf16.mxu0 0
    %898 = vmatmul.mubr.bf16.gmra.mrb[0].mxu0 %v512
    %v899 = vpop.f32.mrb[0].mxu0
    %v900 = vadd.f32 %v199, %v899
    %v901 = vpop.f32.mrb[0].mxu0
    %v902 = vpop.f32.mrb[0].mxu0
    %v903 = vadd.f32 %v199, %v902
    %v904 = vpop.f32.mrb[0].mxu0
    %905 = vmatprep.mubr.bf16.mxu0 0
    %906 = vmatmul.mubr.bf16.gmra.mrb[0].mxu0 %v513
    %v907 = vpop.f32.mrb[0].mxu0
    %v908 = vadd.f32 %v199, %v907
    %v909 = vpop.f32.mrb[0].mxu0
    %v910 = vpop.f32.mrb[0].mxu0
    %v911 = vadd.f32 %v199, %v910
    %v912 = vpop.f32.mrb[0].mxu0
    %913 = vmatprep.mubr.bf16.mxu0 0
    %914 = vmatmul.mubr.bf16.gmra.mrb[0].mxu0 %v514
    %v915 = vpop.f32.mrb[0].mxu0
    %v916 = vadd.f32 %v199, %v915
    %v917 = vpop.f32.mrb[0].mxu0
    %v918 = vpop.f32.mrb[0].mxu0
    %v919 = vadd.f32 %v199, %v918
    %v920 = vpop.f32.mrb[0].mxu0
    %921 = vmatprep.mubr.bf16.mxu0 0
    %922 = vmatmul.mubr.bf16.gmra.mrb[0].mxu0 %v515
    %v923 = vpop.f32.mrb[0].mxu0
    %v924 = vadd.f32 %v199, %v923
    %v925 = vpop.f32.mrb[0].mxu0
    %v926 = vpop.f32.mrb[0].mxu0
    %v927 = vadd.f32 %v199, %v926
    %v928 = vpop.f32.mrb[0].mxu0
    %929 = vmatprep.mubr.bf16.mxu0 0
    %930 = vmatmul.mubr.bf16.gmra.mrb[0].mxu0 %v516
    %v931 = vpop.f32.mrb[0].mxu0
    %v932 = vadd.f32 %v199, %v931
    %v933 = vpop.f32.mrb[0].mxu0
    %v934 = vpop.f32.mrb[0].mxu0
    %v935 = vadd.f32 %v199, %v934
    %v936 = vpop.f32.mrb[0].mxu0
    %937 = vmatprep.mubr.bf16.mxu0 0
    %938 = vmatmul.mubr.bf16.gmra.mrb[0].mxu0 %v517
    %v939 = vpop.f32.mrb[0].mxu0
    %v940 = vadd.f32 %v199, %v939
    %v941 = vpop.f32.mrb[0].mxu0
    %v942 = vpop.f32.mrb[0].mxu0
    %v943 = vadd.f32 %v199, %v942
    %v944 = vpop.f32.mrb[0].mxu0
    %945 = vmatprep.mubr.bf16.mxu0 0
    %946 = vmatmul.mubr.bf16.gmra.mrb[0].mxu0 %v518
    %v947 = vpop.f32.mrb[0].mxu0
    %v948 = vadd.f32 %v199, %v947
    %v949 = vpop.f32.mrb[0].mxu0
    %v950 = vpop.f32.mrb[0].mxu0
    %v951 = vadd.f32 %v199, %v950
    %v952 = vpop.f32.mrb[0].mxu0
    %953 = vmatprep.mubr.bf16.mxu0 0
    %954 = vmatmul.mubr.bf16.gmra.mrb[0].mxu0 %v519
    %v955 = vpop.f32.mrb[0].mxu0
    %v956 = vadd.f32 %v199, %v955
    %v957 = vpop.f32.mrb[0].mxu0
    %v958 = vpop.f32.mrb[0].mxu0
    %v959 = vadd.f32 %v199, %v958
    %v960 = vpop.f32.mrb[0].mxu0
    %961 = vmatprep.mubr.bf16.mxu0 0
    %962 = vmatmul.mubr.bf16.gmra.mrb[0].mxu0 %v520
    %v963 = vpop.f32.mrb[0].mxu0
    %v964 = vadd.f32 %v199, %v963
    %v965 = vpop.f32.mrb[0].mxu0
    %v966 = vpop.f32.mrb[0].mxu0
    %v967 = vadd.f32 %v199, %v966
    %v968 = vpop.f32.mrb[0].mxu0
    %969 = vmatprep.mubr.bf16.mxu0 0
    %970 = vmatmul.mubr.bf16.gmra.mrb[0].mxu0 %v521
    %v971 = vpop.f32.mrb[0].mxu0
    %v972 = vadd.f32 %v199, %v971
    %v973 = vpop.f32.mrb[0].mxu0
    %v974 = vpop.f32.mrb[0].mxu0
    %v975 = vadd.f32 %v199, %v974
    %v976 = vpop.f32.mrb[0].mxu0
    %977 = vmatprep.mubr.bf16.mxu0 0
    %978 = vmatmul.mubr.bf16.gmra.mrb[0].mxu0 %v522
    %v979 = vpop.f32.mrb[0].mxu0
    %v980 = vadd.f32 %v199, %v979
    %v981 = vpop.f32.mrb[0].mxu0
    %v982 = vpop.f32.mrb[0].mxu0
    %v983 = vadd.f32 %v199, %v982
    %v984 = vpop.f32.mrb[0].mxu0
    %985 = vmatprep.mubr.bf16.mxu0 0
    %986 = vmatmul.mubr.bf16.gmra.mrb[0].mxu0 %v523
    %v987 = vpop.f32.mrb[0].mxu0
    %v988 = vadd.f32 %v199, %v987
    %v989 = vpop.f32.mrb[0].mxu0
    %v990 = vpop.f32.mrb[0].mxu0
    %v991 = vadd.f32 %v199, %v990
    %v992 = vpop.f32.mrb[0].mxu0
    %993 = vmatprep.mubr.bf16.mxu0 0
    %994 = vmatmul.mubr.bf16.gmra.mrb[0].mxu0 %v524
    %v995 = vpop.f32.mrb[0].mxu0
    %v996 = vadd.f32 %v199, %v995
    %v997 = vpop.f32.mrb[0].mxu0
    %v998 = vpop.f32.mrb[0].mxu0
    %v999 = vadd.f32 %v199, %v998
    %v1000 = vpop.f32.mrb[0].mxu0
    %1001 = vmatprep.mubr.bf16.mxu0 0
    %1002 = vmatmul.mubr.bf16.gmra.mrb[0].mxu0 %v525
    %v1003 = vpop.f32.mrb[0].mxu0
    %v1004 = vadd.f32 %v199, %v1003
    %v1005 = vpop.f32.mrb[0].mxu0
    %v1006 = vpop.f32.mrb[0].mxu0
    %v1007 = vadd.f32 %v199, %v1006
    %v1008 = vpop.f32.mrb[0].mxu0
    %1009 = vmatprep.mubr.bf16.mxu0 0
    %1010 = vmatmul.mubr.bf16.gmra.mrb[0].mxu0 %v526
    %v1011 = vpop.f32.mrb[0].mxu0
    %v1012 = vadd.f32 %v199, %v1011
    %v1013 = vpop.f32.mrb[0].mxu0
    %v1014 = vpop.f32.mrb[0].mxu0
    %v1015 = vadd.f32 %v199, %v1014
    %v1016 = vpop.f32.mrb[0].mxu0
    %1017 = vmatprep.mubr.bf16.mxu0 0
    %1018 = vmatmul.mubr.bf16.gmra.mrb[0].mxu0 %v527
    %v1019 = vpop.f32.mrb[0].mxu0
    %v1020 = vadd.f32 %v199, %v1019
    %v1021 = vpop.f32.mrb[0].mxu0
    %v1022 = vpop.f32.mrb[0].mxu0
    %v1023 = vadd.f32 %v199, %v1022
    %v1024 = vpop.f32.mrb[0].mxu0
    %1025 = vmatprep.mubr.bf16.mxu0 0
    %1026 = vmatmul.mubr.bf16.gmra.mrb[0].mxu0 %v528
    %v1027 = vpop.f32.mrb[0].mxu0
    %v1028 = vadd.f32 %v199, %v1027
    %v1029 = vpop.f32.mrb[0].mxu0
    %v1030 = vpop.f32.mrb[0].mxu0
    %v1031 = vadd.f32 %v199, %v1030
    %v1032 = vpop.f32.mrb[0].mxu0
    %1033 = vmatprep.mubr.bf16.mxu0 0
    %1034 = vmatmul.mubr.bf16.gmra.mrb[0].mxu0 %v529
    %v1035 = vpop.f32.mrb[0].mxu0
    %v1036 = vadd.f32 %v199, %v1035
    %v1037 = vpop.f32.mrb[0].mxu0
    %v1038 = vpop.f32.mrb[0].mxu0
    %v1039 = vadd.f32 %v199, %v1038
    %v1040 = vpop.f32.mrb[0].mxu0
    %1041 = vmatprep.mubr.bf16.mxu0 0
    %1042 = vmatmul.mubr.bf16.gmra.mrb[0].mxu0 %v530
    %v1043 = vpop.f32.mrb[0].mxu0
    %v1044 = vadd.f32 %v199, %v1043
    %v1045 = vpop.f32.mrb[0].mxu0
    %v1046 = vpop.f32.mrb[0].mxu0
    %v1047 = vadd.f32 %v199, %v1046
    %v1048 = vpop.f32.mrb[0].mxu0
    %1049 = vmatprep.mubr.bf16.mxu0 0
    %1050 = vmatmul.mubr.bf16.gmra.mrb[0].mxu0 %v531
    %v1051 = vpop.f32.mrb[0].mxu0
    %v1052 = vadd.f32 %v199, %v1051
    %v1053 = vpop.f32.mrb[0].mxu0
    %v1054 = vpop.f32.mrb[0].mxu0
    %v1055 = vadd.f32 %v199, %v1054
    %v1056 = vpop.f32.mrb[0].mxu0
    %1057 = vmatprep.mubr.bf16.mxu0 0
    %1058 = vmatmul.mubr.bf16.gmra.mrb[0].mxu0 %v532
    %v1059 = vpop.f32.mrb[0].mxu0
    %v1060 = vadd.f32 %v199, %v1059
    %v1061 = vpop.f32.mrb[0].mxu0
    %v1062 = vpop.f32.mrb[0].mxu0
    %v1063 = vadd.f32 %v199, %v1062
    %v1064 = vpop.f32.mrb[0].mxu0
    %1065 = vmatprep.mubr.bf16.mxu0 0
    %1066 = vmatmul.mubr.bf16.gmra.mrb[0].mxu0 %v533
    %v1067 = vpop.f32.mrb[0].mxu0
    %v1068 = vadd.f32 %v199, %v1067
    %v1069 = vpop.f32.mrb[0].mxu0
    %v1070 = vpop.f32.mrb[0].mxu0
    %v1071 = vadd.f32 %v199, %v1070
    %v1072 = vpop.f32.mrb[0].mxu0
    %1073 = vmatprep.mubr.bf16.mxu0 0
    %1074 = vmatmul.mubr.bf16.gmra.mrb[0].mxu0 %v534
    %v1075 = vpop.f32.mrb[0].mxu0
    %v1076 = vadd.f32 %v199, %v1075
    %v1077 = vpop.f32.mrb[0].mxu0
    %v1078 = vpop.f32.mrb[0].mxu0
    %v1079 = vadd.f32 %v199, %v1078
    %v1080 = vpop.f32.mrb[0].mxu0
    %1081 = vmatprep.mubr.bf16.mxu0 0
    %1082 = vmatmul.mubr.bf16.gmra.mrb[0].mxu0 %v535
    %v1083 = vpop.f32.mrb[0].mxu0
    %v1084 = vadd.f32 %v199, %v1083
    %v1085 = vpop.f32.mrb[0].mxu0
    %v1086 = vpop.f32.mrb[0].mxu0
    %v1087 = vadd.f32 %v199, %v1086
    %v1088 = vpop.f32.mrb[0].mxu0
    %1089 = vmatprep.mubr.bf16.mxu0 0
    %1090 = vmatmul.mubr.bf16.gmra.mrb[0].mxu0 %v536
    %v1091 = vpop.f32.mrb[0].mxu0
    %v1092 = vadd.f32 %v199, %v1091
    %v1093 = vpop.f32.mrb[0].mxu0
    %v1094 = vpop.f32.mrb[0].mxu0
    %v1095 = vadd.f32 %v199, %v1094
    %v1096 = vpop.f32.mrb[0].mxu0
    %1097 = vmatprep.mubr.bf16.mxu0 0
    %1098 = vmatmul.mubr.bf16.gmra.mrb[0].mxu0 %v537
    %v1099 = vpop.f32.mrb[0].mxu0
    %v1100 = vadd.f32 %v199, %v1099
    %v1101 = vpop.f32.mrb[0].mxu0
    %v1102 = vpop.f32.mrb[0].mxu0
    %v1103 = vadd.f32 %v199, %v1102
    %v1104 = vpop.f32.mrb[0].mxu0
    %1105 = vmatprep.mubr.bf16.mxu0 0
    %1106 = vmatmul.mubr.bf16.gmra.mrb[0].mxu0 %v538
    %v1107 = vpop.f32.mrb[0].mxu0
    %v1108 = vadd.f32 %v199, %v1107
    %v1109 = vpop.f32.mrb[0].mxu0
    %v1110 = vpop.f32.mrb[0].mxu0
    %v1111 = vadd.f32 %v199, %v1110
    %v1112 = vpop.f32.mrb[0].mxu0
    %1113 = vmatprep.mubr.bf16.mxu0 0
    %1114 = vmatmul.mubr.bf16.gmra.mrb[0].mxu0 %v539
    %v1115 = vpop.f32.mrb[0].mxu0
    %v1116 = vadd.f32 %v199, %v1115
    %v1117 = vpop.f32.mrb[0].mxu0
    %v1118 = vpop.f32.mrb[0].mxu0
    %v1119 = vadd.f32 %v199, %v1118
    %v1120 = vpop.f32.mrb[0].mxu0
    %1121 = vmatprep.mubr.bf16.mxu0 0
    %1122 = vmatmul.mubr.bf16.gmra.mrb[0].mxu0 %v540
    %v1123 = vpop.f32.mrb[0].mxu0
    %v1124 = vadd.f32 %v199, %v1123
    %v1125 = vpop.f32.mrb[0].mxu0
    %v1126 = vpop.f32.mrb[0].mxu0
    %v1127 = vadd.f32 %v199, %v1126
    %v1128 = vpop.f32.mrb[0].mxu0
    %1129 = vmatprep.mubr.bf16.mxu0 0
    %1130 = vmatmul.mubr.bf16.gmra.mrb[0].mxu0 %v541
    %v1131 = vpop.f32.mrb[0].mxu0
    %v1132 = vadd.f32 %v199, %v1131
    %v1133 = vpop.f32.mrb[0].mxu0
    %v1134 = vpop.f32.mrb[0].mxu0
    %v1135 = vadd.f32 %v199, %v1134
    %v1136 = vpop.f32.mrb[0].mxu0
    %1137 = vmatprep.mubr.bf16.mxu0 0
    %1138 = vmatmul.mubr.bf16.gmra.mrb[0].mxu0 %v542
    %v1139 = vpop.f32.mrb[0].mxu0
    %v1140 = vadd.f32 %v199, %v1139
    %v1141 = vpop.f32.mrb[0].mxu0
    %v1142 = vpop.f32.mrb[0].mxu0
    %v1143 = vadd.f32 %v199, %v1142
    %v1144 = vpop.f32.mrb[0].mxu0
    %1145 = vmatprep.mubr.bf16.mxu0 0
    %1146 = vmatmul.mubr.bf16.gmra.mrb[0].mxu0 %v543
    %v1147 = vpop.f32.mrb[0].mxu0
    %v1148 = vadd.f32 %v199, %v1147
    %v1149 = vpop.f32.mrb[0].mxu0
    %v1150 = vpop.f32.mrb[0].mxu0
    %v1151 = vadd.f32 %v199, %v1150
    %v1152 = vpop.f32.mrb[0].mxu0
    %1153 = vmatprep.mubr.bf16.mxu0 0
    %1154 = vmatmul.mubr.bf16.gmra.mrb[0].mxu0 %v544
    %v1155 = vpop.f32.mrb[0].mxu0
    %v1156 = vadd.f32 %v199, %v1155
    %v1157 = vpop.f32.mrb[0].mxu0
    %v1158 = vpop.f32.mrb[0].mxu0
    %v1159 = vadd.f32 %v199, %v1158
    %v1160 = vpop.f32.mrb[0].mxu0
    %1161 = vmatprep.mubr.bf16.mxu0 0
    %1162 = vmatmul.mubr.bf16.gmra.mrb[0].mxu0 %v545
    %v1163 = vpop.f32.mrb[0].mxu0
    %v1164 = vadd.f32 %v199, %v1163
    %v1165 = vpop.f32.mrb[0].mxu0
    %v1166 = vpop.f32.mrb[0].mxu0
    %v1167 = vadd.f32 %v199, %v1166
    %v1168 = vpop.f32.mrb[0].mxu0
    %1169 = vmatprep.mubr.bf16.mxu0 0
    %1170 = vmatmul.mubr.bf16.gmra.mrb[0].mxu0 %v546
    %v1171 = vpop.f32.mrb[0].mxu0
    %v1172 = vadd.f32 %v199, %v1171
    %v1173 = vpop.f32.mrb[0].mxu0
    %v1174 = vpop.f32.mrb[0].mxu0
    %v1175 = vadd.f32 %v199, %v1174
    %v1176 = vpop.f32.mrb[0].mxu0
    %1177 = vmatprep.mubr.bf16.mxu0 0
    %1178 = vmatmul.mubr.bf16.gmra.mrb[0].mxu0 %v547
    %v1179 = vpop.f32.mrb[0].mxu0
    %v1180 = vadd.f32 %v199, %v1179
    %v1181 = vpop.f32.mrb[0].mxu0
    %v1182 = vpop.f32.mrb[0].mxu0
    %v1183 = vadd.f32 %v199, %v1182
    %v1184 = vpop.f32.mrb[0].mxu0
    %1185 = vmatprep.mubr.bf16.mxu0 0
    %1186 = vmatmul.mubr.bf16.gmra.mrb[0].mxu0 %v548
    %v1187 = vpop.f32.mrb[0].mxu0
    %v1188 = vadd.f32 %v199, %v1187
    %v1189 = vpop.f32.mrb[0].mxu0
    %v1190 = vpop.f32.mrb[0].mxu0
    %v1191 = vadd.f32 %v199, %v1190
    %v1192 = vpop.f32.mrb[0].mxu0
    %1193 = vmatprep.mubr.bf16.mxu0 0
    %1194 = vmatmul.mubr.bf16.gmra.mrb[0].mxu0 %v549
    %v1195 = vpop.f32.mrb[0].mxu0
    %v1196 = vadd.f32 %v199, %v1195
    %v1197 = vpop.f32.mrb[0].mxu0
    %v1198 = vpop.f32.mrb[0].mxu0
    %v1199 = vadd.f32 %v199, %v1198
    %v1200 = vpop.f32.mrb[0].mxu0
    %1201 = vmatprep.mubr.bf16.mxu0 0
    %1202 = vmatmul.mubr.bf16.gmra.mrb[0].mxu0 %v550
    %v1203 = vpop.f32.mrb[0].mxu0
    %v1204 = vadd.f32 %v199, %v1203
    %v1205 = vpop.f32.mrb[0].mxu0
    %v1206 = vpop.f32.mrb[0].mxu0
    %v1207 = vadd.f32 %v199, %v1206
    %v1208 = vpop.f32.mrb[0].mxu0
    %1209 = vmatprep.mubr.bf16.mxu0 0
    %1210 = vmatmul.mubr.bf16.gmra.mrb[0].mxu0 %v551
    %v1211 = vpop.f32.mrb[0].mxu0
    %v1212 = vadd.f32 %v199, %v1211
    %v1213 = vpop.f32.mrb[0].mxu0
    %v1214 = vpop.f32.mrb[0].mxu0
    %v1215 = vadd.f32 %v199, %v1214
    %v1216 = vpop.f32.mrb[0].mxu0
    %1217 = vmatprep.mubr.bf16.mxu0 0
    %1218 = vmatmul.mubr.bf16.gmra.mrb[0].mxu0 %v552
    %v1219 = vpop.f32.mrb[0].mxu0
    %v1220 = vadd.f32 %v199, %v1219
    %v1221 = vpop.f32.mrb[0].mxu0
    %v1222 = vpop.f32.mrb[0].mxu0
    %v1223 = vadd.f32 %v199, %v1222
    %v1224 = vpop.f32.mrb[0].mxu0
    %1225 = vmatprep.mubr.bf16.mxu0 0
    %1226 = vmatmul.mubr.bf16.gmra.mrb[0].mxu0 %v553
    %v1227 = vpop.f32.mrb[0].mxu0
    %v1228 = vadd.f32 %v199, %v1227
    %v1229 = vpop.f32.mrb[0].mxu0
    %v1230 = vpop.f32.mrb[0].mxu0
    %v1231 = vadd.f32 %v199, %v1230
    %v1232 = vpop.f32.mrb[0].mxu0
    %1233 = vmatprep.mubr.bf16.mxu0 0
    %1234 = vmatmul.mubr.bf16.gmra.mrb[0].mxu0 %v554
    %v1235 = vpop.f32.mrb[0].mxu0
    %v1236 = vadd.f32 %v199, %v1235
    %v1237 = vpop.f32.mrb[0].mxu0
    %v1238 = vpop.f32.mrb[0].mxu0
    %v1239 = vadd.f32 %v199, %v1238
    %v1240 = vpop.f32.mrb[0].mxu0
    %1241 = vmatprep.mubr.bf16.mxu0 0
    %1242 = vmatmul.mubr.bf16.gmra.mrb[0].mxu0 %v555
    %v1243 = vpop.f32.mrb[0].mxu0
    %v1244 = vadd.f32 %v199, %v1243
    %v1245 = vpop.f32.mrb[0].mxu0
    %v1246 = vpop.f32.mrb[0].mxu0
    %v1247 = vadd.f32 %v199, %v1246
    %v1248 = vpop.f32.mrb[0].mxu0
    %1249 = vmatprep.mubr.bf16.mxu0 0
    %1250 = vmatmul.mubr.bf16.gmra.mrb[0].mxu0 %v556
    %v1251 = vpop.f32.mrb[0].mxu0
    %v1252 = vadd.f32 %v199, %v1251
    %v1253 = vpop.f32.mrb[0].mxu0
    %v1254 = vpop.f32.mrb[0].mxu0
    %v1255 = vadd.f32 %v199, %v1254
    %v1256 = vpop.f32.mrb[0].mxu0
    %1257 = vmatprep.mubr.bf16.mxu0 0
    %1258 = vmatmul.mubr.bf16.gmra.mrb[0].mxu0 %v557
    %v1259 = vpop.f32.mrb[0].mxu0
    %v1260 = vadd.f32 %v199, %v1259
    %v1261 = vpop.f32.mrb[0].mxu0
    %v1262 = vpop.f32.mrb[0].mxu0
    %v1263 = vadd.f32 %v199, %v1262
    %v1264 = vpop.f32.mrb[0].mxu0
    %1265 = vmatprep.mubr.bf16.mxu0 0
    %1266 = vmatmul.mubr.bf16.gmra.mrb[0].mxu0 %v558
    %v1267 = vpop.f32.mrb[0].mxu0
    %v1268 = vadd.f32 %v199, %v1267
    %v1269 = vpop.f32.mrb[0].mxu0
    %v1270 = vpop.f32.mrb[0].mxu0
    %v1271 = vadd.f32 %v199, %v1270
    %v1272 = vpop.f32.mrb[0].mxu0
    %1273 = vmatprep.mubr.bf16.mxu0 0
    %1274 = vmatmul.mubr.bf16.gmra.mrb[0].mxu0 %v559
    %v1275 = vpop.f32.mrb[0].mxu0
    %v1276 = vadd.f32 %v199, %v1275
    %v1277 = vpop.f32.mrb[0].mxu0
    %v1278 = vpop.f32.mrb[0].mxu0
    %v1279 = vadd.f32 %v199, %v1278
    %v1280 = vpop.f32.mrb[0].mxu0
    %1281 = vmatprep.mubr.bf16.mxu0 0
    %1282 = vmatmul.mubr.bf16.gmra.mrb[0].mxu0 %v560
    %v1283 = vpop.f32.mrb[0].mxu0
    %v1284 = vadd.f32 %v199, %v1283
    %v1285 = vpop.f32.mrb[0].mxu0
    %v1286 = vpop.f32.mrb[0].mxu0
    %v1287 = vadd.f32 %v199, %v1286
    %v1288 = vpop.f32.mrb[0].mxu0
    %1289 = vdwg.mxu0
    %v1290 = vmax.f32 %v716, 0.0
    %v1291 = vmax.f32 %v719, 0.0
    %v1292 = vmax.f32 %v724, 0.0
    %v1293 = vmax.f32 %v727, 0.0
    %v1294 = vmax.f32 %v732, 0.0
    %v1295 = vmax.f32 %v735, 0.0
    %v1296 = vmax.f32 %v740, 0.0
    %v1297 = vmax.f32 %v743, 0.0
    %v1298 = vmax.f32 %v748, 0.0
    %v1299 = vmax.f32 %v751, 0.0
    %v1300 = vmax.f32 %v756, 0.0
    %v1301 = vmax.f32 %v759, 0.0
    %v1302 = vmax.f32 %v764, 0.0
    %v1303 = vmax.f32 %v767, 0.0
    %v1304 = vmax.f32 %v772, 0.0
    %v1305 = vmax.f32 %v775, 0.0
    %v1306 = vmax.f32 %v780, 0.0
    %v1307 = vmax.f32 %v783, 0.0
    %v1308 = vmax.f32 %v788, 0.0
    %v1309 = vmax.f32 %v791, 0.0
    %v1310 = vmax.f32 %v796, 0.0
    %v1311 = vmax.f32 %v799, 0.0
    %v1312 = vmax.f32 %v804, 0.0
    %v1313 = vmax.f32 %v807, 0.0
    %v1314 = vmax.f32 %v812, 0.0
    %v1315 = vmax.f32 %v815, 0.0
    %v1316 = vmax.f32 %v820, 0.0
    %v1317 = vmax.f32 %v823, 0.0
    %v1318 = vmax.f32 %v828, 0.0
    %v1319 = vmax.f32 %v831, 0.0
    %v1320 = vmax.f32 %v836, 0.0
    %v1321 = vmax.f32 %v839, 0.0
    %v1322 = vmax.f32 %v844, 0.0
    %v1323 = vmax.f32 %v847, 0.0
    %v1324 = vmax.f32 %v852, 0.0
    %v1325 = vmax.f32 %v855, 0.0
    %v1326 = vmax.f32 %v860, 0.0
    %v1327 = vmax.f32 %v863, 0.0
    %v1328 = vmax.f32 %v868, 0.0
    %v1329 = vmax.f32 %v871, 0.0
    %v1330 = vmax.f32 %v876, 0.0
    %v1331 = vmax.f32 %v879, 0.0
    %v1332 = vmax.f32 %v884, 0.0
    %v1333 = vmax.f32 %v887, 0.0
    %v1334 = vmax.f32 %v892, 0.0
    %v1335 = vmax.f32 %v895, 0.0
    %v1336 = vmax.f32 %v900, 0.0
    %v1337 = vmax.f32 %v903, 0.0
    %v1338 = vmax.f32 %v908, 0.0
    %v1339 = vmax.f32 %v911, 0.0
    %v1340 = vmax.f32 %v916, 0.0
    %v1341 = vmax.f32 %v919, 0.0
    %v1342 = vmax.f32 %v924, 0.0
    %v1343 = vmax.f32 %v927, 0.0
    %v1344 = vmax.f32 %v932, 0.0
    %v1345 = vmax.f32 %v935, 0.0
    %v1346 = vmax.f32 %v940, 0.0
    %v1347 = vmax.f32 %v943, 0.0
    %v1348 = vmax.f32 %v948, 0.0
    %v1349 = vmax.f32 %v951, 0.0
    %v1350 = vmax.f32 %v956, 0.0
    %v1351 = vmax.f32 %v959, 0.0
    %v1352 = vmax.f32 %v964, 0.0
    %v1353 = vmax.f32 %v967, 0.0
    %v1354 = vmax.f32 %v972, 0.0
    %v1355 = vmax.f32 %v975, 0.0
    %v1356 = vmax.f32 %v980, 0.0
    %v1357 = vmax.f32 %v983, 0.0
    %v1358 = vmax.f32 %v988, 0.0
    %v1359 = vmax.f32 %v991, 0.0
    %v1360 = vmax.f32 %v996, 0.0
    %v1361 = vmax.f32 %v999, 0.0
    %v1362 = vmax.f32 %v1004, 0.0
    %v1363 = vmax.f32 %v1007, 0.0
    %v1364 = vmax.f32 %v1012, 0.0
    %v1365 = vmax.f32 %v1015, 0.0
    %v1366 = vmax.f32 %v1020, 0.0
    %v1367 = vmax.f32 %v1023, 0.0
    %v1368 = vmax.f32 %v1028, 0.0
    %v1369 = vmax.f32 %v1031, 0.0
    %v1370 = vmax.f32 %v1036, 0.0
    %v1371 = vmax.f32 %v1039, 0.0
    %v1372 = vmax.f32 %v1044, 0.0
    %v1373 = vmax.f32 %v1047, 0.0
    %v1374 = vmax.f32 %v1052, 0.0
    %v1375 = vmax.f32 %v1055, 0.0
    %v1376 = vmax.f32 %v1060, 0.0
    %v1377 = vmax.f32 %v1063, 0.0
    %v1378 = vmax.f32 %v1068, 0.0
    %v1379 = vmax.f32 %v1071, 0.0
    %v1380 = vmax.f32 %v1076, 0.0
    %v1381 = vmax.f32 %v1079, 0.0
    %v1382 = vmax.f32 %v1084, 0.0
    %v1383 = vmax.f32 %v1087, 0.0
    %v1384 = vmax.f32 %v1092, 0.0
    %v1385 = vmax.f32 %v1095, 0.0
    %v1386 = vmax.f32 %v1100, 0.0
    %v1387 = vmax.f32 %v1103, 0.0
    %v1388 = vmax.f32 %v1108, 0.0
    %v1389 = vmax.f32 %v1111, 0.0
    %v1390 = vmax.f32 %v1116, 0.0
    %v1391 = vmax.f32 %v1119, 0.0
    %v1392 = vmax.f32 %v1124, 0.0
    %v1393 = vmax.f32 %v1127, 0.0
    %v1394 = vmax.f32 %v1132, 0.0
    %v1395 = vmax.f32 %v1135, 0.0
    %v1396 = vmax.f32 %v1140, 0.0
    %v1397 = vmax.f32 %v1143, 0.0
    %v1398 = vmax.f32 %v1148, 0.0
    %v1399 = vmax.f32 %v1151, 0.0
    %v1400 = vmax.f32 %v1156, 0.0
    %v1401 = vmax.f32 %v1159, 0.0
    %v1402 = vmax.f32 %v1164, 0.0
    %v1403 = vmax.f32 %v1167, 0.0
    %v1404 = vmax.f32 %v1172, 0.0
    %v1405 = vmax.f32 %v1175, 0.0
    %v1406 = vmax.f32 %v1180, 0.0
    %v1407 = vmax.f32 %v1183, 0.0
    %v1408 = vmax.f32 %v1188, 0.0
    %v1409 = vmax.f32 %v1191, 0.0
    %v1410 = vmax.f32 %v1196, 0.0
    %v1411 = vmax.f32 %v1199, 0.0
    %v1412 = vmax.f32 %v1204, 0.0
    %v1413 = vmax.f32 %v1207, 0.0
    %v1414 = vmax.f32 %v1212, 0.0
    %v1415 = vmax.f32 %v1215, 0.0
    %v1416 = vmax.f32 %v1220, 0.0
    %v1417 = vmax.f32 %v1223, 0.0
    %v1418 = vmax.f32 %v1228, 0.0
    %v1419 = vmax.f32 %v1231, 0.0
    %v1420 = vmax.f32 %v1236, 0.0
    %v1421 = vmax.f32 %v1239, 0.0
    %v1422 = vmax.f32 %v1244, 0.0
    %v1423 = vmax.f32 %v1247, 0.0
    %v1424 = vmax.f32 %v1252, 0.0
    %v1425 = vmax.f32 %v1255, 0.0
    %v1426 = vmax.f32 %v1260, 0.0
    %v1427 = vmax.f32 %v1263, 0.0
    %v1428 = vmax.f32 %v1268, 0.0
    %v1429 = vmax.f32 %v1271, 0.0
    %v1430 = vmax.f32 %v1276, 0.0
    %v1431 = vmax.f32 %v1279, 0.0
    %v1432 = vmax.f32 %v1284, 0.0
    %v1433 = vmax.f32 %v1287, 0.0
    %1434 = vst [vmem:[#allocation2] sm:$0xff] %v1290
    %1435 = vst [vmem:[#allocation2 + $0x8] sm:$0xff] %v1291
    %1436 = vst [vmem:[#allocation2 + $0x10] sm:$0xff] %v1292
    %1437 = vst [vmem:[#allocation2 + $0x18] sm:$0xff] %v1293
    %1438 = vst [vmem:[#allocation2 + $0x20] sm:$0xff] %v1294
    %1439 = vst [vmem:[#allocation2 + $0x28] sm:$0xff] %v1295
    %1440 = vst [vmem:[#allocation2 + $0x30] sm:$0xff] %v1296
    %1441 = vst [vmem:[#allocation2 + $0x38] sm:$0xff] %v1297
    %1442 = vst [vmem:[#allocation2 + $0x40] sm:$0xff] %v1298
    %1443 = vst [vmem:[#allocation2 + $0x48] sm:$0xff] %v1299
    %1444 = vst [vmem:[#allocation2 + $0x50] sm:$0xff] %v1300
    %1445 = vst [vmem:[#allocation2 + $0x58] sm:$0xff] %v1301
    %1446 = vst [vmem:[#allocation2 + $0x60] sm:$0xff] %v1302
    %1447 = vst [vmem:[#allocation2 + $0x68] sm:$0xff] %v1303
    %1448 = vst [vmem:[#allocation2 + $0x70] sm:$0xff] %v1304
    %1449 = vst [vmem:[#allocation2 + $0x78] sm:$0xff] %v1305
    %1450 = vst [vmem:[#allocation2 + $0x80] sm:$0xff] %v1306
    %1451 = vst [vmem:[#allocation2 + $0x88] sm:$0xff] %v1307
    %1452 = vst [vmem:[#allocation2 + $0x90] sm:$0xff] %v1308
    %1453 = vst [vmem:[#allocation2 + $0x98] sm:$0xff] %v1309
    %1454 = vst [vmem:[#allocation2 + $0xa0] sm:$0xff] %v1310
    %1455 = vst [vmem:[#allocation2 + $0xa8] sm:$0xff] %v1311
    %1456 = vst [vmem:[#allocation2 + $0xb0] sm:$0xff] %v1312
    %1457 = vst [vmem:[#allocation2 + $0xb8] sm:$0xff] %v1313
    %1458 = vst [vmem:[#allocation2 + $0xc0] sm:$0xff] %v1314
    %1459 = vst [vmem:[#allocation2 + $0xc8] sm:$0xff] %v1315
    %1460 = vst [vmem:[#allocation2 + $0xd0] sm:$0xff] %v1316
    %1461 = vst [vmem:[#allocation2 + $0xd8] sm:$0xff] %v1317
    %1462 = vst [vmem:[#allocation2 + $0xe0] sm:$0xff] %v1318
    %1463 = vst [vmem:[#allocation2 + $0xe8] sm:$0xff] %v1319
    %1464 = vst [vmem:[#allocation2 + $0xf0] sm:$0xff] %v1320
    %1465 = vst [vmem:[#allocation2 + $0xf8] sm:$0xff] %v1321
    %1466 = vst [vmem:[#allocation2 + $0x100] sm:$0xff] %v1322
    %1467 = vst [vmem:[#allocation2 + $0x108] sm:$0xff] %v1323
    %1468 = vst [vmem:[#allocation2 + $0x110] sm:$0xff] %v1324
    %1469 = vst [vmem:[#allocation2 + $0x118] sm:$0xff] %v1325
    %1470 = vst [vmem:[#allocation2 + $0x120] sm:$0xff] %v1326
    %1471 = vst [vmem:[#allocation2 + $0x128] sm:$0xff] %v1327
    %1472 = vst [vmem:[#allocation2 + $0x130] sm:$0xff] %v1328
    %1473 = vst [vmem:[#allocation2 + $0x138] sm:$0xff] %v1329
    %1474 = vst [vmem:[#allocation2 + $0x140] sm:$0xff] %v1330
    %1475 = vst [vmem:[#allocation2 + $0x148] sm:$0xff] %v1331
    %1476 = vst [vmem:[#allocation2 + $0x150] sm:$0xff] %v1332
    %1477 = vst [vmem:[#allocation2 + $0x158] sm:$0xff] %v1333
    %1478 = vst [vmem:[#allocation2 + $0x160] sm:$0xff] %v1334
    %1479 = vst [vmem:[#allocation2 + $0x168] sm:$0xff] %v1335
    %1480 = vst [vmem:[#allocation2 + $0x170] sm:$0xff] %v1336
    %1481 = vst [vmem:[#allocation2 + $0x178] sm:$0xff] %v1337
    %1482 = vst [vmem:[#allocation2 + $0x180] sm:$0xff] %v1338
    %1483 = vst [vmem:[#allocation2 + $0x188] sm:$0xff] %v1339
    %1484 = vst [vmem:[#allocation2 + $0x190] sm:$0xff] %v1340
    %1485 = vst [vmem:[#allocation2 + $0x198] sm:$0xff] %v1341
    %1486 = vst [vmem:[#allocation2 + $0x1a0] sm:$0xff] %v1342
    %1487 = vst [vmem:[#allocation2 + $0x1a8] sm:$0xff] %v1343
    %1488 = vst [vmem:[#allocation2 + $0x1b0] sm:$0xff] %v1344
    %1489 = vst [vmem:[#allocation2 + $0x1b8] sm:$0xff] %v1345
    %1490 = vst [vmem:[#allocation2 + $0x1c0] sm:$0xff] %v1346
    %1491 = vst [vmem:[#allocation2 + $0x1c8] sm:$0xff] %v1347
    %1492 = vst [vmem:[#allocation2 + $0x1d0] sm:$0xff] %v1348
    %1493 = vst [vmem:[#allocation2 + $0x1d8] sm:$0xff] %v1349
    %1494 = vst [vmem:[#allocation2 + $0x1e0] sm:$0xff] %v1350
    %1495 = vst [vmem:[#allocation2 + $0x1e8] sm:$0xff] %v1351
    %1496 = vst [vmem:[#allocation2 + $0x1f0] sm:$0xff] %v1352
    %1497 = vst [vmem:[#allocation2 + $0x1f8] sm:$0xff] %v1353
    %1498 = vst [vmem:[#allocation2 + $0x200] sm:$0xff] %v1354
    %1499 = vst [vmem:[#allocation2 + $0x208] sm:$0xff] %v1355
    %1500 = vst [vmem:[#allocation2 + $0x210] sm:$0xff] %v1356
    %1501 = vst [vmem:[#allocation2 + $0x218] sm:$0xff] %v1357
    %1502 = vst [vmem:[#allocation2 + $0x220] sm:$0xff] %v1358
    %1503 = vst [vmem:[#allocation2 + $0x228] sm:$0xff] %v1359
    %1504 = vst [vmem:[#allocation2 + $0x230] sm:$0xff] %v1360
    %1505 = vst [vmem:[#allocation2 + $0x238] sm:$0xff] %v1361
    %1506 = vst [vmem:[#allocation2 + $0x240] sm:$0xff] %v1362
    %1507 = vst [vmem:[#allocation2 + $0x248] sm:$0xff] %v1363
    %1508 = vst [vmem:[#allocation2 + $0x250] sm:$0xff] %v1364
    %1509 = vst [vmem:[#allocation2 + $0x258] sm:$0xff] %v1365
    %1510 = vst [vmem:[#allocation2 + $0x260] sm:$0xff] %v1366
    %1511 = vst [vmem:[#allocation2 + $0x268] sm:$0xff] %v1367
    %1512 = vst [vmem:[#allocation2 + $0x270] sm:$0xff] %v1368
    %1513 = vst [vmem:[#allocation2 + $0x278] sm:$0xff] %v1369
    %1514 = vst [vmem:[#allocation2 + $0x280] sm:$0xff] %v1370
    %1515 = vst [vmem:[#allocation2 + $0x288] sm:$0xff] %v1371
    %1516 = vst [vmem:[#allocation2 + $0x290] sm:$0xff] %v1372
    %1517 = vst [vmem:[#allocation2 + $0x298] sm:$0xff] %v1373
    %1518 = vst [vmem:[#allocation2 + $0x2a0] sm:$0xff] %v1374
    %1519 = vst [vmem:[#allocation2 + $0x2a8] sm:$0xff] %v1375
    %1520 = vst [vmem:[#allocation2 + $0x2b0] sm:$0xff] %v1376
    %1521 = vst [vmem:[#allocation2 + $0x2b8] sm:$0xff] %v1377
    %1522 = vst [vmem:[#allocation2 + $0x2c0] sm:$0xff] %v1378
    %1523 = vst [vmem:[#allocation2 + $0x2c8] sm:$0xff] %v1379
    %1524 = vst [vmem:[#allocation2 + $0x2d0] sm:$0xff] %v1380
    %1525 = vst [vmem:[#allocation2 + $0x2d8] sm:$0xff] %v1381
    %1526 = vst [vmem:[#allocation2 + $0x2e0] sm:$0xff] %v1382
    %1527 = vst [vmem:[#allocation2 + $0x2e8] sm:$0xff] %v1383
    %1528 = vst [vmem:[#allocation2 + $0x2f0] sm:$0xff] %v1384
    %1529 = vst [vmem:[#allocation2 + $0x2f8] sm:$0xff] %v1385
    %1530 = vst [vmem:[#allocation2 + $0x300] sm:$0xff] %v1386
    %1531 = vst [vmem:[#allocation2 + $0x308] sm:$0xff] %v1387
    %1532 = vst [vmem:[#allocation2 + $0x310] sm:$0xff] %v1388
    %1533 = vst [vmem:[#allocation2 + $0x318] sm:$0xff] %v1389
    %1534 = vst [vmem:[#allocation2 + $0x320] sm:$0xff] %v1390
    %1535 = vst [vmem:[#allocation2 + $0x328] sm:$0xff] %v1391
    %1536 = vst [vmem:[#allocation2 + $0x330] sm:$0xff] %v1392
    %1537 = vst [vmem:[#allocation2 + $0x338] sm:$0xff] %v1393
    %1538 = vst [vmem:[#allocation2 + $0x340] sm:$0xff] %v1394
    %1539 = vst [vmem:[#allocation2 + $0x348] sm:$0xff] %v1395
    %1540 = vst [vmem:[#allocation2 + $0x350] sm:$0xff] %v1396
    %1541 = vst [vmem:[#allocation2 + $0x358] sm:$0xff] %v1397
    %1542 = vst [vmem:[#allocation2 + $0x360] sm:$0xff] %v1398
    %1543 = vst [vmem:[#allocation2 + $0x368] sm:$0xff] %v1399
    %1544 = vst [vmem:[#allocation2 + $0x370] sm:$0xff] %v1400
    %1545 = vst [vmem:[#allocation2 + $0x378] sm:$0xff] %v1401
    %1546 = vst [vmem:[#allocation2 + $0x380] sm:$0xff] %v1402
    %1547 = vst [vmem:[#allocation2 + $0x388] sm:$0xff] %v1403
    %1548 = vst [vmem:[#allocation2 + $0x390] sm:$0xff] %v1404
    %1549 = vst [vmem:[#allocation2 + $0x398] sm:$0xff] %v1405
    %1550 = vst [vmem:[#allocation2 + $0x3a0] sm:$0xff] %v1406
    %1551 = vst [vmem:[#allocation2 + $0x3a8] sm:$0xff] %v1407
    %1552 = vst [vmem:[#allocation2 + $0x3b0] sm:$0xff] %v1408
    %1553 = vst [vmem:[#allocation2 + $0x3b8] sm:$0xff] %v1409
    %1554 = vst [vmem:[#allocation2 + $0x3c0] sm:$0xff] %v1410
    %1555 = vst [vmem:[#allocation2 + $0x3c8] sm:$0xff] %v1411
    %1556 = vst [vmem:[#allocation2 + $0x3d0] sm:$0xff] %v1412
    %1557 = vst [vmem:[#allocation2 + $0x3d8] sm:$0xff] %v1413
    %1558 = vst [vmem:[#allocation2 + $0x3e0] sm:$0xff] %v1414
    %1559 = vst [vmem:[#allocation2 + $0x3e8] sm:$0xff] %v1415
    %1560 = vst [vmem:[#allocation2 + $0x3f0] sm:$0xff] %v1416
    %1561 = vst [vmem:[#allocation2 + $0x3f8] sm:$0xff] %v1417
    %1562 = vst [vmem:[#allocation2 + $0x400] sm:$0xff] %v1418
    %1563 = vst [vmem:[#allocation2 + $0x408] sm:$0xff] %v1419
    %1564 = vst [vmem:[#allocation2 + $0x410] sm:$0xff] %v1420
    %1565 = vst [vmem:[#allocation2 + $0x418] sm:$0xff] %v1421
    %1566 = vst [vmem:[#allocation2 + $0x420] sm:$0xff] %v1422
    %1567 = vst [vmem:[#allocation2 + $0x428] sm:$0xff] %v1423
    %1568 = vst [vmem:[#allocation2 + $0x430] sm:$0xff] %v1424
    %1569 = vst [vmem:[#allocation2 + $0x438] sm:$0xff] %v1425
    %1570 = vst [vmem:[#allocation2 + $0x440] sm:$0xff] %v1426
    %1571 = vst [vmem:[#allocation2 + $0x448] sm:$0xff] %v1427
    %1572 = vst [vmem:[#allocation2 + $0x450] sm:$0xff] %v1428
    %1573 = vst [vmem:[#allocation2 + $0x458] sm:$0xff] %v1429
    %1574 = vst [vmem:[#allocation2 + $0x460] sm:$0xff] %v1430
    %1575 = vst [vmem:[#allocation2 + $0x468] sm:$0xff] %v1431
    %1576 = vst [vmem:[#allocation2 + $0x470] sm:$0xff] %v1432
    %1577 = vst [vmem:[#allocation2 + $0x478] sm:$0xff] %v1433
    %v1578 = vld [vmem:[#allocation2] ss:$2 sm:$0xff]
    %s1579 = scalar_lea.vmem [#allocation2], 16
    %v1580 = vld [vmem:[%s1579] ss:$2 sm:$0xf]
    %s1581 = scalar_lea.vmem [#allocation2], 24
    %v1582 = vld [vmem:[%s1581] ss:$2 sm:$0xff]
    %s1583 = scalar_lea.vmem [#allocation2], 40
    %v1584 = vld [vmem:[%s1583] ss:$2 sm:$0xf]
    %s1585 = scalar_lea.vmem [#allocation2], 48
    %v1586 = vld [vmem:[%s1585] ss:$2 sm:$0xff]
    %s1587 = scalar_lea.vmem [#allocation2], 64
    %v1588 = vld [vmem:[%s1587] ss:$2 sm:$0xf]
    %s1589 = scalar_lea.vmem [#allocation2], 72
    %v1590 = vld [vmem:[%s1589] ss:$2 sm:$0xff]
    %s1591 = scalar_lea.vmem [#allocation2], 88
    %v1592 = vld [vmem:[%s1591] ss:$2 sm:$0xf]
    %s1593 = scalar_lea.vmem [#allocation2], 96
    %v1594 = vld [vmem:[%s1593] ss:$2 sm:$0xff]
    %s1595 = scalar_lea.vmem [#allocation2], 112
    %v1596 = vld [vmem:[%s1595] ss:$2 sm:$0xf]
    %s1597 = scalar_lea.vmem [#allocation2], 120
    %v1598 = vld [vmem:[%s1597] ss:$2 sm:$0xff]
    %s1599 = scalar_lea.vmem [#allocation2], 136
    %v1600 = vld [vmem:[%s1599] ss:$2 sm:$0xf]
    %s1601 = scalar_lea.vmem [#allocation2], 144
    %v1602 = vld [vmem:[%s1601] ss:$2 sm:$0xff]
    %s1603 = scalar_lea.vmem [#allocation2], 160
    %v1604 = vld [vmem:[%s1603] ss:$2 sm:$0xf]
    %s1605 = scalar_lea.vmem [#allocation2], 168
    %v1606 = vld [vmem:[%s1605] ss:$2 sm:$0xff]
    %s1607 = scalar_lea.vmem [#allocation2], 184
    %v1608 = vld [vmem:[%s1607] ss:$2 sm:$0xf]
    %s1609 = scalar_lea.vmem [#allocation2], 192
    %v1610 = vld [vmem:[%s1609] ss:$2 sm:$0xff]
    %s1611 = scalar_lea.vmem [#allocation2], 208
    %v1612 = vld [vmem:[%s1611] ss:$2 sm:$0xf]
    %s1613 = scalar_lea.vmem [#allocation2], 216
    %v1614 = vld [vmem:[%s1613] ss:$2 sm:$0xff]
    %s1615 = scalar_lea.vmem [#allocation2], 232
    %v1616 = vld [vmem:[%s1615] ss:$2 sm:$0xf]
    %s1617 = scalar_lea.vmem [#allocation2], 240
    %v1618 = vld [vmem:[%s1617] ss:$2 sm:$0xff]
    %s1619 = scalar_lea.vmem [#allocation2], 256
    %v1620 = vld [vmem:[%s1619] ss:$2 sm:$0xf]
    %s1621 = scalar_lea.vmem [#allocation2], 264
    %v1622 = vld [vmem:[%s1621] ss:$2 sm:$0xff]
    %s1623 = scalar_lea.vmem [#allocation2], 280
    %v1624 = vld [vmem:[%s1623] ss:$2 sm:$0xf]
    %s1625 = scalar_lea.vmem [#allocation2], 288
    %v1626 = vld [vmem:[%s1625] ss:$2 sm:$0xff]
    %s1627 = scalar_lea.vmem [#allocation2], 304
    %v1628 = vld [vmem:[%s1627] ss:$2 sm:$0xf]
    %s1629 = scalar_lea.vmem [#allocation2], 312
    %v1630 = vld [vmem:[%s1629] ss:$2 sm:$0xff]
    %s1631 = scalar_lea.vmem [#allocation2], 328
    %v1632 = vld [vmem:[%s1631] ss:$2 sm:$0xf]
    %s1633 = scalar_lea.vmem [#allocation2], 336
    %v1634 = vld [vmem:[%s1633] ss:$2 sm:$0xff]
    %s1635 = scalar_lea.vmem [#allocation2], 352
    %v1636 = vld [vmem:[%s1635] ss:$2 sm:$0xf]
    %s1637 = scalar_lea.vmem [#allocation2], 360
    %v1638 = vld [vmem:[%s1637] ss:$2 sm:$0xff]
    %s1639 = scalar_lea.vmem [#allocation2], 376
    %v1640 = vld [vmem:[%s1639] ss:$2 sm:$0xf]
    %s1641 = scalar_lea.vmem [#allocation2], 384
    %v1642 = vld [vmem:[%s1641] ss:$2 sm:$0xff]
    %s1643 = scalar_lea.vmem [#allocation2], 400
    %v1644 = vld [vmem:[%s1643] ss:$2 sm:$0xf]
    %s1645 = scalar_lea.vmem [#allocation2], 408
    %v1646 = vld [vmem:[%s1645] ss:$2 sm:$0xff]
    %s1647 = scalar_lea.vmem [#allocation2], 424
    %v1648 = vld [vmem:[%s1647] ss:$2 sm:$0xf]
    %s1649 = scalar_lea.vmem [#allocation2], 432
    %v1650 = vld [vmem:[%s1649] ss:$2 sm:$0xff]
    %s1651 = scalar_lea.vmem [#allocation2], 448
    %v1652 = vld [vmem:[%s1651] ss:$2 sm:$0xf]
    %s1653 = scalar_lea.vmem [#allocation2], 456
    %v1654 = vld [vmem:[%s1653] ss:$2 sm:$0xff]
    %s1655 = scalar_lea.vmem [#allocation2], 472
    %v1656 = vld [vmem:[%s1655] ss:$2 sm:$0xf]
    %s1657 = scalar_lea.vmem [#allocation2], 480
    %v1658 = vld [vmem:[%s1657] ss:$2 sm:$0xff]
    %s1659 = scalar_lea.vmem [#allocation2], 496
    %v1660 = vld [vmem:[%s1659] ss:$2 sm:$0xf]
    %s1661 = scalar_lea.vmem [#allocation2], 504
    %v1662 = vld [vmem:[%s1661] ss:$2 sm:$0xff]
    %s1663 = scalar_lea.vmem [#allocation2], 520
    %v1664 = vld [vmem:[%s1663] ss:$2 sm:$0xf]
    %s1665 = scalar_lea.vmem [#allocation2], 528
    %v1666 = vld [vmem:[%s1665] ss:$2 sm:$0xff]
    %s1667 = scalar_lea.vmem [#allocation2], 544
    %v1668 = vld [vmem:[%s1667] ss:$2 sm:$0xf]
    %s1669 = scalar_lea.vmem [#allocation2], 552
    %v1670 = vld [vmem:[%s1669] ss:$2 sm:$0xff]
    %s1671 = scalar_lea.vmem [#allocation2], 568
    %v1672 = vld [vmem:[%s1671] ss:$2 sm:$0xf]
    %s1673 = scalar_lea.vmem [#allocation2], 576
    %v1674 = vld [vmem:[%s1673] ss:$2 sm:$0xff]
    %s1675 = scalar_lea.vmem [#allocation2], 592
    %v1676 = vld [vmem:[%s1675] ss:$2 sm:$0xf]
    %s1677 = scalar_lea.vmem [#allocation2], 600
    %v1678 = vld [vmem:[%s1677] ss:$2 sm:$0xff]
    %s1679 = scalar_lea.vmem [#allocation2], 616
    %v1680 = vld [vmem:[%s1679] ss:$2 sm:$0xf]
    %s1681 = scalar_lea.vmem [#allocation2], 624
    %v1682 = vld [vmem:[%s1681] ss:$2 sm:$0xff]
    %s1683 = scalar_lea.vmem [#allocation2], 640
    %v1684 = vld [vmem:[%s1683] ss:$2 sm:$0xf]
    %s1685 = scalar_lea.vmem [#allocation2], 648
    %v1686 = vld [vmem:[%s1685] ss:$2 sm:$0xff]
    %s1687 = scalar_lea.vmem [#allocation2], 664
    %v1688 = vld [vmem:[%s1687] ss:$2 sm:$0xf]
    %s1689 = scalar_lea.vmem [#allocation2], 672
    %v1690 = vld [vmem:[%s1689] ss:$2 sm:$0xff]
    %s1691 = scalar_lea.vmem [#allocation2], 688
    %v1692 = vld [vmem:[%s1691] ss:$2 sm:$0xf]
    %s1693 = scalar_lea.vmem [#allocation2], 696
    %v1694 = vld [vmem:[%s1693] ss:$2 sm:$0xff]
    %s1695 = scalar_lea.vmem [#allocation2], 712
    %v1696 = vld [vmem:[%s1695] ss:$2 sm:$0xf]
    %s1697 = scalar_lea.vmem [#allocation2], 720
    %v1698 = vld [vmem:[%s1697] ss:$2 sm:$0xff]
    %s1699 = scalar_lea.vmem [#allocation2], 736
    %v1700 = vld [vmem:[%s1699] ss:$2 sm:$0xf]
    %s1701 = scalar_lea.vmem [#allocation2], 744
    %v1702 = vld [vmem:[%s1701] ss:$2 sm:$0xff]
    %s1703 = scalar_lea.vmem [#allocation2], 760
    %v1704 = vld [vmem:[%s1703] ss:$2 sm:$0xf]
    %s1705 = scalar_lea.vmem [#allocation2], 768
    %v1706 = vld [vmem:[%s1705] ss:$2 sm:$0xff]
    %s1707 = scalar_lea.vmem [#allocation2], 784
    %v1708 = vld [vmem:[%s1707] ss:$2 sm:$0xf]
    %s1709 = scalar_lea.vmem [#allocation2], 792
    %v1710 = vld [vmem:[%s1709] ss:$2 sm:$0xff]
    %s1711 = scalar_lea.vmem [#allocation2], 808
    %v1712 = vld [vmem:[%s1711] ss:$2 sm:$0xf]
    %s1713 = scalar_lea.vmem [#allocation2], 816
    %v1714 = vld [vmem:[%s1713] ss:$2 sm:$0xff]
    %s1715 = scalar_lea.vmem [#allocation2], 832
    %v1716 = vld [vmem:[%s1715] ss:$2 sm:$0xf]
    %s1717 = scalar_lea.vmem [#allocation2], 840
    %v1718 = vld [vmem:[%s1717] ss:$2 sm:$0xff]
    %s1719 = scalar_lea.vmem [#allocation2], 856
    %v1720 = vld [vmem:[%s1719] ss:$2 sm:$0xf]
    %s1721 = scalar_lea.vmem [#allocation2], 864
    %v1722 = vld [vmem:[%s1721] ss:$2 sm:$0xff]
    %s1723 = scalar_lea.vmem [#allocation2], 880
    %v1724 = vld [vmem:[%s1723] ss:$2 sm:$0xf]
    %s1725 = scalar_lea.vmem [#allocation2], 888
    %v1726 = vld [vmem:[%s1725] ss:$2 sm:$0xff]
    %s1727 = scalar_lea.vmem [#allocation2], 904
    %v1728 = vld [vmem:[%s1727] ss:$2 sm:$0xf]
    %s1729 = scalar_lea.vmem [#allocation2], 912
    %v1730 = vld [vmem:[%s1729] ss:$2 sm:$0xff]
    %s1731 = scalar_lea.vmem [#allocation2], 928
    %v1732 = vld [vmem:[%s1731] ss:$2 sm:$0xf]
    %s1733 = scalar_lea.vmem [#allocation2], 936
    %v1734 = vld [vmem:[%s1733] ss:$2 sm:$0xff]
    %s1735 = scalar_lea.vmem [#allocation2], 952
    %v1736 = vld [vmem:[%s1735] ss:$2 sm:$0xf]
    %s1737 = scalar_lea.vmem [#allocation2], 960
    %v1738 = vld [vmem:[%s1737] ss:$2 sm:$0xff]
    %s1739 = scalar_lea.vmem [#allocation2], 976
    %v1740 = vld [vmem:[%s1739] ss:$2 sm:$0xf]
    %s1741 = scalar_lea.vmem [#allocation2], 984
    %v1742 = vld [vmem:[%s1741] ss:$2 sm:$0xff]
    %s1743 = scalar_lea.vmem [#allocation2], 1000
    %v1744 = vld [vmem:[%s1743] ss:$2 sm:$0xf]
    %s1745 = scalar_lea.vmem [#allocation2], 1008
    %v1746 = vld [vmem:[%s1745] ss:$2 sm:$0xff]
    %s1747 = scalar_lea.vmem [#allocation2], 1024
    %v1748 = vld [vmem:[%s1747] ss:$2 sm:$0xf]
    %s1749 = scalar_lea.vmem [#allocation2], 1032
    %v1750 = vld [vmem:[%s1749] ss:$2 sm:$0xff]
    %s1751 = scalar_lea.vmem [#allocation2], 1048
    %v1752 = vld [vmem:[%s1751] ss:$2 sm:$0xf]
    %s1753 = scalar_lea.vmem [#allocation2], 1056
    %v1754 = vld [vmem:[%s1753] ss:$2 sm:$0xff]
    %s1755 = scalar_lea.vmem [#allocation2], 1072
    %v1756 = vld [vmem:[%s1755] ss:$2 sm:$0xf]
    %s1757 = scalar_lea.vmem [#allocation2], 1080
    %v1758 = vld [vmem:[%s1757] ss:$2 sm:$0xff]
    %s1759 = scalar_lea.vmem [#allocation2], 1096
    %v1760 = vld [vmem:[%s1759] ss:$2 sm:$0xf]
    %s1761 = scalar_lea.vmem [#allocation2], 1104
    %v1762 = vld [vmem:[%s1761] ss:$2 sm:$0xff]
    %s1763 = scalar_lea.vmem [#allocation2], 1120
    %v1764 = vld [vmem:[%s1763] ss:$2 sm:$0xf]
    %s1765 = scalar_lea.vmem [#allocation2], 1128
    %v1766 = vld [vmem:[%s1765] ss:$2 sm:$0xff]
    %s1767 = scalar_lea.vmem [#allocation2], 1144
    %v1768 = vld [vmem:[%s1767] ss:$2 sm:$0xf]
    %s1769 = scalar_lea.vmem [#allocation2], 1
    %v1770 = vld [vmem:[%s1769] ss:$2 sm:$0xff]
    %s1771 = scalar_lea.vmem [#allocation2], 17
    %v1772 = vld [vmem:[%s1771] ss:$2 sm:$0xf]
    %s1773 = scalar_lea.vmem [#allocation2], 25
    %v1774 = vld [vmem:[%s1773] ss:$2 sm:$0xff]
    %s1775 = scalar_lea.vmem [#allocation2], 41
    %v1776 = vld [vmem:[%s1775] ss:$2 sm:$0xf]
    %s1777 = scalar_lea.vmem [#allocation2], 49
    %v1778 = vld [vmem:[%s1777] ss:$2 sm:$0xff]
    %s1779 = scalar_lea.vmem [#allocation2], 65
    %v1780 = vld [vmem:[%s1779] ss:$2 sm:$0xf]
    %s1781 = scalar_lea.vmem [#allocation2], 73
    %v1782 = vld [vmem:[%s1781] ss:$2 sm:$0xff]
    %s1783 = scalar_lea.vmem [#allocation2], 89
    %v1784 = vld [vmem:[%s1783] ss:$2 sm:$0xf]
    %s1785 = scalar_lea.vmem [#allocation2], 97
    %v1786 = vld [vmem:[%s1785] ss:$2 sm:$0xff]
    %s1787 = scalar_lea.vmem [#allocation2], 113
    %v1788 = vld [vmem:[%s1787] ss:$2 sm:$0xf]
    %s1789 = scalar_lea.vmem [#allocation2], 121
    %v1790 = vld [vmem:[%s1789] ss:$2 sm:$0xff]
    %s1791 = scalar_lea.vmem [#allocation2], 137
    %v1792 = vld [vmem:[%s1791] ss:$2 sm:$0xf]
    %s1793 = scalar_lea.vmem [#allocation2], 145
    %v1794 = vld [vmem:[%s1793] ss:$2 sm:$0xff]
    %s1795 = scalar_lea.vmem [#allocation2], 161
    %v1796 = vld [vmem:[%s1795] ss:$2 sm:$0xf]
    %s1797 = scalar_lea.vmem [#allocation2], 169
    %v1798 = vld [vmem:[%s1797] ss:$2 sm:$0xff]
    %s1799 = scalar_lea.vmem [#allocation2], 185
    %v1800 = vld [vmem:[%s1799] ss:$2 sm:$0xf]
    %s1801 = scalar_lea.vmem [#allocation2], 193
    %v1802 = vld [vmem:[%s1801] ss:$2 sm:$0xff]
    %s1803 = scalar_lea.vmem [#allocation2], 209
    %v1804 = vld [vmem:[%s1803] ss:$2 sm:$0xf]
    %s1805 = scalar_lea.vmem [#allocation2], 217
    %v1806 = vld [vmem:[%s1805] ss:$2 sm:$0xff]
    %s1807 = scalar_lea.vmem [#allocation2], 233
    %v1808 = vld [vmem:[%s1807] ss:$2 sm:$0xf]
    %s1809 = scalar_lea.vmem [#allocation2], 241
    %v1810 = vld [vmem:[%s1809] ss:$2 sm:$0xff]
    %s1811 = scalar_lea.vmem [#allocation2], 257
    %v1812 = vld [vmem:[%s1811] ss:$2 sm:$0xf]
    %s1813 = scalar_lea.vmem [#allocation2], 265
    %v1814 = vld [vmem:[%s1813] ss:$2 sm:$0xff]
    %s1815 = scalar_lea.vmem [#allocation2], 281
    %v1816 = vld [vmem:[%s1815] ss:$2 sm:$0xf]
    %s1817 = scalar_lea.vmem [#allocation2], 289
    %v1818 = vld [vmem:[%s1817] ss:$2 sm:$0xff]
    %s1819 = scalar_lea.vmem [#allocation2], 305
    %v1820 = vld [vmem:[%s1819] ss:$2 sm:$0xf]
    %s1821 = scalar_lea.vmem [#allocation2], 313
    %v1822 = vld [vmem:[%s1821] ss:$2 sm:$0xff]
    %s1823 = scalar_lea.vmem [#allocation2], 329
    %v1824 = vld [vmem:[%s1823] ss:$2 sm:$0xf]
    %s1825 = scalar_lea.vmem [#allocation2], 337
    %v1826 = vld [vmem:[%s1825] ss:$2 sm:$0xff]
    %s1827 = scalar_lea.vmem [#allocation2], 353
    %v1828 = vld [vmem:[%s1827] ss:$2 sm:$0xf]
    %s1829 = scalar_lea.vmem [#allocation2], 361
    %v1830 = vld [vmem:[%s1829] ss:$2 sm:$0xff]
    %s1831 = scalar_lea.vmem [#allocation2], 377
    %v1832 = vld [vmem:[%s1831] ss:$2 sm:$0xf]
    %s1833 = scalar_lea.vmem [#allocation2], 385
    %v1834 = vld [vmem:[%s1833] ss:$2 sm:$0xff]
    %s1835 = scalar_lea.vmem [#allocation2], 401
    %v1836 = vld [vmem:[%s1835] ss:$2 sm:$0xf]
    %s1837 = scalar_lea.vmem [#allocation2], 409
    %v1838 = vld [vmem:[%s1837] ss:$2 sm:$0xff]
    %s1839 = scalar_lea.vmem [#allocation2], 425
    %v1840 = vld [vmem:[%s1839] ss:$2 sm:$0xf]
    %s1841 = scalar_lea.vmem [#allocation2], 433
    %v1842 = vld [vmem:[%s1841] ss:$2 sm:$0xff]
    %s1843 = scalar_lea.vmem [#allocation2], 449
    %v1844 = vld [vmem:[%s1843] ss:$2 sm:$0xf]
    %s1845 = scalar_lea.vmem [#allocation2], 457
    %v1846 = vld [vmem:[%s1845] ss:$2 sm:$0xff]
    %s1847 = scalar_lea.vmem [#allocation2], 473
    %v1848 = vld [vmem:[%s1847] ss:$2 sm:$0xf]
    %s1849 = scalar_lea.vmem [#allocation2], 481
    %v1850 = vld [vmem:[%s1849] ss:$2 sm:$0xff]
    %s1851 = scalar_lea.vmem [#allocation2], 497
    %v1852 = vld [vmem:[%s1851] ss:$2 sm:$0xf]
    %s1853 = scalar_lea.vmem [#allocation2], 505
    %v1854 = vld [vmem:[%s1853] ss:$2 sm:$0xff]
    %s1855 = scalar_lea.vmem [#allocation2], 521
    %v1856 = vld [vmem:[%s1855] ss:$2 sm:$0xf]
    %s1857 = scalar_lea.vmem [#allocation2], 529
    %v1858 = vld [vmem:[%s1857] ss:$2 sm:$0xff]
    %s1859 = scalar_lea.vmem [#allocation2], 545
    %v1860 = vld [vmem:[%s1859] ss:$2 sm:$0xf]
    %s1861 = scalar_lea.vmem [#allocation2], 553
    %v1862 = vld [vmem:[%s1861] ss:$2 sm:$0xff]
    %s1863 = scalar_lea.vmem [#allocation2], 569
    %v1864 = vld [vmem:[%s1863] ss:$2 sm:$0xf]
    %s1865 = scalar_lea.vmem [#allocation2], 577
    %v1866 = vld [vmem:[%s1865] ss:$2 sm:$0xff]
    %s1867 = scalar_lea.vmem [#allocation2], 593
    %v1868 = vld [vmem:[%s1867] ss:$2 sm:$0xf]
    %s1869 = scalar_lea.vmem [#allocation2], 601
    %v1870 = vld [vmem:[%s1869] ss:$2 sm:$0xff]
    %s1871 = scalar_lea.vmem [#allocation2], 617
    %v1872 = vld [vmem:[%s1871] ss:$2 sm:$0xf]
    %s1873 = scalar_lea.vmem [#allocation2], 625
    %v1874 = vld [vmem:[%s1873] ss:$2 sm:$0xff]
    %s1875 = scalar_lea.vmem [#allocation2], 641
    %v1876 = vld [vmem:[%s1875] ss:$2 sm:$0xf]
    %s1877 = scalar_lea.vmem [#allocation2], 649
    %v1878 = vld [vmem:[%s1877] ss:$2 sm:$0xff]
    %s1879 = scalar_lea.vmem [#allocation2], 665
    %v1880 = vld [vmem:[%s1879] ss:$2 sm:$0xf]
    %s1881 = scalar_lea.vmem [#allocation2], 673
    %v1882 = vld [vmem:[%s1881] ss:$2 sm:$0xff]
    %s1883 = scalar_lea.vmem [#allocation2], 689
    %v1884 = vld [vmem:[%s1883] ss:$2 sm:$0xf]
    %s1885 = scalar_lea.vmem [#allocation2], 697
    %v1886 = vld [vmem:[%s1885] ss:$2 sm:$0xff]
    %s1887 = scalar_lea.vmem [#allocation2], 713
    %v1888 = vld [vmem:[%s1887] ss:$2 sm:$0xf]
    %s1889 = scalar_lea.vmem [#allocation2], 721
    %v1890 = vld [vmem:[%s1889] ss:$2 sm:$0xff]
    %s1891 = scalar_lea.vmem [#allocation2], 737
    %v1892 = vld [vmem:[%s1891] ss:$2 sm:$0xf]
    %s1893 = scalar_lea.vmem [#allocation2], 745
    %v1894 = vld [vmem:[%s1893] ss:$2 sm:$0xff]
    %s1895 = scalar_lea.vmem [#allocation2], 761
    %v1896 = vld [vmem:[%s1895] ss:$2 sm:$0xf]
    %s1897 = scalar_lea.vmem [#allocation2], 769
    %v1898 = vld [vmem:[%s1897] ss:$2 sm:$0xff]
    %s1899 = scalar_lea.vmem [#allocation2], 785
    %v1900 = vld [vmem:[%s1899] ss:$2 sm:$0xf]
    %s1901 = scalar_lea.vmem [#allocation2], 793
    %v1902 = vld [vmem:[%s1901] ss:$2 sm:$0xff]
    %s1903 = scalar_lea.vmem [#allocation2], 809
    %v1904 = vld [vmem:[%s1903] ss:$2 sm:$0xf]
    %s1905 = scalar_lea.vmem [#allocation2], 817
    %v1906 = vld [vmem:[%s1905] ss:$2 sm:$0xff]
    %s1907 = scalar_lea.vmem [#allocation2], 833
    %v1908 = vld [vmem:[%s1907] ss:$2 sm:$0xf]
    %s1909 = scalar_lea.vmem [#allocation2], 841
    %v1910 = vld [vmem:[%s1909] ss:$2 sm:$0xff]
    %s1911 = scalar_lea.vmem [#allocation2], 857
    %v1912 = vld [vmem:[%s1911] ss:$2 sm:$0xf]
    %s1913 = scalar_lea.vmem [#allocation2], 865
    %v1914 = vld [vmem:[%s1913] ss:$2 sm:$0xff]
    %s1915 = scalar_lea.vmem [#allocation2], 881
    %v1916 = vld [vmem:[%s1915] ss:$2 sm:$0xf]
    %s1917 = scalar_lea.vmem [#allocation2], 889
    %v1918 = vld [vmem:[%s1917] ss:$2 sm:$0xff]
    %s1919 = scalar_lea.vmem [#allocation2], 905
    %v1920 = vld [vmem:[%s1919] ss:$2 sm:$0xf]
    %s1921 = scalar_lea.vmem [#allocation2], 913
    %v1922 = vld [vmem:[%s1921] ss:$2 sm:$0xff]
    %s1923 = scalar_lea.vmem [#allocation2], 929
    %v1924 = vld [vmem:[%s1923] ss:$2 sm:$0xf]
    %s1925 = scalar_lea.vmem [#allocation2], 937
    %v1926 = vld [vmem:[%s1925] ss:$2 sm:$0xff]
    %s1927 = scalar_lea.vmem [#allocation2], 953
    %v1928 = vld [vmem:[%s1927] ss:$2 sm:$0xf]
    %s1929 = scalar_lea.vmem [#allocation2], 961
    %v1930 = vld [vmem:[%s1929] ss:$2 sm:$0xff]
    %s1931 = scalar_lea.vmem [#allocation2], 977
    %v1932 = vld [vmem:[%s1931] ss:$2 sm:$0xf]
    %s1933 = scalar_lea.vmem [#allocation2], 985
    %v1934 = vld [vmem:[%s1933] ss:$2 sm:$0xff]
    %s1935 = scalar_lea.vmem [#allocation2], 1001
    %v1936 = vld [vmem:[%s1935] ss:$2 sm:$0xf]
    %s1937 = scalar_lea.vmem [#allocation2], 1009
    %v1938 = vld [vmem:[%s1937] ss:$2 sm:$0xff]
    %s1939 = scalar_lea.vmem [#allocation2], 1025
    %v1940 = vld [vmem:[%s1939] ss:$2 sm:$0xf]
    %s1941 = scalar_lea.vmem [#allocation2], 1033
    %v1942 = vld [vmem:[%s1941] ss:$2 sm:$0xff]
    %s1943 = scalar_lea.vmem [#allocation2], 1049
    %v1944 = vld [vmem:[%s1943] ss:$2 sm:$0xf]
    %s1945 = scalar_lea.vmem [#allocation2], 1057
    %v1946 = vld [vmem:[%s1945] ss:$2 sm:$0xff]
    %s1947 = scalar_lea.vmem [#allocation2], 1073
    %v1948 = vld [vmem:[%s1947] ss:$2 sm:$0xf]
    %s1949 = scalar_lea.vmem [#allocation2], 1081
    %v1950 = vld [vmem:[%s1949] ss:$2 sm:$0xff]
    %s1951 = scalar_lea.vmem [#allocation2], 1097
    %v1952 = vld [vmem:[%s1951] ss:$2 sm:$0xf]
    %s1953 = scalar_lea.vmem [#allocation2], 1105
    %v1954 = vld [vmem:[%s1953] ss:$2 sm:$0xff]
    %s1955 = scalar_lea.vmem [#allocation2], 1121
    %v1956 = vld [vmem:[%s1955] ss:$2 sm:$0xf]
    %s1957 = scalar_lea.vmem [#allocation2], 1129
    %v1958 = vld [vmem:[%s1957] ss:$2 sm:$0xff]
    %s1959 = scalar_lea.vmem [#allocation2], 1145
    %v1960 = vld [vmem:[%s1959] ss:$2 sm:$0xf]
    %v1961 = vmax.f32 %v1578, %v1770
    %v1962 = vmax.f32 %v1580, %v1772
    %v1963 = vmax.f32 %v1582, %v1774
    %v1964 = vmax.f32 %v1584, %v1776
    %v1965 = vmax.f32 %v1586, %v1778
    %v1966 = vmax.f32 %v1588, %v1780
    %v1967 = vmax.f32 %v1590, %v1782
    %v1968 = vmax.f32 %v1592, %v1784
    %v1969 = vmax.f32 %v1594, %v1786
    %v1970 = vmax.f32 %v1596, %v1788
    %v1971 = vmax.f32 %v1598, %v1790
    %v1972 = vmax.f32 %v1600, %v1792
    %v1973 = vmax.f32 %v1602, %v1794
    %v1974 = vmax.f32 %v1604, %v1796
    %v1975 = vmax.f32 %v1606, %v1798
    %v1976 = vmax.f32 %v1608, %v1800
    %v1977 = vmax.f32 %v1610, %v1802
    %v1978 = vmax.f32 %v1612, %v1804
    %v1979 = vmax.f32 %v1614, %v1806
    %v1980 = vmax.f32 %v1616, %v1808
    %v1981 = vmax.f32 %v1618, %v1810
    %v1982 = vmax.f32 %v1620, %v1812
    %v1983 = vmax.f32 %v1622, %v1814
    %v1984 = vmax.f32 %v1624, %v1816
    %v1985 = vmax.f32 %v1626, %v1818
    %v1986 = vmax.f32 %v1628, %v1820
    %v1987 = vmax.f32 %v1630, %v1822
    %v1988 = vmax.f32 %v1632, %v1824
    %v1989 = vmax.f32 %v1634, %v1826
    %v1990 = vmax.f32 %v1636, %v1828
    %v1991 = vmax.f32 %v1638, %v1830
    %v1992 = vmax.f32 %v1640, %v1832
    %v1993 = vmax.f32 %v1642, %v1834
    %v1994 = vmax.f32 %v1644, %v1836
    %v1995 = vmax.f32 %v1646, %v1838
    %v1996 = vmax.f32 %v1648, %v1840
    %v1997 = vmax.f32 %v1650, %v1842
    %v1998 = vmax.f32 %v1652, %v1844
    %v1999 = vmax.f32 %v1654, %v1846
    %v2000 = vmax.f32 %v1656, %v1848
    %v2001 = vmax.f32 %v1658, %v1850
    %v2002 = vmax.f32 %v1660, %v1852
    %v2003 = vmax.f32 %v1662, %v1854
    %v2004 = vmax.f32 %v1664, %v1856
    %v2005 = vmax.f32 %v1666, %v1858
    %v2006 = vmax.f32 %v1668, %v1860
    %v2007 = vmax.f32 %v1670, %v1862
    %v2008 = vmax.f32 %v1672, %v1864
    %v2009 = vmax.f32 %v1674, %v1866
    %v2010 = vmax.f32 %v1676, %v1868
    %v2011 = vmax.f32 %v1678, %v1870
    %v2012 = vmax.f32 %v1680, %v1872
    %v2013 = vmax.f32 %v1682, %v1874
    %v2014 = vmax.f32 %v1684, %v1876
    %v2015 = vmax.f32 %v1686, %v1878
    %v2016 = vmax.f32 %v1688, %v1880
    %v2017 = vmax.f32 %v1690, %v1882
    %v2018 = vmax.f32 %v1692, %v1884
    %v2019 = vmax.f32 %v1694, %v1886
    %v2020 = vmax.f32 %v1696, %v1888
    %v2021 = vmax.f32 %v1698, %v1890
    %v2022 = vmax.f32 %v1700, %v1892
    %v2023 = vmax.f32 %v1702, %v1894
    %v2024 = vmax.f32 %v1704, %v1896
    %v2025 = vmax.f32 %v1706, %v1898
    %v2026 = vmax.f32 %v1708, %v1900
    %v2027 = vmax.f32 %v1710, %v1902
    %v2028 = vmax.f32 %v1712, %v1904
    %v2029 = vmax.f32 %v1714, %v1906
    %v2030 = vmax.f32 %v1716, %v1908
    %v2031 = vmax.f32 %v1718, %v1910
    %v2032 = vmax.f32 %v1720, %v1912
    %v2033 = vmax.f32 %v1722, %v1914
    %v2034 = vmax.f32 %v1724, %v1916
    %v2035 = vmax.f32 %v1726, %v1918
    %v2036 = vmax.f32 %v1728, %v1920
    %v2037 = vmax.f32 %v1730, %v1922
    %v2038 = vmax.f32 %v1732, %v1924
    %v2039 = vmax.f32 %v1734, %v1926
    %v2040 = vmax.f32 %v1736, %v1928
    %v2041 = vmax.f32 %v1738, %v1930
    %v2042 = vmax.f32 %v1740, %v1932
    %v2043 = vmax.f32 %v1742, %v1934
    %v2044 = vmax.f32 %v1744, %v1936
    %v2045 = vmax.f32 %v1746, %v1938
    %v2046 = vmax.f32 %v1748, %v1940
    %v2047 = vmax.f32 %v1750, %v1942
    %v2048 = vmax.f32 %v1752, %v1944
    %v2049 = vmax.f32 %v1754, %v1946
    %v2050 = vmax.f32 %v1756, %v1948
    %v2051 = vmax.f32 %v1758, %v1950
    %v2052 = vmax.f32 %v1760, %v1952
    %v2053 = vmax.f32 %v1762, %v1954
    %v2054 = vmax.f32 %v1764, %v1956
    %v2055 = vmax.f32 %v1766, %v1958
    %v2056 = vmax.f32 %v1768, %v1960
    %v2057 = vmax.f32 %v1961, %v1963
    %v2058 = vmax.f32 %v1962, %v1964
    %v2059 = vmax.f32 %v1965, %v1967
    %v2060 = vmax.f32 %v1966, %v1968
    %v2061 = vmax.f32 %v1969, %v1971
    %v2062 = vmax.f32 %v1970, %v1972
    %v2063 = vmax.f32 %v1973, %v1975
    %v2064 = vmax.f32 %v1974, %v1976
    %v2065 = vmax.f32 %v1977, %v1979
    %v2066 = vmax.f32 %v1978, %v1980
    %v2067 = vmax.f32 %v1981, %v1983
    %v2068 = vmax.f32 %v1982, %v1984
    %v2069 = vmax.f32 %v1985, %v1987
    %v2070 = vmax.f32 %v1986, %v1988
    %v2071 = vmax.f32 %v1989, %v1991
    %v2072 = vmax.f32 %v1990, %v1992
    %v2073 = vmax.f32 %v1993, %v1995
    %v2074 = vmax.f32 %v1994, %v1996
    %v2075 = vmax.f32 %v1997, %v1999
    %v2076 = vmax.f32 %v1998, %v2000
    %v2077 = vmax.f32 %v2001, %v2003
    %v2078 = vmax.f32 %v2002, %v2004
    %v2079 = vmax.f32 %v2005, %v2007
    %v2080 = vmax.f32 %v2006, %v2008
    %v2081 = vmax.f32 %v2009, %v2011
    %v2082 = vmax.f32 %v2010, %v2012
    %v2083 = vmax.f32 %v2013, %v2015
    %v2084 = vmax.f32 %v2014, %v2016
    %v2085 = vmax.f32 %v2017, %v2019
    %v2086 = vmax.f32 %v2018, %v2020
    %v2087 = vmax.f32 %v2021, %v2023
    %v2088 = vmax.f32 %v2022, %v2024
    %v2089 = vmax.f32 %v2025, %v2027
    %v2090 = vmax.f32 %v2026, %v2028
    %v2091 = vmax.f32 %v2029, %v2031
    %v2092 = vmax.f32 %v2030, %v2032
    %v2093 = vmax.f32 %v2033, %v2035
    %v2094 = vmax.f32 %v2034, %v2036
    %v2095 = vmax.f32 %v2037, %v2039
    %v2096 = vmax.f32 %v2038, %v2040
    %v2097 = vmax.f32 %v2041, %v2043
    %v2098 = vmax.f32 %v2042, %v2044
    %v2099 = vmax.f32 %v2045, %v2047
    %v2100 = vmax.f32 %v2046, %v2048
    %v2101 = vmax.f32 %v2049, %v2051
    %v2102 = vmax.f32 %v2050, %v2052
    %v2103 = vmax.f32 %v2053, %v2055
    %v2104 = vmax.f32 %v2054, %v2056
    %2105 = vst [vmem:[#allocation3] sm:$0xff] %v2057
    %2106 = vst [vmem:[#allocation3 + $0x8] sm:$0xf] %v2058
    %2107 = vst [vmem:[#allocation3 + $0x10] sm:$0xff] %v2059
    %2108 = vst [vmem:[#allocation3 + $0x18] sm:$0xf] %v2060
    %2109 = vst [vmem:[#allocation3 + $0x20] sm:$0xff] %v2061
    %2110 = vst [vmem:[#allocation3 + $0x28] sm:$0xf] %v2062
    %2111 = vst [vmem:[#allocation3 + $0x30] sm:$0xff] %v2063
    %2112 = vst [vmem:[#allocation3 + $0x38] sm:$0xf] %v2064
    %2113 = vst [vmem:[#allocation3 + $0x40] sm:$0xff] %v2065
    %2114 = vst [vmem:[#allocation3 + $0x48] sm:$0xf] %v2066
    %2115 = vst [vmem:[#allocation3 + $0x50] sm:$0xff] %v2067
    %2116 = vst [vmem:[#allocation3 + $0x58] sm:$0xf] %v2068
    %2117 = vst [vmem:[#allocation3 + $0x60] sm:$0xff] %v2069
    %2118 = vst [vmem:[#allocation3 + $0x68] sm:$0xf] %v2070
    %2119 = vst [vmem:[#allocation3 + $0x70] sm:$0xff] %v2071
    %2120 = vst [vmem:[#allocation3 + $0x78] sm:$0xf] %v2072
    %2121 = vst [vmem:[#allocation3 + $0x80] sm:$0xff] %v2073
    %2122 = vst [vmem:[#allocation3 + $0x88] sm:$0xf] %v2074
    %2123 = vst [vmem:[#allocation3 + $0x90] sm:$0xff] %v2075
    %2124 = vst [vmem:[#allocation3 + $0x98] sm:$0xf] %v2076
    %2125 = vst [vmem:[#allocation3 + $0xa0] sm:$0xff] %v2077
    %2126 = vst [vmem:[#allocation3 + $0xa8] sm:$0xf] %v2078
    %2127 = vst [vmem:[#allocation3 + $0xb0] sm:$0xff] %v2079
    %2128 = vst [vmem:[#allocation3 + $0xb8] sm:$0xf] %v2080
    %2129 = vst [vmem:[#allocation3 + $0xc0] sm:$0xff] %v2081
    %2130 = vst [vmem:[#allocation3 + $0xc8] sm:$0xf] %v2082
    %2131 = vst [vmem:[#allocation3 + $0xd0] sm:$0xff] %v2083
    %2132 = vst [vmem:[#allocation3 + $0xd8] sm:$0xf] %v2084
    %2133 = vst [vmem:[#allocation3 + $0xe0] sm:$0xff] %v2085
    %2134 = vst [vmem:[#allocation3 + $0xe8] sm:$0xf] %v2086
    %2135 = vst [vmem:[#allocation3 + $0xf0] sm:$0xff] %v2087
    %2136 = vst [vmem:[#allocation3 + $0xf8] sm:$0xf] %v2088
    %2137 = vst [vmem:[#allocation3 + $0x100] sm:$0xff] %v2089
    %2138 = vst [vmem:[#allocation3 + $0x108] sm:$0xf] %v2090
    %2139 = vst [vmem:[#allocation3 + $0x110] sm:$0xff] %v2091
    %2140 = vst [vmem:[#allocation3 + $0x118] sm:$0xf] %v2092
    %2141 = vst [vmem:[#allocation3 + $0x120] sm:$0xff] %v2093
    %2142 = vst [vmem:[#allocation3 + $0x128] sm:$0xf] %v2094
    %2143 = vst [vmem:[#allocation3 + $0x130] sm:$0xff] %v2095
    %2144 = vst [vmem:[#allocation3 + $0x138] sm:$0xf] %v2096
    %2145 = vst [vmem:[#allocation3 + $0x140] sm:$0xff] %v2097
    %2146 = vst [vmem:[#allocation3 + $0x148] sm:$0xf] %v2098
    %2147 = vst [vmem:[#allocation3 + $0x150] sm:$0xff] %v2099
    %2148 = vst [vmem:[#allocation3 + $0x158] sm:$0xf] %v2100
    %2149 = vst [vmem:[#allocation3 + $0x160] sm:$0xff] %v2101
    %2150 = vst [vmem:[#allocation3 + $0x168] sm:$0xf] %v2102
    %2151 = vst [vmem:[#allocation3 + $0x170] sm:$0xff] %v2103
    %2152 = vst [vmem:[#allocation3 + $0x178] sm:$0xf] %v2104
    %v2153 = vld [vmem:[#allocation3] sm:$0xff]
    %v2154 = vld [vmem:[#allocation3 + $0x10] sm:$0xff]
    %v2155 = vld [vmem:[#allocation3 + $0x20] sm:$0xff]
    %v2156 = vld [vmem:[#allocation3 + $0x30] sm:$0xff]
    %v2157 = vld [vmem:[#allocation3 + $0x40] sm:$0xff]
    %v2158 = vld [vmem:[#allocation3 + $0x50] sm:$0xff]
    %v2159 = vld [vmem:[#allocation3 + $0x60] sm:$0xff]
    %v2160 = vld [vmem:[#allocation3 + $0x70] sm:$0xff]
    %v2161 = vld [vmem:[#allocation3 + $0xc0] sm:$0xff]
    %v2162 = vld [vmem:[#allocation3 + $0xd0] sm:$0xff]
    %v2163 = vld [vmem:[#allocation3 + $0xe0] sm:$0xff]
    %v2164 = vld [vmem:[#allocation3 + $0xf0] sm:$0xff]
    %v2165 = vld [vmem:[#allocation3 + $0x100] sm:$0xff]
    %v2166 = vld [vmem:[#allocation3 + $0x110] sm:$0xff]
    %v2167 = vld [vmem:[#allocation3 + $0x120] sm:$0xff]
    %v2168 = vld [vmem:[#allocation3 + $0x130] sm:$0xff]
    %v2169 = vpack.c.bf16 %v2154, %v2153
    %v2170 = vpack.c.bf16 %v2156, %v2155
    %v2171 = vpack.c.bf16 %v2158, %v2157
    %v2172 = vpack.c.bf16 %v2160, %v2159
    %v2173 = vpack.c.bf16 %v2162, %v2161
    %v2174 = vpack.c.bf16 %v2164, %v2163
    %v2175 = vpack.c.bf16 %v2166, %v2165
    %v2176 = vpack.c.bf16 %v2168, %v2167
    %v2177 = vld [vmem:[%s3] sm:$0xf]
    %v2178 = vld [vmem:[%s3 + $0x4] sm:$0xf]
    %v2179 = vld [vmem:[%s3 + $0x8] sm:$0xf]
    %v2180 = vld [vmem:[%s3 + $0xc] sm:$0xf]
    %v2181 = vld [vmem:[%s3 + $0x10] sm:$0xf]
    %v2182 = vld [vmem:[%s3 + $0x14] sm:$0xf]
    %v2183 = vld [vmem:[%s3 + $0x18] sm:$0xf]
    %v2184 = vld [vmem:[%s3 + $0x1c] sm:$0xf]
    %v2185 = vld [vmem:[%s3 + $0x20] sm:$0xf]
    %v2186 = vld [vmem:[%s3 + $0x24] sm:$0xf]
    %v2187 = vld [vmem:[%s3 + $0x28] sm:$0xf]
    %v2188 = vld [vmem:[%s3 + $0x2c] sm:$0xf]
    %v2189 = vld [vmem:[%s3 + $0x30] sm:$0xf]
    %v2190 = vld [vmem:[%s3 + $0x34] sm:$0xf]
    %v2191 = vld [vmem:[%s3 + $0x38] sm:$0xf]
    %v2192 = vld [vmem:[%s3 + $0x3c] sm:$0xf]
    %v2193 = vld [vmem:[#allocation3 + $0x1] sm:$0xff]
    %v2194 = vld [vmem:[#allocation3 + $0x11] sm:$0xff]
    %v2195 = vld [vmem:[#allocation3 + $0x21] sm:$0xff]
    %v2196 = vld [vmem:[#allocation3 + $0x31] sm:$0xff]
    %v2197 = vld [vmem:[#allocation3 + $0x41] sm:$0xff]
    %v2198 = vld [vmem:[#allocation3 + $0x51] sm:$0xff]
    %v2199 = vld [vmem:[#allocation3 + $0x61] sm:$0xff]
    %v2200 = vld [vmem:[#allocation3 + $0x71] sm:$0xff]
    %v2201 = vld [vmem:[#allocation3 + $0xc1] sm:$0xff]
    %v2202 = vld [vmem:[#allocation3 + $0xd1] sm:$0xff]
    %v2203 = vld [vmem:[#allocation3 + $0xe1] sm:$0xff]
    %v2204 = vld [vmem:[#allocation3 + $0xf1] sm:$0xff]
    %v2205 = vld [vmem:[#allocation3 + $0x101] sm:$0xff]
    %v2206 = vld [vmem:[#allocation3 + $0x111] sm:$0xff]
    %v2207 = vld [vmem:[#allocation3 + $0x121] sm:$0xff]
    %v2208 = vld [vmem:[#allocation3 + $0x131] sm:$0xff]
    %v2209 = vpack.c.bf16 %v2194, %v2193
    %v2210 = vpack.c.bf16 %v2196, %v2195
    %v2211 = vpack.c.bf16 %v2198, %v2197
    %v2212 = vpack.c.bf16 %v2200, %v2199
    %v2213 = vpack.c.bf16 %v2202, %v2201
    %v2214 = vpack.c.bf16 %v2204, %v2203
    %v2215 = vpack.c.bf16 %v2206, %v2205
    %v2216 = vpack.c.bf16 %v2208, %v2207
    %s2217 = scalar_lea.vmem %s3, 64
    %v2218 = vld [vmem:[%s2217] sm:$0xf]
    %v2219 = vld [vmem:[%s2217 + $0x4] sm:$0xf]
    %v2220 = vld [vmem:[%s2217 + $0x8] sm:$0xf]
    %v2221 = vld [vmem:[%s2217 + $0xc] sm:$0xf]
    %v2222 = vld [vmem:[%s2217 + $0x10] sm:$0xf]
    %v2223 = vld [vmem:[%s2217 + $0x14] sm:$0xf]
    %v2224 = vld [vmem:[%s2217 + $0x18] sm:$0xf]
    %v2225 = vld [vmem:[%s2217 + $0x1c] sm:$0xf]
    %v2226 = vld [vmem:[%s2217 + $0x20] sm:$0xf]
    %v2227 = vld [vmem:[%s2217 + $0x24] sm:$0xf]
    %v2228 = vld [vmem:[%s2217 + $0x28] sm:$0xf]
    %v2229 = vld [vmem:[%s2217 + $0x2c] sm:$0xf]
    %v2230 = vld [vmem:[%s2217 + $0x30] sm:$0xf]
    %v2231 = vld [vmem:[%s2217 + $0x34] sm:$0xf]
    %v2232 = vld [vmem:[%s2217 + $0x38] sm:$0xf]
    %v2233 = vld [vmem:[%s2217 + $0x3c] sm:$0xf]
    %v2250 = vunpack.c.l.b16 %v2218
    %v2251 = vunpack.c.l.b16 %v2219
    %v2252 = vunpack.c.l.b16 %v2220
    %v2253 = vunpack.c.l.b16 %v2221
    %v2254 = vunpack.c.l.b16 %v2222
    %v2255 = vunpack.c.l.b16 %v2223
    %v2256 = vunpack.c.l.b16 %v2224
    %v2257 = vunpack.c.l.b16 %v2225
    %v2258 = vunpack.c.l.b16 %v2226
    %v2259 = vunpack.c.l.b16 %v2227
    %v2260 = vunpack.c.l.b16 %v2228
    %v2261 = vunpack.c.l.b16 %v2229
    %v2262 = vunpack.c.l.b16 %v2230
    %v2263 = vunpack.c.l.b16 %v2231
    %v2264 = vunpack.c.l.b16 %v2232
    %v2265 = vunpack.c.l.b16 %v2233
    %v2266 = vpack.c.b16 %v2251, %v2250
    %v2267 = vpack.c.b16 %v2253, %v2252
    %v2268 = vpack.c.b16 %v2255, %v2254
    %v2269 = vpack.c.b16 %v2257, %v2256
    %v2270 = vpack.c.b16 %v2259, %v2258
    %v2271 = vpack.c.b16 %v2261, %v2260
    %v2272 = vpack.c.b16 %v2263, %v2262
    %v2273 = vpack.c.b16 %v2265, %v2264
    %2282 = vmatprep.subr.bf16.mxu0 0
    %2283 = vmatpush1.bf16.msra.mxu0 %v2266
    %2284 = vmatprep.subr.bf16.mxu0 0
    %2285 = vmatpush1.bf16.msra.mxu0 %v2267
    %2286 = vmatprep.subr.bf16.mxu0 0
    %2287 = vmatpush1.bf16.msra.mxu0 %v2268
    %2288 = vmatprep.subr.bf16.mxu0 0
    %2289 = vmatpush1.bf16.msra.mxu0 %v2269
    %2290 = vmatprep.subr.bf16.mxu0 0
    %2291 = vmatpush1.bf16.msra.mxu0 %v2270
    %2292 = vmatprep.subr.bf16.mxu0 0
    %2293 = vmatpush1.bf16.msra.mxu0 %v2271
    %2294 = vmatprep.subr.bf16.mxu0 0
    %2295 = vmatpush1.bf16.msra.mxu0 %v2272
    %2296 = vmatprep.subr.bf16.mxu0 0
    %2297 = vmatpush1.bf16.msra.mxu0 %v2273
    %2298 = vmatprep.subr.bf16.mxu0 0
    %2299 = vmatpush1.bf16.msra.mxu0 0
    %2300 = vmatprep.subr.bf16.mxu0 0
    %2301 = vmatpush1.bf16.msra.mxu0 0
    %2302 = vmatprep.subr.bf16.mxu0 0
    %2303 = vmatpush1.bf16.msra.mxu0 0
    %2304 = vmatprep.subr.bf16.mxu0 0
    %2305 = vmatpush1.bf16.msra.mxu0 0
    %2306 = vmatprep.subr.bf16.mxu0 0
    %2307 = vmatpush1.bf16.msra.mxu0 0
    %2308 = vmatprep.subr.bf16.mxu0 0
    %2309 = vmatpush1.bf16.msra.mxu0 0
    %2310 = vmatprep.subr.bf16.mxu0 0
    %2311 = vmatpush1.bf16.msra.mxu0 0
    %2312 = vmatprep.subr.bf16.mxu0 0
    %2313 = vmatpush1.bf16.msra.mxu0 0
    %2314 = vmatprep.mubr.bf16.mxu0 0
    %2315 = vmatmul.mubr.bf16.gmra.mrb[0].mxu0 %v2209
    %v2316 = vpop.f32.mrb[0].mxu0
    %v2317 = vadd.f32 0.0, %v2316
    %v2318 = vpop.f32.mrb[0].mxu0
    %v2319 = vpop.f32.mrb[0].mxu0
    %v2320 = vadd.f32 0.0, %v2319
    %v2321 = vpop.f32.mrb[0].mxu0
    %2322 = vmatprep.mubr.bf16.mxu0 0
    %2323 = vmatmul.mubr.bf16.gmra.mrb[0].mxu0 %v2210
    %v2324 = vpop.f32.mrb[0].mxu0
    %v2325 = vadd.f32 0.0, %v2324
    %v2326 = vpop.f32.mrb[0].mxu0
    %v2327 = vpop.f32.mrb[0].mxu0
    %v2328 = vadd.f32 0.0, %v2327
    %v2329 = vpop.f32.mrb[0].mxu0
    %2330 = vmatprep.mubr.bf16.mxu0 0
    %2331 = vmatmul.mubr.bf16.gmra.mrb[0].mxu0 %v2211
    %v2332 = vpop.f32.mrb[0].mxu0
    %v2333 = vadd.f32 0.0, %v2332
    %v2334 = vpop.f32.mrb[0].mxu0
    %v2335 = vpop.f32.mrb[0].mxu0
    %v2336 = vadd.f32 0.0, %v2335
    %v2337 = vpop.f32.mrb[0].mxu0
    %2338 = vmatprep.mubr.bf16.mxu0 0
    %2339 = vmatmul.mubr.bf16.gmra.mrb[0].mxu0 %v2212
    %v2340 = vpop.f32.mrb[0].mxu0
    %v2341 = vadd.f32 0.0, %v2340
    %v2342 = vpop.f32.mrb[0].mxu0
    %v2343 = vpop.f32.mrb[0].mxu0
    %v2344 = vadd.f32 0.0, %v2343
    %v2345 = vpop.f32.mrb[0].mxu0
    %2346 = vmatprep.mubr.bf16.mxu0 0
    %2347 = vmatmul.mubr.bf16.gmra.mrb[0].mxu0 %v2213
    %v2348 = vpop.f32.mrb[0].mxu0
    %v2349 = vadd.f32 0.0, %v2348
    %v2350 = vpop.f32.mrb[0].mxu0
    %v2351 = vpop.f32.mrb[0].mxu0
    %v2352 = vadd.f32 0.0, %v2351
    %v2353 = vpop.f32.mrb[0].mxu0
    %2354 = vmatprep.mubr.bf16.mxu0 0
    %2355 = vmatmul.mubr.bf16.gmra.mrb[0].mxu0 %v2214
    %v2356 = vpop.f32.mrb[0].mxu0
    %v2357 = vadd.f32 0.0, %v2356
    %v2358 = vpop.f32.mrb[0].mxu0
    %v2359 = vpop.f32.mrb[0].mxu0
    %v2360 = vadd.f32 0.0, %v2359
    %v2361 = vpop.f32.mrb[0].mxu0
    %2362 = vmatprep.mubr.bf16.mxu0 0
    %2363 = vmatmul.mubr.bf16.gmra.mrb[0].mxu0 %v2215
    %v2364 = vpop.f32.mrb[0].mxu0
    %v2365 = vadd.f32 0.0, %v2364
    %v2366 = vpop.f32.mrb[0].mxu0
    %v2367 = vpop.f32.mrb[0].mxu0
    %v2368 = vadd.f32 0.0, %v2367
    %v2369 = vpop.f32.mrb[0].mxu0
    %2370 = vmatprep.mubr.bf16.mxu0 0
    %2371 = vmatmul.mubr.bf16.gmra.mrb[0].mxu0 %v2216
    %v2372 = vpop.f32.mrb[0].mxu0
    %v2373 = vadd.f32 0.0, %v2372
    %v2374 = vpop.f32.mrb[0].mxu0
    %v2375 = vpop.f32.mrb[0].mxu0
    %v2376 = vadd.f32 0.0, %v2375
    %v2377 = vpop.f32.mrb[0].mxu0
    %2378 = vdwg.mxu0
    %v2395 = vunpack.c.l.b16 %v2177
    %v2396 = vunpack.c.l.b16 %v2178
    %v2397 = vunpack.c.l.b16 %v2179
    %v2398 = vunpack.c.l.b16 %v2180
    %v2399 = vunpack.c.l.b16 %v2181
    %v2400 = vunpack.c.l.b16 %v2182
    %v2401 = vunpack.c.l.b16 %v2183
    %v2402 = vunpack.c.l.b16 %v2184
    %v2403 = vunpack.c.l.b16 %v2185
    %v2404 = vunpack.c.l.b16 %v2186
    %v2405 = vunpack.c.l.b16 %v2187
    %v2406 = vunpack.c.l.b16 %v2188
    %v2407 = vunpack.c.l.b16 %v2189
    %v2408 = vunpack.c.l.b16 %v2190
    %v2409 = vunpack.c.l.b16 %v2191
    %v2410 = vunpack.c.l.b16 %v2192
    %v2411 = vpack.c.b16 %v2396, %v2395
    %v2412 = vpack.c.b16 %v2398, %v2397
    %v2413 = vpack.c.b16 %v2400, %v2399
    %v2414 = vpack.c.b16 %v2402, %v2401
    %v2415 = vpack.c.b16 %v2404, %v2403
    %v2416 = vpack.c.b16 %v2406, %v2405
    %v2417 = vpack.c.b16 %v2408, %v2407
    %v2418 = vpack.c.b16 %v2410, %v2409
    %2427 = vmatprep.subr.bf16.mxu0 0
    %2428 = vmatpush1.bf16.msra.mxu0 %v2411
    %2429 = vmatprep.subr.bf16.mxu0 0
    %2430 = vmatpush1.bf16.msra.mxu0 %v2412
    %2431 = vmatprep.subr.bf16.mxu0 0
    %2432 = vmatpush1.bf16.msra.mxu0 %v2413
    %2433 = vmatprep.subr.bf16.mxu0 0
    %2434 = vmatpush1.bf16.msra.mxu0 %v2414
    %2435 = vmatprep.subr.bf16.mxu0 0
    %2436 = vmatpush1.bf16.msra.mxu0 %v2415
    %2437 = vmatprep.subr.bf16.mxu0 0
    %2438 = vmatpush1.bf16.msra.mxu0 %v2416
    %2439 = vmatprep.subr.bf16.mxu0 0
    %2440 = vmatpush1.bf16.msra.mxu0 %v2417
    %2441 = vmatprep.subr.bf16.mxu0 0
    %2442 = vmatpush1.bf16.msra.mxu0 %v2418
    %2443 = vmatprep.subr.bf16.mxu0 0
    %2444 = vmatpush1.bf16.msra.mxu0 0
    %2445 = vmatprep.subr.bf16.mxu0 0
    %2446 = vmatpush1.bf16.msra.mxu0 0
    %2447 = vmatprep.subr.bf16.mxu0 0
    %2448 = vmatpush1.bf16.msra.mxu0 0
    %2449 = vmatprep.subr.bf16.mxu0 0
    %2450 = vmatpush1.bf16.msra.mxu0 0
    %2451 = vmatprep.subr.bf16.mxu0 0
    %2452 = vmatpush1.bf16.msra.mxu0 0
    %2453 = vmatprep.subr.bf16.mxu0 0
    %2454 = vmatpush1.bf16.msra.mxu0 0
    %2455 = vmatprep.subr.bf16.mxu0 0
    %2456 = vmatpush1.bf16.msra.mxu0 0
    %2457 = vmatprep.subr.bf16.mxu0 0
    %2458 = vmatpush1.bf16.msra.mxu0 0
    %2459 = vmatprep.mubr.bf16.mxu0 0
    %2460 = vmatmul.mubr.bf16.gmra.mrb[0].mxu0 %v2169
    %v2461 = vpop.f32.mrb[0].mxu0
    %v2462 = vadd.f32 %v2317, %v2461
    %v2463 = vpop.f32.mrb[0].mxu0
    %v2464 = vpop.f32.mrb[0].mxu0
    %v2465 = vadd.f32 %v2320, %v2464
    %v2466 = vpop.f32.mrb[0].mxu0
    %2467 = vmatprep.mubr.bf16.mxu0 0
    %2468 = vmatmul.mubr.bf16.gmra.mrb[0].mxu0 %v2170
    %v2469 = vpop.f32.mrb[0].mxu0
    %v2470 = vadd.f32 %v2325, %v2469
    %v2471 = vpop.f32.mrb[0].mxu0
    %v2472 = vpop.f32.mrb[0].mxu0
    %v2473 = vadd.f32 %v2328, %v2472
    %v2474 = vpop.f32.mrb[0].mxu0
    %2475 = vmatprep.mubr.bf16.mxu0 0
    %2476 = vmatmul.mubr.bf16.gmra.mrb[0].mxu0 %v2171
    %v2477 = vpop.f32.mrb[0].mxu0
    %v2478 = vadd.f32 %v2333, %v2477
    %v2479 = vpop.f32.mrb[0].mxu0
    %v2480 = vpop.f32.mrb[0].mxu0
    %v2481 = vadd.f32 %v2336, %v2480
    %v2482 = vpop.f32.mrb[0].mxu0
    %2483 = vmatprep.mubr.bf16.mxu0 0
    %2484 = vmatmul.mubr.bf16.gmra.mrb[0].mxu0 %v2172
    %v2485 = vpop.f32.mrb[0].mxu0
    %v2486 = vadd.f32 %v2341, %v2485
    %v2487 = vpop.f32.mrb[0].mxu0
    %v2488 = vpop.f32.mrb[0].mxu0
    %v2489 = vadd.f32 %v2344, %v2488
    %v2490 = vpop.f32.mrb[0].mxu0
    %2491 = vmatprep.mubr.bf16.mxu0 0
    %2492 = vmatmul.mubr.bf16.gmra.mrb[0].mxu0 %v2173
    %v2493 = vpop.f32.mrb[0].mxu0
    %v2494 = vadd.f32 %v2349, %v2493
    %v2495 = vpop.f32.mrb[0].mxu0
    %v2496 = vpop.f32.mrb[0].mxu0
    %v2497 = vadd.f32 %v2352, %v2496
    %v2498 = vpop.f32.mrb[0].mxu0
    %2499 = vmatprep.mubr.bf16.mxu0 0
    %2500 = vmatmul.mubr.bf16.gmra.mrb[0].mxu0 %v2174
    %v2501 = vpop.f32.mrb[0].mxu0
    %v2502 = vadd.f32 %v2357, %v2501
    %v2503 = vpop.f32.mrb[0].mxu0
    %v2504 = vpop.f32.mrb[0].mxu0
    %v2505 = vadd.f32 %v2360, %v2504
    %v2506 = vpop.f32.mrb[0].mxu0
    %2507 = vmatprep.mubr.bf16.mxu0 0
    %2508 = vmatmul.mubr.bf16.gmra.mrb[0].mxu0 %v2175
    %v2509 = vpop.f32.mrb[0].mxu0
    %v2510 = vadd.f32 %v2365, %v2509
    %v2511 = vpop.f32.mrb[0].mxu0
    %v2512 = vpop.f32.mrb[0].mxu0
    %v2513 = vadd.f32 %v2368, %v2512
    %v2514 = vpop.f32.mrb[0].mxu0
    %2515 = vmatprep.mubr.bf16.mxu0 0
    %2516 = vmatmul.mubr.bf16.gmra.mrb[0].mxu0 %v2176
    %v2517 = vpop.f32.mrb[0].mxu0
    %v2518 = vadd.f32 %v2373, %v2517
    %v2519 = vpop.f32.mrb[0].mxu0
    %v2520 = vpop.f32.mrb[0].mxu0
    %v2521 = vadd.f32 %v2376, %v2520
    %v2522 = vpop.f32.mrb[0].mxu0
    %2523 = vdwg.mxu0
    %v2524 = vld [vmem:[#allocation3 + $0x2] sm:$0xff]
    %v2525 = vld [vmem:[#allocation3 + $0x12] sm:$0xff]
    %v2526 = vld [vmem:[#allocation3 + $0x22] sm:$0xff]
    %v2527 = vld [vmem:[#allocation3 + $0x32] sm:$0xff]
    %v2528 = vld [vmem:[#allocation3 + $0x42] sm:$0xff]
    %v2529 = vld [vmem:[#allocation3 + $0x52] sm:$0xff]
    %v2530 = vld [vmem:[#allocation3 + $0x62] sm:$0xff]
    %v2531 = vld [vmem:[#allocation3 + $0x72] sm:$0xff]
    %v2532 = vld [vmem:[#allocation3 + $0xc2] sm:$0xff]
    %v2533 = vld [vmem:[#allocation3 + $0xd2] sm:$0xff]
    %v2534 = vld [vmem:[#allocation3 + $0xe2] sm:$0xff]
    %v2535 = vld [vmem:[#allocation3 + $0xf2] sm:$0xff]
    %v2536 = vld [vmem:[#allocation3 + $0x102] sm:$0xff]
    %v2537 = vld [vmem:[#allocation3 + $0x112] sm:$0xff]
    %v2538 = vld [vmem:[#allocation3 + $0x122] sm:$0xff]
    %v2539 = vld [vmem:[#allocation3 + $0x132] sm:$0xff]
    %v2540 = vpack.c.bf16 %v2525, %v2524
    %v2541 = vpack.c.bf16 %v2527, %v2526
    %v2542 = vpack.c.bf16 %v2529, %v2528
    %v2543 = vpack.c.bf16 %v2531, %v2530
    %v2544 = vpack.c.bf16 %v2533, %v2532
    %v2545 = vpack.c.bf16 %v2535, %v2534
    %v2546 = vpack.c.bf16 %v2537, %v2536
    %v2547 = vpack.c.bf16 %v2539, %v2538
    %s2548 = scalar_lea.vmem %s3, 128
    %v2549 = vld [vmem:[%s2548] sm:$0xf]
    %v2550 = vld [vmem:[%s2548 + $0x4] sm:$0xf]
    %v2551 = vld [vmem:[%s2548 + $0x8] sm:$0xf]
    %v2552 = vld [vmem:[%s2548 + $0xc] sm:$0xf]
    %v2553 = vld [vmem:[%s2548 + $0x10] sm:$0xf]
    %v2554 = vld [vmem:[%s2548 + $0x14] sm:$0xf]
    %v2555 = vld [vmem:[%s2548 + $0x18] sm:$0xf]
    %v2556 = vld [vmem:[%s2548 + $0x1c] sm:$0xf]
    %v2557 = vld [vmem:[%s2548 + $0x20] sm:$0xf]
    %v2558 = vld [vmem:[%s2548 + $0x24] sm:$0xf]
    %v2559 = vld [vmem:[%s2548 + $0x28] sm:$0xf]
    %v2560 = vld [vmem:[%s2548 + $0x2c] sm:$0xf]
    %v2561 = vld [vmem:[%s2548 + $0x30] sm:$0xf]
    %v2562 = vld [vmem:[%s2548 + $0x34] sm:$0xf]
    %v2563 = vld [vmem:[%s2548 + $0x38] sm:$0xf]
    %v2564 = vld [vmem:[%s2548 + $0x3c] sm:$0xf]
    %v2581 = vunpack.c.l.b16 %v2549
    %v2582 = vunpack.c.l.b16 %v2550
    %v2583 = vunpack.c.l.b16 %v2551
    %v2584 = vunpack.c.l.b16 %v2552
    %v2585 = vunpack.c.l.b16 %v2553
    %v2586 = vunpack.c.l.b16 %v2554
    %v2587 = vunpack.c.l.b16 %v2555
    %v2588 = vunpack.c.l.b16 %v2556
    %v2589 = vunpack.c.l.b16 %v2557
    %v2590 = vunpack.c.l.b16 %v2558
    %v2591 = vunpack.c.l.b16 %v2559
    %v2592 = vunpack.c.l.b16 %v2560
    %v2593 = vunpack.c.l.b16 %v2561
    %v2594 = vunpack.c.l.b16 %v2562
    %v2595 = vunpack.c.l.b16 %v2563
    %v2596 = vunpack.c.l.b16 %v2564
    %v2597 = vpack.c.b16 %v2582, %v2581
    %v2598 = vpack.c.b16 %v2584, %v2583
    %v2599 = vpack.c.b16 %v2586, %v2585
    %v2600 = vpack.c.b16 %v2588, %v2587
    %v2601 = vpack.c.b16 %v2590, %v2589
    %v2602 = vpack.c.b16 %v2592, %v2591
    %v2603 = vpack.c.b16 %v2594, %v2593
    %v2604 = vpack.c.b16 %v2596, %v2595
    %2613 = vmatprep.subr.bf16.mxu0 0
    %2614 = vmatpush1.bf16.msra.mxu0 %v2597
    %2615 = vmatprep.subr.bf16.mxu0 0
    %2616 = vmatpush1.bf16.msra.mxu0 %v2598
    %2617 = vmatprep.subr.bf16.mxu0 0
    %2618 = vmatpush1.bf16.msra.mxu0 %v2599
    %2619 = vmatprep.subr.bf16.mxu0 0
    %2620 = vmatpush1.bf16.msra.mxu0 %v2600
    %2621 = vmatprep.subr.bf16.mxu0 0
    %2622 = vmatpush1.bf16.msra.mxu0 %v2601
    %2623 = vmatprep.subr.bf16.mxu0 0
    %2624 = vmatpush1.bf16.msra.mxu0 %v2602
    %2625 = vmatprep.subr.bf16.mxu0 0
    %2626 = vmatpush1.bf16.msra.mxu0 %v2603
    %2627 = vmatprep.subr.bf16.mxu0 0
    %2628 = vmatpush1.bf16.msra.mxu0 %v2604
    %2629 = vmatprep.subr.bf16.mxu0 0
    %2630 = vmatpush1.bf16.msra.mxu0 0
    %2631 = vmatprep.subr.bf16.mxu0 0
    %2632 = vmatpush1.bf16.msra.mxu0 0
    %2633 = vmatprep.subr.bf16.mxu0 0
    %2634 = vmatpush1.bf16.msra.mxu0 0
    %2635 = vmatprep.subr.bf16.mxu0 0
    %2636 = vmatpush1.bf16.msra.mxu0 0
    %2637 = vmatprep.subr.bf16.mxu0 0
    %2638 = vmatpush1.bf16.msra.mxu0 0
    %2639 = vmatprep.subr.bf16.mxu0 0
    %2640 = vmatpush1.bf16.msra.mxu0 0
    %2641 = vmatprep.subr.bf16.mxu0 0
    %2642 = vmatpush1.bf16.msra.mxu0 0
    %2643 = vmatprep.subr.bf16.mxu0 0
    %2644 = vmatpush1.bf16.msra.mxu0 0
    %2645 = vmatprep.mubr.bf16.mxu0 0
    %2646 = vmatmul.mubr.bf16.gmra.mrb[0].mxu0 %v2540
    %v2647 = vpop.f32.mrb[0].mxu0
    %v2648 = vadd.f32 0.0, %v2647
    %v2649 = vpop.f32.mrb[0].mxu0
    %v2650 = vpop.f32.mrb[0].mxu0
    %v2651 = vadd.f32 0.0, %v2650
    %v2652 = vpop.f32.mrb[0].mxu0
    %2653 = vmatprep.mubr.bf16.mxu0 0
    %2654 = vmatmul.mubr.bf16.gmra.mrb[0].mxu0 %v2541
    %v2655 = vpop.f32.mrb[0].mxu0
    %v2656 = vadd.f32 0.0, %v2655
    %v2657 = vpop.f32.mrb[0].mxu0
    %v2658 = vpop.f32.mrb[0].mxu0
    %v2659 = vadd.f32 0.0, %v2658
    %v2660 = vpop.f32.mrb[0].mxu0
    %2661 = vmatprep.mubr.bf16.mxu0 0
    %2662 = vmatmul.mubr.bf16.gmra.mrb[0].mxu0 %v2542
    %v2663 = vpop.f32.mrb[0].mxu0
    %v2664 = vadd.f32 0.0, %v2663
    %v2665 = vpop.f32.mrb[0].mxu0
    %v2666 = vpop.f32.mrb[0].mxu0
    %v2667 = vadd.f32 0.0, %v2666
    %v2668 = vpop.f32.mrb[0].mxu0
    %2669 = vmatprep.mubr.bf16.mxu0 0
    %2670 = vmatmul.mubr.bf16.gmra.mrb[0].mxu0 %v2543
    %v2671 = vpop.f32.mrb[0].mxu0
    %v2672 = vadd.f32 0.0, %v2671
    %v2673 = vpop.f32.mrb[0].mxu0
    %v2674 = vpop.f32.mrb[0].mxu0
    %v2675 = vadd.f32 0.0, %v2674
    %v2676 = vpop.f32.mrb[0].mxu0
    %2677 = vmatprep.mubr.bf16.mxu0 0
    %2678 = vmatmul.mubr.bf16.gmra.mrb[0].mxu0 %v2544
    %v2679 = vpop.f32.mrb[0].mxu0
    %v2680 = vadd.f32 0.0, %v2679
    %v2681 = vpop.f32.mrb[0].mxu0
    %v2682 = vpop.f32.mrb[0].mxu0
    %v2683 = vadd.f32 0.0, %v2682
    %v2684 = vpop.f32.mrb[0].mxu0
    %2685 = vmatprep.mubr.bf16.mxu0 0
    %2686 = vmatmul.mubr.bf16.gmra.mrb[0].mxu0 %v2545
    %v2687 = vpop.f32.mrb[0].mxu0
    %v2688 = vadd.f32 0.0, %v2687
    %v2689 = vpop.f32.mrb[0].mxu0
    %v2690 = vpop.f32.mrb[0].mxu0
    %v2691 = vadd.f32 0.0, %v2690
    %v2692 = vpop.f32.mrb[0].mxu0
    %2693 = vmatprep.mubr.bf16.mxu0 0
    %2694 = vmatmul.mubr.bf16.gmra.mrb[0].mxu0 %v2546
    %v2695 = vpop.f32.mrb[0].mxu0
    %v2696 = vadd.f32 0.0, %v2695
    %v2697 = vpop.f32.mrb[0].mxu0
    %v2698 = vpop.f32.mrb[0].mxu0
    %v2699 = vadd.f32 0.0, %v2698
    %v2700 = vpop.f32.mrb[0].mxu0
    %2701 = vmatprep.mubr.bf16.mxu0 0
    %2702 = vmatmul.mubr.bf16.gmra.mrb[0].mxu0 %v2547
    %v2703 = vpop.f32.mrb[0].mxu0
    %v2704 = vadd.f32 0.0, %v2703
    %v2705 = vpop.f32.mrb[0].mxu0
    %v2706 = vpop.f32.mrb[0].mxu0
    %v2707 = vadd.f32 0.0, %v2706
    %v2708 = vpop.f32.mrb[0].mxu0
    %2709 = vdwg.mxu0
    %v2710 = vadd.f32 %v2462, %v2648
    %v2711 = vadd.f32 %v2465, %v2651
    %v2712 = vadd.f32 %v2470, %v2656
    %v2713 = vadd.f32 %v2473, %v2659
    %v2714 = vadd.f32 %v2478, %v2664
    %v2715 = vadd.f32 %v2481, %v2667
    %v2716 = vadd.f32 %v2486, %v2672
    %v2717 = vadd.f32 %v2489, %v2675
    %v2718 = vadd.f32 %v2494, %v2680
    %v2719 = vadd.f32 %v2497, %v2683
    %v2720 = vadd.f32 %v2502, %v2688
    %v2721 = vadd.f32 %v2505, %v2691
    %v2722 = vadd.f32 %v2510, %v2696
    %v2723 = vadd.f32 %v2513, %v2699
    %v2724 = vadd.f32 %v2518, %v2704
    %v2725 = vadd.f32 %v2521, %v2707
    %v2726 = vld [vmem:[#allocation3 + $0x3] sm:$0xff]
    %v2727 = vld [vmem:[#allocation3 + $0x13] sm:$0xff]
    %v2728 = vld [vmem:[#allocation3 + $0x23] sm:$0xff]
    %v2729 = vld [vmem:[#allocation3 + $0x33] sm:$0xff]
    %v2730 = vld [vmem:[#allocation3 + $0x43] sm:$0xff]
    %v2731 = vld [vmem:[#allocation3 + $0x53] sm:$0xff]
    %v2732 = vld [vmem:[#allocation3 + $0x63] sm:$0xff]
    %v2733 = vld [vmem:[#allocation3 + $0x73] sm:$0xff]
    %v2734 = vld [vmem:[#allocation3 + $0xc3] sm:$0xff]
    %v2735 = vld [vmem:[#allocation3 + $0xd3] sm:$0xff]
    %v2736 = vld [vmem:[#allocation3 + $0xe3] sm:$0xff]
    %v2737 = vld [vmem:[#allocation3 + $0xf3] sm:$0xff]
    %v2738 = vld [vmem:[#allocation3 + $0x103] sm:$0xff]
    %v2739 = vld [vmem:[#allocation3 + $0x113] sm:$0xff]
    %v2740 = vld [vmem:[#allocation3 + $0x123] sm:$0xff]
    %v2741 = vld [vmem:[#allocation3 + $0x133] sm:$0xff]
    %v2742 = vpack.c.bf16 %v2727, %v2726
    %v2743 = vpack.c.bf16 %v2729, %v2728
    %v2744 = vpack.c.bf16 %v2731, %v2730
    %v2745 = vpack.c.bf16 %v2733, %v2732
    %v2746 = vpack.c.bf16 %v2735, %v2734
    %v2747 = vpack.c.bf16 %v2737, %v2736
    %v2748 = vpack.c.bf16 %v2739, %v2738
    %v2749 = vpack.c.bf16 %v2741, %v2740
    %s2750 = scalar_lea.vmem %s3, 192
    %v2751 = vld [vmem:[%s2750] sm:$0xf]
    %v2752 = vld [vmem:[%s2750 + $0x4] sm:$0xf]
    %v2753 = vld [vmem:[%s2750 + $0x8] sm:$0xf]
    %v2754 = vld [vmem:[%s2750 + $0xc] sm:$0xf]
    %v2755 = vld [vmem:[%s2750 + $0x10] sm:$0xf]
    %v2756 = vld [vmem:[%s2750 + $0x14] sm:$0xf]
    %v2757 = vld [vmem:[%s2750 + $0x18] sm:$0xf]
    %v2758 = vld [vmem:[%s2750 + $0x1c] sm:$0xf]
    %v2759 = vld [vmem:[%s2750 + $0x20] sm:$0xf]
    %v2760 = vld [vmem:[%s2750 + $0x24] sm:$0xf]
    %v2761 = vld [vmem:[%s2750 + $0x28] sm:$0xf]
    %v2762 = vld [vmem:[%s2750 + $0x2c] sm:$0xf]
    %v2763 = vld [vmem:[%s2750 + $0x30] sm:$0xf]
    %v2764 = vld [vmem:[%s2750 + $0x34] sm:$0xf]
    %v2765 = vld [vmem:[%s2750 + $0x38] sm:$0xf]
    %v2766 = vld [vmem:[%s2750 + $0x3c] sm:$0xf]
    %v2783 = vunpack.c.l.b16 %v2751
    %v2784 = vunpack.c.l.b16 %v2752
    %v2785 = vunpack.c.l.b16 %v2753
    %v2786 = vunpack.c.l.b16 %v2754
    %v2787 = vunpack.c.l.b16 %v2755
    %v2788 = vunpack.c.l.b16 %v2756
    %v2789 = vunpack.c.l.b16 %v2757
    %v2790 = vunpack.c.l.b16 %v2758
    %v2791 = vunpack.c.l.b16 %v2759
    %v2792 = vunpack.c.l.b16 %v2760
    %v2793 = vunpack.c.l.b16 %v2761
    %v2794 = vunpack.c.l.b16 %v2762
    %v2795 = vunpack.c.l.b16 %v2763
    %v2796 = vunpack.c.l.b16 %v2764
    %v2797 = vunpack.c.l.b16 %v2765
    %v2798 = vunpack.c.l.b16 %v2766
    %v2799 = vpack.c.b16 %v2784, %v2783
    %v2800 = vpack.c.b16 %v2786, %v2785
    %v2801 = vpack.c.b16 %v2788, %v2787
    %v2802 = vpack.c.b16 %v2790, %v2789
    %v2803 = vpack.c.b16 %v2792, %v2791
    %v2804 = vpack.c.b16 %v2794, %v2793
    %v2805 = vpack.c.b16 %v2796, %v2795
    %v2806 = vpack.c.b16 %v2798, %v2797
    %2815 = vmatprep.subr.bf16.mxu0 0
    %2816 = vmatpush1.bf16.msra.mxu0 %v2799
    %2817 = vmatprep.subr.bf16.mxu0 0
    %2818 = vmatpush1.bf16.msra.mxu0 %v2800
    %2819 = vmatprep.subr.bf16.mxu0 0
    %2820 = vmatpush1.bf16.msra.mxu0 %v2801
    %2821 = vmatprep.subr.bf16.mxu0 0
    %2822 = vmatpush1.bf16.msra.mxu0 %v2802
    %2823 = vmatprep.subr.bf16.mxu0 0
    %2824 = vmatpush1.bf16.msra.mxu0 %v2803
    %2825 = vmatprep.subr.bf16.mxu0 0
    %2826 = vmatpush1.bf16.msra.mxu0 %v2804
    %2827 = vmatprep.subr.bf16.mxu0 0
    %2828 = vmatpush1.bf16.msra.mxu0 %v2805
    %2829 = vmatprep.subr.bf16.mxu0 0
    %2830 = vmatpush1.bf16.msra.mxu0 %v2806
    %2831 = vmatprep.subr.bf16.mxu0 0
    %2832 = vmatpush1.bf16.msra.mxu0 0
    %2833 = vmatprep.subr.bf16.mxu0 0
    %2834 = vmatpush1.bf16.msra.mxu0 0
    %2835 = vmatprep.subr.bf16.mxu0 0
    %2836 = vmatpush1.bf16.msra.mxu0 0
    %2837 = vmatprep.subr.bf16.mxu0 0
    %2838 = vmatpush1.bf16.msra.mxu0 0
    %2839 = vmatprep.subr.bf16.mxu0 0
    %2840 = vmatpush1.bf16.msra.mxu0 0
    %2841 = vmatprep.subr.bf16.mxu0 0
    %2842 = vmatpush1.bf16.msra.mxu0 0
    %2843 = vmatprep.subr.bf16.mxu0 0
    %2844 = vmatpush1.bf16.msra.mxu0 0
    %2845 = vmatprep.subr.bf16.mxu0 0
    %2846 = vmatpush1.bf16.msra.mxu0 0
    %2847 = vmatprep.mubr.bf16.mxu0 0
    %2848 = vmatmul.mubr.bf16.gmra.mrb[0].mxu0 %v2742
    %v2849 = vpop.f32.mrb[0].mxu0
    %v2850 = vadd.f32 0.0, %v2849
    %v2851 = vpop.f32.mrb[0].mxu0
    %v2852 = vpop.f32.mrb[0].mxu0
    %v2853 = vadd.f32 0.0, %v2852
    %v2854 = vpop.f32.mrb[0].mxu0
    %2855 = vmatprep.mubr.bf16.mxu0 0
    %2856 = vmatmul.mubr.bf16.gmra.mrb[0].mxu0 %v2743
    %v2857 = vpop.f32.mrb[0].mxu0
    %v2858 = vadd.f32 0.0, %v2857
    %v2859 = vpop.f32.mrb[0].mxu0
    %v2860 = vpop.f32.mrb[0].mxu0
    %v2861 = vadd.f32 0.0, %v2860
    %v2862 = vpop.f32.mrb[0].mxu0
    %2863 = vmatprep.mubr.bf16.mxu0 0
    %2864 = vmatmul.mubr.bf16.gmra.mrb[0].mxu0 %v2744
    %v2865 = vpop.f32.mrb[0].mxu0
    %v2866 = vadd.f32 0.0, %v2865
    %v2867 = vpop.f32.mrb[0].mxu0
    %v2868 = vpop.f32.mrb[0].mxu0
    %v2869 = vadd.f32 0.0, %v2868
    %v2870 = vpop.f32.mrb[0].mxu0
    %2871 = vmatprep.mubr.bf16.mxu0 0
    %2872 = vmatmul.mubr.bf16.gmra.mrb[0].mxu0 %v2745
    %v2873 = vpop.f32.mrb[0].mxu0
    %v2874 = vadd.f32 0.0, %v2873
    %v2875 = vpop.f32.mrb[0].mxu0
    %v2876 = vpop.f32.mrb[0].mxu0
    %v2877 = vadd.f32 0.0, %v2876
    %v2878 = vpop.f32.mrb[0].mxu0
    %2879 = vmatprep.mubr.bf16.mxu0 0
    %2880 = vmatmul.mubr.bf16.gmra.mrb[0].mxu0 %v2746
    %v2881 = vpop.f32.mrb[0].mxu0
    %v2882 = vadd.f32 0.0, %v2881
    %v2883 = vpop.f32.mrb[0].mxu0
    %v2884 = vpop.f32.mrb[0].mxu0
    %v2885 = vadd.f32 0.0, %v2884
    %v2886 = vpop.f32.mrb[0].mxu0
    %2887 = vmatprep.mubr.bf16.mxu0 0
    %2888 = vmatmul.mubr.bf16.gmra.mrb[0].mxu0 %v2747
    %v2889 = vpop.f32.mrb[0].mxu0
    %v2890 = vadd.f32 0.0, %v2889
    %v2891 = vpop.f32.mrb[0].mxu0
    %v2892 = vpop.f32.mrb[0].mxu0
    %v2893 = vadd.f32 0.0, %v2892
    %v2894 = vpop.f32.mrb[0].mxu0
    %2895 = vmatprep.mubr.bf16.mxu0 0
    %2896 = vmatmul.mubr.bf16.gmra.mrb[0].mxu0 %v2748
    %v2897 = vpop.f32.mrb[0].mxu0
    %v2898 = vadd.f32 0.0, %v2897
    %v2899 = vpop.f32.mrb[0].mxu0
    %v2900 = vpop.f32.mrb[0].mxu0
    %v2901 = vadd.f32 0.0, %v2900
    %v2902 = vpop.f32.mrb[0].mxu0
    %2903 = vmatprep.mubr.bf16.mxu0 0
    %2904 = vmatmul.mubr.bf16.gmra.mrb[0].mxu0 %v2749
    %v2905 = vpop.f32.mrb[0].mxu0
    %v2906 = vadd.f32 0.0, %v2905
    %v2907 = vpop.f32.mrb[0].mxu0
    %v2908 = vpop.f32.mrb[0].mxu0
    %v2909 = vadd.f32 0.0, %v2908
    %v2910 = vpop.f32.mrb[0].mxu0
    %2911 = vdwg.mxu0
    %v2912 = vadd.f32 %v2710, %v2850
    %v2913 = vadd.f32 %v2711, %v2853
    %v2914 = vadd.f32 %v2712, %v2858
    %v2915 = vadd.f32 %v2713, %v2861
    %v2916 = vadd.f32 %v2714, %v2866
    %v2917 = vadd.f32 %v2715, %v2869
    %v2918 = vadd.f32 %v2716, %v2874
    %v2919 = vadd.f32 %v2717, %v2877
    %v2920 = vadd.f32 %v2718, %v2882
    %v2921 = vadd.f32 %v2719, %v2885
    %v2922 = vadd.f32 %v2720, %v2890
    %v2923 = vadd.f32 %v2721, %v2893
    %v2924 = vadd.f32 %v2722, %v2898
    %v2925 = vadd.f32 %v2723, %v2901
    %v2926 = vadd.f32 %v2724, %v2906
    %v2927 = vadd.f32 %v2725, %v2909
    %v2928 = vld [vmem:[#allocation3 + $0x4] sm:$0xff]
    %v2929 = vld [vmem:[#allocation3 + $0x14] sm:$0xff]
    %v2930 = vld [vmem:[#allocation3 + $0x24] sm:$0xff]
    %v2931 = vld [vmem:[#allocation3 + $0x34] sm:$0xff]
    %v2932 = vld [vmem:[#allocation3 + $0x44] sm:$0xff]
    %v2933 = vld [vmem:[#allocation3 + $0x54] sm:$0xff]
    %v2934 = vld [vmem:[#allocation3 + $0x64] sm:$0xff]
    %v2935 = vld [vmem:[#allocation3 + $0x74] sm:$0xff]
    %v2936 = vld [vmem:[#allocation3 + $0xc4] sm:$0xff]
    %v2937 = vld [vmem:[#allocation3 + $0xd4] sm:$0xff]
    %v2938 = vld [vmem:[#allocation3 + $0xe4] sm:$0xff]
    %v2939 = vld [vmem:[#allocation3 + $0xf4] sm:$0xff]
    %v2940 = vld [vmem:[#allocation3 + $0x104] sm:$0xff]
    %v2941 = vld [vmem:[#allocation3 + $0x114] sm:$0xff]
    %v2942 = vld [vmem:[#allocation3 + $0x124] sm:$0xff]
    %v2943 = vld [vmem:[#allocation3 + $0x134] sm:$0xff]
    %v2944 = vpack.c.bf16 %v2929, %v2928
    %v2945 = vpack.c.bf16 %v2931, %v2930
    %v2946 = vpack.c.bf16 %v2933, %v2932
    %v2947 = vpack.c.bf16 %v2935, %v2934
    %v2948 = vpack.c.bf16 %v2937, %v2936
    %v2949 = vpack.c.bf16 %v2939, %v2938
    %v2950 = vpack.c.bf16 %v2941, %v2940
    %v2951 = vpack.c.bf16 %v2943, %v2942
    %s2952 = scalar_lea.vmem %s3, 256
    %v2953 = vld [vmem:[%s2952] sm:$0xf]
    %v2954 = vld [vmem:[%s2952 + $0x4] sm:$0xf]
    %v2955 = vld [vmem:[%s2952 + $0x8] sm:$0xf]
    %v2956 = vld [vmem:[%s2952 + $0xc] sm:$0xf]
    %v2957 = vld [vmem:[%s2952 + $0x10] sm:$0xf]
    %v2958 = vld [vmem:[%s2952 + $0x14] sm:$0xf]
    %v2959 = vld [vmem:[%s2952 + $0x18] sm:$0xf]
    %v2960 = vld [vmem:[%s2952 + $0x1c] sm:$0xf]
    %v2961 = vld [vmem:[%s2952 + $0x20] sm:$0xf]
    %v2962 = vld [vmem:[%s2952 + $0x24] sm:$0xf]
    %v2963 = vld [vmem:[%s2952 + $0x28] sm:$0xf]
    %v2964 = vld [vmem:[%s2952 + $0x2c] sm:$0xf]
    %v2965 = vld [vmem:[%s2952 + $0x30] sm:$0xf]
    %v2966 = vld [vmem:[%s2952 + $0x34] sm:$0xf]
    %v2967 = vld [vmem:[%s2952 + $0x38] sm:$0xf]
    %v2968 = vld [vmem:[%s2952 + $0x3c] sm:$0xf]
    %v2985 = vunpack.c.l.b16 %v2953
    %v2986 = vunpack.c.l.b16 %v2954
    %v2987 = vunpack.c.l.b16 %v2955
    %v2988 = vunpack.c.l.b16 %v2956
    %v2989 = vunpack.c.l.b16 %v2957
    %v2990 = vunpack.c.l.b16 %v2958
    %v2991 = vunpack.c.l.b16 %v2959
    %v2992 = vunpack.c.l.b16 %v2960
    %v2993 = vunpack.c.l.b16 %v2961
    %v2994 = vunpack.c.l.b16 %v2962
    %v2995 = vunpack.c.l.b16 %v2963
    %v2996 = vunpack.c.l.b16 %v2964
    %v2997 = vunpack.c.l.b16 %v2965
    %v2998 = vunpack.c.l.b16 %v2966
    %v2999 = vunpack.c.l.b16 %v2967
    %v3000 = vunpack.c.l.b16 %v2968
    %v3001 = vpack.c.b16 %v2986, %v2985
    %v3002 = vpack.c.b16 %v2988, %v2987
    %v3003 = vpack.c.b16 %v2990, %v2989
    %v3004 = vpack.c.b16 %v2992, %v2991
    %v3005 = vpack.c.b16 %v2994, %v2993
    %v3006 = vpack.c.b16 %v2996, %v2995
    %v3007 = vpack.c.b16 %v2998, %v2997
    %v3008 = vpack.c.b16 %v3000, %v2999
    %3017 = vmatprep.subr.bf16.mxu0 0
    %3018 = vmatpush1.bf16.msra.mxu0 %v3001
    %3019 = vmatprep.subr.bf16.mxu0 0
    %3020 = vmatpush1.bf16.msra.mxu0 %v3002
    %3021 = vmatprep.subr.bf16.mxu0 0
    %3022 = vmatpush1.bf16.msra.mxu0 %v3003
    %3023 = vmatprep.subr.bf16.mxu0 0
    %3024 = vmatpush1.bf16.msra.mxu0 %v3004
    %3025 = vmatprep.subr.bf16.mxu0 0
    %3026 = vmatpush1.bf16.msra.mxu0 %v3005
    %3027 = vmatprep.subr.bf16.mxu0 0
    %3028 = vmatpush1.bf16.msra.mxu0 %v3006
    %3029 = vmatprep.subr.bf16.mxu0 0
    %3030 = vmatpush1.bf16.msra.mxu0 %v3007
    %3031 = vmatprep.subr.bf16.mxu0 0
    %3032 = vmatpush1.bf16.msra.mxu0 %v3008
    %3033 = vmatprep.subr.bf16.mxu0 0
    %3034 = vmatpush1.bf16.msra.mxu0 0
    %3035 = vmatprep.subr.bf16.mxu0 0
    %3036 = vmatpush1.bf16.msra.mxu0 0
    %3037 = vmatprep.subr.bf16.mxu0 0
    %3038 = vmatpush1.bf16.msra.mxu0 0
    %3039 = vmatprep.subr.bf16.mxu0 0
    %3040 = vmatpush1.bf16.msra.mxu0 0
    %3041 = vmatprep.subr.bf16.mxu0 0
    %3042 = vmatpush1.bf16.msra.mxu0 0
    %3043 = vmatprep.subr.bf16.mxu0 0
    %3044 = vmatpush1.bf16.msra.mxu0 0
    %3045 = vmatprep.subr.bf16.mxu0 0
    %3046 = vmatpush1.bf16.msra.mxu0 0
    %3047 = vmatprep.subr.bf16.mxu0 0
    %3048 = vmatpush1.bf16.msra.mxu0 0
    %3049 = vmatprep.mubr.bf16.mxu0 0
    %3050 = vmatmul.mubr.bf16.gmra.mrb[0].mxu0 %v2944
    %v3051 = vpop.f32.mrb[0].mxu0
    %v3052 = vadd.f32 0.0, %v3051
    %v3053 = vpop.f32.mrb[0].mxu0
    %v3054 = vpop.f32.mrb[0].mxu0
    %v3055 = vadd.f32 0.0, %v3054
    %v3056 = vpop.f32.mrb[0].mxu0
    %3057 = vmatprep.mubr.bf16.mxu0 0
    %3058 = vmatmul.mubr.bf16.gmra.mrb[0].mxu0 %v2945
    %v3059 = vpop.f32.mrb[0].mxu0
    %v3060 = vadd.f32 0.0, %v3059
    %v3061 = vpop.f32.mrb[0].mxu0
    %v3062 = vpop.f32.mrb[0].mxu0
    %v3063 = vadd.f32 0.0, %v3062
    %v3064 = vpop.f32.mrb[0].mxu0
    %3065 = vmatprep.mubr.bf16.mxu0 0
    %3066 = vmatmul.mubr.bf16.gmra.mrb[0].mxu0 %v2946
    %v3067 = vpop.f32.mrb[0].mxu0
    %v3068 = vadd.f32 0.0, %v3067
    %v3069 = vpop.f32.mrb[0].mxu0
    %v3070 = vpop.f32.mrb[0].mxu0
    %v3071 = vadd.f32 0.0, %v3070
    %v3072 = vpop.f32.mrb[0].mxu0
    %3073 = vmatprep.mubr.bf16.mxu0 0
    %3074 = vmatmul.mubr.bf16.gmra.mrb[0].mxu0 %v2947
    %v3075 = vpop.f32.mrb[0].mxu0
    %v3076 = vadd.f32 0.0, %v3075
    %v3077 = vpop.f32.mrb[0].mxu0
    %v3078 = vpop.f32.mrb[0].mxu0
    %v3079 = vadd.f32 0.0, %v3078
    %v3080 = vpop.f32.mrb[0].mxu0
    %3081 = vmatprep.mubr.bf16.mxu0 0
    %3082 = vmatmul.mubr.bf16.gmra.mrb[0].mxu0 %v2948
    %v3083 = vpop.f32.mrb[0].mxu0
    %v3084 = vadd.f32 0.0, %v3083
    %v3085 = vpop.f32.mrb[0].mxu0
    %v3086 = vpop.f32.mrb[0].mxu0
    %v3087 = vadd.f32 0.0, %v3086
    %v3088 = vpop.f32.mrb[0].mxu0
    %3089 = vmatprep.mubr.bf16.mxu0 0
    %3090 = vmatmul.mubr.bf16.gmra.mrb[0].mxu0 %v2949
    %v3091 = vpop.f32.mrb[0].mxu0
    %v3092 = vadd.f32 0.0, %v3091
    %v3093 = vpop.f32.mrb[0].mxu0
    %v3094 = vpop.f32.mrb[0].mxu0
    %v3095 = vadd.f32 0.0, %v3094
    %v3096 = vpop.f32.mrb[0].mxu0
    %3097 = vmatprep.mubr.bf16.mxu0 0
    %3098 = vmatmul.mubr.bf16.gmra.mrb[0].mxu0 %v2950
    %v3099 = vpop.f32.mrb[0].mxu0
    %v3100 = vadd.f32 0.0, %v3099
    %v3101 = vpop.f32.mrb[0].mxu0
    %v3102 = vpop.f32.mrb[0].mxu0
    %v3103 = vadd.f32 0.0, %v3102
    %v3104 = vpop.f32.mrb[0].mxu0
    %3105 = vmatprep.mubr.bf16.mxu0 0
    %3106 = vmatmul.mubr.bf16.gmra.mrb[0].mxu0 %v2951
    %v3107 = vpop.f32.mrb[0].mxu0
    %v3108 = vadd.f32 0.0, %v3107
    %v3109 = vpop.f32.mrb[0].mxu0
    %v3110 = vpop.f32.mrb[0].mxu0
    %v3111 = vadd.f32 0.0, %v3110
    %v3112 = vpop.f32.mrb[0].mxu0
    %3113 = vdwg.mxu0
    %v3114 = vadd.f32 %v2912, %v3052
    %v3115 = vadd.f32 %v2913, %v3055
    %v3116 = vadd.f32 %v2914, %v3060
    %v3117 = vadd.f32 %v2915, %v3063
    %v3118 = vadd.f32 %v2916, %v3068
    %v3119 = vadd.f32 %v2917, %v3071
    %v3120 = vadd.f32 %v2918, %v3076
    %v3121 = vadd.f32 %v2919, %v3079
    %v3122 = vadd.f32 %v2920, %v3084
    %v3123 = vadd.f32 %v2921, %v3087
    %v3124 = vadd.f32 %v2922, %v3092
    %v3125 = vadd.f32 %v2923, %v3095
    %v3126 = vadd.f32 %v2924, %v3100
    %v3127 = vadd.f32 %v2925, %v3103
    %v3128 = vadd.f32 %v2926, %v3108
    %v3129 = vadd.f32 %v2927, %v3111
    %s3130 = scalar_lea.vmem [#allocation3], 16
    %v3131 = vld [vmem:[%s3130] sm:$0xff]
    %v3132 = vld [vmem:[%s3130 + $0x10] sm:$0xff]
    %v3133 = vld [vmem:[%s3130 + $0x20] sm:$0xff]
    %v3134 = vld [vmem:[%s3130 + $0x30] sm:$0xff]
    %v3135 = vld [vmem:[%s3130 + $0x40] sm:$0xff]
    %v3136 = vld [vmem:[%s3130 + $0x50] sm:$0xff]
    %v3137 = vld [vmem:[%s3130 + $0x60] sm:$0xff]
    %v3138 = vld [vmem:[%s3130 + $0x70] sm:$0xff]
    %v3139 = vld [vmem:[%s3130 + $0xc0] sm:$0xff]
    %v3140 = vld [vmem:[%s3130 + $0xd0] sm:$0xff]
    %v3141 = vld [vmem:[%s3130 + $0xe0] sm:$0xff]
    %v3142 = vld [vmem:[%s3130 + $0xf0] sm:$0xff]
    %v3143 = vld [vmem:[%s3130 + $0x100] sm:$0xff]
    %v3144 = vld [vmem:[%s3130 + $0x110] sm:$0xff]
    %v3145 = vld [vmem:[%s3130 + $0x120] sm:$0xff]
    %v3146 = vld [vmem:[%s3130 + $0x130] sm:$0xff]
    %v3147 = vpack.c.bf16 %v3132, %v3131
    %v3148 = vpack.c.bf16 %v3134, %v3133
    %v3149 = vpack.c.bf16 %v3136, %v3135
    %v3150 = vpack.c.bf16 %v3138, %v3137
    %v3151 = vpack.c.bf16 %v3140, %v3139
    %v3152 = vpack.c.bf16 %v3142, %v3141
    %v3153 = vpack.c.bf16 %v3144, %v3143
    %v3154 = vpack.c.bf16 %v3146, %v3145
    %s3155 = scalar_lea.vmem %s3, 320
    %v3156 = vld [vmem:[%s3155] sm:$0xf]
    %v3157 = vld [vmem:[%s3155 + $0x4] sm:$0xf]
    %v3158 = vld [vmem:[%s3155 + $0x8] sm:$0xf]
    %v3159 = vld [vmem:[%s3155 + $0xc] sm:$0xf]
    %v3160 = vld [vmem:[%s3155 + $0x10] sm:$0xf]
    %v3161 = vld [vmem:[%s3155 + $0x14] sm:$0xf]
    %v3162 = vld [vmem:[%s3155 + $0x18] sm:$0xf]
    %v3163 = vld [vmem:[%s3155 + $0x1c] sm:$0xf]
    %v3164 = vld [vmem:[%s3155 + $0x20] sm:$0xf]
    %v3165 = vld [vmem:[%s3155 + $0x24] sm:$0xf]
    %v3166 = vld [vmem:[%s3155 + $0x28] sm:$0xf]
    %v3167 = vld [vmem:[%s3155 + $0x2c] sm:$0xf]
    %v3168 = vld [vmem:[%s3155 + $0x30] sm:$0xf]
    %v3169 = vld [vmem:[%s3155 + $0x34] sm:$0xf]
    %v3170 = vld [vmem:[%s3155 + $0x38] sm:$0xf]
    %v3171 = vld [vmem:[%s3155 + $0x3c] sm:$0xf]
    %v3188 = vunpack.c.l.b16 %v3156
    %v3189 = vunpack.c.l.b16 %v3157
    %v3190 = vunpack.c.l.b16 %v3158
    %v3191 = vunpack.c.l.b16 %v3159
    %v3192 = vunpack.c.l.b16 %v3160
    %v3193 = vunpack.c.l.b16 %v3161
    %v3194 = vunpack.c.l.b16 %v3162
    %v3195 = vunpack.c.l.b16 %v3163
    %v3196 = vunpack.c.l.b16 %v3164
    %v3197 = vunpack.c.l.b16 %v3165
    %v3198 = vunpack.c.l.b16 %v3166
    %v3199 = vunpack.c.l.b16 %v3167
    %v3200 = vunpack.c.l.b16 %v3168
    %v3201 = vunpack.c.l.b16 %v3169
    %v3202 = vunpack.c.l.b16 %v3170
    %v3203 = vunpack.c.l.b16 %v3171
    %v3204 = vpack.c.b16 %v3189, %v3188
    %v3205 = vpack.c.b16 %v3191, %v3190
    %v3206 = vpack.c.b16 %v3193, %v3192
    %v3207 = vpack.c.b16 %v3195, %v3194
    %v3208 = vpack.c.b16 %v3197, %v3196
    %v3209 = vpack.c.b16 %v3199, %v3198
    %v3210 = vpack.c.b16 %v3201, %v3200
    %v3211 = vpack.c.b16 %v3203, %v3202
    %3220 = vmatprep.subr.bf16.mxu0 0
    %3221 = vmatpush1.bf16.msra.mxu0 %v3204
    %3222 = vmatprep.subr.bf16.mxu0 0
    %3223 = vmatpush1.bf16.msra.mxu0 %v3205
    %3224 = vmatprep.subr.bf16.mxu0 0
    %3225 = vmatpush1.bf16.msra.mxu0 %v3206
    %3226 = vmatprep.subr.bf16.mxu0 0
    %3227 = vmatpush1.bf16.msra.mxu0 %v3207
    %3228 = vmatprep.subr.bf16.mxu0 0
    %3229 = vmatpush1.bf16.msra.mxu0 %v3208
    %3230 = vmatprep.subr.bf16.mxu0 0
    %3231 = vmatpush1.bf16.msra.mxu0 %v3209
    %3232 = vmatprep.subr.bf16.mxu0 0
    %3233 = vmatpush1.bf16.msra.mxu0 %v3210
    %3234 = vmatprep.subr.bf16.mxu0 0
    %3235 = vmatpush1.bf16.msra.mxu0 %v3211
    %3236 = vmatprep.subr.bf16.mxu0 0
    %3237 = vmatpush1.bf16.msra.mxu0 0
    %3238 = vmatprep.subr.bf16.mxu0 0
    %3239 = vmatpush1.bf16.msra.mxu0 0
    %3240 = vmatprep.subr.bf16.mxu0 0
    %3241 = vmatpush1.bf16.msra.mxu0 0
    %3242 = vmatprep.subr.bf16.mxu0 0
    %3243 = vmatpush1.bf16.msra.mxu0 0
    %3244 = vmatprep.subr.bf16.mxu0 0
    %3245 = vmatpush1.bf16.msra.mxu0 0
    %3246 = vmatprep.subr.bf16.mxu0 0
    %3247 = vmatpush1.bf16.msra.mxu0 0
    %3248 = vmatprep.subr.bf16.mxu0 0
    %3249 = vmatpush1.bf16.msra.mxu0 0
    %3250 = vmatprep.subr.bf16.mxu0 0
    %3251 = vmatpush1.bf16.msra.mxu0 0
    %3252 = vmatprep.mubr.bf16.mxu0 0
    %3253 = vmatmul.mubr.bf16.gmra.mrb[0].mxu0 %v3147
    %v3254 = vpop.f32.mrb[0].mxu0
    %v3255 = vadd.f32 0.0, %v3254
    %v3256 = vpop.f32.mrb[0].mxu0
    %v3257 = vpop.f32.mrb[0].mxu0
    %v3258 = vadd.f32 0.0, %v3257
    %v3259 = vpop.f32.mrb[0].mxu0
    %3260 = vmatprep.mubr.bf16.mxu0 0
    %3261 = vmatmul.mubr.bf16.gmra.mrb[0].mxu0 %v3148
    %v3262 = vpop.f32.mrb[0].mxu0
    %v3263 = vadd.f32 0.0, %v3262
    %v3264 = vpop.f32.mrb[0].mxu0
    %v3265 = vpop.f32.mrb[0].mxu0
    %v3266 = vadd.f32 0.0, %v3265
    %v3267 = vpop.f32.mrb[0].mxu0
    %3268 = vmatprep.mubr.bf16.mxu0 0
    %3269 = vmatmul.mubr.bf16.gmra.mrb[0].mxu0 %v3149
    %v3270 = vpop.f32.mrb[0].mxu0
    %v3271 = vadd.f32 0.0, %v3270
    %v3272 = vpop.f32.mrb[0].mxu0
    %v3273 = vpop.f32.mrb[0].mxu0
    %v3274 = vadd.f32 0.0, %v3273
    %v3275 = vpop.f32.mrb[0].mxu0
    %3276 = vmatprep.mubr.bf16.mxu0 0
    %3277 = vmatmul.mubr.bf16.gmra.mrb[0].mxu0 %v3150
    %v3278 = vpop.f32.mrb[0].mxu0
    %v3279 = vadd.f32 0.0, %v3278
    %v3280 = vpop.f32.mrb[0].mxu0
    %v3281 = vpop.f32.mrb[0].mxu0
    %v3282 = vadd.f32 0.0, %v3281
    %v3283 = vpop.f32.mrb[0].mxu0
    %3284 = vmatprep.mubr.bf16.mxu0 0
    %3285 = vmatmul.mubr.bf16.gmra.mrb[0].mxu0 %v3151
    %v3286 = vpop.f32.mrb[0].mxu0
    %v3287 = vadd.f32 0.0, %v3286
    %v3288 = vpop.f32.mrb[0].mxu0
    %v3289 = vpop.f32.mrb[0].mxu0
    %v3290 = vadd.f32 0.0, %v3289
    %v3291 = vpop.f32.mrb[0].mxu0
    %3292 = vmatprep.mubr.bf16.mxu0 0
    %3293 = vmatmul.mubr.bf16.gmra.mrb[0].mxu0 %v3152
    %v3294 = vpop.f32.mrb[0].mxu0
    %v3295 = vadd.f32 0.0, %v3294
    %v3296 = vpop.f32.mrb[0].mxu0
    %v3297 = vpop.f32.mrb[0].mxu0
    %v3298 = vadd.f32 0.0, %v3297
    %v3299 = vpop.f32.mrb[0].mxu0
    %3300 = vmatprep.mubr.bf16.mxu0 0
    %3301 = vmatmul.mubr.bf16.gmra.mrb[0].mxu0 %v3153
    %v3302 = vpop.f32.mrb[0].mxu0
    %v3303 = vadd.f32 0.0, %v3302
    %v3304 = vpop.f32.mrb[0].mxu0
    %v3305 = vpop.f32.mrb[0].mxu0
    %v3306 = vadd.f32 0.0, %v3305
    %v3307 = vpop.f32.mrb[0].mxu0
    %3308 = vmatprep.mubr.bf16.mxu0 0
    %3309 = vmatmul.mubr.bf16.gmra.mrb[0].mxu0 %v3154
    %v3310 = vpop.f32.mrb[0].mxu0
    %v3311 = vadd.f32 0.0, %v3310
    %v3312 = vpop.f32.mrb[0].mxu0
    %v3313 = vpop.f32.mrb[0].mxu0
    %v3314 = vadd.f32 0.0, %v3313
    %v3315 = vpop.f32.mrb[0].mxu0
    %3316 = vdwg.mxu0
    %v3317 = vadd.f32 %v3114, %v3255
    %v3318 = vadd.f32 %v3115, %v3258
    %v3319 = vadd.f32 %v3116, %v3263
    %v3320 = vadd.f32 %v3117, %v3266
    %v3321 = vadd.f32 %v3118, %v3271
    %v3322 = vadd.f32 %v3119, %v3274
    %v3323 = vadd.f32 %v3120, %v3279
    %v3324 = vadd.f32 %v3121, %v3282
    %v3325 = vadd.f32 %v3122, %v3287
    %v3326 = vadd.f32 %v3123, %v3290
    %v3327 = vadd.f32 %v3124, %v3295
    %v3328 = vadd.f32 %v3125, %v3298
    %v3329 = vadd.f32 %v3126, %v3303
    %v3330 = vadd.f32 %v3127, %v3306
    %v3331 = vadd.f32 %v3128, %v3311
    %v3332 = vadd.f32 %v3129, %v3314
    %v3333 = vld [vmem:[%s3130 + $0x1] sm:$0xff]
    %v3334 = vld [vmem:[%s3130 + $0x11] sm:$0xff]
    %v3335 = vld [vmem:[%s3130 + $0x21] sm:$0xff]
    %v3336 = vld [vmem:[%s3130 + $0x31] sm:$0xff]
    %v3337 = vld [vmem:[%s3130 + $0x41] sm:$0xff]
    %v3338 = vld [vmem:[%s3130 + $0x51] sm:$0xff]
    %v3339 = vld [vmem:[%s3130 + $0x61] sm:$0xff]
    %v3340 = vld [vmem:[%s3130 + $0x71] sm:$0xff]
    %v3341 = vld [vmem:[%s3130 + $0xc1] sm:$0xff]
    %v3342 = vld [vmem:[%s3130 + $0xd1] sm:$0xff]
    %v3343 = vld [vmem:[%s3130 + $0xe1] sm:$0xff]
    %v3344 = vld [vmem:[%s3130 + $0xf1] sm:$0xff]
    %v3345 = vld [vmem:[%s3130 + $0x101] sm:$0xff]
    %v3346 = vld [vmem:[%s3130 + $0x111] sm:$0xff]
    %v3347 = vld [vmem:[%s3130 + $0x121] sm:$0xff]
    %v3348 = vld [vmem:[%s3130 + $0x131] sm:$0xff]
    %v3349 = vpack.c.bf16 %v3334, %v3333
    %v3350 = vpack.c.bf16 %v3336, %v3335
    %v3351 = vpack.c.bf16 %v3338, %v3337
    %v3352 = vpack.c.bf16 %v3340, %v3339
    %v3353 = vpack.c.bf16 %v3342, %v3341
    %v3354 = vpack.c.bf16 %v3344, %v3343
    %v3355 = vpack.c.bf16 %v3346, %v3345
    %v3356 = vpack.c.bf16 %v3348, %v3347
    %s3357 = scalar_lea.vmem %s3, 384
    %v3358 = vld [vmem:[%s3357] sm:$0xf]
    %v3359 = vld [vmem:[%s3357 + $0x4] sm:$0xf]
    %v3360 = vld [vmem:[%s3357 + $0x8] sm:$0xf]
    %v3361 = vld [vmem:[%s3357 + $0xc] sm:$0xf]
    %v3362 = vld [vmem:[%s3357 + $0x10] sm:$0xf]
    %v3363 = vld [vmem:[%s3357 + $0x14] sm:$0xf]
    %v3364 = vld [vmem:[%s3357 + $0x18] sm:$0xf]
    %v3365 = vld [vmem:[%s3357 + $0x1c] sm:$0xf]
    %v3366 = vld [vmem:[%s3357 + $0x20] sm:$0xf]
    %v3367 = vld [vmem:[%s3357 + $0x24] sm:$0xf]
    %v3368 = vld [vmem:[%s3357 + $0x28] sm:$0xf]
    %v3369 = vld [vmem:[%s3357 + $0x2c] sm:$0xf]
    %v3370 = vld [vmem:[%s3357 + $0x30] sm:$0xf]
    %v3371 = vld [vmem:[%s3357 + $0x34] sm:$0xf]
    %v3372 = vld [vmem:[%s3357 + $0x38] sm:$0xf]
    %v3373 = vld [vmem:[%s3357 + $0x3c] sm:$0xf]
    %v3390 = vunpack.c.l.b16 %v3358
    %v3391 = vunpack.c.l.b16 %v3359
    %v3392 = vunpack.c.l.b16 %v3360
    %v3393 = vunpack.c.l.b16 %v3361
    %v3394 = vunpack.c.l.b16 %v3362
    %v3395 = vunpack.c.l.b16 %v3363
    %v3396 = vunpack.c.l.b16 %v3364
    %v3397 = vunpack.c.l.b16 %v3365
    %v3398 = vunpack.c.l.b16 %v3366
    %v3399 = vunpack.c.l.b16 %v3367
    %v3400 = vunpack.c.l.b16 %v3368
    %v3401 = vunpack.c.l.b16 %v3369
    %v3402 = vunpack.c.l.b16 %v3370
    %v3403 = vunpack.c.l.b16 %v3371
    %v3404 = vunpack.c.l.b16 %v3372
    %v3405 = vunpack.c.l.b16 %v3373
    %v3406 = vpack.c.b16 %v3391, %v3390
    %v3407 = vpack.c.b16 %v3393, %v3392
    %v3408 = vpack.c.b16 %v3395, %v3394
    %v3409 = vpack.c.b16 %v3397, %v3396
    %v3410 = vpack.c.b16 %v3399, %v3398
    %v3411 = vpack.c.b16 %v3401, %v3400
    %v3412 = vpack.c.b16 %v3403, %v3402
    %v3413 = vpack.c.b16 %v3405, %v3404
    %3422 = vmatprep.subr.bf16.mxu0 0
    %3423 = vmatpush1.bf16.msra.mxu0 %v3406
    %3424 = vmatprep.subr.bf16.mxu0 0
    %3425 = vmatpush1.bf16.msra.mxu0 %v3407
    %3426 = vmatprep.subr.bf16.mxu0 0
    %3427 = vmatpush1.bf16.msra.mxu0 %v3408
    %3428 = vmatprep.subr.bf16.mxu0 0
    %3429 = vmatpush1.bf16.msra.mxu0 %v3409
    %3430 = vmatprep.subr.bf16.mxu0 0
    %3431 = vmatpush1.bf16.msra.mxu0 %v3410
    %3432 = vmatprep.subr.bf16.mxu0 0
    %3433 = vmatpush1.bf16.msra.mxu0 %v3411
    %3434 = vmatprep.subr.bf16.mxu0 0
    %3435 = vmatpush1.bf16.msra.mxu0 %v3412
    %3436 = vmatprep.subr.bf16.mxu0 0
    %3437 = vmatpush1.bf16.msra.mxu0 %v3413
    %3438 = vmatprep.subr.bf16.mxu0 0
    %3439 = vmatpush1.bf16.msra.mxu0 0
    %3440 = vmatprep.subr.bf16.mxu0 0
    %3441 = vmatpush1.bf16.msra.mxu0 0
    %3442 = vmatprep.subr.bf16.mxu0 0
    %3443 = vmatpush1.bf16.msra.mxu0 0
    %3444 = vmatprep.subr.bf16.mxu0 0
    %3445 = vmatpush1.bf16.msra.mxu0 0
    %3446 = vmatprep.subr.bf16.mxu0 0
    %3447 = vmatpush1.bf16.msra.mxu0 0
    %3448 = vmatprep.subr.bf16.mxu0 0
    %3449 = vmatpush1.bf16.msra.mxu0 0
    %3450 = vmatprep.subr.bf16.mxu0 0
    %3451 = vmatpush1.bf16.msra.mxu0 0
    %3452 = vmatprep.subr.bf16.mxu0 0
    %3453 = vmatpush1.bf16.msra.mxu0 0
    %3454 = vmatprep.mubr.bf16.mxu0 0
    %3455 = vmatmul.mubr.bf16.gmra.mrb[0].mxu0 %v3349
    %v3456 = vpop.f32.mrb[0].mxu0
    %v3457 = vadd.f32 0.0, %v3456
    %v3458 = vpop.f32.mrb[0].mxu0
    %v3459 = vpop.f32.mrb[0].mxu0
    %v3460 = vadd.f32 0.0, %v3459
    %v3461 = vpop.f32.mrb[0].mxu0
    %3462 = vmatprep.mubr.bf16.mxu0 0
    %3463 = vmatmul.mubr.bf16.gmra.mrb[0].mxu0 %v3350
    %v3464 = vpop.f32.mrb[0].mxu0
    %v3465 = vadd.f32 0.0, %v3464
    %v3466 = vpop.f32.mrb[0].mxu0
    %v3467 = vpop.f32.mrb[0].mxu0
    %v3468 = vadd.f32 0.0, %v3467
    %v3469 = vpop.f32.mrb[0].mxu0
    %3470 = vmatprep.mubr.bf16.mxu0 0
    %3471 = vmatmul.mubr.bf16.gmra.mrb[0].mxu0 %v3351
    %v3472 = vpop.f32.mrb[0].mxu0
    %v3473 = vadd.f32 0.0, %v3472
    %v3474 = vpop.f32.mrb[0].mxu0
    %v3475 = vpop.f32.mrb[0].mxu0
    %v3476 = vadd.f32 0.0, %v3475
    %v3477 = vpop.f32.mrb[0].mxu0
    %3478 = vmatprep.mubr.bf16.mxu0 0
    %3479 = vmatmul.mubr.bf16.gmra.mrb[0].mxu0 %v3352
    %v3480 = vpop.f32.mrb[0].mxu0
    %v3481 = vadd.f32 0.0, %v3480
    %v3482 = vpop.f32.mrb[0].mxu0
    %v3483 = vpop.f32.mrb[0].mxu0
    %v3484 = vadd.f32 0.0, %v3483
    %v3485 = vpop.f32.mrb[0].mxu0
    %3486 = vmatprep.mubr.bf16.mxu0 0
    %3487 = vmatmul.mubr.bf16.gmra.mrb[0].mxu0 %v3353
    %v3488 = vpop.f32.mrb[0].mxu0
    %v3489 = vadd.f32 0.0, %v3488
    %v3490 = vpop.f32.mrb[0].mxu0
    %v3491 = vpop.f32.mrb[0].mxu0
    %v3492 = vadd.f32 0.0, %v3491
    %v3493 = vpop.f32.mrb[0].mxu0
    %3494 = vmatprep.mubr.bf16.mxu0 0
    %3495 = vmatmul.mubr.bf16.gmra.mrb[0].mxu0 %v3354
    %v3496 = vpop.f32.mrb[0].mxu0
    %v3497 = vadd.f32 0.0, %v3496
    %v3498 = vpop.f32.mrb[0].mxu0
    %v3499 = vpop.f32.mrb[0].mxu0
    %v3500 = vadd.f32 0.0, %v3499
    %v3501 = vpop.f32.mrb[0].mxu0
    %3502 = vmatprep.mubr.bf16.mxu0 0
    %3503 = vmatmul.mubr.bf16.gmra.mrb[0].mxu0 %v3355
    %v3504 = vpop.f32.mrb[0].mxu0
    %v3505 = vadd.f32 0.0, %v3504
    %v3506 = vpop.f32.mrb[0].mxu0
    %v3507 = vpop.f32.mrb[0].mxu0
    %v3508 = vadd.f32 0.0, %v3507
    %v3509 = vpop.f32.mrb[0].mxu0
    %3510 = vmatprep.mubr.bf16.mxu0 0
    %3511 = vmatmul.mubr.bf16.gmra.mrb[0].mxu0 %v3356
    %v3512 = vpop.f32.mrb[0].mxu0
    %v3513 = vadd.f32 0.0, %v3512
    %v3514 = vpop.f32.mrb[0].mxu0
    %v3515 = vpop.f32.mrb[0].mxu0
    %v3516 = vadd.f32 0.0, %v3515
    %v3517 = vpop.f32.mrb[0].mxu0
    %3518 = vdwg.mxu0
    %v3519 = vadd.f32 %v3317, %v3457
    %v3520 = vadd.f32 %v3318, %v3460
    %v3521 = vadd.f32 %v3319, %v3465
    %v3522 = vadd.f32 %v3320, %v3468
    %v3523 = vadd.f32 %v3321, %v3473
    %v3524 = vadd.f32 %v3322, %v3476
    %v3525 = vadd.f32 %v3323, %v3481
    %v3526 = vadd.f32 %v3324, %v3484
    %v3527 = vadd.f32 %v3325, %v3489
    %v3528 = vadd.f32 %v3326, %v3492
    %v3529 = vadd.f32 %v3327, %v3497
    %v3530 = vadd.f32 %v3328, %v3500
    %v3531 = vadd.f32 %v3329, %v3505
    %v3532 = vadd.f32 %v3330, %v3508
    %v3533 = vadd.f32 %v3331, %v3513
    %v3534 = vadd.f32 %v3332, %v3516
    %v3535 = vld [vmem:[%s3130 + $0x2] sm:$0xff]
    %v3536 = vld [vmem:[%s3130 + $0x12] sm:$0xff]
    %v3537 = vld [vmem:[%s3130 + $0x22] sm:$0xff]
    %v3538 = vld [vmem:[%s3130 + $0x32] sm:$0xff]
    %v3539 = vld [vmem:[%s3130 + $0x42] sm:$0xff]
    %v3540 = vld [vmem:[%s3130 + $0x52] sm:$0xff]
    %v3541 = vld [vmem:[%s3130 + $0x62] sm:$0xff]
    %v3542 = vld [vmem:[%s3130 + $0x72] sm:$0xff]
    %v3543 = vld [vmem:[%s3130 + $0xc2] sm:$0xff]
    %v3544 = vld [vmem:[%s3130 + $0xd2] sm:$0xff]
    %v3545 = vld [vmem:[%s3130 + $0xe2] sm:$0xff]
    %v3546 = vld [vmem:[%s3130 + $0xf2] sm:$0xff]
    %v3547 = vld [vmem:[%s3130 + $0x102] sm:$0xff]
    %v3548 = vld [vmem:[%s3130 + $0x112] sm:$0xff]
    %v3549 = vld [vmem:[%s3130 + $0x122] sm:$0xff]
    %v3550 = vld [vmem:[%s3130 + $0x132] sm:$0xff]
    %v3551 = vpack.c.bf16 %v3536, %v3535
    %v3552 = vpack.c.bf16 %v3538, %v3537
    %v3553 = vpack.c.bf16 %v3540, %v3539
    %v3554 = vpack.c.bf16 %v3542, %v3541
    %v3555 = vpack.c.bf16 %v3544, %v3543
    %v3556 = vpack.c.bf16 %v3546, %v3545
    %v3557 = vpack.c.bf16 %v3548, %v3547
    %v3558 = vpack.c.bf16 %v3550, %v3549
    %s3559 = scalar_lea.vmem %s3, 448
    %v3560 = vld [vmem:[%s3559] sm:$0xf]
    %v3561 = vld [vmem:[%s3559 + $0x4] sm:$0xf]
    %v3562 = vld [vmem:[%s3559 + $0x8] sm:$0xf]
    %v3563 = vld [vmem:[%s3559 + $0xc] sm:$0xf]
    %v3564 = vld [vmem:[%s3559 + $0x10] sm:$0xf]
    %v3565 = vld [vmem:[%s3559 + $0x14] sm:$0xf]
    %v3566 = vld [vmem:[%s3559 + $0x18] sm:$0xf]
    %v3567 = vld [vmem:[%s3559 + $0x1c] sm:$0xf]
    %v3568 = vld [vmem:[%s3559 + $0x20] sm:$0xf]
    %v3569 = vld [vmem:[%s3559 + $0x24] sm:$0xf]
    %v3570 = vld [vmem:[%s3559 + $0x28] sm:$0xf]
    %v3571 = vld [vmem:[%s3559 + $0x2c] sm:$0xf]
    %v3572 = vld [vmem:[%s3559 + $0x30] sm:$0xf]
    %v3573 = vld [vmem:[%s3559 + $0x34] sm:$0xf]
    %v3574 = vld [vmem:[%s3559 + $0x38] sm:$0xf]
    %v3575 = vld [vmem:[%s3559 + $0x3c] sm:$0xf]
    %v3592 = vunpack.c.l.b16 %v3560
    %v3593 = vunpack.c.l.b16 %v3561
    %v3594 = vunpack.c.l.b16 %v3562
    %v3595 = vunpack.c.l.b16 %v3563
    %v3596 = vunpack.c.l.b16 %v3564
    %v3597 = vunpack.c.l.b16 %v3565
    %v3598 = vunpack.c.l.b16 %v3566
    %v3599 = vunpack.c.l.b16 %v3567
    %v3600 = vunpack.c.l.b16 %v3568
    %v3601 = vunpack.c.l.b16 %v3569
    %v3602 = vunpack.c.l.b16 %v3570
    %v3603 = vunpack.c.l.b16 %v3571
    %v3604 = vunpack.c.l.b16 %v3572
    %v3605 = vunpack.c.l.b16 %v3573
    %v3606 = vunpack.c.l.b16 %v3574
    %v3607 = vunpack.c.l.b16 %v3575
    %v3608 = vpack.c.b16 %v3593, %v3592
    %v3609 = vpack.c.b16 %v3595, %v3594
    %v3610 = vpack.c.b16 %v3597, %v3596
    %v3611 = vpack.c.b16 %v3599, %v3598
    %v3612 = vpack.c.b16 %v3601, %v3600
    %v3613 = vpack.c.b16 %v3603, %v3602
    %v3614 = vpack.c.b16 %v3605, %v3604
    %v3615 = vpack.c.b16 %v3607, %v3606
    %3624 = vmatprep.subr.bf16.mxu0 0
    %3625 = vmatpush1.bf16.msra.mxu0 %v3608
    %3626 = vmatprep.subr.bf16.mxu0 0
    %3627 = vmatpush1.bf16.msra.mxu0 %v3609
    %3628 = vmatprep.subr.bf16.mxu0 0
    %3629 = vmatpush1.bf16.msra.mxu0 %v3610
    %3630 = vmatprep.subr.bf16.mxu0 0
    %3631 = vmatpush1.bf16.msra.mxu0 %v3611
    %3632 = vmatprep.subr.bf16.mxu0 0
    %3633 = vmatpush1.bf16.msra.mxu0 %v3612
    %3634 = vmatprep.subr.bf16.mxu0 0
    %3635 = vmatpush1.bf16.msra.mxu0 %v3613
    %3636 = vmatprep.subr.bf16.mxu0 0
    %3637 = vmatpush1.bf16.msra.mxu0 %v3614
    %3638 = vmatprep.subr.bf16.mxu0 0
    %3639 = vmatpush1.bf16.msra.mxu0 %v3615
    %3640 = vmatprep.subr.bf16.mxu0 0
    %3641 = vmatpush1.bf16.msra.mxu0 0
    %3642 = vmatprep.subr.bf16.mxu0 0
    %3643 = vmatpush1.bf16.msra.mxu0 0
    %3644 = vmatprep.subr.bf16.mxu0 0
    %3645 = vmatpush1.bf16.msra.mxu0 0
    %3646 = vmatprep.subr.bf16.mxu0 0
    %3647 = vmatpush1.bf16.msra.mxu0 0
    %3648 = vmatprep.subr.bf16.mxu0 0
    %3649 = vmatpush1.bf16.msra.mxu0 0
    %3650 = vmatprep.subr.bf16.mxu0 0
    %3651 = vmatpush1.bf16.msra.mxu0 0
    %3652 = vmatprep.subr.bf16.mxu0 0
    %3653 = vmatpush1.bf16.msra.mxu0 0
    %3654 = vmatprep.subr.bf16.mxu0 0
    %3655 = vmatpush1.bf16.msra.mxu0 0
    %3656 = vmatprep.mubr.bf16.mxu0 0
    %3657 = vmatmul.mubr.bf16.gmra.mrb[0].mxu0 %v3551
    %v3658 = vpop.f32.mrb[0].mxu0
    %v3659 = vadd.f32 0.0, %v3658
    %v3660 = vpop.f32.mrb[0].mxu0
    %v3661 = vpop.f32.mrb[0].mxu0
    %v3662 = vadd.f32 0.0, %v3661
    %v3663 = vpop.f32.mrb[0].mxu0
    %3664 = vmatprep.mubr.bf16.mxu0 0
    %3665 = vmatmul.mubr.bf16.gmra.mrb[0].mxu0 %v3552
    %v3666 = vpop.f32.mrb[0].mxu0
    %v3667 = vadd.f32 0.0, %v3666
    %v3668 = vpop.f32.mrb[0].mxu0
    %v3669 = vpop.f32.mrb[0].mxu0
    %v3670 = vadd.f32 0.0, %v3669
    %v3671 = vpop.f32.mrb[0].mxu0
    %3672 = vmatprep.mubr.bf16.mxu0 0
    %3673 = vmatmul.mubr.bf16.gmra.mrb[0].mxu0 %v3553
    %v3674 = vpop.f32.mrb[0].mxu0
    %v3675 = vadd.f32 0.0, %v3674
    %v3676 = vpop.f32.mrb[0].mxu0
    %v3677 = vpop.f32.mrb[0].mxu0
    %v3678 = vadd.f32 0.0, %v3677
    %v3679 = vpop.f32.mrb[0].mxu0
    %3680 = vmatprep.mubr.bf16.mxu0 0
    %3681 = vmatmul.mubr.bf16.gmra.mrb[0].mxu0 %v3554
    %v3682 = vpop.f32.mrb[0].mxu0
    %v3683 = vadd.f32 0.0, %v3682
    %v3684 = vpop.f32.mrb[0].mxu0
    %v3685 = vpop.f32.mrb[0].mxu0
    %v3686 = vadd.f32 0.0, %v3685
    %v3687 = vpop.f32.mrb[0].mxu0
    %3688 = vmatprep.mubr.bf16.mxu0 0
    %3689 = vmatmul.mubr.bf16.gmra.mrb[0].mxu0 %v3555
    %v3690 = vpop.f32.mrb[0].mxu0
    %v3691 = vadd.f32 0.0, %v3690
    %v3692 = vpop.f32.mrb[0].mxu0
    %v3693 = vpop.f32.mrb[0].mxu0
    %v3694 = vadd.f32 0.0, %v3693
    %v3695 = vpop.f32.mrb[0].mxu0
    %3696 = vmatprep.mubr.bf16.mxu0 0
    %3697 = vmatmul.mubr.bf16.gmra.mrb[0].mxu0 %v3556
    %v3698 = vpop.f32.mrb[0].mxu0
    %v3699 = vadd.f32 0.0, %v3698
    %v3700 = vpop.f32.mrb[0].mxu0
    %v3701 = vpop.f32.mrb[0].mxu0
    %v3702 = vadd.f32 0.0, %v3701
    %v3703 = vpop.f32.mrb[0].mxu0
    %3704 = vmatprep.mubr.bf16.mxu0 0
    %3705 = vmatmul.mubr.bf16.gmra.mrb[0].mxu0 %v3557
    %v3706 = vpop.f32.mrb[0].mxu0
    %v3707 = vadd.f32 0.0, %v3706
    %v3708 = vpop.f32.mrb[0].mxu0
    %v3709 = vpop.f32.mrb[0].mxu0
    %v3710 = vadd.f32 0.0, %v3709
    %v3711 = vpop.f32.mrb[0].mxu0
    %3712 = vmatprep.mubr.bf16.mxu0 0
    %3713 = vmatmul.mubr.bf16.gmra.mrb[0].mxu0 %v3558
    %v3714 = vpop.f32.mrb[0].mxu0
    %v3715 = vadd.f32 0.0, %v3714
    %v3716 = vpop.f32.mrb[0].mxu0
    %v3717 = vpop.f32.mrb[0].mxu0
    %v3718 = vadd.f32 0.0, %v3717
    %v3719 = vpop.f32.mrb[0].mxu0
    %3720 = vdwg.mxu0
    %v3721 = vadd.f32 %v3519, %v3659
    %v3722 = vadd.f32 %v3520, %v3662
    %v3723 = vadd.f32 %v3521, %v3667
    %v3724 = vadd.f32 %v3522, %v3670
    %v3725 = vadd.f32 %v3523, %v3675
    %v3726 = vadd.f32 %v3524, %v3678
    %v3727 = vadd.f32 %v3525, %v3683
    %v3728 = vadd.f32 %v3526, %v3686
    %v3729 = vadd.f32 %v3527, %v3691
    %v3730 = vadd.f32 %v3528, %v3694
    %v3731 = vadd.f32 %v3529, %v3699
    %v3732 = vadd.f32 %v3530, %v3702
    %v3733 = vadd.f32 %v3531, %v3707
    %v3734 = vadd.f32 %v3532, %v3710
    %v3735 = vadd.f32 %v3533, %v3715
    %v3736 = vadd.f32 %v3534, %v3718
    %v3737 = vld [vmem:[%s3130 + $0x3] sm:$0xff]
    %v3738 = vld [vmem:[%s3130 + $0x13] sm:$0xff]
    %v3739 = vld [vmem:[%s3130 + $0x23] sm:$0xff]
    %v3740 = vld [vmem:[%s3130 + $0x33] sm:$0xff]
    %v3741 = vld [vmem:[%s3130 + $0x43] sm:$0xff]
    %v3742 = vld [vmem:[%s3130 + $0x53] sm:$0xff]
    %v3743 = vld [vmem:[%s3130 + $0x63] sm:$0xff]
    %v3744 = vld [vmem:[%s3130 + $0x73] sm:$0xff]
    %v3745 = vld [vmem:[%s3130 + $0xc3] sm:$0xff]
    %v3746 = vld [vmem:[%s3130 + $0xd3] sm:$0xff]
    %v3747 = vld [vmem:[%s3130 + $0xe3] sm:$0xff]
    %v3748 = vld [vmem:[%s3130 + $0xf3] sm:$0xff]
    %v3749 = vld [vmem:[%s3130 + $0x103] sm:$0xff]
    %v3750 = vld [vmem:[%s3130 + $0x113] sm:$0xff]
    %v3751 = vld [vmem:[%s3130 + $0x123] sm:$0xff]
    %v3752 = vld [vmem:[%s3130 + $0x133] sm:$0xff]
    %v3753 = vpack.c.bf16 %v3738, %v3737
    %v3754 = vpack.c.bf16 %v3740, %v3739
    %v3755 = vpack.c.bf16 %v3742, %v3741
    %v3756 = vpack.c.bf16 %v3744, %v3743
    %v3757 = vpack.c.bf16 %v3746, %v3745
    %v3758 = vpack.c.bf16 %v3748, %v3747
    %v3759 = vpack.c.bf16 %v3750, %v3749
    %v3760 = vpack.c.bf16 %v3752, %v3751
    %s3761 = scalar_lea.vmem %s3, 512
    %v3762 = vld [vmem:[%s3761] sm:$0xf]
    %v3763 = vld [vmem:[%s3761 + $0x4] sm:$0xf]
    %v3764 = vld [vmem:[%s3761 + $0x8] sm:$0xf]
    %v3765 = vld [vmem:[%s3761 + $0xc] sm:$0xf]
    %v3766 = vld [vmem:[%s3761 + $0x10] sm:$0xf]
    %v3767 = vld [vmem:[%s3761 + $0x14] sm:$0xf]
    %v3768 = vld [vmem:[%s3761 + $0x18] sm:$0xf]
    %v3769 = vld [vmem:[%s3761 + $0x1c] sm:$0xf]
    %v3770 = vld [vmem:[%s3761 + $0x20] sm:$0xf]
    %v3771 = vld [vmem:[%s3761 + $0x24] sm:$0xf]
    %v3772 = vld [vmem:[%s3761 + $0x28] sm:$0xf]
    %v3773 = vld [vmem:[%s3761 + $0x2c] sm:$0xf]
    %v3774 = vld [vmem:[%s3761 + $0x30] sm:$0xf]
    %v3775 = vld [vmem:[%s3761 + $0x34] sm:$0xf]
    %v3776 = vld [vmem:[%s3761 + $0x38] sm:$0xf]
    %v3777 = vld [vmem:[%s3761 + $0x3c] sm:$0xf]
    %v3794 = vunpack.c.l.b16 %v3762
    %v3795 = vunpack.c.l.b16 %v3763
    %v3796 = vunpack.c.l.b16 %v3764
    %v3797 = vunpack.c.l.b16 %v3765
    %v3798 = vunpack.c.l.b16 %v3766
    %v3799 = vunpack.c.l.b16 %v3767
    %v3800 = vunpack.c.l.b16 %v3768
    %v3801 = vunpack.c.l.b16 %v3769
    %v3802 = vunpack.c.l.b16 %v3770
    %v3803 = vunpack.c.l.b16 %v3771
    %v3804 = vunpack.c.l.b16 %v3772
    %v3805 = vunpack.c.l.b16 %v3773
    %v3806 = vunpack.c.l.b16 %v3774
    %v3807 = vunpack.c.l.b16 %v3775
    %v3808 = vunpack.c.l.b16 %v3776
    %v3809 = vunpack.c.l.b16 %v3777
    %v3810 = vpack.c.b16 %v3795, %v3794
    %v3811 = vpack.c.b16 %v3797, %v3796
    %v3812 = vpack.c.b16 %v3799, %v3798
    %v3813 = vpack.c.b16 %v3801, %v3800
    %v3814 = vpack.c.b16 %v3803, %v3802
    %v3815 = vpack.c.b16 %v3805, %v3804
    %v3816 = vpack.c.b16 %v3807, %v3806
    %v3817 = vpack.c.b16 %v3809, %v3808
    %3826 = vmatprep.subr.bf16.mxu0 0
    %3827 = vmatpush1.bf16.msra.mxu0 %v3810
    %3828 = vmatprep.subr.bf16.mxu0 0
    %3829 = vmatpush1.bf16.msra.mxu0 %v3811
    %3830 = vmatprep.subr.bf16.mxu0 0
    %3831 = vmatpush1.bf16.msra.mxu0 %v3812
    %3832 = vmatprep.subr.bf16.mxu0 0
    %3833 = vmatpush1.bf16.msra.mxu0 %v3813
    %3834 = vmatprep.subr.bf16.mxu0 0
    %3835 = vmatpush1.bf16.msra.mxu0 %v3814
    %3836 = vmatprep.subr.bf16.mxu0 0
    %3837 = vmatpush1.bf16.msra.mxu0 %v3815
    %3838 = vmatprep.subr.bf16.mxu0 0
    %3839 = vmatpush1.bf16.msra.mxu0 %v3816
    %3840 = vmatprep.subr.bf16.mxu0 0
    %3841 = vmatpush1.bf16.msra.mxu0 %v3817
    %3842 = vmatprep.subr.bf16.mxu0 0
    %3843 = vmatpush1.bf16.msra.mxu0 0
    %3844 = vmatprep.subr.bf16.mxu0 0
    %3845 = vmatpush1.bf16.msra.mxu0 0
    %3846 = vmatprep.subr.bf16.mxu0 0
    %3847 = vmatpush1.bf16.msra.mxu0 0
    %3848 = vmatprep.subr.bf16.mxu0 0
    %3849 = vmatpush1.bf16.msra.mxu0 0
    %3850 = vmatprep.subr.bf16.mxu0 0
    %3851 = vmatpush1.bf16.msra.mxu0 0
    %3852 = vmatprep.subr.bf16.mxu0 0
    %3853 = vmatpush1.bf16.msra.mxu0 0
    %3854 = vmatprep.subr.bf16.mxu0 0
    %3855 = vmatpush1.bf16.msra.mxu0 0
    %3856 = vmatprep.subr.bf16.mxu0 0
    %3857 = vmatpush1.bf16.msra.mxu0 0
    %3858 = vmatprep.mubr.bf16.mxu0 0
    %3859 = vmatmul.mubr.bf16.gmra.mrb[0].mxu0 %v3753
    %v3860 = vpop.f32.mrb[0].mxu0
    %v3861 = vadd.f32 0.0, %v3860
    %v3862 = vpop.f32.mrb[0].mxu0
    %v3863 = vpop.f32.mrb[0].mxu0
    %v3864 = vadd.f32 0.0, %v3863
    %v3865 = vpop.f32.mrb[0].mxu0
    %3866 = vmatprep.mubr.bf16.mxu0 0
    %3867 = vmatmul.mubr.bf16.gmra.mrb[0].mxu0 %v3754
    %v3868 = vpop.f32.mrb[0].mxu0
    %v3869 = vadd.f32 0.0, %v3868
    %v3870 = vpop.f32.mrb[0].mxu0
    %v3871 = vpop.f32.mrb[0].mxu0
    %v3872 = vadd.f32 0.0, %v3871
    %v3873 = vpop.f32.mrb[0].mxu0
    %3874 = vmatprep.mubr.bf16.mxu0 0
    %3875 = vmatmul.mubr.bf16.gmra.mrb[0].mxu0 %v3755
    %v3876 = vpop.f32.mrb[0].mxu0
    %v3877 = vadd.f32 0.0, %v3876
    %v3878 = vpop.f32.mrb[0].mxu0
    %v3879 = vpop.f32.mrb[0].mxu0
    %v3880 = vadd.f32 0.0, %v3879
    %v3881 = vpop.f32.mrb[0].mxu0
    %3882 = vmatprep.mubr.bf16.mxu0 0
    %3883 = vmatmul.mubr.bf16.gmra.mrb[0].mxu0 %v3756
    %v3884 = vpop.f32.mrb[0].mxu0
    %v3885 = vadd.f32 0.0, %v3884
    %v3886 = vpop.f32.mrb[0].mxu0
    %v3887 = vpop.f32.mrb[0].mxu0
    %v3888 = vadd.f32 0.0, %v3887
    %v3889 = vpop.f32.mrb[0].mxu0
    %3890 = vmatprep.mubr.bf16.mxu0 0
    %3891 = vmatmul.mubr.bf16.gmra.mrb[0].mxu0 %v3757
    %v3892 = vpop.f32.mrb[0].mxu0
    %v3893 = vadd.f32 0.0, %v3892
    %v3894 = vpop.f32.mrb[0].mxu0
    %v3895 = vpop.f32.mrb[0].mxu0
    %v3896 = vadd.f32 0.0, %v3895
    %v3897 = vpop.f32.mrb[0].mxu0
    %3898 = vmatprep.mubr.bf16.mxu0 0
    %3899 = vmatmul.mubr.bf16.gmra.mrb[0].mxu0 %v3758
    %v3900 = vpop.f32.mrb[0].mxu0
    %v3901 = vadd.f32 0.0, %v3900
    %v3902 = vpop.f32.mrb[0].mxu0
    %v3903 = vpop.f32.mrb[0].mxu0
    %v3904 = vadd.f32 0.0, %v3903
    %v3905 = vpop.f32.mrb[0].mxu0
    %3906 = vmatprep.mubr.bf16.mxu0 0
    %3907 = vmatmul.mubr.bf16.gmra.mrb[0].mxu0 %v3759
    %v3908 = vpop.f32.mrb[0].mxu0
    %v3909 = vadd.f32 0.0, %v3908
    %v3910 = vpop.f32.mrb[0].mxu0
    %v3911 = vpop.f32.mrb[0].mxu0
    %v3912 = vadd.f32 0.0, %v3911
    %v3913 = vpop.f32.mrb[0].mxu0
    %3914 = vmatprep.mubr.bf16.mxu0 0
    %3915 = vmatmul.mubr.bf16.gmra.mrb[0].mxu0 %v3760
    %v3916 = vpop.f32.mrb[0].mxu0
    %v3917 = vadd.f32 0.0, %v3916
    %v3918 = vpop.f32.mrb[0].mxu0
    %v3919 = vpop.f32.mrb[0].mxu0
    %v3920 = vadd.f32 0.0, %v3919
    %v3921 = vpop.f32.mrb[0].mxu0
    %3922 = vdwg.mxu0
    %v3923 = vadd.f32 %v3721, %v3861
    %v3924 = vadd.f32 %v3722, %v3864
    %v3925 = vadd.f32 %v3723, %v3869
    %v3926 = vadd.f32 %v3724, %v3872
    %v3927 = vadd.f32 %v3725, %v3877
    %v3928 = vadd.f32 %v3726, %v3880
    %v3929 = vadd.f32 %v3727, %v3885
    %v3930 = vadd.f32 %v3728, %v3888
    %v3931 = vadd.f32 %v3729, %v3893
    %v3932 = vadd.f32 %v3730, %v3896
    %v3933 = vadd.f32 %v3731, %v3901
    %v3934 = vadd.f32 %v3732, %v3904
    %v3935 = vadd.f32 %v3733, %v3909
    %v3936 = vadd.f32 %v3734, %v3912
    %v3937 = vadd.f32 %v3735, %v3917
    %v3938 = vadd.f32 %v3736, %v3920
    %v3939 = vld [vmem:[%s3130 + $0x4] sm:$0xff]
    %v3940 = vld [vmem:[%s3130 + $0x14] sm:$0xff]
    %v3941 = vld [vmem:[%s3130 + $0x24] sm:$0xff]
    %v3942 = vld [vmem:[%s3130 + $0x34] sm:$0xff]
    %v3943 = vld [vmem:[%s3130 + $0x44] sm:$0xff]
    %v3944 = vld [vmem:[%s3130 + $0x54] sm:$0xff]
    %v3945 = vld [vmem:[%s3130 + $0x64] sm:$0xff]
    %v3946 = vld [vmem:[%s3130 + $0x74] sm:$0xff]
    %v3947 = vld [vmem:[%s3130 + $0xc4] sm:$0xff]
    %v3948 = vld [vmem:[%s3130 + $0xd4] sm:$0xff]
    %v3949 = vld [vmem:[%s3130 + $0xe4] sm:$0xff]
    %v3950 = vld [vmem:[%s3130 + $0xf4] sm:$0xff]
    %v3951 = vld [vmem:[%s3130 + $0x104] sm:$0xff]
    %v3952 = vld [vmem:[%s3130 + $0x114] sm:$0xff]
    %v3953 = vld [vmem:[%s3130 + $0x124] sm:$0xff]
    %v3954 = vld [vmem:[%s3130 + $0x134] sm:$0xff]
    %v3955 = vpack.c.bf16 %v3940, %v3939
    %v3956 = vpack.c.bf16 %v3942, %v3941
    %v3957 = vpack.c.bf16 %v3944, %v3943
    %v3958 = vpack.c.bf16 %v3946, %v3945
    %v3959 = vpack.c.bf16 %v3948, %v3947
    %v3960 = vpack.c.bf16 %v3950, %v3949
    %v3961 = vpack.c.bf16 %v3952, %v3951
    %v3962 = vpack.c.bf16 %v3954, %v3953
    %s3963 = scalar_lea.vmem %s3, 576
    %v3964 = vld [vmem:[%s3963] sm:$0xf]
    %v3965 = vld [vmem:[%s3963 + $0x4] sm:$0xf]
    %v3966 = vld [vmem:[%s3963 + $0x8] sm:$0xf]
    %v3967 = vld [vmem:[%s3963 + $0xc] sm:$0xf]
    %v3968 = vld [vmem:[%s3963 + $0x10] sm:$0xf]
    %v3969 = vld [vmem:[%s3963 + $0x14] sm:$0xf]
    %v3970 = vld [vmem:[%s3963 + $0x18] sm:$0xf]
    %v3971 = vld [vmem:[%s3963 + $0x1c] sm:$0xf]
    %v3972 = vld [vmem:[%s3963 + $0x20] sm:$0xf]
    %v3973 = vld [vmem:[%s3963 + $0x24] sm:$0xf]
    %v3974 = vld [vmem:[%s3963 + $0x28] sm:$0xf]
    %v3975 = vld [vmem:[%s3963 + $0x2c] sm:$0xf]
    %v3976 = vld [vmem:[%s3963 + $0x30] sm:$0xf]
    %v3977 = vld [vmem:[%s3963 + $0x34] sm:$0xf]
    %v3978 = vld [vmem:[%s3963 + $0x38] sm:$0xf]
    %v3979 = vld [vmem:[%s3963 + $0x3c] sm:$0xf]
    %v3996 = vunpack.c.l.b16 %v3964
    %v3997 = vunpack.c.l.b16 %v3965
    %v3998 = vunpack.c.l.b16 %v3966
    %v3999 = vunpack.c.l.b16 %v3967
    %v4000 = vunpack.c.l.b16 %v3968
    %v4001 = vunpack.c.l.b16 %v3969
    %v4002 = vunpack.c.l.b16 %v3970
    %v4003 = vunpack.c.l.b16 %v3971
    %v4004 = vunpack.c.l.b16 %v3972
    %v4005 = vunpack.c.l.b16 %v3973
    %v4006 = vunpack.c.l.b16 %v3974
    %v4007 = vunpack.c.l.b16 %v3975
    %v4008 = vunpack.c.l.b16 %v3976
    %v4009 = vunpack.c.l.b16 %v3977
    %v4010 = vunpack.c.l.b16 %v3978
    %v4011 = vunpack.c.l.b16 %v3979
    %v4012 = vpack.c.b16 %v3997, %v3996
    %v4013 = vpack.c.b16 %v3999, %v3998
    %v4014 = vpack.c.b16 %v4001, %v4000
    %v4015 = vpack.c.b16 %v4003, %v4002
    %v4016 = vpack.c.b16 %v4005, %v4004
    %v4017 = vpack.c.b16 %v4007, %v4006
    %v4018 = vpack.c.b16 %v4009, %v4008
    %v4019 = vpack.c.b16 %v4011, %v4010
    %4028 = vmatprep.subr.bf16.mxu0 0
    %4029 = vmatpush1.bf16.msra.mxu0 %v4012
    %4030 = vmatprep.subr.bf16.mxu0 0
    %4031 = vmatpush1.bf16.msra.mxu0 %v4013
    %4032 = vmatprep.subr.bf16.mxu0 0
    %4033 = vmatpush1.bf16.msra.mxu0 %v4014
    %4034 = vmatprep.subr.bf16.mxu0 0
    %4035 = vmatpush1.bf16.msra.mxu0 %v4015
    %4036 = vmatprep.subr.bf16.mxu0 0
    %4037 = vmatpush1.bf16.msra.mxu0 %v4016
    %4038 = vmatprep.subr.bf16.mxu0 0
    %4039 = vmatpush1.bf16.msra.mxu0 %v4017
    %4040 = vmatprep.subr.bf16.mxu0 0
    %4041 = vmatpush1.bf16.msra.mxu0 %v4018
    %4042 = vmatprep.subr.bf16.mxu0 0
    %4043 = vmatpush1.bf16.msra.mxu0 %v4019
    %4044 = vmatprep.subr.bf16.mxu0 0
    %4045 = vmatpush1.bf16.msra.mxu0 0
    %4046 = vmatprep.subr.bf16.mxu0 0
    %4047 = vmatpush1.bf16.msra.mxu0 0
    %4048 = vmatprep.subr.bf16.mxu0 0
    %4049 = vmatpush1.bf16.msra.mxu0 0
    %4050 = vmatprep.subr.bf16.mxu0 0
    %4051 = vmatpush1.bf16.msra.mxu0 0
    %4052 = vmatprep.subr.bf16.mxu0 0
    %4053 = vmatpush1.bf16.msra.mxu0 0
    %4054 = vmatprep.subr.bf16.mxu0 0
    %4055 = vmatpush1.bf16.msra.mxu0 0
    %4056 = vmatprep.subr.bf16.mxu0 0
    %4057 = vmatpush1.bf16.msra.mxu0 0
    %4058 = vmatprep.subr.bf16.mxu0 0
    %4059 = vmatpush1.bf16.msra.mxu0 0
    %4060 = vmatprep.mubr.bf16.mxu0 0
    %4061 = vmatmul.mubr.bf16.gmra.mrb[0].mxu0 %v3955
    %v4062 = vpop.f32.mrb[0].mxu0
    %v4063 = vadd.f32 0.0, %v4062
    %v4064 = vpop.f32.mrb[0].mxu0
    %v4065 = vpop.f32.mrb[0].mxu0
    %v4066 = vadd.f32 0.0, %v4065
    %v4067 = vpop.f32.mrb[0].mxu0
    %4068 = vmatprep.mubr.bf16.mxu0 0
    %4069 = vmatmul.mubr.bf16.gmra.mrb[0].mxu0 %v3956
    %v4070 = vpop.f32.mrb[0].mxu0
    %v4071 = vadd.f32 0.0, %v4070
    %v4072 = vpop.f32.mrb[0].mxu0
    %v4073 = vpop.f32.mrb[0].mxu0
    %v4074 = vadd.f32 0.0, %v4073
    %v4075 = vpop.f32.mrb[0].mxu0
    %4076 = vmatprep.mubr.bf16.mxu0 0
    %4077 = vmatmul.mubr.bf16.gmra.mrb[0].mxu0 %v3957
    %v4078 = vpop.f32.mrb[0].mxu0
    %v4079 = vadd.f32 0.0, %v4078
    %v4080 = vpop.f32.mrb[0].mxu0
    %v4081 = vpop.f32.mrb[0].mxu0
    %v4082 = vadd.f32 0.0, %v4081
    %v4083 = vpop.f32.mrb[0].mxu0
    %4084 = vmatprep.mubr.bf16.mxu0 0
    %4085 = vmatmul.mubr.bf16.gmra.mrb[0].mxu0 %v3958
    %v4086 = vpop.f32.mrb[0].mxu0
    %v4087 = vadd.f32 0.0, %v4086
    %v4088 = vpop.f32.mrb[0].mxu0
    %v4089 = vpop.f32.mrb[0].mxu0
    %v4090 = vadd.f32 0.0, %v4089
    %v4091 = vpop.f32.mrb[0].mxu0
    %4092 = vmatprep.mubr.bf16.mxu0 0
    %4093 = vmatmul.mubr.bf16.gmra.mrb[0].mxu0 %v3959
    %v4094 = vpop.f32.mrb[0].mxu0
    %v4095 = vadd.f32 0.0, %v4094
    %v4096 = vpop.f32.mrb[0].mxu0
    %v4097 = vpop.f32.mrb[0].mxu0
    %v4098 = vadd.f32 0.0, %v4097
    %v4099 = vpop.f32.mrb[0].mxu0
    %4100 = vmatprep.mubr.bf16.mxu0 0
    %4101 = vmatmul.mubr.bf16.gmra.mrb[0].mxu0 %v3960
    %v4102 = vpop.f32.mrb[0].mxu0
    %v4103 = vadd.f32 0.0, %v4102
    %v4104 = vpop.f32.mrb[0].mxu0
    %v4105 = vpop.f32.mrb[0].mxu0
    %v4106 = vadd.f32 0.0, %v4105
    %v4107 = vpop.f32.mrb[0].mxu0
    %4108 = vmatprep.mubr.bf16.mxu0 0
    %4109 = vmatmul.mubr.bf16.gmra.mrb[0].mxu0 %v3961
    %v4110 = vpop.f32.mrb[0].mxu0
    %v4111 = vadd.f32 0.0, %v4110
    %v4112 = vpop.f32.mrb[0].mxu0
    %v4113 = vpop.f32.mrb[0].mxu0
    %v4114 = vadd.f32 0.0, %v4113
    %v4115 = vpop.f32.mrb[0].mxu0
    %4116 = vmatprep.mubr.bf16.mxu0 0
    %4117 = vmatmul.mubr.bf16.gmra.mrb[0].mxu0 %v3962
    %v4118 = vpop.f32.mrb[0].mxu0
    %v4119 = vadd.f32 0.0, %v4118
    %v4120 = vpop.f32.mrb[0].mxu0
    %v4121 = vpop.f32.mrb[0].mxu0
    %v4122 = vadd.f32 0.0, %v4121
    %v4123 = vpop.f32.mrb[0].mxu0
    %4124 = vdwg.mxu0
    %v4125 = vadd.f32 %v3923, %v4063
    %v4126 = vadd.f32 %v3924, %v4066
    %v4127 = vadd.f32 %v3925, %v4071
    %v4128 = vadd.f32 %v3926, %v4074
    %v4129 = vadd.f32 %v3927, %v4079
    %v4130 = vadd.f32 %v3928, %v4082
    %v4131 = vadd.f32 %v3929, %v4087
    %v4132 = vadd.f32 %v3930, %v4090
    %v4133 = vadd.f32 %v3931, %v4095
    %v4134 = vadd.f32 %v3932, %v4098
    %v4135 = vadd.f32 %v3933, %v4103
    %v4136 = vadd.f32 %v3934, %v4106
    %v4137 = vadd.f32 %v3935, %v4111
    %v4138 = vadd.f32 %v3936, %v4114
    %v4139 = vadd.f32 %v3937, %v4119
    %v4140 = vadd.f32 %v3938, %v4122
    %s4141 = scalar_lea.vmem [#allocation3], 32
    %v4142 = vld [vmem:[%s4141] sm:$0xff]
    %v4143 = vld [vmem:[%s4141 + $0x10] sm:$0xff]
    %v4144 = vld [vmem:[%s4141 + $0x20] sm:$0xff]
    %v4145 = vld [vmem:[%s4141 + $0x30] sm:$0xff]
    %v4146 = vld [vmem:[%s4141 + $0x40] sm:$0xff]
    %v4147 = vld [vmem:[%s4141 + $0x50] sm:$0xff]
    %v4148 = vld [vmem:[%s4141 + $0x60] sm:$0xff]
    %v4149 = vld [vmem:[%s4141 + $0x70] sm:$0xff]
    %v4150 = vld [vmem:[%s4141 + $0xc0] sm:$0xff]
    %v4151 = vld [vmem:[%s4141 + $0xd0] sm:$0xff]
    %v4152 = vld [vmem:[%s4141 + $0xe0] sm:$0xff]
    %v4153 = vld [vmem:[%s4141 + $0xf0] sm:$0xff]
    %v4154 = vld [vmem:[%s4141 + $0x100] sm:$0xff]
    %v4155 = vld [vmem:[%s4141 + $0x110] sm:$0xff]
    %v4156 = vld [vmem:[%s4141 + $0x120] sm:$0xff]
    %v4157 = vld [vmem:[%s4141 + $0x130] sm:$0xff]
    %v4158 = vpack.c.bf16 %v4143, %v4142
    %v4159 = vpack.c.bf16 %v4145, %v4144
    %v4160 = vpack.c.bf16 %v4147, %v4146
    %v4161 = vpack.c.bf16 %v4149, %v4148
    %v4162 = vpack.c.bf16 %v4151, %v4150
    %v4163 = vpack.c.bf16 %v4153, %v4152
    %v4164 = vpack.c.bf16 %v4155, %v4154
    %v4165 = vpack.c.bf16 %v4157, %v4156
    %s4166 = scalar_lea.vmem %s3, 640
    %v4167 = vld [vmem:[%s4166] sm:$0xf]
    %v4168 = vld [vmem:[%s4166 + $0x4] sm:$0xf]
    %v4169 = vld [vmem:[%s4166 + $0x8] sm:$0xf]
    %v4170 = vld [vmem:[%s4166 + $0xc] sm:$0xf]
    %v4171 = vld [vmem:[%s4166 + $0x10] sm:$0xf]
    %v4172 = vld [vmem:[%s4166 + $0x14] sm:$0xf]
    %v4173 = vld [vmem:[%s4166 + $0x18] sm:$0xf]
    %v4174 = vld [vmem:[%s4166 + $0x1c] sm:$0xf]
    %v4175 = vld [vmem:[%s4166 + $0x20] sm:$0xf]
    %v4176 = vld [vmem:[%s4166 + $0x24] sm:$0xf]
    %v4177 = vld [vmem:[%s4166 + $0x28] sm:$0xf]
    %v4178 = vld [vmem:[%s4166 + $0x2c] sm:$0xf]
    %v4179 = vld [vmem:[%s4166 + $0x30] sm:$0xf]
    %v4180 = vld [vmem:[%s4166 + $0x34] sm:$0xf]
    %v4181 = vld [vmem:[%s4166 + $0x38] sm:$0xf]
    %v4182 = vld [vmem:[%s4166 + $0x3c] sm:$0xf]
    %v4199 = vunpack.c.l.b16 %v4167
    %v4200 = vunpack.c.l.b16 %v4168
    %v4201 = vunpack.c.l.b16 %v4169
    %v4202 = vunpack.c.l.b16 %v4170
    %v4203 = vunpack.c.l.b16 %v4171
    %v4204 = vunpack.c.l.b16 %v4172
    %v4205 = vunpack.c.l.b16 %v4173
    %v4206 = vunpack.c.l.b16 %v4174
    %v4207 = vunpack.c.l.b16 %v4175
    %v4208 = vunpack.c.l.b16 %v4176
    %v4209 = vunpack.c.l.b16 %v4177
    %v4210 = vunpack.c.l.b16 %v4178
    %v4211 = vunpack.c.l.b16 %v4179
    %v4212 = vunpack.c.l.b16 %v4180
    %v4213 = vunpack.c.l.b16 %v4181
    %v4214 = vunpack.c.l.b16 %v4182
    %v4215 = vpack.c.b16 %v4200, %v4199
    %v4216 = vpack.c.b16 %v4202, %v4201
    %v4217 = vpack.c.b16 %v4204, %v4203
    %v4218 = vpack.c.b16 %v4206, %v4205
    %v4219 = vpack.c.b16 %v4208, %v4207
    %v4220 = vpack.c.b16 %v4210, %v4209
    %v4221 = vpack.c.b16 %v4212, %v4211
    %v4222 = vpack.c.b16 %v4214, %v4213
    %4231 = vmatprep.subr.bf16.mxu0 0
    %4232 = vmatpush1.bf16.msra.mxu0 %v4215
    %4233 = vmatprep.subr.bf16.mxu0 0
    %4234 = vmatpush1.bf16.msra.mxu0 %v4216
    %4235 = vmatprep.subr.bf16.mxu0 0
    %4236 = vmatpush1.bf16.msra.mxu0 %v4217
    %4237 = vmatprep.subr.bf16.mxu0 0
    %4238 = vmatpush1.bf16.msra.mxu0 %v4218
    %4239 = vmatprep.subr.bf16.mxu0 0
    %4240 = vmatpush1.bf16.msra.mxu0 %v4219
    %4241 = vmatprep.subr.bf16.mxu0 0
    %4242 = vmatpush1.bf16.msra.mxu0 %v4220
    %4243 = vmatprep.subr.bf16.mxu0 0
    %4244 = vmatpush1.bf16.msra.mxu0 %v4221
    %4245 = vmatprep.subr.bf16.mxu0 0
    %4246 = vmatpush1.bf16.msra.mxu0 %v4222
    %4247 = vmatprep.subr.bf16.mxu0 0
    %4248 = vmatpush1.bf16.msra.mxu0 0
    %4249 = vmatprep.subr.bf16.mxu0 0
    %4250 = vmatpush1.bf16.msra.mxu0 0
    %4251 = vmatprep.subr.bf16.mxu0 0
    %4252 = vmatpush1.bf16.msra.mxu0 0
    %4253 = vmatprep.subr.bf16.mxu0 0
    %4254 = vmatpush1.bf16.msra.mxu0 0
    %4255 = vmatprep.subr.bf16.mxu0 0
    %4256 = vmatpush1.bf16.msra.mxu0 0
    %4257 = vmatprep.subr.bf16.mxu0 0
    %4258 = vmatpush1.bf16.msra.mxu0 0
    %4259 = vmatprep.subr.bf16.mxu0 0
    %4260 = vmatpush1.bf16.msra.mxu0 0
    %4261 = vmatprep.subr.bf16.mxu0 0
    %4262 = vmatpush1.bf16.msra.mxu0 0
    %4263 = vmatprep.mubr.bf16.mxu0 0
    %4264 = vmatmul.mubr.bf16.gmra.mrb[0].mxu0 %v4158
    %v4265 = vpop.f32.mrb[0].mxu0
    %v4266 = vadd.f32 0.0, %v4265
    %v4267 = vpop.f32.mrb[0].mxu0
    %v4268 = vpop.f32.mrb[0].mxu0
    %v4269 = vadd.f32 0.0, %v4268
    %v4270 = vpop.f32.mrb[0].mxu0
    %4271 = vmatprep.mubr.bf16.mxu0 0
    %4272 = vmatmul.mubr.bf16.gmra.mrb[0].mxu0 %v4159
    %v4273 = vpop.f32.mrb[0].mxu0
    %v4274 = vadd.f32 0.0, %v4273
    %v4275 = vpop.f32.mrb[0].mxu0
    %v4276 = vpop.f32.mrb[0].mxu0
    %v4277 = vadd.f32 0.0, %v4276
    %v4278 = vpop.f32.mrb[0].mxu0
    %4279 = vmatprep.mubr.bf16.mxu0 0
    %4280 = vmatmul.mubr.bf16.gmra.mrb[0].mxu0 %v4160
    %v4281 = vpop.f32.mrb[0].mxu0
    %v4282 = vadd.f32 0.0, %v4281
    %v4283 = vpop.f32.mrb[0].mxu0
    %v4284 = vpop.f32.mrb[0].mxu0
    %v4285 = vadd.f32 0.0, %v4284
    %v4286 = vpop.f32.mrb[0].mxu0
    %4287 = vmatprep.mubr.bf16.mxu0 0
    %4288 = vmatmul.mubr.bf16.gmra.mrb[0].mxu0 %v4161
    %v4289 = vpop.f32.mrb[0].mxu0
    %v4290 = vadd.f32 0.0, %v4289
    %v4291 = vpop.f32.mrb[0].mxu0
    %v4292 = vpop.f32.mrb[0].mxu0
    %v4293 = vadd.f32 0.0, %v4292
    %v4294 = vpop.f32.mrb[0].mxu0
    %4295 = vmatprep.mubr.bf16.mxu0 0
    %4296 = vmatmul.mubr.bf16.gmra.mrb[0].mxu0 %v4162
    %v4297 = vpop.f32.mrb[0].mxu0
    %v4298 = vadd.f32 0.0, %v4297
    %v4299 = vpop.f32.mrb[0].mxu0
    %v4300 = vpop.f32.mrb[0].mxu0
    %v4301 = vadd.f32 0.0, %v4300
    %v4302 = vpop.f32.mrb[0].mxu0
    %4303 = vmatprep.mubr.bf16.mxu0 0
    %4304 = vmatmul.mubr.bf16.gmra.mrb[0].mxu0 %v4163
    %v4305 = vpop.f32.mrb[0].mxu0
    %v4306 = vadd.f32 0.0, %v4305
    %v4307 = vpop.f32.mrb[0].mxu0
    %v4308 = vpop.f32.mrb[0].mxu0
    %v4309 = vadd.f32 0.0, %v4308
    %v4310 = vpop.f32.mrb[0].mxu0
    %4311 = vmatprep.mubr.bf16.mxu0 0
    %4312 = vmatmul.mubr.bf16.gmra.mrb[0].mxu0 %v4164
    %v4313 = vpop.f32.mrb[0].mxu0
    %v4314 = vadd.f32 0.0, %v4313
    %v4315 = vpop.f32.mrb[0].mxu0
    %v4316 = vpop.f32.mrb[0].mxu0
    %v4317 = vadd.f32 0.0, %v4316
    %v4318 = vpop.f32.mrb[0].mxu0
    %4319 = vmatprep.mubr.bf16.mxu0 0
    %4320 = vmatmul.mubr.bf16.gmra.mrb[0].mxu0 %v4165
    %v4321 = vpop.f32.mrb[0].mxu0
    %v4322 = vadd.f32 0.0, %v4321
    %v4323 = vpop.f32.mrb[0].mxu0
    %v4324 = vpop.f32.mrb[0].mxu0
    %v4325 = vadd.f32 0.0, %v4324
    %v4326 = vpop.f32.mrb[0].mxu0
    %4327 = vdwg.mxu0
    %v4328 = vadd.f32 %v4125, %v4266
    %v4329 = vadd.f32 %v4126, %v4269
    %v4330 = vadd.f32 %v4127, %v4274
    %v4331 = vadd.f32 %v4128, %v4277
    %v4332 = vadd.f32 %v4129, %v4282
    %v4333 = vadd.f32 %v4130, %v4285
    %v4334 = vadd.f32 %v4131, %v4290
    %v4335 = vadd.f32 %v4132, %v4293
    %v4336 = vadd.f32 %v4133, %v4298
    %v4337 = vadd.f32 %v4134, %v4301
    %v4338 = vadd.f32 %v4135, %v4306
    %v4339 = vadd.f32 %v4136, %v4309
    %v4340 = vadd.f32 %v4137, %v4314
    %v4341 = vadd.f32 %v4138, %v4317
    %v4342 = vadd.f32 %v4139, %v4322
    %v4343 = vadd.f32 %v4140, %v4325
    %v4344 = vld [vmem:[%s4141 + $0x1] sm:$0xff]
    %v4345 = vld [vmem:[%s4141 + $0x11] sm:$0xff]
    %v4346 = vld [vmem:[%s4141 + $0x21] sm:$0xff]
    %v4347 = vld [vmem:[%s4141 + $0x31] sm:$0xff]
    %v4348 = vld [vmem:[%s4141 + $0x41] sm:$0xff]
    %v4349 = vld [vmem:[%s4141 + $0x51] sm:$0xff]
    %v4350 = vld [vmem:[%s4141 + $0x61] sm:$0xff]
    %v4351 = vld [vmem:[%s4141 + $0x71] sm:$0xff]
    %v4352 = vld [vmem:[%s4141 + $0xc1] sm:$0xff]
    %v4353 = vld [vmem:[%s4141 + $0xd1] sm:$0xff]
    %v4354 = vld [vmem:[%s4141 + $0xe1] sm:$0xff]
    %v4355 = vld [vmem:[%s4141 + $0xf1] sm:$0xff]
    %v4356 = vld [vmem:[%s4141 + $0x101] sm:$0xff]
    %v4357 = vld [vmem:[%s4141 + $0x111] sm:$0xff]
    %v4358 = vld [vmem:[%s4141 + $0x121] sm:$0xff]
    %v4359 = vld [vmem:[%s4141 + $0x131] sm:$0xff]
    %v4360 = vpack.c.bf16 %v4345, %v4344
    %v4361 = vpack.c.bf16 %v4347, %v4346
    %v4362 = vpack.c.bf16 %v4349, %v4348
    %v4363 = vpack.c.bf16 %v4351, %v4350
    %v4364 = vpack.c.bf16 %v4353, %v4352
    %v4365 = vpack.c.bf16 %v4355, %v4354
    %v4366 = vpack.c.bf16 %v4357, %v4356
    %v4367 = vpack.c.bf16 %v4359, %v4358
    %s4368 = scalar_lea.vmem %s3, 704
    %v4369 = vld [vmem:[%s4368] sm:$0xf]
    %v4370 = vld [vmem:[%s4368 + $0x4] sm:$0xf]
    %v4371 = vld [vmem:[%s4368 + $0x8] sm:$0xf]
    %v4372 = vld [vmem:[%s4368 + $0xc] sm:$0xf]
    %v4373 = vld [vmem:[%s4368 + $0x10] sm:$0xf]
    %v4374 = vld [vmem:[%s4368 + $0x14] sm:$0xf]
    %v4375 = vld [vmem:[%s4368 + $0x18] sm:$0xf]
    %v4376 = vld [vmem:[%s4368 + $0x1c] sm:$0xf]
    %v4377 = vld [vmem:[%s4368 + $0x20] sm:$0xf]
    %v4378 = vld [vmem:[%s4368 + $0x24] sm:$0xf]
    %v4379 = vld [vmem:[%s4368 + $0x28] sm:$0xf]
    %v4380 = vld [vmem:[%s4368 + $0x2c] sm:$0xf]
    %v4381 = vld [vmem:[%s4368 + $0x30] sm:$0xf]
    %v4382 = vld [vmem:[%s4368 + $0x34] sm:$0xf]
    %v4383 = vld [vmem:[%s4368 + $0x38] sm:$0xf]
    %v4384 = vld [vmem:[%s4368 + $0x3c] sm:$0xf]
    %v4401 = vunpack.c.l.b16 %v4369
    %v4402 = vunpack.c.l.b16 %v4370
    %v4403 = vunpack.c.l.b16 %v4371
    %v4404 = vunpack.c.l.b16 %v4372
    %v4405 = vunpack.c.l.b16 %v4373
    %v4406 = vunpack.c.l.b16 %v4374
    %v4407 = vunpack.c.l.b16 %v4375
    %v4408 = vunpack.c.l.b16 %v4376
    %v4409 = vunpack.c.l.b16 %v4377
    %v4410 = vunpack.c.l.b16 %v4378
    %v4411 = vunpack.c.l.b16 %v4379
    %v4412 = vunpack.c.l.b16 %v4380
    %v4413 = vunpack.c.l.b16 %v4381
    %v4414 = vunpack.c.l.b16 %v4382
    %v4415 = vunpack.c.l.b16 %v4383
    %v4416 = vunpack.c.l.b16 %v4384
    %v4417 = vpack.c.b16 %v4402, %v4401
    %v4418 = vpack.c.b16 %v4404, %v4403
    %v4419 = vpack.c.b16 %v4406, %v4405
    %v4420 = vpack.c.b16 %v4408, %v4407
    %v4421 = vpack.c.b16 %v4410, %v4409
    %v4422 = vpack.c.b16 %v4412, %v4411
    %v4423 = vpack.c.b16 %v4414, %v4413
    %v4424 = vpack.c.b16 %v4416, %v4415
    %4433 = vmatprep.subr.bf16.mxu0 0
    %4434 = vmatpush1.bf16.msra.mxu0 %v4417
    %4435 = vmatprep.subr.bf16.mxu0 0
    %4436 = vmatpush1.bf16.msra.mxu0 %v4418
    %4437 = vmatprep.subr.bf16.mxu0 0
    %4438 = vmatpush1.bf16.msra.mxu0 %v4419
    %4439 = vmatprep.subr.bf16.mxu0 0
    %4440 = vmatpush1.bf16.msra.mxu0 %v4420
    %4441 = vmatprep.subr.bf16.mxu0 0
    %4442 = vmatpush1.bf16.msra.mxu0 %v4421
    %4443 = vmatprep.subr.bf16.mxu0 0
    %4444 = vmatpush1.bf16.msra.mxu0 %v4422
    %4445 = vmatprep.subr.bf16.mxu0 0
    %4446 = vmatpush1.bf16.msra.mxu0 %v4423
    %4447 = vmatprep.subr.bf16.mxu0 0
    %4448 = vmatpush1.bf16.msra.mxu0 %v4424
    %4449 = vmatprep.subr.bf16.mxu0 0
    %4450 = vmatpush1.bf16.msra.mxu0 0
    %4451 = vmatprep.subr.bf16.mxu0 0
    %4452 = vmatpush1.bf16.msra.mxu0 0
    %4453 = vmatprep.subr.bf16.mxu0 0
    %4454 = vmatpush1.bf16.msra.mxu0 0
    %4455 = vmatprep.subr.bf16.mxu0 0
    %4456 = vmatpush1.bf16.msra.mxu0 0
    %4457 = vmatprep.subr.bf16.mxu0 0
    %4458 = vmatpush1.bf16.msra.mxu0 0
    %4459 = vmatprep.subr.bf16.mxu0 0
    %4460 = vmatpush1.bf16.msra.mxu0 0
    %4461 = vmatprep.subr.bf16.mxu0 0
    %4462 = vmatpush1.bf16.msra.mxu0 0
    %4463 = vmatprep.subr.bf16.mxu0 0
    %4464 = vmatpush1.bf16.msra.mxu0 0
    %4465 = vmatprep.mubr.bf16.mxu0 0
    %4466 = vmatmul.mubr.bf16.gmra.mrb[0].mxu0 %v4360
    %v4467 = vpop.f32.mrb[0].mxu0
    %v4468 = vadd.f32 0.0, %v4467
    %v4469 = vpop.f32.mrb[0].mxu0
    %v4470 = vpop.f32.mrb[0].mxu0
    %v4471 = vadd.f32 0.0, %v4470
    %v4472 = vpop.f32.mrb[0].mxu0
    %4473 = vmatprep.mubr.bf16.mxu0 0
    %4474 = vmatmul.mubr.bf16.gmra.mrb[0].mxu0 %v4361
    %v4475 = vpop.f32.mrb[0].mxu0
    %v4476 = vadd.f32 0.0, %v4475
    %v4477 = vpop.f32.mrb[0].mxu0
    %v4478 = vpop.f32.mrb[0].mxu0
    %v4479 = vadd.f32 0.0, %v4478
    %v4480 = vpop.f32.mrb[0].mxu0
    %4481 = vmatprep.mubr.bf16.mxu0 0
    %4482 = vmatmul.mubr.bf16.gmra.mrb[0].mxu0 %v4362
    %v4483 = vpop.f32.mrb[0].mxu0
    %v4484 = vadd.f32 0.0, %v4483
    %v4485 = vpop.f32.mrb[0].mxu0
    %v4486 = vpop.f32.mrb[0].mxu0
    %v4487 = vadd.f32 0.0, %v4486
    %v4488 = vpop.f32.mrb[0].mxu0
    %4489 = vmatprep.mubr.bf16.mxu0 0
    %4490 = vmatmul.mubr.bf16.gmra.mrb[0].mxu0 %v4363
    %v4491 = vpop.f32.mrb[0].mxu0
    %v4492 = vadd.f32 0.0, %v4491
    %v4493 = vpop.f32.mrb[0].mxu0
    %v4494 = vpop.f32.mrb[0].mxu0
    %v4495 = vadd.f32 0.0, %v4494
    %v4496 = vpop.f32.mrb[0].mxu0
    %4497 = vmatprep.mubr.bf16.mxu0 0
    %4498 = vmatmul.mubr.bf16.gmra.mrb[0].mxu0 %v4364
    %v4499 = vpop.f32.mrb[0].mxu0
    %v4500 = vadd.f32 0.0, %v4499
    %v4501 = vpop.f32.mrb[0].mxu0
    %v4502 = vpop.f32.mrb[0].mxu0
    %v4503 = vadd.f32 0.0, %v4502
    %v4504 = vpop.f32.mrb[0].mxu0
    %4505 = vmatprep.mubr.bf16.mxu0 0
    %4506 = vmatmul.mubr.bf16.gmra.mrb[0].mxu0 %v4365
    %v4507 = vpop.f32.mrb[0].mxu0
    %v4508 = vadd.f32 0.0, %v4507
    %v4509 = vpop.f32.mrb[0].mxu0
    %v4510 = vpop.f32.mrb[0].mxu0
    %v4511 = vadd.f32 0.0, %v4510
    %v4512 = vpop.f32.mrb[0].mxu0
    %4513 = vmatprep.mubr.bf16.mxu0 0
    %4514 = vmatmul.mubr.bf16.gmra.mrb[0].mxu0 %v4366
    %v4515 = vpop.f32.mrb[0].mxu0
    %v4516 = vadd.f32 0.0, %v4515
    %v4517 = vpop.f32.mrb[0].mxu0
    %v4518 = vpop.f32.mrb[0].mxu0
    %v4519 = vadd.f32 0.0, %v4518
    %v4520 = vpop.f32.mrb[0].mxu0
    %4521 = vmatprep.mubr.bf16.mxu0 0
    %4522 = vmatmul.mubr.bf16.gmra.mrb[0].mxu0 %v4367
    %v4523 = vpop.f32.mrb[0].mxu0
    %v4524 = vadd.f32 0.0, %v4523
    %v4525 = vpop.f32.mrb[0].mxu0
    %v4526 = vpop.f32.mrb[0].mxu0
    %v4527 = vadd.f32 0.0, %v4526
    %v4528 = vpop.f32.mrb[0].mxu0
    %4529 = vdwg.mxu0
    %v4530 = vadd.f32 %v4328, %v4468
    %v4531 = vadd.f32 %v4329, %v4471
    %v4532 = vadd.f32 %v4330, %v4476
    %v4533 = vadd.f32 %v4331, %v4479
    %v4534 = vadd.f32 %v4332, %v4484
    %v4535 = vadd.f32 %v4333, %v4487
    %v4536 = vadd.f32 %v4334, %v4492
    %v4537 = vadd.f32 %v4335, %v4495
    %v4538 = vadd.f32 %v4336, %v4500
    %v4539 = vadd.f32 %v4337, %v4503
    %v4540 = vadd.f32 %v4338, %v4508
    %v4541 = vadd.f32 %v4339, %v4511
    %v4542 = vadd.f32 %v4340, %v4516
    %v4543 = vadd.f32 %v4341, %v4519
    %v4544 = vadd.f32 %v4342, %v4524
    %v4545 = vadd.f32 %v4343, %v4527
    %v4546 = vld [vmem:[%s4141 + $0x2] sm:$0xff]
    %v4547 = vld [vmem:[%s4141 + $0x12] sm:$0xff]
    %v4548 = vld [vmem:[%s4141 + $0x22] sm:$0xff]
    %v4549 = vld [vmem:[%s4141 + $0x32] sm:$0xff]
    %v4550 = vld [vmem:[%s4141 + $0x42] sm:$0xff]
    %v4551 = vld [vmem:[%s4141 + $0x52] sm:$0xff]
    %v4552 = vld [vmem:[%s4141 + $0x62] sm:$0xff]
    %v4553 = vld [vmem:[%s4141 + $0x72] sm:$0xff]
    %v4554 = vld [vmem:[%s4141 + $0xc2] sm:$0xff]
    %v4555 = vld [vmem:[%s4141 + $0xd2] sm:$0xff]
    %v4556 = vld [vmem:[%s4141 + $0xe2] sm:$0xff]
    %v4557 = vld [vmem:[%s4141 + $0xf2] sm:$0xff]
    %v4558 = vld [vmem:[%s4141 + $0x102] sm:$0xff]
    %v4559 = vld [vmem:[%s4141 + $0x112] sm:$0xff]
    %v4560 = vld [vmem:[%s4141 + $0x122] sm:$0xff]
    %v4561 = vld [vmem:[%s4141 + $0x132] sm:$0xff]
    %v4562 = vpack.c.bf16 %v4547, %v4546
    %v4563 = vpack.c.bf16 %v4549, %v4548
    %v4564 = vpack.c.bf16 %v4551, %v4550
    %v4565 = vpack.c.bf16 %v4553, %v4552
    %v4566 = vpack.c.bf16 %v4555, %v4554
    %v4567 = vpack.c.bf16 %v4557, %v4556
    %v4568 = vpack.c.bf16 %v4559, %v4558
    %v4569 = vpack.c.bf16 %v4561, %v4560
    %s4570 = scalar_lea.vmem %s3, 768
    %v4571 = vld [vmem:[%s4570] sm:$0xf]
    %v4572 = vld [vmem:[%s4570 + $0x4] sm:$0xf]
    %v4573 = vld [vmem:[%s4570 + $0x8] sm:$0xf]
    %v4574 = vld [vmem:[%s4570 + $0xc] sm:$0xf]
    %v4575 = vld [vmem:[%s4570 + $0x10] sm:$0xf]
    %v4576 = vld [vmem:[%s4570 + $0x14] sm:$0xf]
    %v4577 = vld [vmem:[%s4570 + $0x18] sm:$0xf]
    %v4578 = vld [vmem:[%s4570 + $0x1c] sm:$0xf]
    %v4579 = vld [vmem:[%s4570 + $0x20] sm:$0xf]
    %v4580 = vld [vmem:[%s4570 + $0x24] sm:$0xf]
    %v4581 = vld [vmem:[%s4570 + $0x28] sm:$0xf]
    %v4582 = vld [vmem:[%s4570 + $0x2c] sm:$0xf]
    %v4583 = vld [vmem:[%s4570 + $0x30] sm:$0xf]
    %v4584 = vld [vmem:[%s4570 + $0x34] sm:$0xf]
    %v4585 = vld [vmem:[%s4570 + $0x38] sm:$0xf]
    %v4586 = vld [vmem:[%s4570 + $0x3c] sm:$0xf]
    %v4603 = vunpack.c.l.b16 %v4571
    %v4604 = vunpack.c.l.b16 %v4572
    %v4605 = vunpack.c.l.b16 %v4573
    %v4606 = vunpack.c.l.b16 %v4574
    %v4607 = vunpack.c.l.b16 %v4575
    %v4608 = vunpack.c.l.b16 %v4576
    %v4609 = vunpack.c.l.b16 %v4577
    %v4610 = vunpack.c.l.b16 %v4578
    %v4611 = vunpack.c.l.b16 %v4579
    %v4612 = vunpack.c.l.b16 %v4580
    %v4613 = vunpack.c.l.b16 %v4581
    %v4614 = vunpack.c.l.b16 %v4582
    %v4615 = vunpack.c.l.b16 %v4583
    %v4616 = vunpack.c.l.b16 %v4584
    %v4617 = vunpack.c.l.b16 %v4585
    %v4618 = vunpack.c.l.b16 %v4586
    %v4619 = vpack.c.b16 %v4604, %v4603
    %v4620 = vpack.c.b16 %v4606, %v4605
    %v4621 = vpack.c.b16 %v4608, %v4607
    %v4622 = vpack.c.b16 %v4610, %v4609
    %v4623 = vpack.c.b16 %v4612, %v4611
    %v4624 = vpack.c.b16 %v4614, %v4613
    %v4625 = vpack.c.b16 %v4616, %v4615
    %v4626 = vpack.c.b16 %v4618, %v4617
    %4635 = vmatprep.subr.bf16.mxu0 0
    %4636 = vmatpush1.bf16.msra.mxu0 %v4619
    %4637 = vmatprep.subr.bf16.mxu0 0
    %4638 = vmatpush1.bf16.msra.mxu0 %v4620
    %4639 = vmatprep.subr.bf16.mxu0 0
    %4640 = vmatpush1.bf16.msra.mxu0 %v4621
    %4641 = vmatprep.subr.bf16.mxu0 0
    %4642 = vmatpush1.bf16.msra.mxu0 %v4622
    %4643 = vmatprep.subr.bf16.mxu0 0
    %4644 = vmatpush1.bf16.msra.mxu0 %v4623
    %4645 = vmatprep.subr.bf16.mxu0 0
    %4646 = vmatpush1.bf16.msra.mxu0 %v4624
    %4647 = vmatprep.subr.bf16.mxu0 0
    %4648 = vmatpush1.bf16.msra.mxu0 %v4625
    %4649 = vmatprep.subr.bf16.mxu0 0
    %4650 = vmatpush1.bf16.msra.mxu0 %v4626
    %4651 = vmatprep.subr.bf16.mxu0 0
    %4652 = vmatpush1.bf16.msra.mxu0 0
    %4653 = vmatprep.subr.bf16.mxu0 0
    %4654 = vmatpush1.bf16.msra.mxu0 0
    %4655 = vmatprep.subr.bf16.mxu0 0
    %4656 = vmatpush1.bf16.msra.mxu0 0
    %4657 = vmatprep.subr.bf16.mxu0 0
    %4658 = vmatpush1.bf16.msra.mxu0 0
    %4659 = vmatprep.subr.bf16.mxu0 0
    %4660 = vmatpush1.bf16.msra.mxu0 0
    %4661 = vmatprep.subr.bf16.mxu0 0
    %4662 = vmatpush1.bf16.msra.mxu0 0
    %4663 = vmatprep.subr.bf16.mxu0 0
    %4664 = vmatpush1.bf16.msra.mxu0 0
    %4665 = vmatprep.subr.bf16.mxu0 0
    %4666 = vmatpush1.bf16.msra.mxu0 0
    %4667 = vmatprep.mubr.bf16.mxu0 0
    %4668 = vmatmul.mubr.bf16.gmra.mrb[0].mxu0 %v4562
    %v4669 = vpop.f32.mrb[0].mxu0
    %v4670 = vadd.f32 0.0, %v4669
    %v4671 = vpop.f32.mrb[0].mxu0
    %v4672 = vpop.f32.mrb[0].mxu0
    %v4673 = vadd.f32 0.0, %v4672
    %v4674 = vpop.f32.mrb[0].mxu0
    %4675 = vmatprep.mubr.bf16.mxu0 0
    %4676 = vmatmul.mubr.bf16.gmra.mrb[0].mxu0 %v4563
    %v4677 = vpop.f32.mrb[0].mxu0
    %v4678 = vadd.f32 0.0, %v4677
    %v4679 = vpop.f32.mrb[0].mxu0
    %v4680 = vpop.f32.mrb[0].mxu0
    %v4681 = vadd.f32 0.0, %v4680
    %v4682 = vpop.f32.mrb[0].mxu0
    %4683 = vmatprep.mubr.bf16.mxu0 0
    %4684 = vmatmul.mubr.bf16.gmra.mrb[0].mxu0 %v4564
    %v4685 = vpop.f32.mrb[0].mxu0
    %v4686 = vadd.f32 0.0, %v4685
    %v4687 = vpop.f32.mrb[0].mxu0
    %v4688 = vpop.f32.mrb[0].mxu0
    %v4689 = vadd.f32 0.0, %v4688
    %v4690 = vpop.f32.mrb[0].mxu0
    %4691 = vmatprep.mubr.bf16.mxu0 0
    %4692 = vmatmul.mubr.bf16.gmra.mrb[0].mxu0 %v4565
    %v4693 = vpop.f32.mrb[0].mxu0
    %v4694 = vadd.f32 0.0, %v4693
    %v4695 = vpop.f32.mrb[0].mxu0
    %v4696 = vpop.f32.mrb[0].mxu0
    %v4697 = vadd.f32 0.0, %v4696
    %v4698 = vpop.f32.mrb[0].mxu0
    %4699 = vmatprep.mubr.bf16.mxu0 0
    %4700 = vmatmul.mubr.bf16.gmra.mrb[0].mxu0 %v4566
    %v4701 = vpop.f32.mrb[0].mxu0
    %v4702 = vadd.f32 0.0, %v4701
    %v4703 = vpop.f32.mrb[0].mxu0
    %v4704 = vpop.f32.mrb[0].mxu0
    %v4705 = vadd.f32 0.0, %v4704
    %v4706 = vpop.f32.mrb[0].mxu0
    %4707 = vmatprep.mubr.bf16.mxu0 0
    %4708 = vmatmul.mubr.bf16.gmra.mrb[0].mxu0 %v4567
    %v4709 = vpop.f32.mrb[0].mxu0
    %v4710 = vadd.f32 0.0, %v4709
    %v4711 = vpop.f32.mrb[0].mxu0
    %v4712 = vpop.f32.mrb[0].mxu0
    %v4713 = vadd.f32 0.0, %v4712
    %v4714 = vpop.f32.mrb[0].mxu0
    %4715 = vmatprep.mubr.bf16.mxu0 0
    %4716 = vmatmul.mubr.bf16.gmra.mrb[0].mxu0 %v4568
    %v4717 = vpop.f32.mrb[0].mxu0
    %v4718 = vadd.f32 0.0, %v4717
    %v4719 = vpop.f32.mrb[0].mxu0
    %v4720 = vpop.f32.mrb[0].mxu0
    %v4721 = vadd.f32 0.0, %v4720
    %v4722 = vpop.f32.mrb[0].mxu0
    %4723 = vmatprep.mubr.bf16.mxu0 0
    %4724 = vmatmul.mubr.bf16.gmra.mrb[0].mxu0 %v4569
    %v4725 = vpop.f32.mrb[0].mxu0
    %v4726 = vadd.f32 0.0, %v4725
    %v4727 = vpop.f32.mrb[0].mxu0
    %v4728 = vpop.f32.mrb[0].mxu0
    %v4729 = vadd.f32 0.0, %v4728
    %v4730 = vpop.f32.mrb[0].mxu0
    %4731 = vdwg.mxu0
    %v4732 = vadd.f32 %v4530, %v4670
    %v4733 = vadd.f32 %v4531, %v4673
    %v4734 = vadd.f32 %v4532, %v4678
    %v4735 = vadd.f32 %v4533, %v4681
    %v4736 = vadd.f32 %v4534, %v4686
    %v4737 = vadd.f32 %v4535, %v4689
    %v4738 = vadd.f32 %v4536, %v4694
    %v4739 = vadd.f32 %v4537, %v4697
    %v4740 = vadd.f32 %v4538, %v4702
    %v4741 = vadd.f32 %v4539, %v4705
    %v4742 = vadd.f32 %v4540, %v4710
    %v4743 = vadd.f32 %v4541, %v4713
    %v4744 = vadd.f32 %v4542, %v4718
    %v4745 = vadd.f32 %v4543, %v4721
    %v4746 = vadd.f32 %v4544, %v4726
    %v4747 = vadd.f32 %v4545, %v4729
    %v4748 = vld [vmem:[%s4141 + $0x3] sm:$0xff]
    %v4749 = vld [vmem:[%s4141 + $0x13] sm:$0xff]
    %v4750 = vld [vmem:[%s4141 + $0x23] sm:$0xff]
    %v4751 = vld [vmem:[%s4141 + $0x33] sm:$0xff]
    %v4752 = vld [vmem:[%s4141 + $0x43] sm:$0xff]
    %v4753 = vld [vmem:[%s4141 + $0x53] sm:$0xff]
    %v4754 = vld [vmem:[%s4141 + $0x63] sm:$0xff]
    %v4755 = vld [vmem:[%s4141 + $0x73] sm:$0xff]
    %v4756 = vld [vmem:[%s4141 + $0xc3] sm:$0xff]
    %v4757 = vld [vmem:[%s4141 + $0xd3] sm:$0xff]
    %v4758 = vld [vmem:[%s4141 + $0xe3] sm:$0xff]
    %v4759 = vld [vmem:[%s4141 + $0xf3] sm:$0xff]
    %v4760 = vld [vmem:[%s4141 + $0x103] sm:$0xff]
    %v4761 = vld [vmem:[%s4141 + $0x113] sm:$0xff]
    %v4762 = vld [vmem:[%s4141 + $0x123] sm:$0xff]
    %v4763 = vld [vmem:[%s4141 + $0x133] sm:$0xff]
    %v4764 = vpack.c.bf16 %v4749, %v4748
    %v4765 = vpack.c.bf16 %v4751, %v4750
    %v4766 = vpack.c.bf16 %v4753, %v4752
    %v4767 = vpack.c.bf16 %v4755, %v4754
    %v4768 = vpack.c.bf16 %v4757, %v4756
    %v4769 = vpack.c.bf16 %v4759, %v4758
    %v4770 = vpack.c.bf16 %v4761, %v4760
    %v4771 = vpack.c.bf16 %v4763, %v4762
    %s4772 = scalar_lea.vmem %s3, 832
    %v4773 = vld [vmem:[%s4772] sm:$0xf]
    %v4774 = vld [vmem:[%s4772 + $0x4] sm:$0xf]
    %v4775 = vld [vmem:[%s4772 + $0x8] sm:$0xf]
    %v4776 = vld [vmem:[%s4772 + $0xc] sm:$0xf]
    %v4777 = vld [vmem:[%s4772 + $0x10] sm:$0xf]
    %v4778 = vld [vmem:[%s4772 + $0x14] sm:$0xf]
    %v4779 = vld [vmem:[%s4772 + $0x18] sm:$0xf]
    %v4780 = vld [vmem:[%s4772 + $0x1c] sm:$0xf]
    %v4781 = vld [vmem:[%s4772 + $0x20] sm:$0xf]
    %v4782 = vld [vmem:[%s4772 + $0x24] sm:$0xf]
    %v4783 = vld [vmem:[%s4772 + $0x28] sm:$0xf]
    %v4784 = vld [vmem:[%s4772 + $0x2c] sm:$0xf]
    %v4785 = vld [vmem:[%s4772 + $0x30] sm:$0xf]
    %v4786 = vld [vmem:[%s4772 + $0x34] sm:$0xf]
    %v4787 = vld [vmem:[%s4772 + $0x38] sm:$0xf]
    %v4788 = vld [vmem:[%s4772 + $0x3c] sm:$0xf]
    %v4805 = vunpack.c.l.b16 %v4773
    %v4806 = vunpack.c.l.b16 %v4774
    %v4807 = vunpack.c.l.b16 %v4775
    %v4808 = vunpack.c.l.b16 %v4776
    %v4809 = vunpack.c.l.b16 %v4777
    %v4810 = vunpack.c.l.b16 %v4778
    %v4811 = vunpack.c.l.b16 %v4779
    %v4812 = vunpack.c.l.b16 %v4780
    %v4813 = vunpack.c.l.b16 %v4781
    %v4814 = vunpack.c.l.b16 %v4782
    %v4815 = vunpack.c.l.b16 %v4783
    %v4816 = vunpack.c.l.b16 %v4784
    %v4817 = vunpack.c.l.b16 %v4785
    %v4818 = vunpack.c.l.b16 %v4786
    %v4819 = vunpack.c.l.b16 %v4787
    %v4820 = vunpack.c.l.b16 %v4788
    %v4821 = vpack.c.b16 %v4806, %v4805
    %v4822 = vpack.c.b16 %v4808, %v4807
    %v4823 = vpack.c.b16 %v4810, %v4809
    %v4824 = vpack.c.b16 %v4812, %v4811
    %v4825 = vpack.c.b16 %v4814, %v4813
    %v4826 = vpack.c.b16 %v4816, %v4815
    %v4827 = vpack.c.b16 %v4818, %v4817
    %v4828 = vpack.c.b16 %v4820, %v4819
    %4837 = vmatprep.subr.bf16.mxu0 0
    %4838 = vmatpush1.bf16.msra.mxu0 %v4821
    %4839 = vmatprep.subr.bf16.mxu0 0
    %4840 = vmatpush1.bf16.msra.mxu0 %v4822
    %4841 = vmatprep.subr.bf16.mxu0 0
    %4842 = vmatpush1.bf16.msra.mxu0 %v4823
    %4843 = vmatprep.subr.bf16.mxu0 0
    %4844 = vmatpush1.bf16.msra.mxu0 %v4824
    %4845 = vmatprep.subr.bf16.mxu0 0
    %4846 = vmatpush1.bf16.msra.mxu0 %v4825
    %4847 = vmatprep.subr.bf16.mxu0 0
    %4848 = vmatpush1.bf16.msra.mxu0 %v4826
    %4849 = vmatprep.subr.bf16.mxu0 0
    %4850 = vmatpush1.bf16.msra.mxu0 %v4827
    %4851 = vmatprep.subr.bf16.mxu0 0
    %4852 = vmatpush1.bf16.msra.mxu0 %v4828
    %4853 = vmatprep.subr.bf16.mxu0 0
    %4854 = vmatpush1.bf16.msra.mxu0 0
    %4855 = vmatprep.subr.bf16.mxu0 0
    %4856 = vmatpush1.bf16.msra.mxu0 0
    %4857 = vmatprep.subr.bf16.mxu0 0
    %4858 = vmatpush1.bf16.msra.mxu0 0
    %4859 = vmatprep.subr.bf16.mxu0 0
    %4860 = vmatpush1.bf16.msra.mxu0 0
    %4861 = vmatprep.subr.bf16.mxu0 0
    %4862 = vmatpush1.bf16.msra.mxu0 0
    %4863 = vmatprep.subr.bf16.mxu0 0
    %4864 = vmatpush1.bf16.msra.mxu0 0
    %4865 = vmatprep.subr.bf16.mxu0 0
    %4866 = vmatpush1.bf16.msra.mxu0 0
    %4867 = vmatprep.subr.bf16.mxu0 0
    %4868 = vmatpush1.bf16.msra.mxu0 0
    %4869 = vmatprep.mubr.bf16.mxu0 0
    %4870 = vmatmul.mubr.bf16.gmra.mrb[0].mxu0 %v4764
    %v4871 = vpop.f32.mrb[0].mxu0
    %v4872 = vadd.f32 0.0, %v4871
    %v4873 = vpop.f32.mrb[0].mxu0
    %v4874 = vpop.f32.mrb[0].mxu0
    %v4875 = vadd.f32 0.0, %v4874
    %v4876 = vpop.f32.mrb[0].mxu0
    %4877 = vmatprep.mubr.bf16.mxu0 0
    %4878 = vmatmul.mubr.bf16.gmra.mrb[0].mxu0 %v4765
    %v4879 = vpop.f32.mrb[0].mxu0
    %v4880 = vadd.f32 0.0, %v4879
    %v4881 = vpop.f32.mrb[0].mxu0
    %v4882 = vpop.f32.mrb[0].mxu0
    %v4883 = vadd.f32 0.0, %v4882
    %v4884 = vpop.f32.mrb[0].mxu0
    %4885 = vmatprep.mubr.bf16.mxu0 0
    %4886 = vmatmul.mubr.bf16.gmra.mrb[0].mxu0 %v4766
    %v4887 = vpop.f32.mrb[0].mxu0
    %v4888 = vadd.f32 0.0, %v4887
    %v4889 = vpop.f32.mrb[0].mxu0
    %v4890 = vpop.f32.mrb[0].mxu0
    %v4891 = vadd.f32 0.0, %v4890
    %v4892 = vpop.f32.mrb[0].mxu0
    %4893 = vmatprep.mubr.bf16.mxu0 0
    %4894 = vmatmul.mubr.bf16.gmra.mrb[0].mxu0 %v4767
    %v4895 = vpop.f32.mrb[0].mxu0
    %v4896 = vadd.f32 0.0, %v4895
    %v4897 = vpop.f32.mrb[0].mxu0
    %v4898 = vpop.f32.mrb[0].mxu0
    %v4899 = vadd.f32 0.0, %v4898
    %v4900 = vpop.f32.mrb[0].mxu0
    %4901 = vmatprep.mubr.bf16.mxu0 0
    %4902 = vmatmul.mubr.bf16.gmra.mrb[0].mxu0 %v4768
    %v4903 = vpop.f32.mrb[0].mxu0
    %v4904 = vadd.f32 0.0, %v4903
    %v4905 = vpop.f32.mrb[0].mxu0
    %v4906 = vpop.f32.mrb[0].mxu0
    %v4907 = vadd.f32 0.0, %v4906
    %v4908 = vpop.f32.mrb[0].mxu0
    %4909 = vmatprep.mubr.bf16.mxu0 0
    %4910 = vmatmul.mubr.bf16.gmra.mrb[0].mxu0 %v4769
    %v4911 = vpop.f32.mrb[0].mxu0
    %v4912 = vadd.f32 0.0, %v4911
    %v4913 = vpop.f32.mrb[0].mxu0
    %v4914 = vpop.f32.mrb[0].mxu0
    %v4915 = vadd.f32 0.0, %v4914
    %v4916 = vpop.f32.mrb[0].mxu0
    %4917 = vmatprep.mubr.bf16.mxu0 0
    %4918 = vmatmul.mubr.bf16.gmra.mrb[0].mxu0 %v4770
    %v4919 = vpop.f32.mrb[0].mxu0
    %v4920 = vadd.f32 0.0, %v4919
    %v4921 = vpop.f32.mrb[0].mxu0
    %v4922 = vpop.f32.mrb[0].mxu0
    %v4923 = vadd.f32 0.0, %v4922
    %v4924 = vpop.f32.mrb[0].mxu0
    %4925 = vmatprep.mubr.bf16.mxu0 0
    %4926 = vmatmul.mubr.bf16.gmra.mrb[0].mxu0 %v4771
    %v4927 = vpop.f32.mrb[0].mxu0
    %v4928 = vadd.f32 0.0, %v4927
    %v4929 = vpop.f32.mrb[0].mxu0
    %v4930 = vpop.f32.mrb[0].mxu0
    %v4931 = vadd.f32 0.0, %v4930
    %v4932 = vpop.f32.mrb[0].mxu0
    %4933 = vdwg.mxu0
    %v4934 = vadd.f32 %v4732, %v4872
    %v4935 = vadd.f32 %v4733, %v4875
    %v4936 = vadd.f32 %v4734, %v4880
    %v4937 = vadd.f32 %v4735, %v4883
    %v4938 = vadd.f32 %v4736, %v4888
    %v4939 = vadd.f32 %v4737, %v4891
    %v4940 = vadd.f32 %v4738, %v4896
    %v4941 = vadd.f32 %v4739, %v4899
    %v4942 = vadd.f32 %v4740, %v4904
    %v4943 = vadd.f32 %v4741, %v4907
    %v4944 = vadd.f32 %v4742, %v4912
    %v4945 = vadd.f32 %v4743, %v4915
    %v4946 = vadd.f32 %v4744, %v4920
    %v4947 = vadd.f32 %v4745, %v4923
    %v4948 = vadd.f32 %v4746, %v4928
    %v4949 = vadd.f32 %v4747, %v4931
    %v4950 = vld [vmem:[%s4141 + $0x4] sm:$0xff]
    %v4951 = vld [vmem:[%s4141 + $0x14] sm:$0xff]
    %v4952 = vld [vmem:[%s4141 + $0x24] sm:$0xff]
    %v4953 = vld [vmem:[%s4141 + $0x34] sm:$0xff]
    %v4954 = vld [vmem:[%s4141 + $0x44] sm:$0xff]
    %v4955 = vld [vmem:[%s4141 + $0x54] sm:$0xff]
    %v4956 = vld [vmem:[%s4141 + $0x64] sm:$0xff]
    %v4957 = vld [vmem:[%s4141 + $0x74] sm:$0xff]
    %v4958 = vld [vmem:[%s4141 + $0xc4] sm:$0xff]
    %v4959 = vld [vmem:[%s4141 + $0xd4] sm:$0xff]
    %v4960 = vld [vmem:[%s4141 + $0xe4] sm:$0xff]
    %v4961 = vld [vmem:[%s4141 + $0xf4] sm:$0xff]
    %v4962 = vld [vmem:[%s4141 + $0x104] sm:$0xff]
    %v4963 = vld [vmem:[%s4141 + $0x114] sm:$0xff]
    %v4964 = vld [vmem:[%s4141 + $0x124] sm:$0xff]
    %v4965 = vld [vmem:[%s4141 + $0x134] sm:$0xff]
    %v4966 = vpack.c.bf16 %v4951, %v4950
    %v4967 = vpack.c.bf16 %v4953, %v4952
    %v4968 = vpack.c.bf16 %v4955, %v4954
    %v4969 = vpack.c.bf16 %v4957, %v4956
    %v4970 = vpack.c.bf16 %v4959, %v4958
    %v4971 = vpack.c.bf16 %v4961, %v4960
    %v4972 = vpack.c.bf16 %v4963, %v4962
    %v4973 = vpack.c.bf16 %v4965, %v4964
    %s4974 = scalar_lea.vmem %s3, 896
    %v4975 = vld [vmem:[%s4974] sm:$0xf]
    %v4976 = vld [vmem:[%s4974 + $0x4] sm:$0xf]
    %v4977 = vld [vmem:[%s4974 + $0x8] sm:$0xf]
    %v4978 = vld [vmem:[%s4974 + $0xc] sm:$0xf]
    %v4979 = vld [vmem:[%s4974 + $0x10] sm:$0xf]
    %v4980 = vld [vmem:[%s4974 + $0x14] sm:$0xf]
    %v4981 = vld [vmem:[%s4974 + $0x18] sm:$0xf]
    %v4982 = vld [vmem:[%s4974 + $0x1c] sm:$0xf]
    %v4983 = vld [vmem:[%s4974 + $0x20] sm:$0xf]
    %v4984 = vld [vmem:[%s4974 + $0x24] sm:$0xf]
    %v4985 = vld [vmem:[%s4974 + $0x28] sm:$0xf]
    %v4986 = vld [vmem:[%s4974 + $0x2c] sm:$0xf]
    %v4987 = vld [vmem:[%s4974 + $0x30] sm:$0xf]
    %v4988 = vld [vmem:[%s4974 + $0x34] sm:$0xf]
    %v4989 = vld [vmem:[%s4974 + $0x38] sm:$0xf]
    %v4990 = vld [vmem:[%s4974 + $0x3c] sm:$0xf]
    %v5007 = vunpack.c.l.b16 %v4975
    %v5008 = vunpack.c.l.b16 %v4976
    %v5009 = vunpack.c.l.b16 %v4977
    %v5010 = vunpack.c.l.b16 %v4978
    %v5011 = vunpack.c.l.b16 %v4979
    %v5012 = vunpack.c.l.b16 %v4980
    %v5013 = vunpack.c.l.b16 %v4981
    %v5014 = vunpack.c.l.b16 %v4982
    %v5015 = vunpack.c.l.b16 %v4983
    %v5016 = vunpack.c.l.b16 %v4984
    %v5017 = vunpack.c.l.b16 %v4985
    %v5018 = vunpack.c.l.b16 %v4986
    %v5019 = vunpack.c.l.b16 %v4987
    %v5020 = vunpack.c.l.b16 %v4988
    %v5021 = vunpack.c.l.b16 %v4989
    %v5022 = vunpack.c.l.b16 %v4990
    %v5023 = vpack.c.b16 %v5008, %v5007
    %v5024 = vpack.c.b16 %v5010, %v5009
    %v5025 = vpack.c.b16 %v5012, %v5011
    %v5026 = vpack.c.b16 %v5014, %v5013
    %v5027 = vpack.c.b16 %v5016, %v5015
    %v5028 = vpack.c.b16 %v5018, %v5017
    %v5029 = vpack.c.b16 %v5020, %v5019
    %v5030 = vpack.c.b16 %v5022, %v5021
    %5039 = vmatprep.subr.bf16.mxu0 0
    %5040 = vmatpush1.bf16.msra.mxu0 %v5023
    %5041 = vmatprep.subr.bf16.mxu0 0
    %5042 = vmatpush1.bf16.msra.mxu0 %v5024
    %5043 = vmatprep.subr.bf16.mxu0 0
    %5044 = vmatpush1.bf16.msra.mxu0 %v5025
    %5045 = vmatprep.subr.bf16.mxu0 0
    %5046 = vmatpush1.bf16.msra.mxu0 %v5026
    %5047 = vmatprep.subr.bf16.mxu0 0
    %5048 = vmatpush1.bf16.msra.mxu0 %v5027
    %5049 = vmatprep.subr.bf16.mxu0 0
    %5050 = vmatpush1.bf16.msra.mxu0 %v5028
    %5051 = vmatprep.subr.bf16.mxu0 0
    %5052 = vmatpush1.bf16.msra.mxu0 %v5029
    %5053 = vmatprep.subr.bf16.mxu0 0
    %5054 = vmatpush1.bf16.msra.mxu0 %v5030
    %5055 = vmatprep.subr.bf16.mxu0 0
    %5056 = vmatpush1.bf16.msra.mxu0 0
    %5057 = vmatprep.subr.bf16.mxu0 0
    %5058 = vmatpush1.bf16.msra.mxu0 0
    %5059 = vmatprep.subr.bf16.mxu0 0
    %5060 = vmatpush1.bf16.msra.mxu0 0
    %5061 = vmatprep.subr.bf16.mxu0 0
    %5062 = vmatpush1.bf16.msra.mxu0 0
    %5063 = vmatprep.subr.bf16.mxu0 0
    %5064 = vmatpush1.bf16.msra.mxu0 0
    %5065 = vmatprep.subr.bf16.mxu0 0
    %5066 = vmatpush1.bf16.msra.mxu0 0
    %5067 = vmatprep.subr.bf16.mxu0 0
    %5068 = vmatpush1.bf16.msra.mxu0 0
    %5069 = vmatprep.subr.bf16.mxu0 0
    %5070 = vmatpush1.bf16.msra.mxu0 0
    %5071 = vmatprep.mubr.bf16.mxu0 0
    %5072 = vmatmul.mubr.bf16.gmra.mrb[0].mxu0 %v4966
    %v5073 = vpop.f32.mrb[0].mxu0
    %v5074 = vadd.f32 0.0, %v5073
    %v5075 = vpop.f32.mrb[0].mxu0
    %v5076 = vpop.f32.mrb[0].mxu0
    %v5077 = vadd.f32 0.0, %v5076
    %v5078 = vpop.f32.mrb[0].mxu0
    %5079 = vmatprep.mubr.bf16.mxu0 0
    %5080 = vmatmul.mubr.bf16.gmra.mrb[0].mxu0 %v4967
    %v5081 = vpop.f32.mrb[0].mxu0
    %v5082 = vadd.f32 0.0, %v5081
    %v5083 = vpop.f32.mrb[0].mxu0
    %v5084 = vpop.f32.mrb[0].mxu0
    %v5085 = vadd.f32 0.0, %v5084
    %v5086 = vpop.f32.mrb[0].mxu0
    %5087 = vmatprep.mubr.bf16.mxu0 0
    %5088 = vmatmul.mubr.bf16.gmra.mrb[0].mxu0 %v4968
    %v5089 = vpop.f32.mrb[0].mxu0
    %v5090 = vadd.f32 0.0, %v5089
    %v5091 = vpop.f32.mrb[0].mxu0
    %v5092 = vpop.f32.mrb[0].mxu0
    %v5093 = vadd.f32 0.0, %v5092
    %v5094 = vpop.f32.mrb[0].mxu0
    %5095 = vmatprep.mubr.bf16.mxu0 0
    %5096 = vmatmul.mubr.bf16.gmra.mrb[0].mxu0 %v4969
    %v5097 = vpop.f32.mrb[0].mxu0
    %v5098 = vadd.f32 0.0, %v5097
    %v5099 = vpop.f32.mrb[0].mxu0
    %v5100 = vpop.f32.mrb[0].mxu0
    %v5101 = vadd.f32 0.0, %v5100
    %v5102 = vpop.f32.mrb[0].mxu0
    %5103 = vmatprep.mubr.bf16.mxu0 0
    %5104 = vmatmul.mubr.bf16.gmra.mrb[0].mxu0 %v4970
    %v5105 = vpop.f32.mrb[0].mxu0
    %v5106 = vadd.f32 0.0, %v5105
    %v5107 = vpop.f32.mrb[0].mxu0
    %v5108 = vpop.f32.mrb[0].mxu0
    %v5109 = vadd.f32 0.0, %v5108
    %v5110 = vpop.f32.mrb[0].mxu0
    %5111 = vmatprep.mubr.bf16.mxu0 0
    %5112 = vmatmul.mubr.bf16.gmra.mrb[0].mxu0 %v4971
    %v5113 = vpop.f32.mrb[0].mxu0
    %v5114 = vadd.f32 0.0, %v5113
    %v5115 = vpop.f32.mrb[0].mxu0
    %v5116 = vpop.f32.mrb[0].mxu0
    %v5117 = vadd.f32 0.0, %v5116
    %v5118 = vpop.f32.mrb[0].mxu0
    %5119 = vmatprep.mubr.bf16.mxu0 0
    %5120 = vmatmul.mubr.bf16.gmra.mrb[0].mxu0 %v4972
    %v5121 = vpop.f32.mrb[0].mxu0
    %v5122 = vadd.f32 0.0, %v5121
    %v5123 = vpop.f32.mrb[0].mxu0
    %v5124 = vpop.f32.mrb[0].mxu0
    %v5125 = vadd.f32 0.0, %v5124
    %v5126 = vpop.f32.mrb[0].mxu0
    %5127 = vmatprep.mubr.bf16.mxu0 0
    %5128 = vmatmul.mubr.bf16.gmra.mrb[0].mxu0 %v4973
    %v5129 = vpop.f32.mrb[0].mxu0
    %v5130 = vadd.f32 0.0, %v5129
    %v5131 = vpop.f32.mrb[0].mxu0
    %v5132 = vpop.f32.mrb[0].mxu0
    %v5133 = vadd.f32 0.0, %v5132
    %v5134 = vpop.f32.mrb[0].mxu0
    %5135 = vdwg.mxu0
    %v5136 = vadd.f32 %v4934, %v5074
    %v5137 = vadd.f32 %v4935, %v5077
    %v5138 = vadd.f32 %v4936, %v5082
    %v5139 = vadd.f32 %v4937, %v5085
    %v5140 = vadd.f32 %v4938, %v5090
    %v5141 = vadd.f32 %v4939, %v5093
    %v5142 = vadd.f32 %v4940, %v5098
    %v5143 = vadd.f32 %v4941, %v5101
    %v5144 = vadd.f32 %v4942, %v5106
    %v5145 = vadd.f32 %v4943, %v5109
    %v5146 = vadd.f32 %v4944, %v5114
    %v5147 = vadd.f32 %v4945, %v5117
    %v5148 = vadd.f32 %v4946, %v5122
    %v5149 = vadd.f32 %v4947, %v5125
    %v5150 = vadd.f32 %v4948, %v5130
    %v5151 = vadd.f32 %v4949, %v5133
    %s5152 = scalar_lea.vmem [#allocation3], 48
    %v5153 = vld [vmem:[%s5152] sm:$0xff]
    %v5154 = vld [vmem:[%s5152 + $0x10] sm:$0xff]
    %v5155 = vld [vmem:[%s5152 + $0x20] sm:$0xff]
    %v5156 = vld [vmem:[%s5152 + $0x30] sm:$0xff]
    %v5157 = vld [vmem:[%s5152 + $0x40] sm:$0xff]
    %v5158 = vld [vmem:[%s5152 + $0x50] sm:$0xff]
    %v5159 = vld [vmem:[%s5152 + $0x60] sm:$0xff]
    %v5160 = vld [vmem:[%s5152 + $0x70] sm:$0xff]
    %v5161 = vld [vmem:[%s5152 + $0xc0] sm:$0xff]
    %v5162 = vld [vmem:[%s5152 + $0xd0] sm:$0xff]
    %v5163 = vld [vmem:[%s5152 + $0xe0] sm:$0xff]
    %v5164 = vld [vmem:[%s5152 + $0xf0] sm:$0xff]
    %v5165 = vld [vmem:[%s5152 + $0x100] sm:$0xff]
    %v5166 = vld [vmem:[%s5152 + $0x110] sm:$0xff]
    %v5167 = vld [vmem:[%s5152 + $0x120] sm:$0xff]
    %v5168 = vld [vmem:[%s5152 + $0x130] sm:$0xff]
    %v5169 = vpack.c.bf16 %v5154, %v5153
    %v5170 = vpack.c.bf16 %v5156, %v5155
    %v5171 = vpack.c.bf16 %v5158, %v5157
    %v5172 = vpack.c.bf16 %v5160, %v5159
    %v5173 = vpack.c.bf16 %v5162, %v5161
    %v5174 = vpack.c.bf16 %v5164, %v5163
    %v5175 = vpack.c.bf16 %v5166, %v5165
    %v5176 = vpack.c.bf16 %v5168, %v5167
    %s5177 = scalar_lea.vmem %s3, 960
    %v5178 = vld [vmem:[%s5177] sm:$0xf]
    %v5179 = vld [vmem:[%s5177 + $0x4] sm:$0xf]
    %v5180 = vld [vmem:[%s5177 + $0x8] sm:$0xf]
    %v5181 = vld [vmem:[%s5177 + $0xc] sm:$0xf]
    %v5182 = vld [vmem:[%s5177 + $0x10] sm:$0xf]
    %v5183 = vld [vmem:[%s5177 + $0x14] sm:$0xf]
    %v5184 = vld [vmem:[%s5177 + $0x18] sm:$0xf]
    %v5185 = vld [vmem:[%s5177 + $0x1c] sm:$0xf]
    %v5186 = vld [vmem:[%s5177 + $0x20] sm:$0xf]
    %v5187 = vld [vmem:[%s5177 + $0x24] sm:$0xf]
    %v5188 = vld [vmem:[%s5177 + $0x28] sm:$0xf]
    %v5189 = vld [vmem:[%s5177 + $0x2c] sm:$0xf]
    %v5190 = vld [vmem:[%s5177 + $0x30] sm:$0xf]
    %v5191 = vld [vmem:[%s5177 + $0x34] sm:$0xf]
    %v5192 = vld [vmem:[%s5177 + $0x38] sm:$0xf]
    %v5193 = vld [vmem:[%s5177 + $0x3c] sm:$0xf]
    %v5210 = vunpack.c.l.b16 %v5178
    %v5211 = vunpack.c.l.b16 %v5179
    %v5212 = vunpack.c.l.b16 %v5180
    %v5213 = vunpack.c.l.b16 %v5181
    %v5214 = vunpack.c.l.b16 %v5182
    %v5215 = vunpack.c.l.b16 %v5183
    %v5216 = vunpack.c.l.b16 %v5184
    %v5217 = vunpack.c.l.b16 %v5185
    %v5218 = vunpack.c.l.b16 %v5186
    %v5219 = vunpack.c.l.b16 %v5187
    %v5220 = vunpack.c.l.b16 %v5188
    %v5221 = vunpack.c.l.b16 %v5189
    %v5222 = vunpack.c.l.b16 %v5190
    %v5223 = vunpack.c.l.b16 %v5191
    %v5224 = vunpack.c.l.b16 %v5192
    %v5225 = vunpack.c.l.b16 %v5193
    %v5226 = vpack.c.b16 %v5211, %v5210
    %v5227 = vpack.c.b16 %v5213, %v5212
    %v5228 = vpack.c.b16 %v5215, %v5214
    %v5229 = vpack.c.b16 %v5217, %v5216
    %v5230 = vpack.c.b16 %v5219, %v5218
    %v5231 = vpack.c.b16 %v5221, %v5220
    %v5232 = vpack.c.b16 %v5223, %v5222
    %v5233 = vpack.c.b16 %v5225, %v5224
    %5242 = vmatprep.subr.bf16.mxu0 0
    %5243 = vmatpush1.bf16.msra.mxu0 %v5226
    %5244 = vmatprep.subr.bf16.mxu0 0
    %5245 = vmatpush1.bf16.msra.mxu0 %v5227
    %5246 = vmatprep.subr.bf16.mxu0 0
    %5247 = vmatpush1.bf16.msra.mxu0 %v5228
    %5248 = vmatprep.subr.bf16.mxu0 0
    %5249 = vmatpush1.bf16.msra.mxu0 %v5229
    %5250 = vmatprep.subr.bf16.mxu0 0
    %5251 = vmatpush1.bf16.msra.mxu0 %v5230
    %5252 = vmatprep.subr.bf16.mxu0 0
    %5253 = vmatpush1.bf16.msra.mxu0 %v5231
    %5254 = vmatprep.subr.bf16.mxu0 0
    %5255 = vmatpush1.bf16.msra.mxu0 %v5232
    %5256 = vmatprep.subr.bf16.mxu0 0
    %5257 = vmatpush1.bf16.msra.mxu0 %v5233
    %5258 = vmatprep.subr.bf16.mxu0 0
    %5259 = vmatpush1.bf16.msra.mxu0 0
    %5260 = vmatprep.subr.bf16.mxu0 0
    %5261 = vmatpush1.bf16.msra.mxu0 0
    %5262 = vmatprep.subr.bf16.mxu0 0
    %5263 = vmatpush1.bf16.msra.mxu0 0
    %5264 = vmatprep.subr.bf16.mxu0 0
    %5265 = vmatpush1.bf16.msra.mxu0 0
    %5266 = vmatprep.subr.bf16.mxu0 0
    %5267 = vmatpush1.bf16.msra.mxu0 0
    %5268 = vmatprep.subr.bf16.mxu0 0
    %5269 = vmatpush1.bf16.msra.mxu0 0
    %5270 = vmatprep.subr.bf16.mxu0 0
    %5271 = vmatpush1.bf16.msra.mxu0 0
    %5272 = vmatprep.subr.bf16.mxu0 0
    %5273 = vmatpush1.bf16.msra.mxu0 0
    %5274 = vmatprep.mubr.bf16.mxu0 0
    %5275 = vmatmul.mubr.bf16.gmra.mrb[0].mxu0 %v5169
    %v5276 = vpop.f32.mrb[0].mxu0
    %v5277 = vadd.f32 0.0, %v5276
    %v5278 = vpop.f32.mrb[0].mxu0
    %v5279 = vpop.f32.mrb[0].mxu0
    %v5280 = vadd.f32 0.0, %v5279
    %v5281 = vpop.f32.mrb[0].mxu0
    %5282 = vmatprep.mubr.bf16.mxu0 0
    %5283 = vmatmul.mubr.bf16.gmra.mrb[0].mxu0 %v5170
    %v5284 = vpop.f32.mrb[0].mxu0
    %v5285 = vadd.f32 0.0, %v5284
    %v5286 = vpop.f32.mrb[0].mxu0
    %v5287 = vpop.f32.mrb[0].mxu0
    %v5288 = vadd.f32 0.0, %v5287
    %v5289 = vpop.f32.mrb[0].mxu0
    %5290 = vmatprep.mubr.bf16.mxu0 0
    %5291 = vmatmul.mubr.bf16.gmra.mrb[0].mxu0 %v5171
    %v5292 = vpop.f32.mrb[0].mxu0
    %v5293 = vadd.f32 0.0, %v5292
    %v5294 = vpop.f32.mrb[0].mxu0
    %v5295 = vpop.f32.mrb[0].mxu0
    %v5296 = vadd.f32 0.0, %v5295
    %v5297 = vpop.f32.mrb[0].mxu0
    %5298 = vmatprep.mubr.bf16.mxu0 0
    %5299 = vmatmul.mubr.bf16.gmra.mrb[0].mxu0 %v5172
    %v5300 = vpop.f32.mrb[0].mxu0
    %v5301 = vadd.f32 0.0, %v5300
    %v5302 = vpop.f32.mrb[0].mxu0
    %v5303 = vpop.f32.mrb[0].mxu0
    %v5304 = vadd.f32 0.0, %v5303
    %v5305 = vpop.f32.mrb[0].mxu0
    %5306 = vmatprep.mubr.bf16.mxu0 0
    %5307 = vmatmul.mubr.bf16.gmra.mrb[0].mxu0 %v5173
    %v5308 = vpop.f32.mrb[0].mxu0
    %v5309 = vadd.f32 0.0, %v5308
    %v5310 = vpop.f32.mrb[0].mxu0
    %v5311 = vpop.f32.mrb[0].mxu0
    %v5312 = vadd.f32 0.0, %v5311
    %v5313 = vpop.f32.mrb[0].mxu0
    %5314 = vmatprep.mubr.bf16.mxu0 0
    %5315 = vmatmul.mubr.bf16.gmra.mrb[0].mxu0 %v5174
    %v5316 = vpop.f32.mrb[0].mxu0
    %v5317 = vadd.f32 0.0, %v5316
    %v5318 = vpop.f32.mrb[0].mxu0
    %v5319 = vpop.f32.mrb[0].mxu0
    %v5320 = vadd.f32 0.0, %v5319
    %v5321 = vpop.f32.mrb[0].mxu0
    %5322 = vmatprep.mubr.bf16.mxu0 0
    %5323 = vmatmul.mubr.bf16.gmra.mrb[0].mxu0 %v5175
    %v5324 = vpop.f32.mrb[0].mxu0
    %v5325 = vadd.f32 0.0, %v5324
    %v5326 = vpop.f32.mrb[0].mxu0
    %v5327 = vpop.f32.mrb[0].mxu0
    %v5328 = vadd.f32 0.0, %v5327
    %v5329 = vpop.f32.mrb[0].mxu0
    %5330 = vmatprep.mubr.bf16.mxu0 0
    %5331 = vmatmul.mubr.bf16.gmra.mrb[0].mxu0 %v5176
    %v5332 = vpop.f32.mrb[0].mxu0
    %v5333 = vadd.f32 0.0, %v5332
    %v5334 = vpop.f32.mrb[0].mxu0
    %v5335 = vpop.f32.mrb[0].mxu0
    %v5336 = vadd.f32 0.0, %v5335
    %v5337 = vpop.f32.mrb[0].mxu0
    %5338 = vdwg.mxu0
    %v5339 = vadd.f32 %v5136, %v5277
    %v5340 = vadd.f32 %v5137, %v5280
    %v5341 = vadd.f32 %v5138, %v5285
    %v5342 = vadd.f32 %v5139, %v5288
    %v5343 = vadd.f32 %v5140, %v5293
    %v5344 = vadd.f32 %v5141, %v5296
    %v5345 = vadd.f32 %v5142, %v5301
    %v5346 = vadd.f32 %v5143, %v5304
    %v5347 = vadd.f32 %v5144, %v5309
    %v5348 = vadd.f32 %v5145, %v5312
    %v5349 = vadd.f32 %v5146, %v5317
    %v5350 = vadd.f32 %v5147, %v5320
    %v5351 = vadd.f32 %v5148, %v5325
    %v5352 = vadd.f32 %v5149, %v5328
    %v5353 = vadd.f32 %v5150, %v5333
    %v5354 = vadd.f32 %v5151, %v5336
    %v5355 = vld [vmem:[%s5152 + $0x1] sm:$0xff]
    %v5356 = vld [vmem:[%s5152 + $0x11] sm:$0xff]
    %v5357 = vld [vmem:[%s5152 + $0x21] sm:$0xff]
    %v5358 = vld [vmem:[%s5152 + $0x31] sm:$0xff]
    %v5359 = vld [vmem:[%s5152 + $0x41] sm:$0xff]
    %v5360 = vld [vmem:[%s5152 + $0x51] sm:$0xff]
    %v5361 = vld [vmem:[%s5152 + $0x61] sm:$0xff]
    %v5362 = vld [vmem:[%s5152 + $0x71] sm:$0xff]
    %v5363 = vld [vmem:[%s5152 + $0xc1] sm:$0xff]
    %v5364 = vld [vmem:[%s5152 + $0xd1] sm:$0xff]
    %v5365 = vld [vmem:[%s5152 + $0xe1] sm:$0xff]
    %v5366 = vld [vmem:[%s5152 + $0xf1] sm:$0xff]
    %v5367 = vld [vmem:[%s5152 + $0x101] sm:$0xff]
    %v5368 = vld [vmem:[%s5152 + $0x111] sm:$0xff]
    %v5369 = vld [vmem:[%s5152 + $0x121] sm:$0xff]
    %v5370 = vld [vmem:[%s5152 + $0x131] sm:$0xff]
    %v5371 = vpack.c.bf16 %v5356, %v5355
    %v5372 = vpack.c.bf16 %v5358, %v5357
    %v5373 = vpack.c.bf16 %v5360, %v5359
    %v5374 = vpack.c.bf16 %v5362, %v5361
    %v5375 = vpack.c.bf16 %v5364, %v5363
    %v5376 = vpack.c.bf16 %v5366, %v5365
    %v5377 = vpack.c.bf16 %v5368, %v5367
    %v5378 = vpack.c.bf16 %v5370, %v5369
    %s5379 = scalar_lea.vmem %s3, 1024
    %v5380 = vld [vmem:[%s5379] sm:$0xf]
    %v5381 = vld [vmem:[%s5379 + $0x4] sm:$0xf]
    %v5382 = vld [vmem:[%s5379 + $0x8] sm:$0xf]
    %v5383 = vld [vmem:[%s5379 + $0xc] sm:$0xf]
    %v5384 = vld [vmem:[%s5379 + $0x10] sm:$0xf]
    %v5385 = vld [vmem:[%s5379 + $0x14] sm:$0xf]
    %v5386 = vld [vmem:[%s5379 + $0x18] sm:$0xf]
    %v5387 = vld [vmem:[%s5379 + $0x1c] sm:$0xf]
    %v5388 = vld [vmem:[%s5379 + $0x20] sm:$0xf]
    %v5389 = vld [vmem:[%s5379 + $0x24] sm:$0xf]
    %v5390 = vld [vmem:[%s5379 + $0x28] sm:$0xf]
    %v5391 = vld [vmem:[%s5379 + $0x2c] sm:$0xf]
    %v5392 = vld [vmem:[%s5379 + $0x30] sm:$0xf]
    %v5393 = vld [vmem:[%s5379 + $0x34] sm:$0xf]
    %v5394 = vld [vmem:[%s5379 + $0x38] sm:$0xf]
    %v5395 = vld [vmem:[%s5379 + $0x3c] sm:$0xf]
    %v5412 = vunpack.c.l.b16 %v5380
    %v5413 = vunpack.c.l.b16 %v5381
    %v5414 = vunpack.c.l.b16 %v5382
    %v5415 = vunpack.c.l.b16 %v5383
    %v5416 = vunpack.c.l.b16 %v5384
    %v5417 = vunpack.c.l.b16 %v5385
    %v5418 = vunpack.c.l.b16 %v5386
    %v5419 = vunpack.c.l.b16 %v5387
    %v5420 = vunpack.c.l.b16 %v5388
    %v5421 = vunpack.c.l.b16 %v5389
    %v5422 = vunpack.c.l.b16 %v5390
    %v5423 = vunpack.c.l.b16 %v5391
    %v5424 = vunpack.c.l.b16 %v5392
    %v5425 = vunpack.c.l.b16 %v5393
    %v5426 = vunpack.c.l.b16 %v5394
    %v5427 = vunpack.c.l.b16 %v5395
    %v5428 = vpack.c.b16 %v5413, %v5412
    %v5429 = vpack.c.b16 %v5415, %v5414
    %v5430 = vpack.c.b16 %v5417, %v5416
    %v5431 = vpack.c.b16 %v5419, %v5418
    %v5432 = vpack.c.b16 %v5421, %v5420
    %v5433 = vpack.c.b16 %v5423, %v5422
    %v5434 = vpack.c.b16 %v5425, %v5424
    %v5435 = vpack.c.b16 %v5427, %v5426
    %5444 = vmatprep.subr.bf16.mxu0 0
    %5445 = vmatpush1.bf16.msra.mxu0 %v5428
    %5446 = vmatprep.subr.bf16.mxu0 0
    %5447 = vmatpush1.bf16.msra.mxu0 %v5429
    %5448 = vmatprep.subr.bf16.mxu0 0
    %5449 = vmatpush1.bf16.msra.mxu0 %v5430
    %5450 = vmatprep.subr.bf16.mxu0 0
    %5451 = vmatpush1.bf16.msra.mxu0 %v5431
    %5452 = vmatprep.subr.bf16.mxu0 0
    %5453 = vmatpush1.bf16.msra.mxu0 %v5432
    %5454 = vmatprep.subr.bf16.mxu0 0
    %5455 = vmatpush1.bf16.msra.mxu0 %v5433
    %5456 = vmatprep.subr.bf16.mxu0 0
    %5457 = vmatpush1.bf16.msra.mxu0 %v5434
    %5458 = vmatprep.subr.bf16.mxu0 0
    %5459 = vmatpush1.bf16.msra.mxu0 %v5435
    %5460 = vmatprep.subr.bf16.mxu0 0
    %5461 = vmatpush1.bf16.msra.mxu0 0
    %5462 = vmatprep.subr.bf16.mxu0 0
    %5463 = vmatpush1.bf16.msra.mxu0 0
    %5464 = vmatprep.subr.bf16.mxu0 0
    %5465 = vmatpush1.bf16.msra.mxu0 0
    %5466 = vmatprep.subr.bf16.mxu0 0
    %5467 = vmatpush1.bf16.msra.mxu0 0
    %5468 = vmatprep.subr.bf16.mxu0 0
    %5469 = vmatpush1.bf16.msra.mxu0 0
    %5470 = vmatprep.subr.bf16.mxu0 0
    %5471 = vmatpush1.bf16.msra.mxu0 0
    %5472 = vmatprep.subr.bf16.mxu0 0
    %5473 = vmatpush1.bf16.msra.mxu0 0
    %5474 = vmatprep.subr.bf16.mxu0 0
    %5475 = vmatpush1.bf16.msra.mxu0 0
    %5476 = vmatprep.mubr.bf16.mxu0 0
    %5477 = vmatmul.mubr.bf16.gmra.mrb[0].mxu0 %v5371
    %v5478 = vpop.f32.mrb[0].mxu0
    %v5479 = vadd.f32 0.0, %v5478
    %v5480 = vpop.f32.mrb[0].mxu0
    %v5481 = vpop.f32.mrb[0].mxu0
    %v5482 = vadd.f32 0.0, %v5481
    %v5483 = vpop.f32.mrb[0].mxu0
    %5484 = vmatprep.mubr.bf16.mxu0 0
    %5485 = vmatmul.mubr.bf16.gmra.mrb[0].mxu0 %v5372
    %v5486 = vpop.f32.mrb[0].mxu0
    %v5487 = vadd.f32 0.0, %v5486
    %v5488 = vpop.f32.mrb[0].mxu0
    %v5489 = vpop.f32.mrb[0].mxu0
    %v5490 = vadd.f32 0.0, %v5489
    %v5491 = vpop.f32.mrb[0].mxu0
    %5492 = vmatprep.mubr.bf16.mxu0 0
    %5493 = vmatmul.mubr.bf16.gmra.mrb[0].mxu0 %v5373
    %v5494 = vpop.f32.mrb[0].mxu0
    %v5495 = vadd.f32 0.0, %v5494
    %v5496 = vpop.f32.mrb[0].mxu0
    %v5497 = vpop.f32.mrb[0].mxu0
    %v5498 = vadd.f32 0.0, %v5497
    %v5499 = vpop.f32.mrb[0].mxu0
    %5500 = vmatprep.mubr.bf16.mxu0 0
    %5501 = vmatmul.mubr.bf16.gmra.mrb[0].mxu0 %v5374
    %v5502 = vpop.f32.mrb[0].mxu0
    %v5503 = vadd.f32 0.0, %v5502
    %v5504 = vpop.f32.mrb[0].mxu0
    %v5505 = vpop.f32.mrb[0].mxu0
    %v5506 = vadd.f32 0.0, %v5505
    %v5507 = vpop.f32.mrb[0].mxu0
    %5508 = vmatprep.mubr.bf16.mxu0 0
    %5509 = vmatmul.mubr.bf16.gmra.mrb[0].mxu0 %v5375
    %v5510 = vpop.f32.mrb[0].mxu0
    %v5511 = vadd.f32 0.0, %v5510
    %v5512 = vpop.f32.mrb[0].mxu0
    %v5513 = vpop.f32.mrb[0].mxu0
    %v5514 = vadd.f32 0.0, %v5513
    %v5515 = vpop.f32.mrb[0].mxu0
    %5516 = vmatprep.mubr.bf16.mxu0 0
    %5517 = vmatmul.mubr.bf16.gmra.mrb[0].mxu0 %v5376
    %v5518 = vpop.f32.mrb[0].mxu0
    %v5519 = vadd.f32 0.0, %v5518
    %v5520 = vpop.f32.mrb[0].mxu0
    %v5521 = vpop.f32.mrb[0].mxu0
    %v5522 = vadd.f32 0.0, %v5521
    %v5523 = vpop.f32.mrb[0].mxu0
    %5524 = vmatprep.mubr.bf16.mxu0 0
    %5525 = vmatmul.mubr.bf16.gmra.mrb[0].mxu0 %v5377
    %v5526 = vpop.f32.mrb[0].mxu0
    %v5527 = vadd.f32 0.0, %v5526
    %v5528 = vpop.f32.mrb[0].mxu0
    %v5529 = vpop.f32.mrb[0].mxu0
    %v5530 = vadd.f32 0.0, %v5529
    %v5531 = vpop.f32.mrb[0].mxu0
    %5532 = vmatprep.mubr.bf16.mxu0 0
    %5533 = vmatmul.mubr.bf16.gmra.mrb[0].mxu0 %v5378
    %v5534 = vpop.f32.mrb[0].mxu0
    %v5535 = vadd.f32 0.0, %v5534
    %v5536 = vpop.f32.mrb[0].mxu0
    %v5537 = vpop.f32.mrb[0].mxu0
    %v5538 = vadd.f32 0.0, %v5537
    %v5539 = vpop.f32.mrb[0].mxu0
    %5540 = vdwg.mxu0
    %v5541 = vadd.f32 %v5339, %v5479
    %v5542 = vadd.f32 %v5340, %v5482
    %v5543 = vadd.f32 %v5341, %v5487
    %v5544 = vadd.f32 %v5342, %v5490
    %v5545 = vadd.f32 %v5343, %v5495
    %v5546 = vadd.f32 %v5344, %v5498
    %v5547 = vadd.f32 %v5345, %v5503
    %v5548 = vadd.f32 %v5346, %v5506
    %v5549 = vadd.f32 %v5347, %v5511
    %v5550 = vadd.f32 %v5348, %v5514
    %v5551 = vadd.f32 %v5349, %v5519
    %v5552 = vadd.f32 %v5350, %v5522
    %v5553 = vadd.f32 %v5351, %v5527
    %v5554 = vadd.f32 %v5352, %v5530
    %v5555 = vadd.f32 %v5353, %v5535
    %v5556 = vadd.f32 %v5354, %v5538
    %v5557 = vld [vmem:[%s5152 + $0x2] sm:$0xff]
    %v5558 = vld [vmem:[%s5152 + $0x12] sm:$0xff]
    %v5559 = vld [vmem:[%s5152 + $0x22] sm:$0xff]
    %v5560 = vld [vmem:[%s5152 + $0x32] sm:$0xff]
    %v5561 = vld [vmem:[%s5152 + $0x42] sm:$0xff]
    %v5562 = vld [vmem:[%s5152 + $0x52] sm:$0xff]
    %v5563 = vld [vmem:[%s5152 + $0x62] sm:$0xff]
    %v5564 = vld [vmem:[%s5152 + $0x72] sm:$0xff]
    %v5565 = vld [vmem:[%s5152 + $0xc2] sm:$0xff]
    %v5566 = vld [vmem:[%s5152 + $0xd2] sm:$0xff]
    %v5567 = vld [vmem:[%s5152 + $0xe2] sm:$0xff]
    %v5568 = vld [vmem:[%s5152 + $0xf2] sm:$0xff]
    %v5569 = vld [vmem:[%s5152 + $0x102] sm:$0xff]
    %v5570 = vld [vmem:[%s5152 + $0x112] sm:$0xff]
    %v5571 = vld [vmem:[%s5152 + $0x122] sm:$0xff]
    %v5572 = vld [vmem:[%s5152 + $0x132] sm:$0xff]
    %v5573 = vpack.c.bf16 %v5558, %v5557
    %v5574 = vpack.c.bf16 %v5560, %v5559
    %v5575 = vpack.c.bf16 %v5562, %v5561
    %v5576 = vpack.c.bf16 %v5564, %v5563
    %v5577 = vpack.c.bf16 %v5566, %v5565
    %v5578 = vpack.c.bf16 %v5568, %v5567
    %v5579 = vpack.c.bf16 %v5570, %v5569
    %v5580 = vpack.c.bf16 %v5572, %v5571
    %s5581 = scalar_lea.vmem %s3, 1088
    %v5582 = vld [vmem:[%s5581] sm:$0xf]
    %v5583 = vld [vmem:[%s5581 + $0x4] sm:$0xf]
    %v5584 = vld [vmem:[%s5581 + $0x8] sm:$0xf]
    %v5585 = vld [vmem:[%s5581 + $0xc] sm:$0xf]
    %v5586 = vld [vmem:[%s5581 + $0x10] sm:$0xf]
    %v5587 = vld [vmem:[%s5581 + $0x14] sm:$0xf]
    %v5588 = vld [vmem:[%s5581 + $0x18] sm:$0xf]
    %v5589 = vld [vmem:[%s5581 + $0x1c] sm:$0xf]
    %v5590 = vld [vmem:[%s5581 + $0x20] sm:$0xf]
    %v5591 = vld [vmem:[%s5581 + $0x24] sm:$0xf]
    %v5592 = vld [vmem:[%s5581 + $0x28] sm:$0xf]
    %v5593 = vld [vmem:[%s5581 + $0x2c] sm:$0xf]
    %v5594 = vld [vmem:[%s5581 + $0x30] sm:$0xf]
    %v5595 = vld [vmem:[%s5581 + $0x34] sm:$0xf]
    %v5596 = vld [vmem:[%s5581 + $0x38] sm:$0xf]
    %v5597 = vld [vmem:[%s5581 + $0x3c] sm:$0xf]
    %v5614 = vunpack.c.l.b16 %v5582
    %v5615 = vunpack.c.l.b16 %v5583
    %v5616 = vunpack.c.l.b16 %v5584
    %v5617 = vunpack.c.l.b16 %v5585
    %v5618 = vunpack.c.l.b16 %v5586
    %v5619 = vunpack.c.l.b16 %v5587
    %v5620 = vunpack.c.l.b16 %v5588
    %v5621 = vunpack.c.l.b16 %v5589
    %v5622 = vunpack.c.l.b16 %v5590
    %v5623 = vunpack.c.l.b16 %v5591
    %v5624 = vunpack.c.l.b16 %v5592
    %v5625 = vunpack.c.l.b16 %v5593
    %v5626 = vunpack.c.l.b16 %v5594
    %v5627 = vunpack.c.l.b16 %v5595
    %v5628 = vunpack.c.l.b16 %v5596
    %v5629 = vunpack.c.l.b16 %v5597
    %v5630 = vpack.c.b16 %v5615, %v5614
    %v5631 = vpack.c.b16 %v5617, %v5616
    %v5632 = vpack.c.b16 %v5619, %v5618
    %v5633 = vpack.c.b16 %v5621, %v5620
    %v5634 = vpack.c.b16 %v5623, %v5622
    %v5635 = vpack.c.b16 %v5625, %v5624
    %v5636 = vpack.c.b16 %v5627, %v5626
    %v5637 = vpack.c.b16 %v5629, %v5628
    %5646 = vmatprep.subr.bf16.mxu0 0
    %5647 = vmatpush1.bf16.msra.mxu0 %v5630
    %5648 = vmatprep.subr.bf16.mxu0 0
    %5649 = vmatpush1.bf16.msra.mxu0 %v5631
    %5650 = vmatprep.subr.bf16.mxu0 0
    %5651 = vmatpush1.bf16.msra.mxu0 %v5632
    %5652 = vmatprep.subr.bf16.mxu0 0
    %5653 = vmatpush1.bf16.msra.mxu0 %v5633
    %5654 = vmatprep.subr.bf16.mxu0 0
    %5655 = vmatpush1.bf16.msra.mxu0 %v5634
    %5656 = vmatprep.subr.bf16.mxu0 0
    %5657 = vmatpush1.bf16.msra.mxu0 %v5635
    %5658 = vmatprep.subr.bf16.mxu0 0
    %5659 = vmatpush1.bf16.msra.mxu0 %v5636
    %5660 = vmatprep.subr.bf16.mxu0 0
    %5661 = vmatpush1.bf16.msra.mxu0 %v5637
    %5662 = vmatprep.subr.bf16.mxu0 0
    %5663 = vmatpush1.bf16.msra.mxu0 0
    %5664 = vmatprep.subr.bf16.mxu0 0
    %5665 = vmatpush1.bf16.msra.mxu0 0
    %5666 = vmatprep.subr.bf16.mxu0 0
    %5667 = vmatpush1.bf16.msra.mxu0 0
    %5668 = vmatprep.subr.bf16.mxu0 0
    %5669 = vmatpush1.bf16.msra.mxu0 0
    %5670 = vmatprep.subr.bf16.mxu0 0
    %5671 = vmatpush1.bf16.msra.mxu0 0
    %5672 = vmatprep.subr.bf16.mxu0 0
    %5673 = vmatpush1.bf16.msra.mxu0 0
    %5674 = vmatprep.subr.bf16.mxu0 0
    %5675 = vmatpush1.bf16.msra.mxu0 0
    %5676 = vmatprep.subr.bf16.mxu0 0
    %5677 = vmatpush1.bf16.msra.mxu0 0
    %5678 = vmatprep.mubr.bf16.mxu0 0
    %5679 = vmatmul.mubr.bf16.gmra.mrb[0].mxu0 %v5573
    %v5680 = vpop.f32.mrb[0].mxu0
    %v5681 = vadd.f32 0.0, %v5680
    %v5682 = vpop.f32.mrb[0].mxu0
    %v5683 = vpop.f32.mrb[0].mxu0
    %v5684 = vadd.f32 0.0, %v5683
    %v5685 = vpop.f32.mrb[0].mxu0
    %5686 = vmatprep.mubr.bf16.mxu0 0
    %5687 = vmatmul.mubr.bf16.gmra.mrb[0].mxu0 %v5574
    %v5688 = vpop.f32.mrb[0].mxu0
    %v5689 = vadd.f32 0.0, %v5688
    %v5690 = vpop.f32.mrb[0].mxu0
    %v5691 = vpop.f32.mrb[0].mxu0
    %v5692 = vadd.f32 0.0, %v5691
    %v5693 = vpop.f32.mrb[0].mxu0
    %5694 = vmatprep.mubr.bf16.mxu0 0
    %5695 = vmatmul.mubr.bf16.gmra.mrb[0].mxu0 %v5575
    %v5696 = vpop.f32.mrb[0].mxu0
    %v5697 = vadd.f32 0.0, %v5696
    %v5698 = vpop.f32.mrb[0].mxu0
    %v5699 = vpop.f32.mrb[0].mxu0
    %v5700 = vadd.f32 0.0, %v5699
    %v5701 = vpop.f32.mrb[0].mxu0
    %5702 = vmatprep.mubr.bf16.mxu0 0
    %5703 = vmatmul.mubr.bf16.gmra.mrb[0].mxu0 %v5576
    %v5704 = vpop.f32.mrb[0].mxu0
    %v5705 = vadd.f32 0.0, %v5704
    %v5706 = vpop.f32.mrb[0].mxu0
    %v5707 = vpop.f32.mrb[0].mxu0
    %v5708 = vadd.f32 0.0, %v5707
    %v5709 = vpop.f32.mrb[0].mxu0
    %5710 = vmatprep.mubr.bf16.mxu0 0
    %5711 = vmatmul.mubr.bf16.gmra.mrb[0].mxu0 %v5577
    %v5712 = vpop.f32.mrb[0].mxu0
    %v5713 = vadd.f32 0.0, %v5712
    %v5714 = vpop.f32.mrb[0].mxu0
    %v5715 = vpop.f32.mrb[0].mxu0
    %v5716 = vadd.f32 0.0, %v5715
    %v5717 = vpop.f32.mrb[0].mxu0
    %5718 = vmatprep.mubr.bf16.mxu0 0
    %5719 = vmatmul.mubr.bf16.gmra.mrb[0].mxu0 %v5578
    %v5720 = vpop.f32.mrb[0].mxu0
    %v5721 = vadd.f32 0.0, %v5720
    %v5722 = vpop.f32.mrb[0].mxu0
    %v5723 = vpop.f32.mrb[0].mxu0
    %v5724 = vadd.f32 0.0, %v5723
    %v5725 = vpop.f32.mrb[0].mxu0
    %5726 = vmatprep.mubr.bf16.mxu0 0
    %5727 = vmatmul.mubr.bf16.gmra.mrb[0].mxu0 %v5579
    %v5728 = vpop.f32.mrb[0].mxu0
    %v5729 = vadd.f32 0.0, %v5728
    %v5730 = vpop.f32.mrb[0].mxu0
    %v5731 = vpop.f32.mrb[0].mxu0
    %v5732 = vadd.f32 0.0, %v5731
    %v5733 = vpop.f32.mrb[0].mxu0
    %5734 = vmatprep.mubr.bf16.mxu0 0
    %5735 = vmatmul.mubr.bf16.gmra.mrb[0].mxu0 %v5580
    %v5736 = vpop.f32.mrb[0].mxu0
    %v5737 = vadd.f32 0.0, %v5736
    %v5738 = vpop.f32.mrb[0].mxu0
    %v5739 = vpop.f32.mrb[0].mxu0
    %v5740 = vadd.f32 0.0, %v5739
    %v5741 = vpop.f32.mrb[0].mxu0
    %5742 = vdwg.mxu0
    %v5743 = vadd.f32 %v5541, %v5681
    %v5744 = vadd.f32 %v5542, %v5684
    %v5745 = vadd.f32 %v5543, %v5689
    %v5746 = vadd.f32 %v5544, %v5692
    %v5747 = vadd.f32 %v5545, %v5697
    %v5748 = vadd.f32 %v5546, %v5700
    %v5749 = vadd.f32 %v5547, %v5705
    %v5750 = vadd.f32 %v5548, %v5708
    %v5751 = vadd.f32 %v5549, %v5713
    %v5752 = vadd.f32 %v5550, %v5716
    %v5753 = vadd.f32 %v5551, %v5721
    %v5754 = vadd.f32 %v5552, %v5724
    %v5755 = vadd.f32 %v5553, %v5729
    %v5756 = vadd.f32 %v5554, %v5732
    %v5757 = vadd.f32 %v5555, %v5737
    %v5758 = vadd.f32 %v5556, %v5740
    %v5759 = vld [vmem:[%s5152 + $0x3] sm:$0xff]
    %v5760 = vld [vmem:[%s5152 + $0x13] sm:$0xff]
    %v5761 = vld [vmem:[%s5152 + $0x23] sm:$0xff]
    %v5762 = vld [vmem:[%s5152 + $0x33] sm:$0xff]
    %v5763 = vld [vmem:[%s5152 + $0x43] sm:$0xff]
    %v5764 = vld [vmem:[%s5152 + $0x53] sm:$0xff]
    %v5765 = vld [vmem:[%s5152 + $0x63] sm:$0xff]
    %v5766 = vld [vmem:[%s5152 + $0x73] sm:$0xff]
    %v5767 = vld [vmem:[%s5152 + $0xc3] sm:$0xff]
    %v5768 = vld [vmem:[%s5152 + $0xd3] sm:$0xff]
    %v5769 = vld [vmem:[%s5152 + $0xe3] sm:$0xff]
    %v5770 = vld [vmem:[%s5152 + $0xf3] sm:$0xff]
    %v5771 = vld [vmem:[%s5152 + $0x103] sm:$0xff]
    %v5772 = vld [vmem:[%s5152 + $0x113] sm:$0xff]
    %v5773 = vld [vmem:[%s5152 + $0x123] sm:$0xff]
    %v5774 = vld [vmem:[%s5152 + $0x133] sm:$0xff]
    %v5775 = vpack.c.bf16 %v5760, %v5759
    %v5776 = vpack.c.bf16 %v5762, %v5761
    %v5777 = vpack.c.bf16 %v5764, %v5763
    %v5778 = vpack.c.bf16 %v5766, %v5765
    %v5779 = vpack.c.bf16 %v5768, %v5767
    %v5780 = vpack.c.bf16 %v5770, %v5769
    %v5781 = vpack.c.bf16 %v5772, %v5771
    %v5782 = vpack.c.bf16 %v5774, %v5773
    %s5783 = scalar_lea.vmem %s3, 1152
    %v5784 = vld [vmem:[%s5783] sm:$0xf]
    %v5785 = vld [vmem:[%s5783 + $0x4] sm:$0xf]
    %v5786 = vld [vmem:[%s5783 + $0x8] sm:$0xf]
    %v5787 = vld [vmem:[%s5783 + $0xc] sm:$0xf]
    %v5788 = vld [vmem:[%s5783 + $0x10] sm:$0xf]
    %v5789 = vld [vmem:[%s5783 + $0x14] sm:$0xf]
    %v5790 = vld [vmem:[%s5783 + $0x18] sm:$0xf]
    %v5791 = vld [vmem:[%s5783 + $0x1c] sm:$0xf]
    %v5792 = vld [vmem:[%s5783 + $0x20] sm:$0xf]
    %v5793 = vld [vmem:[%s5783 + $0x24] sm:$0xf]
    %v5794 = vld [vmem:[%s5783 + $0x28] sm:$0xf]
    %v5795 = vld [vmem:[%s5783 + $0x2c] sm:$0xf]
    %v5796 = vld [vmem:[%s5783 + $0x30] sm:$0xf]
    %v5797 = vld [vmem:[%s5783 + $0x34] sm:$0xf]
    %v5798 = vld [vmem:[%s5783 + $0x38] sm:$0xf]
    %v5799 = vld [vmem:[%s5783 + $0x3c] sm:$0xf]
    %v5816 = vunpack.c.l.b16 %v5784
    %v5817 = vunpack.c.l.b16 %v5785
    %v5818 = vunpack.c.l.b16 %v5786
    %v5819 = vunpack.c.l.b16 %v5787
    %v5820 = vunpack.c.l.b16 %v5788
    %v5821 = vunpack.c.l.b16 %v5789
    %v5822 = vunpack.c.l.b16 %v5790
    %v5823 = vunpack.c.l.b16 %v5791
    %v5824 = vunpack.c.l.b16 %v5792
    %v5825 = vunpack.c.l.b16 %v5793
    %v5826 = vunpack.c.l.b16 %v5794
    %v5827 = vunpack.c.l.b16 %v5795
    %v5828 = vunpack.c.l.b16 %v5796
    %v5829 = vunpack.c.l.b16 %v5797
    %v5830 = vunpack.c.l.b16 %v5798
    %v5831 = vunpack.c.l.b16 %v5799
    %v5832 = vpack.c.b16 %v5817, %v5816
    %v5833 = vpack.c.b16 %v5819, %v5818
    %v5834 = vpack.c.b16 %v5821, %v5820
    %v5835 = vpack.c.b16 %v5823, %v5822
    %v5836 = vpack.c.b16 %v5825, %v5824
    %v5837 = vpack.c.b16 %v5827, %v5826
    %v5838 = vpack.c.b16 %v5829, %v5828
    %v5839 = vpack.c.b16 %v5831, %v5830
    %5848 = vmatprep.subr.bf16.mxu0 0
    %5849 = vmatpush1.bf16.msra.mxu0 %v5832
    %5850 = vmatprep.subr.bf16.mxu0 0
    %5851 = vmatpush1.bf16.msra.mxu0 %v5833
    %5852 = vmatprep.subr.bf16.mxu0 0
    %5853 = vmatpush1.bf16.msra.mxu0 %v5834
    %5854 = vmatprep.subr.bf16.mxu0 0
    %5855 = vmatpush1.bf16.msra.mxu0 %v5835
    %5856 = vmatprep.subr.bf16.mxu0 0
    %5857 = vmatpush1.bf16.msra.mxu0 %v5836
    %5858 = vmatprep.subr.bf16.mxu0 0
    %5859 = vmatpush1.bf16.msra.mxu0 %v5837
    %5860 = vmatprep.subr.bf16.mxu0 0
    %5861 = vmatpush1.bf16.msra.mxu0 %v5838
    %5862 = vmatprep.subr.bf16.mxu0 0
    %5863 = vmatpush1.bf16.msra.mxu0 %v5839
    %5864 = vmatprep.subr.bf16.mxu0 0
    %5865 = vmatpush1.bf16.msra.mxu0 0
    %5866 = vmatprep.subr.bf16.mxu0 0
    %5867 = vmatpush1.bf16.msra.mxu0 0
    %5868 = vmatprep.subr.bf16.mxu0 0
    %5869 = vmatpush1.bf16.msra.mxu0 0
    %5870 = vmatprep.subr.bf16.mxu0 0
    %5871 = vmatpush1.bf16.msra.mxu0 0
    %5872 = vmatprep.subr.bf16.mxu0 0
    %5873 = vmatpush1.bf16.msra.mxu0 0
    %5874 = vmatprep.subr.bf16.mxu0 0
    %5875 = vmatpush1.bf16.msra.mxu0 0
    %5876 = vmatprep.subr.bf16.mxu0 0
    %5877 = vmatpush1.bf16.msra.mxu0 0
    %5878 = vmatprep.subr.bf16.mxu0 0
    %5879 = vmatpush1.bf16.msra.mxu0 0
    %5880 = vmatprep.mubr.bf16.mxu0 0
    %5881 = vmatmul.mubr.bf16.gmra.mrb[0].mxu0 %v5775
    %v5882 = vpop.f32.mrb[0].mxu0
    %v5883 = vadd.f32 0.0, %v5882
    %v5884 = vpop.f32.mrb[0].mxu0
    %v5885 = vpop.f32.mrb[0].mxu0
    %v5886 = vadd.f32 0.0, %v5885
    %v5887 = vpop.f32.mrb[0].mxu0
    %5888 = vmatprep.mubr.bf16.mxu0 0
    %5889 = vmatmul.mubr.bf16.gmra.mrb[0].mxu0 %v5776
    %v5890 = vpop.f32.mrb[0].mxu0
    %v5891 = vadd.f32 0.0, %v5890
    %v5892 = vpop.f32.mrb[0].mxu0
    %v5893 = vpop.f32.mrb[0].mxu0
    %v5894 = vadd.f32 0.0, %v5893
    %v5895 = vpop.f32.mrb[0].mxu0
    %5896 = vmatprep.mubr.bf16.mxu0 0
    %5897 = vmatmul.mubr.bf16.gmra.mrb[0].mxu0 %v5777
    %v5898 = vpop.f32.mrb[0].mxu0
    %v5899 = vadd.f32 0.0, %v5898
    %v5900 = vpop.f32.mrb[0].mxu0
    %v5901 = vpop.f32.mrb[0].mxu0
    %v5902 = vadd.f32 0.0, %v5901
    %v5903 = vpop.f32.mrb[0].mxu0
    %5904 = vmatprep.mubr.bf16.mxu0 0
    %5905 = vmatmul.mubr.bf16.gmra.mrb[0].mxu0 %v5778
    %v5906 = vpop.f32.mrb[0].mxu0
    %v5907 = vadd.f32 0.0, %v5906
    %v5908 = vpop.f32.mrb[0].mxu0
    %v5909 = vpop.f32.mrb[0].mxu0
    %v5910 = vadd.f32 0.0, %v5909
    %v5911 = vpop.f32.mrb[0].mxu0
    %5912 = vmatprep.mubr.bf16.mxu0 0
    %5913 = vmatmul.mubr.bf16.gmra.mrb[0].mxu0 %v5779
    %v5914 = vpop.f32.mrb[0].mxu0
    %v5915 = vadd.f32 0.0, %v5914
    %v5916 = vpop.f32.mrb[0].mxu0
    %v5917 = vpop.f32.mrb[0].mxu0
    %v5918 = vadd.f32 0.0, %v5917
    %v5919 = vpop.f32.mrb[0].mxu0
    %5920 = vmatprep.mubr.bf16.mxu0 0
    %5921 = vmatmul.mubr.bf16.gmra.mrb[0].mxu0 %v5780
    %v5922 = vpop.f32.mrb[0].mxu0
    %v5923 = vadd.f32 0.0, %v5922
    %v5924 = vpop.f32.mrb[0].mxu0
    %v5925 = vpop.f32.mrb[0].mxu0
    %v5926 = vadd.f32 0.0, %v5925
    %v5927 = vpop.f32.mrb[0].mxu0
    %5928 = vmatprep.mubr.bf16.mxu0 0
    %5929 = vmatmul.mubr.bf16.gmra.mrb[0].mxu0 %v5781
    %v5930 = vpop.f32.mrb[0].mxu0
    %v5931 = vadd.f32 0.0, %v5930
    %v5932 = vpop.f32.mrb[0].mxu0
    %v5933 = vpop.f32.mrb[0].mxu0
    %v5934 = vadd.f32 0.0, %v5933
    %v5935 = vpop.f32.mrb[0].mxu0
    %5936 = vmatprep.mubr.bf16.mxu0 0
    %5937 = vmatmul.mubr.bf16.gmra.mrb[0].mxu0 %v5782
    %v5938 = vpop.f32.mrb[0].mxu0
    %v5939 = vadd.f32 0.0, %v5938
    %v5940 = vpop.f32.mrb[0].mxu0
    %v5941 = vpop.f32.mrb[0].mxu0
    %v5942 = vadd.f32 0.0, %v5941
    %v5943 = vpop.f32.mrb[0].mxu0
    %5944 = vdwg.mxu0
    %v5945 = vadd.f32 %v5743, %v5883
    %v5946 = vadd.f32 %v5744, %v5886
    %v5947 = vadd.f32 %v5745, %v5891
    %v5948 = vadd.f32 %v5746, %v5894
    %v5949 = vadd.f32 %v5747, %v5899
    %v5950 = vadd.f32 %v5748, %v5902
    %v5951 = vadd.f32 %v5749, %v5907
    %v5952 = vadd.f32 %v5750, %v5910
    %v5953 = vadd.f32 %v5751, %v5915
    %v5954 = vadd.f32 %v5752, %v5918
    %v5955 = vadd.f32 %v5753, %v5923
    %v5956 = vadd.f32 %v5754, %v5926
    %v5957 = vadd.f32 %v5755, %v5931
    %v5958 = vadd.f32 %v5756, %v5934
    %v5959 = vadd.f32 %v5757, %v5939
    %v5960 = vadd.f32 %v5758, %v5942
    %v5961 = vld [vmem:[%s5152 + $0x4] sm:$0xff]
    %v5962 = vld [vmem:[%s5152 + $0x14] sm:$0xff]
    %v5963 = vld [vmem:[%s5152 + $0x24] sm:$0xff]
    %v5964 = vld [vmem:[%s5152 + $0x34] sm:$0xff]
    %v5965 = vld [vmem:[%s5152 + $0x44] sm:$0xff]
    %v5966 = vld [vmem:[%s5152 + $0x54] sm:$0xff]
    %v5967 = vld [vmem:[%s5152 + $0x64] sm:$0xff]
    %v5968 = vld [vmem:[%s5152 + $0x74] sm:$0xff]
    %v5969 = vld [vmem:[%s5152 + $0xc4] sm:$0xff]
    %v5970 = vld [vmem:[%s5152 + $0xd4] sm:$0xff]
    %v5971 = vld [vmem:[%s5152 + $0xe4] sm:$0xff]
    %v5972 = vld [vmem:[%s5152 + $0xf4] sm:$0xff]
    %v5973 = vld [vmem:[%s5152 + $0x104] sm:$0xff]
    %v5974 = vld [vmem:[%s5152 + $0x114] sm:$0xff]
    %v5975 = vld [vmem:[%s5152 + $0x124] sm:$0xff]
    %v5976 = vld [vmem:[%s5152 + $0x134] sm:$0xff]
    %v5977 = vpack.c.bf16 %v5962, %v5961
    %v5978 = vpack.c.bf16 %v5964, %v5963
    %v5979 = vpack.c.bf16 %v5966, %v5965
    %v5980 = vpack.c.bf16 %v5968, %v5967
    %v5981 = vpack.c.bf16 %v5970, %v5969
    %v5982 = vpack.c.bf16 %v5972, %v5971
    %v5983 = vpack.c.bf16 %v5974, %v5973
    %v5984 = vpack.c.bf16 %v5976, %v5975
    %s5985 = scalar_lea.vmem %s3, 1216
    %v5986 = vld [vmem:[%s5985] sm:$0xf]
    %v5987 = vld [vmem:[%s5985 + $0x4] sm:$0xf]
    %v5988 = vld [vmem:[%s5985 + $0x8] sm:$0xf]
    %v5989 = vld [vmem:[%s5985 + $0xc] sm:$0xf]
    %v5990 = vld [vmem:[%s5985 + $0x10] sm:$0xf]
    %v5991 = vld [vmem:[%s5985 + $0x14] sm:$0xf]
    %v5992 = vld [vmem:[%s5985 + $0x18] sm:$0xf]
    %v5993 = vld [vmem:[%s5985 + $0x1c] sm:$0xf]
    %v5994 = vld [vmem:[%s5985 + $0x20] sm:$0xf]
    %v5995 = vld [vmem:[%s5985 + $0x24] sm:$0xf]
    %v5996 = vld [vmem:[%s5985 + $0x28] sm:$0xf]
    %v5997 = vld [vmem:[%s5985 + $0x2c] sm:$0xf]
    %v5998 = vld [vmem:[%s5985 + $0x30] sm:$0xf]
    %v5999 = vld [vmem:[%s5985 + $0x34] sm:$0xf]
    %v6000 = vld [vmem:[%s5985 + $0x38] sm:$0xf]
    %v6001 = vld [vmem:[%s5985 + $0x3c] sm:$0xf]
    %v6018 = vunpack.c.l.b16 %v5986
    %v6019 = vunpack.c.l.b16 %v5987
    %v6020 = vunpack.c.l.b16 %v5988
    %v6021 = vunpack.c.l.b16 %v5989
    %v6022 = vunpack.c.l.b16 %v5990
    %v6023 = vunpack.c.l.b16 %v5991
    %v6024 = vunpack.c.l.b16 %v5992
    %v6025 = vunpack.c.l.b16 %v5993
    %v6026 = vunpack.c.l.b16 %v5994
    %v6027 = vunpack.c.l.b16 %v5995
    %v6028 = vunpack.c.l.b16 %v5996
    %v6029 = vunpack.c.l.b16 %v5997
    %v6030 = vunpack.c.l.b16 %v5998
    %v6031 = vunpack.c.l.b16 %v5999
    %v6032 = vunpack.c.l.b16 %v6000
    %v6033 = vunpack.c.l.b16 %v6001
    %v6034 = vpack.c.b16 %v6019, %v6018
    %v6035 = vpack.c.b16 %v6021, %v6020
    %v6036 = vpack.c.b16 %v6023, %v6022
    %v6037 = vpack.c.b16 %v6025, %v6024
    %v6038 = vpack.c.b16 %v6027, %v6026
    %v6039 = vpack.c.b16 %v6029, %v6028
    %v6040 = vpack.c.b16 %v6031, %v6030
    %v6041 = vpack.c.b16 %v6033, %v6032
    %6050 = vmatprep.subr.bf16.mxu0 0
    %6051 = vmatpush1.bf16.msra.mxu0 %v6034
    %6052 = vmatprep.subr.bf16.mxu0 0
    %6053 = vmatpush1.bf16.msra.mxu0 %v6035
    %6054 = vmatprep.subr.bf16.mxu0 0
    %6055 = vmatpush1.bf16.msra.mxu0 %v6036
    %6056 = vmatprep.subr.bf16.mxu0 0
    %6057 = vmatpush1.bf16.msra.mxu0 %v6037
    %6058 = vmatprep.subr.bf16.mxu0 0
    %6059 = vmatpush1.bf16.msra.mxu0 %v6038
    %6060 = vmatprep.subr.bf16.mxu0 0
    %6061 = vmatpush1.bf16.msra.mxu0 %v6039
    %6062 = vmatprep.subr.bf16.mxu0 0
    %6063 = vmatpush1.bf16.msra.mxu0 %v6040
    %6064 = vmatprep.subr.bf16.mxu0 0
    %6065 = vmatpush1.bf16.msra.mxu0 %v6041
    %6066 = vmatprep.subr.bf16.mxu0 0
    %6067 = vmatpush1.bf16.msra.mxu0 0
    %6068 = vmatprep.subr.bf16.mxu0 0
    %6069 = vmatpush1.bf16.msra.mxu0 0
    %6070 = vmatprep.subr.bf16.mxu0 0
    %6071 = vmatpush1.bf16.msra.mxu0 0
    %6072 = vmatprep.subr.bf16.mxu0 0
    %6073 = vmatpush1.bf16.msra.mxu0 0
    %6074 = vmatprep.subr.bf16.mxu0 0
    %6075 = vmatpush1.bf16.msra.mxu0 0
    %6076 = vmatprep.subr.bf16.mxu0 0
    %6077 = vmatpush1.bf16.msra.mxu0 0
    %6078 = vmatprep.subr.bf16.mxu0 0
    %6079 = vmatpush1.bf16.msra.mxu0 0
    %6080 = vmatprep.subr.bf16.mxu0 0
    %6081 = vmatpush1.bf16.msra.mxu0 0
    %6082 = vmatprep.mubr.bf16.mxu0 0
    %6083 = vmatmul.mubr.bf16.gmra.mrb[0].mxu0 %v5977
    %v6084 = vpop.f32.mrb[0].mxu0
    %v6085 = vadd.f32 0.0, %v6084
    %v6086 = vpop.f32.mrb[0].mxu0
    %v6087 = vpop.f32.mrb[0].mxu0
    %v6088 = vadd.f32 0.0, %v6087
    %v6089 = vpop.f32.mrb[0].mxu0
    %6090 = vmatprep.mubr.bf16.mxu0 0
    %6091 = vmatmul.mubr.bf16.gmra.mrb[0].mxu0 %v5978
    %v6092 = vpop.f32.mrb[0].mxu0
    %v6093 = vadd.f32 0.0, %v6092
    %v6094 = vpop.f32.mrb[0].mxu0
    %v6095 = vpop.f32.mrb[0].mxu0
    %v6096 = vadd.f32 0.0, %v6095
    %v6097 = vpop.f32.mrb[0].mxu0
    %6098 = vmatprep.mubr.bf16.mxu0 0
    %6099 = vmatmul.mubr.bf16.gmra.mrb[0].mxu0 %v5979
    %v6100 = vpop.f32.mrb[0].mxu0
    %v6101 = vadd.f32 0.0, %v6100
    %v6102 = vpop.f32.mrb[0].mxu0
    %v6103 = vpop.f32.mrb[0].mxu0
    %v6104 = vadd.f32 0.0, %v6103
    %v6105 = vpop.f32.mrb[0].mxu0
    %6106 = vmatprep.mubr.bf16.mxu0 0
    %6107 = vmatmul.mubr.bf16.gmra.mrb[0].mxu0 %v5980
    %v6108 = vpop.f32.mrb[0].mxu0
    %v6109 = vadd.f32 0.0, %v6108
    %v6110 = vpop.f32.mrb[0].mxu0
    %v6111 = vpop.f32.mrb[0].mxu0
    %v6112 = vadd.f32 0.0, %v6111
    %v6113 = vpop.f32.mrb[0].mxu0
    %6114 = vmatprep.mubr.bf16.mxu0 0
    %6115 = vmatmul.mubr.bf16.gmra.mrb[0].mxu0 %v5981
    %v6116 = vpop.f32.mrb[0].mxu0
    %v6117 = vadd.f32 0.0, %v6116
    %v6118 = vpop.f32.mrb[0].mxu0
    %v6119 = vpop.f32.mrb[0].mxu0
    %v6120 = vadd.f32 0.0, %v6119
    %v6121 = vpop.f32.mrb[0].mxu0
    %6122 = vmatprep.mubr.bf16.mxu0 0
    %6123 = vmatmul.mubr.bf16.gmra.mrb[0].mxu0 %v5982
    %v6124 = vpop.f32.mrb[0].mxu0
    %v6125 = vadd.f32 0.0, %v6124
    %v6126 = vpop.f32.mrb[0].mxu0
    %v6127 = vpop.f32.mrb[0].mxu0
    %v6128 = vadd.f32 0.0, %v6127
    %v6129 = vpop.f32.mrb[0].mxu0
    %6130 = vmatprep.mubr.bf16.mxu0 0
    %6131 = vmatmul.mubr.bf16.gmra.mrb[0].mxu0 %v5983
    %v6132 = vpop.f32.mrb[0].mxu0
    %v6133 = vadd.f32 0.0, %v6132
    %v6134 = vpop.f32.mrb[0].mxu0
    %v6135 = vpop.f32.mrb[0].mxu0
    %v6136 = vadd.f32 0.0, %v6135
    %v6137 = vpop.f32.mrb[0].mxu0
    %6138 = vmatprep.mubr.bf16.mxu0 0
    %6139 = vmatmul.mubr.bf16.gmra.mrb[0].mxu0 %v5984
    %v6140 = vpop.f32.mrb[0].mxu0
    %v6141 = vadd.f32 0.0, %v6140
    %v6142 = vpop.f32.mrb[0].mxu0
    %v6143 = vpop.f32.mrb[0].mxu0
    %v6144 = vadd.f32 0.0, %v6143
    %v6145 = vpop.f32.mrb[0].mxu0
    %6146 = vdwg.mxu0
    %v6147 = vadd.f32 %v5945, %v6085
    %v6148 = vadd.f32 %v5946, %v6088
    %v6149 = vadd.f32 %v5947, %v6093
    %v6150 = vadd.f32 %v5948, %v6096
    %v6151 = vadd.f32 %v5949, %v6101
    %v6152 = vadd.f32 %v5950, %v6104
    %v6153 = vadd.f32 %v5951, %v6109
    %v6154 = vadd.f32 %v5952, %v6112
    %v6155 = vadd.f32 %v5953, %v6117
    %v6156 = vadd.f32 %v5954, %v6120
    %v6157 = vadd.f32 %v5955, %v6125
    %v6158 = vadd.f32 %v5956, %v6128
    %v6159 = vadd.f32 %v5957, %v6133
    %v6160 = vadd.f32 %v5958, %v6136
    %v6161 = vadd.f32 %v5959, %v6141
    %v6162 = vadd.f32 %v5960, %v6144
    %s6163 = scalar_lea.vmem [#allocation3], 64
    %v6164 = vld [vmem:[%s6163] sm:$0xff]
    %v6165 = vld [vmem:[%s6163 + $0x10] sm:$0xff]
    %v6166 = vld [vmem:[%s6163 + $0x20] sm:$0xff]
    %v6167 = vld [vmem:[%s6163 + $0x30] sm:$0xff]
    %v6168 = vld [vmem:[%s6163 + $0x40] sm:$0xff]
    %v6169 = vld [vmem:[%s6163 + $0x50] sm:$0xff]
    %v6170 = vld [vmem:[%s6163 + $0x60] sm:$0xff]
    %v6171 = vld [vmem:[%s6163 + $0x70] sm:$0xff]
    %v6172 = vld [vmem:[%s6163 + $0xc0] sm:$0xff]
    %v6173 = vld [vmem:[%s6163 + $0xd0] sm:$0xff]
    %v6174 = vld [vmem:[%s6163 + $0xe0] sm:$0xff]
    %v6175 = vld [vmem:[%s6163 + $0xf0] sm:$0xff]
    %v6176 = vld [vmem:[%s6163 + $0x100] sm:$0xff]
    %v6177 = vld [vmem:[%s6163 + $0x110] sm:$0xff]
    %v6178 = vld [vmem:[%s6163 + $0x120] sm:$0xff]
    %v6179 = vld [vmem:[%s6163 + $0x130] sm:$0xff]
    %v6180 = vpack.c.bf16 %v6165, %v6164
    %v6181 = vpack.c.bf16 %v6167, %v6166
    %v6182 = vpack.c.bf16 %v6169, %v6168
    %v6183 = vpack.c.bf16 %v6171, %v6170
    %v6184 = vpack.c.bf16 %v6173, %v6172
    %v6185 = vpack.c.bf16 %v6175, %v6174
    %v6186 = vpack.c.bf16 %v6177, %v6176
    %v6187 = vpack.c.bf16 %v6179, %v6178
    %s6188 = scalar_lea.vmem %s3, 1280
    %v6189 = vld [vmem:[%s6188] sm:$0xf]
    %v6190 = vld [vmem:[%s6188 + $0x4] sm:$0xf]
    %v6191 = vld [vmem:[%s6188 + $0x8] sm:$0xf]
    %v6192 = vld [vmem:[%s6188 + $0xc] sm:$0xf]
    %v6193 = vld [vmem:[%s6188 + $0x10] sm:$0xf]
    %v6194 = vld [vmem:[%s6188 + $0x14] sm:$0xf]
    %v6195 = vld [vmem:[%s6188 + $0x18] sm:$0xf]
    %v6196 = vld [vmem:[%s6188 + $0x1c] sm:$0xf]
    %v6197 = vld [vmem:[%s6188 + $0x20] sm:$0xf]
    %v6198 = vld [vmem:[%s6188 + $0x24] sm:$0xf]
    %v6199 = vld [vmem:[%s6188 + $0x28] sm:$0xf]
    %v6200 = vld [vmem:[%s6188 + $0x2c] sm:$0xf]
    %v6201 = vld [vmem:[%s6188 + $0x30] sm:$0xf]
    %v6202 = vld [vmem:[%s6188 + $0x34] sm:$0xf]
    %v6203 = vld [vmem:[%s6188 + $0x38] sm:$0xf]
    %v6204 = vld [vmem:[%s6188 + $0x3c] sm:$0xf]
    %v6221 = vunpack.c.l.b16 %v6189
    %v6222 = vunpack.c.l.b16 %v6190
    %v6223 = vunpack.c.l.b16 %v6191
    %v6224 = vunpack.c.l.b16 %v6192
    %v6225 = vunpack.c.l.b16 %v6193
    %v6226 = vunpack.c.l.b16 %v6194
    %v6227 = vunpack.c.l.b16 %v6195
    %v6228 = vunpack.c.l.b16 %v6196
    %v6229 = vunpack.c.l.b16 %v6197
    %v6230 = vunpack.c.l.b16 %v6198
    %v6231 = vunpack.c.l.b16 %v6199
    %v6232 = vunpack.c.l.b16 %v6200
    %v6233 = vunpack.c.l.b16 %v6201
    %v6234 = vunpack.c.l.b16 %v6202
    %v6235 = vunpack.c.l.b16 %v6203
    %v6236 = vunpack.c.l.b16 %v6204
    %v6237 = vpack.c.b16 %v6222, %v6221
    %v6238 = vpack.c.b16 %v6224, %v6223
    %v6239 = vpack.c.b16 %v6226, %v6225
    %v6240 = vpack.c.b16 %v6228, %v6227
    %v6241 = vpack.c.b16 %v6230, %v6229
    %v6242 = vpack.c.b16 %v6232, %v6231
    %v6243 = vpack.c.b16 %v6234, %v6233
    %v6244 = vpack.c.b16 %v6236, %v6235
    %6253 = vmatprep.subr.bf16.mxu0 0
    %6254 = vmatpush1.bf16.msra.mxu0 %v6237
    %6255 = vmatprep.subr.bf16.mxu0 0
    %6256 = vmatpush1.bf16.msra.mxu0 %v6238
    %6257 = vmatprep.subr.bf16.mxu0 0
    %6258 = vmatpush1.bf16.msra.mxu0 %v6239
    %6259 = vmatprep.subr.bf16.mxu0 0
    %6260 = vmatpush1.bf16.msra.mxu0 %v6240
    %6261 = vmatprep.subr.bf16.mxu0 0
    %6262 = vmatpush1.bf16.msra.mxu0 %v6241
    %6263 = vmatprep.subr.bf16.mxu0 0
    %6264 = vmatpush1.bf16.msra.mxu0 %v6242
    %6265 = vmatprep.subr.bf16.mxu0 0
    %6266 = vmatpush1.bf16.msra.mxu0 %v6243
    %6267 = vmatprep.subr.bf16.mxu0 0
    %6268 = vmatpush1.bf16.msra.mxu0 %v6244
    %6269 = vmatprep.subr.bf16.mxu0 0
    %6270 = vmatpush1.bf16.msra.mxu0 0
    %6271 = vmatprep.subr.bf16.mxu0 0
    %6272 = vmatpush1.bf16.msra.mxu0 0
    %6273 = vmatprep.subr.bf16.mxu0 0
    %6274 = vmatpush1.bf16.msra.mxu0 0
    %6275 = vmatprep.subr.bf16.mxu0 0
    %6276 = vmatpush1.bf16.msra.mxu0 0
    %6277 = vmatprep.subr.bf16.mxu0 0
    %6278 = vmatpush1.bf16.msra.mxu0 0
    %6279 = vmatprep.subr.bf16.mxu0 0
    %6280 = vmatpush1.bf16.msra.mxu0 0
    %6281 = vmatprep.subr.bf16.mxu0 0
    %6282 = vmatpush1.bf16.msra.mxu0 0
    %6283 = vmatprep.subr.bf16.mxu0 0
    %6284 = vmatpush1.bf16.msra.mxu0 0
    %6285 = vmatprep.mubr.bf16.mxu0 0
    %6286 = vmatmul.mubr.bf16.gmra.mrb[0].mxu0 %v6180
    %v6287 = vpop.f32.mrb[0].mxu0
    %v6288 = vadd.f32 0.0, %v6287
    %v6289 = vpop.f32.mrb[0].mxu0
    %v6290 = vpop.f32.mrb[0].mxu0
    %v6291 = vadd.f32 0.0, %v6290
    %v6292 = vpop.f32.mrb[0].mxu0
    %6293 = vmatprep.mubr.bf16.mxu0 0
    %6294 = vmatmul.mubr.bf16.gmra.mrb[0].mxu0 %v6181
    %v6295 = vpop.f32.mrb[0].mxu0
    %v6296 = vadd.f32 0.0, %v6295
    %v6297 = vpop.f32.mrb[0].mxu0
    %v6298 = vpop.f32.mrb[0].mxu0
    %v6299 = vadd.f32 0.0, %v6298
    %v6300 = vpop.f32.mrb[0].mxu0
    %6301 = vmatprep.mubr.bf16.mxu0 0
    %6302 = vmatmul.mubr.bf16.gmra.mrb[0].mxu0 %v6182
    %v6303 = vpop.f32.mrb[0].mxu0
    %v6304 = vadd.f32 0.0, %v6303
    %v6305 = vpop.f32.mrb[0].mxu0
    %v6306 = vpop.f32.mrb[0].mxu0
    %v6307 = vadd.f32 0.0, %v6306
    %v6308 = vpop.f32.mrb[0].mxu0
    %6309 = vmatprep.mubr.bf16.mxu0 0
    %6310 = vmatmul.mubr.bf16.gmra.mrb[0].mxu0 %v6183
    %v6311 = vpop.f32.mrb[0].mxu0
    %v6312 = vadd.f32 0.0, %v6311
    %v6313 = vpop.f32.mrb[0].mxu0
    %v6314 = vpop.f32.mrb[0].mxu0
    %v6315 = vadd.f32 0.0, %v6314
    %v6316 = vpop.f32.mrb[0].mxu0
    %6317 = vmatprep.mubr.bf16.mxu0 0
    %6318 = vmatmul.mubr.bf16.gmra.mrb[0].mxu0 %v6184
    %v6319 = vpop.f32.mrb[0].mxu0
    %v6320 = vadd.f32 0.0, %v6319
    %v6321 = vpop.f32.mrb[0].mxu0
    %v6322 = vpop.f32.mrb[0].mxu0
    %v6323 = vadd.f32 0.0, %v6322
    %v6324 = vpop.f32.mrb[0].mxu0
    %6325 = vmatprep.mubr.bf16.mxu0 0
    %6326 = vmatmul.mubr.bf16.gmra.mrb[0].mxu0 %v6185
    %v6327 = vpop.f32.mrb[0].mxu0
    %v6328 = vadd.f32 0.0, %v6327
    %v6329 = vpop.f32.mrb[0].mxu0
    %v6330 = vpop.f32.mrb[0].mxu0
    %v6331 = vadd.f32 0.0, %v6330
    %v6332 = vpop.f32.mrb[0].mxu0
    %6333 = vmatprep.mubr.bf16.mxu0 0
    %6334 = vmatmul.mubr.bf16.gmra.mrb[0].mxu0 %v6186
    %v6335 = vpop.f32.mrb[0].mxu0
    %v6336 = vadd.f32 0.0, %v6335
    %v6337 = vpop.f32.mrb[0].mxu0
    %v6338 = vpop.f32.mrb[0].mxu0
    %v6339 = vadd.f32 0.0, %v6338
    %v6340 = vpop.f32.mrb[0].mxu0
    %6341 = vmatprep.mubr.bf16.mxu0 0
    %6342 = vmatmul.mubr.bf16.gmra.mrb[0].mxu0 %v6187
    %v6343 = vpop.f32.mrb[0].mxu0
    %v6344 = vadd.f32 0.0, %v6343
    %v6345 = vpop.f32.mrb[0].mxu0
    %v6346 = vpop.f32.mrb[0].mxu0
    %v6347 = vadd.f32 0.0, %v6346
    %v6348 = vpop.f32.mrb[0].mxu0
    %6349 = vdwg.mxu0
    %v6350 = vadd.f32 %v6147, %v6288
    %v6351 = vadd.f32 %v6148, %v6291
    %v6352 = vadd.f32 %v6149, %v6296
    %v6353 = vadd.f32 %v6150, %v6299
    %v6354 = vadd.f32 %v6151, %v6304
    %v6355 = vadd.f32 %v6152, %v6307
    %v6356 = vadd.f32 %v6153, %v6312
    %v6357 = vadd.f32 %v6154, %v6315
    %v6358 = vadd.f32 %v6155, %v6320
    %v6359 = vadd.f32 %v6156, %v6323
    %v6360 = vadd.f32 %v6157, %v6328
    %v6361 = vadd.f32 %v6158, %v6331
    %v6362 = vadd.f32 %v6159, %v6336
    %v6363 = vadd.f32 %v6160, %v6339
    %v6364 = vadd.f32 %v6161, %v6344
    %v6365 = vadd.f32 %v6162, %v6347
    %v6366 = vld [vmem:[%s6163 + $0x1] sm:$0xff]
    %v6367 = vld [vmem:[%s6163 + $0x11] sm:$0xff]
    %v6368 = vld [vmem:[%s6163 + $0x21] sm:$0xff]
    %v6369 = vld [vmem:[%s6163 + $0x31] sm:$0xff]
    %v6370 = vld [vmem:[%s6163 + $0x41] sm:$0xff]
    %v6371 = vld [vmem:[%s6163 + $0x51] sm:$0xff]
    %v6372 = vld [vmem:[%s6163 + $0x61] sm:$0xff]
    %v6373 = vld [vmem:[%s6163 + $0x71] sm:$0xff]
    %v6374 = vld [vmem:[%s6163 + $0xc1] sm:$0xff]
    %v6375 = vld [vmem:[%s6163 + $0xd1] sm:$0xff]
    %v6376 = vld [vmem:[%s6163 + $0xe1] sm:$0xff]
    %v6377 = vld [vmem:[%s6163 + $0xf1] sm:$0xff]
    %v6378 = vld [vmem:[%s6163 + $0x101] sm:$0xff]
    %v6379 = vld [vmem:[%s6163 + $0x111] sm:$0xff]
    %v6380 = vld [vmem:[%s6163 + $0x121] sm:$0xff]
    %v6381 = vld [vmem:[%s6163 + $0x131] sm:$0xff]
    %v6382 = vpack.c.bf16 %v6367, %v6366
    %v6383 = vpack.c.bf16 %v6369, %v6368
    %v6384 = vpack.c.bf16 %v6371, %v6370
    %v6385 = vpack.c.bf16 %v6373, %v6372
    %v6386 = vpack.c.bf16 %v6375, %v6374
    %v6387 = vpack.c.bf16 %v6377, %v6376
    %v6388 = vpack.c.bf16 %v6379, %v6378
    %v6389 = vpack.c.bf16 %v6381, %v6380
    %s6390 = scalar_lea.vmem %s3, 1344
    %v6391 = vld [vmem:[%s6390] sm:$0xf]
    %v6392 = vld [vmem:[%s6390 + $0x4] sm:$0xf]
    %v6393 = vld [vmem:[%s6390 + $0x8] sm:$0xf]
    %v6394 = vld [vmem:[%s6390 + $0xc] sm:$0xf]
    %v6395 = vld [vmem:[%s6390 + $0x10] sm:$0xf]
    %v6396 = vld [vmem:[%s6390 + $0x14] sm:$0xf]
    %v6397 = vld [vmem:[%s6390 + $0x18] sm:$0xf]
    %v6398 = vld [vmem:[%s6390 + $0x1c] sm:$0xf]
    %v6399 = vld [vmem:[%s6390 + $0x20] sm:$0xf]
    %v6400 = vld [vmem:[%s6390 + $0x24] sm:$0xf]
    %v6401 = vld [vmem:[%s6390 + $0x28] sm:$0xf]
    %v6402 = vld [vmem:[%s6390 + $0x2c] sm:$0xf]
    %v6403 = vld [vmem:[%s6390 + $0x30] sm:$0xf]
    %v6404 = vld [vmem:[%s6390 + $0x34] sm:$0xf]
    %v6405 = vld [vmem:[%s6390 + $0x38] sm:$0xf]
    %v6406 = vld [vmem:[%s6390 + $0x3c] sm:$0xf]
    %v6423 = vunpack.c.l.b16 %v6391
    %v6424 = vunpack.c.l.b16 %v6392
    %v6425 = vunpack.c.l.b16 %v6393
    %v6426 = vunpack.c.l.b16 %v6394
    %v6427 = vunpack.c.l.b16 %v6395
    %v6428 = vunpack.c.l.b16 %v6396
    %v6429 = vunpack.c.l.b16 %v6397
    %v6430 = vunpack.c.l.b16 %v6398
    %v6431 = vunpack.c.l.b16 %v6399
    %v6432 = vunpack.c.l.b16 %v6400
    %v6433 = vunpack.c.l.b16 %v6401
    %v6434 = vunpack.c.l.b16 %v6402
    %v6435 = vunpack.c.l.b16 %v6403
    %v6436 = vunpack.c.l.b16 %v6404
    %v6437 = vunpack.c.l.b16 %v6405
    %v6438 = vunpack.c.l.b16 %v6406
    %v6439 = vpack.c.b16 %v6424, %v6423
    %v6440 = vpack.c.b16 %v6426, %v6425
    %v6441 = vpack.c.b16 %v6428, %v6427
    %v6442 = vpack.c.b16 %v6430, %v6429
    %v6443 = vpack.c.b16 %v6432, %v6431
    %v6444 = vpack.c.b16 %v6434, %v6433
    %v6445 = vpack.c.b16 %v6436, %v6435
    %v6446 = vpack.c.b16 %v6438, %v6437
    %6455 = vmatprep.subr.bf16.mxu0 0
    %6456 = vmatpush1.bf16.msra.mxu0 %v6439
    %6457 = vmatprep.subr.bf16.mxu0 0
    %6458 = vmatpush1.bf16.msra.mxu0 %v6440
    %6459 = vmatprep.subr.bf16.mxu0 0
    %6460 = vmatpush1.bf16.msra.mxu0 %v6441
    %6461 = vmatprep.subr.bf16.mxu0 0
    %6462 = vmatpush1.bf16.msra.mxu0 %v6442
    %6463 = vmatprep.subr.bf16.mxu0 0
    %6464 = vmatpush1.bf16.msra.mxu0 %v6443
    %6465 = vmatprep.subr.bf16.mxu0 0
    %6466 = vmatpush1.bf16.msra.mxu0 %v6444
    %6467 = vmatprep.subr.bf16.mxu0 0
    %6468 = vmatpush1.bf16.msra.mxu0 %v6445
    %6469 = vmatprep.subr.bf16.mxu0 0
    %6470 = vmatpush1.bf16.msra.mxu0 %v6446
    %6471 = vmatprep.subr.bf16.mxu0 0
    %6472 = vmatpush1.bf16.msra.mxu0 0
    %6473 = vmatprep.subr.bf16.mxu0 0
    %6474 = vmatpush1.bf16.msra.mxu0 0
    %6475 = vmatprep.subr.bf16.mxu0 0
    %6476 = vmatpush1.bf16.msra.mxu0 0
    %6477 = vmatprep.subr.bf16.mxu0 0
    %6478 = vmatpush1.bf16.msra.mxu0 0
    %6479 = vmatprep.subr.bf16.mxu0 0
    %6480 = vmatpush1.bf16.msra.mxu0 0
    %6481 = vmatprep.subr.bf16.mxu0 0
    %6482 = vmatpush1.bf16.msra.mxu0 0
    %6483 = vmatprep.subr.bf16.mxu0 0
    %6484 = vmatpush1.bf16.msra.mxu0 0
    %6485 = vmatprep.subr.bf16.mxu0 0
    %6486 = vmatpush1.bf16.msra.mxu0 0
    %6487 = vmatprep.mubr.bf16.mxu0 0
    %6488 = vmatmul.mubr.bf16.gmra.mrb[0].mxu0 %v6382
    %v6489 = vpop.f32.mrb[0].mxu0
    %v6490 = vadd.f32 0.0, %v6489
    %v6491 = vpop.f32.mrb[0].mxu0
    %v6492 = vpop.f32.mrb[0].mxu0
    %v6493 = vadd.f32 0.0, %v6492
    %v6494 = vpop.f32.mrb[0].mxu0
    %6495 = vmatprep.mubr.bf16.mxu0 0
    %6496 = vmatmul.mubr.bf16.gmra.mrb[0].mxu0 %v6383
    %v6497 = vpop.f32.mrb[0].mxu0
    %v6498 = vadd.f32 0.0, %v6497
    %v6499 = vpop.f32.mrb[0].mxu0
    %v6500 = vpop.f32.mrb[0].mxu0
    %v6501 = vadd.f32 0.0, %v6500
    %v6502 = vpop.f32.mrb[0].mxu0
    %6503 = vmatprep.mubr.bf16.mxu0 0
    %6504 = vmatmul.mubr.bf16.gmra.mrb[0].mxu0 %v6384
    %v6505 = vpop.f32.mrb[0].mxu0
    %v6506 = vadd.f32 0.0, %v6505
    %v6507 = vpop.f32.mrb[0].mxu0
    %v6508 = vpop.f32.mrb[0].mxu0
    %v6509 = vadd.f32 0.0, %v6508
    %v6510 = vpop.f32.mrb[0].mxu0
    %6511 = vmatprep.mubr.bf16.mxu0 0
    %6512 = vmatmul.mubr.bf16.gmra.mrb[0].mxu0 %v6385
    %v6513 = vpop.f32.mrb[0].mxu0
    %v6514 = vadd.f32 0.0, %v6513
    %v6515 = vpop.f32.mrb[0].mxu0
    %v6516 = vpop.f32.mrb[0].mxu0
    %v6517 = vadd.f32 0.0, %v6516
    %v6518 = vpop.f32.mrb[0].mxu0
    %6519 = vmatprep.mubr.bf16.mxu0 0
    %6520 = vmatmul.mubr.bf16.gmra.mrb[0].mxu0 %v6386
    %v6521 = vpop.f32.mrb[0].mxu0
    %v6522 = vadd.f32 0.0, %v6521
    %v6523 = vpop.f32.mrb[0].mxu0
    %v6524 = vpop.f32.mrb[0].mxu0
    %v6525 = vadd.f32 0.0, %v6524
    %v6526 = vpop.f32.mrb[0].mxu0
    %6527 = vmatprep.mubr.bf16.mxu0 0
    %6528 = vmatmul.mubr.bf16.gmra.mrb[0].mxu0 %v6387
    %v6529 = vpop.f32.mrb[0].mxu0
    %v6530 = vadd.f32 0.0, %v6529
    %v6531 = vpop.f32.mrb[0].mxu0
    %v6532 = vpop.f32.mrb[0].mxu0
    %v6533 = vadd.f32 0.0, %v6532
    %v6534 = vpop.f32.mrb[0].mxu0
    %6535 = vmatprep.mubr.bf16.mxu0 0
    %6536 = vmatmul.mubr.bf16.gmra.mrb[0].mxu0 %v6388
    %v6537 = vpop.f32.mrb[0].mxu0
    %v6538 = vadd.f32 0.0, %v6537
    %v6539 = vpop.f32.mrb[0].mxu0
    %v6540 = vpop.f32.mrb[0].mxu0
    %v6541 = vadd.f32 0.0, %v6540
    %v6542 = vpop.f32.mrb[0].mxu0
    %6543 = vmatprep.mubr.bf16.mxu0 0
    %6544 = vmatmul.mubr.bf16.gmra.mrb[0].mxu0 %v6389
    %v6545 = vpop.f32.mrb[0].mxu0
    %v6546 = vadd.f32 0.0, %v6545
    %v6547 = vpop.f32.mrb[0].mxu0
    %v6548 = vpop.f32.mrb[0].mxu0
    %v6549 = vadd.f32 0.0, %v6548
    %v6550 = vpop.f32.mrb[0].mxu0
    %6551 = vdwg.mxu0
    %v6552 = vadd.f32 %v6350, %v6490
    %v6553 = vadd.f32 %v6351, %v6493
    %v6554 = vadd.f32 %v6352, %v6498
    %v6555 = vadd.f32 %v6353, %v6501
    %v6556 = vadd.f32 %v6354, %v6506
    %v6557 = vadd.f32 %v6355, %v6509
    %v6558 = vadd.f32 %v6356, %v6514
    %v6559 = vadd.f32 %v6357, %v6517
    %v6560 = vadd.f32 %v6358, %v6522
    %v6561 = vadd.f32 %v6359, %v6525
    %v6562 = vadd.f32 %v6360, %v6530
    %v6563 = vadd.f32 %v6361, %v6533
    %v6564 = vadd.f32 %v6362, %v6538
    %v6565 = vadd.f32 %v6363, %v6541
    %v6566 = vadd.f32 %v6364, %v6546
    %v6567 = vadd.f32 %v6365, %v6549
    %v6568 = vld [vmem:[%s6163 + $0x2] sm:$0xff]
    %v6569 = vld [vmem:[%s6163 + $0x12] sm:$0xff]
    %v6570 = vld [vmem:[%s6163 + $0x22] sm:$0xff]
    %v6571 = vld [vmem:[%s6163 + $0x32] sm:$0xff]
    %v6572 = vld [vmem:[%s6163 + $0x42] sm:$0xff]
    %v6573 = vld [vmem:[%s6163 + $0x52] sm:$0xff]
    %v6574 = vld [vmem:[%s6163 + $0x62] sm:$0xff]
    %v6575 = vld [vmem:[%s6163 + $0x72] sm:$0xff]
    %v6576 = vld [vmem:[%s6163 + $0xc2] sm:$0xff]
    %v6577 = vld [vmem:[%s6163 + $0xd2] sm:$0xff]
    %v6578 = vld [vmem:[%s6163 + $0xe2] sm:$0xff]
    %v6579 = vld [vmem:[%s6163 + $0xf2] sm:$0xff]
    %v6580 = vld [vmem:[%s6163 + $0x102] sm:$0xff]
    %v6581 = vld [vmem:[%s6163 + $0x112] sm:$0xff]
    %v6582 = vld [vmem:[%s6163 + $0x122] sm:$0xff]
    %v6583 = vld [vmem:[%s6163 + $0x132] sm:$0xff]
    %v6584 = vpack.c.bf16 %v6569, %v6568
    %v6585 = vpack.c.bf16 %v6571, %v6570
    %v6586 = vpack.c.bf16 %v6573, %v6572
    %v6587 = vpack.c.bf16 %v6575, %v6574
    %v6588 = vpack.c.bf16 %v6577, %v6576
    %v6589 = vpack.c.bf16 %v6579, %v6578
    %v6590 = vpack.c.bf16 %v6581, %v6580
    %v6591 = vpack.c.bf16 %v6583, %v6582
    %s6592 = scalar_lea.vmem %s3, 1408
    %v6593 = vld [vmem:[%s6592] sm:$0xf]
    %v6594 = vld [vmem:[%s6592 + $0x4] sm:$0xf]
    %v6595 = vld [vmem:[%s6592 + $0x8] sm:$0xf]
    %v6596 = vld [vmem:[%s6592 + $0xc] sm:$0xf]
    %v6597 = vld [vmem:[%s6592 + $0x10] sm:$0xf]
    %v6598 = vld [vmem:[%s6592 + $0x14] sm:$0xf]
    %v6599 = vld [vmem:[%s6592 + $0x18] sm:$0xf]
    %v6600 = vld [vmem:[%s6592 + $0x1c] sm:$0xf]
    %v6601 = vld [vmem:[%s6592 + $0x20] sm:$0xf]
    %v6602 = vld [vmem:[%s6592 + $0x24] sm:$0xf]
    %v6603 = vld [vmem:[%s6592 + $0x28] sm:$0xf]
    %v6604 = vld [vmem:[%s6592 + $0x2c] sm:$0xf]
    %v6605 = vld [vmem:[%s6592 + $0x30] sm:$0xf]
    %v6606 = vld [vmem:[%s6592 + $0x34] sm:$0xf]
    %v6607 = vld [vmem:[%s6592 + $0x38] sm:$0xf]
    %v6608 = vld [vmem:[%s6592 + $0x3c] sm:$0xf]
    %v6625 = vunpack.c.l.b16 %v6593
    %v6626 = vunpack.c.l.b16 %v6594
    %v6627 = vunpack.c.l.b16 %v6595
    %v6628 = vunpack.c.l.b16 %v6596
    %v6629 = vunpack.c.l.b16 %v6597
    %v6630 = vunpack.c.l.b16 %v6598
    %v6631 = vunpack.c.l.b16 %v6599
    %v6632 = vunpack.c.l.b16 %v6600
    %v6633 = vunpack.c.l.b16 %v6601
    %v6634 = vunpack.c.l.b16 %v6602
    %v6635 = vunpack.c.l.b16 %v6603
    %v6636 = vunpack.c.l.b16 %v6604
    %v6637 = vunpack.c.l.b16 %v6605
    %v6638 = vunpack.c.l.b16 %v6606
    %v6639 = vunpack.c.l.b16 %v6607
    %v6640 = vunpack.c.l.b16 %v6608
    %v6641 = vpack.c.b16 %v6626, %v6625
    %v6642 = vpack.c.b16 %v6628, %v6627
    %v6643 = vpack.c.b16 %v6630, %v6629
    %v6644 = vpack.c.b16 %v6632, %v6631
    %v6645 = vpack.c.b16 %v6634, %v6633
    %v6646 = vpack.c.b16 %v6636, %v6635
    %v6647 = vpack.c.b16 %v6638, %v6637
    %v6648 = vpack.c.b16 %v6640, %v6639
    %6657 = vmatprep.subr.bf16.mxu0 0
    %6658 = vmatpush1.bf16.msra.mxu0 %v6641
    %6659 = vmatprep.subr.bf16.mxu0 0
    %6660 = vmatpush1.bf16.msra.mxu0 %v6642
    %6661 = vmatprep.subr.bf16.mxu0 0
    %6662 = vmatpush1.bf16.msra.mxu0 %v6643
    %6663 = vmatprep.subr.bf16.mxu0 0
    %6664 = vmatpush1.bf16.msra.mxu0 %v6644
    %6665 = vmatprep.subr.bf16.mxu0 0
    %6666 = vmatpush1.bf16.msra.mxu0 %v6645
    %6667 = vmatprep.subr.bf16.mxu0 0
    %6668 = vmatpush1.bf16.msra.mxu0 %v6646
    %6669 = vmatprep.subr.bf16.mxu0 0
    %6670 = vmatpush1.bf16.msra.mxu0 %v6647
    %6671 = vmatprep.subr.bf16.mxu0 0
    %6672 = vmatpush1.bf16.msra.mxu0 %v6648
    %6673 = vmatprep.subr.bf16.mxu0 0
    %6674 = vmatpush1.bf16.msra.mxu0 0
    %6675 = vmatprep.subr.bf16.mxu0 0
    %6676 = vmatpush1.bf16.msra.mxu0 0
    %6677 = vmatprep.subr.bf16.mxu0 0
    %6678 = vmatpush1.bf16.msra.mxu0 0
    %6679 = vmatprep.subr.bf16.mxu0 0
    %6680 = vmatpush1.bf16.msra.mxu0 0
    %6681 = vmatprep.subr.bf16.mxu0 0
    %6682 = vmatpush1.bf16.msra.mxu0 0
    %6683 = vmatprep.subr.bf16.mxu0 0
    %6684 = vmatpush1.bf16.msra.mxu0 0
    %6685 = vmatprep.subr.bf16.mxu0 0
    %6686 = vmatpush1.bf16.msra.mxu0 0
    %6687 = vmatprep.subr.bf16.mxu0 0
    %6688 = vmatpush1.bf16.msra.mxu0 0
    %6689 = vmatprep.mubr.bf16.mxu0 0
    %6690 = vmatmul.mubr.bf16.gmra.mrb[0].mxu0 %v6584
    %v6691 = vpop.f32.mrb[0].mxu0
    %v6692 = vadd.f32 0.0, %v6691
    %v6693 = vpop.f32.mrb[0].mxu0
    %v6694 = vpop.f32.mrb[0].mxu0
    %v6695 = vadd.f32 0.0, %v6694
    %v6696 = vpop.f32.mrb[0].mxu0
    %6697 = vmatprep.mubr.bf16.mxu0 0
    %6698 = vmatmul.mubr.bf16.gmra.mrb[0].mxu0 %v6585
    %v6699 = vpop.f32.mrb[0].mxu0
    %v6700 = vadd.f32 0.0, %v6699
    %v6701 = vpop.f32.mrb[0].mxu0
    %v6702 = vpop.f32.mrb[0].mxu0
    %v6703 = vadd.f32 0.0, %v6702
    %v6704 = vpop.f32.mrb[0].mxu0
    %6705 = vmatprep.mubr.bf16.mxu0 0
    %6706 = vmatmul.mubr.bf16.gmra.mrb[0].mxu0 %v6586
    %v6707 = vpop.f32.mrb[0].mxu0
    %v6708 = vadd.f32 0.0, %v6707
    %v6709 = vpop.f32.mrb[0].mxu0
    %v6710 = vpop.f32.mrb[0].mxu0
    %v6711 = vadd.f32 0.0, %v6710
    %v6712 = vpop.f32.mrb[0].mxu0
    %6713 = vmatprep.mubr.bf16.mxu0 0
    %6714 = vmatmul.mubr.bf16.gmra.mrb[0].mxu0 %v6587
    %v6715 = vpop.f32.mrb[0].mxu0
    %v6716 = vadd.f32 0.0, %v6715
    %v6717 = vpop.f32.mrb[0].mxu0
    %v6718 = vpop.f32.mrb[0].mxu0
    %v6719 = vadd.f32 0.0, %v6718
    %v6720 = vpop.f32.mrb[0].mxu0
    %6721 = vmatprep.mubr.bf16.mxu0 0
    %6722 = vmatmul.mubr.bf16.gmra.mrb[0].mxu0 %v6588
    %v6723 = vpop.f32.mrb[0].mxu0
    %v6724 = vadd.f32 0.0, %v6723
    %v6725 = vpop.f32.mrb[0].mxu0
    %v6726 = vpop.f32.mrb[0].mxu0
    %v6727 = vadd.f32 0.0, %v6726
    %v6728 = vpop.f32.mrb[0].mxu0
    %6729 = vmatprep.mubr.bf16.mxu0 0
    %6730 = vmatmul.mubr.bf16.gmra.mrb[0].mxu0 %v6589
    %v6731 = vpop.f32.mrb[0].mxu0
    %v6732 = vadd.f32 0.0, %v6731
    %v6733 = vpop.f32.mrb[0].mxu0
    %v6734 = vpop.f32.mrb[0].mxu0
    %v6735 = vadd.f32 0.0, %v6734
    %v6736 = vpop.f32.mrb[0].mxu0
    %6737 = vmatprep.mubr.bf16.mxu0 0
    %6738 = vmatmul.mubr.bf16.gmra.mrb[0].mxu0 %v6590
    %v6739 = vpop.f32.mrb[0].mxu0
    %v6740 = vadd.f32 0.0, %v6739
    %v6741 = vpop.f32.mrb[0].mxu0
    %v6742 = vpop.f32.mrb[0].mxu0
    %v6743 = vadd.f32 0.0, %v6742
    %v6744 = vpop.f32.mrb[0].mxu0
    %6745 = vmatprep.mubr.bf16.mxu0 0
    %6746 = vmatmul.mubr.bf16.gmra.mrb[0].mxu0 %v6591
    %v6747 = vpop.f32.mrb[0].mxu0
    %v6748 = vadd.f32 0.0, %v6747
    %v6749 = vpop.f32.mrb[0].mxu0
    %v6750 = vpop.f32.mrb[0].mxu0
    %v6751 = vadd.f32 0.0, %v6750
    %v6752 = vpop.f32.mrb[0].mxu0
    %6753 = vdwg.mxu0
    %v6754 = vadd.f32 %v6552, %v6692
    %v6755 = vadd.f32 %v6553, %v6695
    %v6756 = vadd.f32 %v6554, %v6700
    %v6757 = vadd.f32 %v6555, %v6703
    %v6758 = vadd.f32 %v6556, %v6708
    %v6759 = vadd.f32 %v6557, %v6711
    %v6760 = vadd.f32 %v6558, %v6716
    %v6761 = vadd.f32 %v6559, %v6719
    %v6762 = vadd.f32 %v6560, %v6724
    %v6763 = vadd.f32 %v6561, %v6727
    %v6764 = vadd.f32 %v6562, %v6732
    %v6765 = vadd.f32 %v6563, %v6735
    %v6766 = vadd.f32 %v6564, %v6740
    %v6767 = vadd.f32 %v6565, %v6743
    %v6768 = vadd.f32 %v6566, %v6748
    %v6769 = vadd.f32 %v6567, %v6751
    %v6770 = vld [vmem:[%s6163 + $0x3] sm:$0xff]
    %v6771 = vld [vmem:[%s6163 + $0x13] sm:$0xff]
    %v6772 = vld [vmem:[%s6163 + $0x23] sm:$0xff]
    %v6773 = vld [vmem:[%s6163 + $0x33] sm:$0xff]
    %v6774 = vld [vmem:[%s6163 + $0x43] sm:$0xff]
    %v6775 = vld [vmem:[%s6163 + $0x53] sm:$0xff]
    %v6776 = vld [vmem:[%s6163 + $0x63] sm:$0xff]
    %v6777 = vld [vmem:[%s6163 + $0x73] sm:$0xff]
    %v6778 = vld [vmem:[%s6163 + $0xc3] sm:$0xff]
    %v6779 = vld [vmem:[%s6163 + $0xd3] sm:$0xff]
    %v6780 = vld [vmem:[%s6163 + $0xe3] sm:$0xff]
    %v6781 = vld [vmem:[%s6163 + $0xf3] sm:$0xff]
    %v6782 = vld [vmem:[%s6163 + $0x103] sm:$0xff]
    %v6783 = vld [vmem:[%s6163 + $0x113] sm:$0xff]
    %v6784 = vld [vmem:[%s6163 + $0x123] sm:$0xff]
    %v6785 = vld [vmem:[%s6163 + $0x133] sm:$0xff]
    %v6786 = vpack.c.bf16 %v6771, %v6770
    %v6787 = vpack.c.bf16 %v6773, %v6772
    %v6788 = vpack.c.bf16 %v6775, %v6774
    %v6789 = vpack.c.bf16 %v6777, %v6776
    %v6790 = vpack.c.bf16 %v6779, %v6778
    %v6791 = vpack.c.bf16 %v6781, %v6780
    %v6792 = vpack.c.bf16 %v6783, %v6782
    %v6793 = vpack.c.bf16 %v6785, %v6784
    %s6794 = scalar_lea.vmem %s3, 1472
    %v6795 = vld [vmem:[%s6794] sm:$0xf]
    %v6796 = vld [vmem:[%s6794 + $0x4] sm:$0xf]
    %v6797 = vld [vmem:[%s6794 + $0x8] sm:$0xf]
    %v6798 = vld [vmem:[%s6794 + $0xc] sm:$0xf]
    %v6799 = vld [vmem:[%s6794 + $0x10] sm:$0xf]
    %v6800 = vld [vmem:[%s6794 + $0x14] sm:$0xf]
    %v6801 = vld [vmem:[%s6794 + $0x18] sm:$0xf]
    %v6802 = vld [vmem:[%s6794 + $0x1c] sm:$0xf]
    %v6803 = vld [vmem:[%s6794 + $0x20] sm:$0xf]
    %v6804 = vld [vmem:[%s6794 + $0x24] sm:$0xf]
    %v6805 = vld [vmem:[%s6794 + $0x28] sm:$0xf]
    %v6806 = vld [vmem:[%s6794 + $0x2c] sm:$0xf]
    %v6807 = vld [vmem:[%s6794 + $0x30] sm:$0xf]
    %v6808 = vld [vmem:[%s6794 + $0x34] sm:$0xf]
    %v6809 = vld [vmem:[%s6794 + $0x38] sm:$0xf]
    %v6810 = vld [vmem:[%s6794 + $0x3c] sm:$0xf]
    %v6827 = vunpack.c.l.b16 %v6795
    %v6828 = vunpack.c.l.b16 %v6796
    %v6829 = vunpack.c.l.b16 %v6797
    %v6830 = vunpack.c.l.b16 %v6798
    %v6831 = vunpack.c.l.b16 %v6799
    %v6832 = vunpack.c.l.b16 %v6800
    %v6833 = vunpack.c.l.b16 %v6801
    %v6834 = vunpack.c.l.b16 %v6802
    %v6835 = vunpack.c.l.b16 %v6803
    %v6836 = vunpack.c.l.b16 %v6804
    %v6837 = vunpack.c.l.b16 %v6805
    %v6838 = vunpack.c.l.b16 %v6806
    %v6839 = vunpack.c.l.b16 %v6807
    %v6840 = vunpack.c.l.b16 %v6808
    %v6841 = vunpack.c.l.b16 %v6809
    %v6842 = vunpack.c.l.b16 %v6810
    %v6843 = vpack.c.b16 %v6828, %v6827
    %v6844 = vpack.c.b16 %v6830, %v6829
    %v6845 = vpack.c.b16 %v6832, %v6831
    %v6846 = vpack.c.b16 %v6834, %v6833
    %v6847 = vpack.c.b16 %v6836, %v6835
    %v6848 = vpack.c.b16 %v6838, %v6837
    %v6849 = vpack.c.b16 %v6840, %v6839
    %v6850 = vpack.c.b16 %v6842, %v6841
    %6859 = vmatprep.subr.bf16.mxu0 0
    %6860 = vmatpush1.bf16.msra.mxu0 %v6843
    %6861 = vmatprep.subr.bf16.mxu0 0
    %6862 = vmatpush1.bf16.msra.mxu0 %v6844
    %6863 = vmatprep.subr.bf16.mxu0 0
    %6864 = vmatpush1.bf16.msra.mxu0 %v6845
    %6865 = vmatprep.subr.bf16.mxu0 0
    %6866 = vmatpush1.bf16.msra.mxu0 %v6846
    %6867 = vmatprep.subr.bf16.mxu0 0
    %6868 = vmatpush1.bf16.msra.mxu0 %v6847
    %6869 = vmatprep.subr.bf16.mxu0 0
    %6870 = vmatpush1.bf16.msra.mxu0 %v6848
    %6871 = vmatprep.subr.bf16.mxu0 0
    %6872 = vmatpush1.bf16.msra.mxu0 %v6849
    %6873 = vmatprep.subr.bf16.mxu0 0
    %6874 = vmatpush1.bf16.msra.mxu0 %v6850
    %6875 = vmatprep.subr.bf16.mxu0 0
    %6876 = vmatpush1.bf16.msra.mxu0 0
    %6877 = vmatprep.subr.bf16.mxu0 0
    %6878 = vmatpush1.bf16.msra.mxu0 0
    %6879 = vmatprep.subr.bf16.mxu0 0
    %6880 = vmatpush1.bf16.msra.mxu0 0
    %6881 = vmatprep.subr.bf16.mxu0 0
    %6882 = vmatpush1.bf16.msra.mxu0 0
    %6883 = vmatprep.subr.bf16.mxu0 0
    %6884 = vmatpush1.bf16.msra.mxu0 0
    %6885 = vmatprep.subr.bf16.mxu0 0
    %6886 = vmatpush1.bf16.msra.mxu0 0
    %6887 = vmatprep.subr.bf16.mxu0 0
    %6888 = vmatpush1.bf16.msra.mxu0 0
    %6889 = vmatprep.subr.bf16.mxu0 0
    %6890 = vmatpush1.bf16.msra.mxu0 0
    %6891 = vmatprep.mubr.bf16.mxu0 0
    %6892 = vmatmul.mubr.bf16.gmra.mrb[0].mxu0 %v6786
    %v6893 = vpop.f32.mrb[0].mxu0
    %v6894 = vadd.f32 0.0, %v6893
    %v6895 = vpop.f32.mrb[0].mxu0
    %v6896 = vpop.f32.mrb[0].mxu0
    %v6897 = vadd.f32 0.0, %v6896
    %v6898 = vpop.f32.mrb[0].mxu0
    %6899 = vmatprep.mubr.bf16.mxu0 0
    %6900 = vmatmul.mubr.bf16.gmra.mrb[0].mxu0 %v6787
    %v6901 = vpop.f32.mrb[0].mxu0
    %v6902 = vadd.f32 0.0, %v6901
    %v6903 = vpop.f32.mrb[0].mxu0
    %v6904 = vpop.f32.mrb[0].mxu0
    %v6905 = vadd.f32 0.0, %v6904
    %v6906 = vpop.f32.mrb[0].mxu0
    %6907 = vmatprep.mubr.bf16.mxu0 0
    %6908 = vmatmul.mubr.bf16.gmra.mrb[0].mxu0 %v6788
    %v6909 = vpop.f32.mrb[0].mxu0
    %v6910 = vadd.f32 0.0, %v6909
    %v6911 = vpop.f32.mrb[0].mxu0
    %v6912 = vpop.f32.mrb[0].mxu0
    %v6913 = vadd.f32 0.0, %v6912
    %v6914 = vpop.f32.mrb[0].mxu0
    %6915 = vmatprep.mubr.bf16.mxu0 0
    %6916 = vmatmul.mubr.bf16.gmra.mrb[0].mxu0 %v6789
    %v6917 = vpop.f32.mrb[0].mxu0
    %v6918 = vadd.f32 0.0, %v6917
    %v6919 = vpop.f32.mrb[0].mxu0
    %v6920 = vpop.f32.mrb[0].mxu0
    %v6921 = vadd.f32 0.0, %v6920
    %v6922 = vpop.f32.mrb[0].mxu0
    %6923 = vmatprep.mubr.bf16.mxu0 0
    %6924 = vmatmul.mubr.bf16.gmra.mrb[0].mxu0 %v6790
    %v6925 = vpop.f32.mrb[0].mxu0
    %v6926 = vadd.f32 0.0, %v6925
    %v6927 = vpop.f32.mrb[0].mxu0
    %v6928 = vpop.f32.mrb[0].mxu0
    %v6929 = vadd.f32 0.0, %v6928
    %v6930 = vpop.f32.mrb[0].mxu0
    %6931 = vmatprep.mubr.bf16.mxu0 0
    %6932 = vmatmul.mubr.bf16.gmra.mrb[0].mxu0 %v6791
    %v6933 = vpop.f32.mrb[0].mxu0
    %v6934 = vadd.f32 0.0, %v6933
    %v6935 = vpop.f32.mrb[0].mxu0
    %v6936 = vpop.f32.mrb[0].mxu0
    %v6937 = vadd.f32 0.0, %v6936
    %v6938 = vpop.f32.mrb[0].mxu0
    %6939 = vmatprep.mubr.bf16.mxu0 0
    %6940 = vmatmul.mubr.bf16.gmra.mrb[0].mxu0 %v6792
    %v6941 = vpop.f32.mrb[0].mxu0
    %v6942 = vadd.f32 0.0, %v6941
    %v6943 = vpop.f32.mrb[0].mxu0
    %v6944 = vpop.f32.mrb[0].mxu0
    %v6945 = vadd.f32 0.0, %v6944
    %v6946 = vpop.f32.mrb[0].mxu0
    %6947 = vmatprep.mubr.bf16.mxu0 0
    %6948 = vmatmul.mubr.bf16.gmra.mrb[0].mxu0 %v6793
    %v6949 = vpop.f32.mrb[0].mxu0
    %v6950 = vadd.f32 0.0, %v6949
    %v6951 = vpop.f32.mrb[0].mxu0
    %v6952 = vpop.f32.mrb[0].mxu0
    %v6953 = vadd.f32 0.0, %v6952
    %v6954 = vpop.f32.mrb[0].mxu0
    %6955 = vdwg.mxu0
    %v6956 = vadd.f32 %v6754, %v6894
    %v6957 = vadd.f32 %v6755, %v6897
    %v6958 = vadd.f32 %v6756, %v6902
    %v6959 = vadd.f32 %v6757, %v6905
    %v6960 = vadd.f32 %v6758, %v6910
    %v6961 = vadd.f32 %v6759, %v6913
    %v6962 = vadd.f32 %v6760, %v6918
    %v6963 = vadd.f32 %v6761, %v6921
    %v6964 = vadd.f32 %v6762, %v6926
    %v6965 = vadd.f32 %v6763, %v6929
    %v6966 = vadd.f32 %v6764, %v6934
    %v6967 = vadd.f32 %v6765, %v6937
    %v6968 = vadd.f32 %v6766, %v6942
    %v6969 = vadd.f32 %v6767, %v6945
    %v6970 = vadd.f32 %v6768, %v6950
    %v6971 = vadd.f32 %v6769, %v6953
    %v6972 = vld [vmem:[%s6163 + $0x4] sm:$0xff]
    %v6973 = vld [vmem:[%s6163 + $0x14] sm:$0xff]
    %v6974 = vld [vmem:[%s6163 + $0x24] sm:$0xff]
    %v6975 = vld [vmem:[%s6163 + $0x34] sm:$0xff]
    %v6976 = vld [vmem:[%s6163 + $0x44] sm:$0xff]
    %v6977 = vld [vmem:[%s6163 + $0x54] sm:$0xff]
    %v6978 = vld [vmem:[%s6163 + $0x64] sm:$0xff]
    %v6979 = vld [vmem:[%s6163 + $0x74] sm:$0xff]
    %v6980 = vld [vmem:[%s6163 + $0xc4] sm:$0xff]
    %v6981 = vld [vmem:[%s6163 + $0xd4] sm:$0xff]
    %v6982 = vld [vmem:[%s6163 + $0xe4] sm:$0xff]
    %v6983 = vld [vmem:[%s6163 + $0xf4] sm:$0xff]
    %v6984 = vld [vmem:[%s6163 + $0x104] sm:$0xff]
    %v6985 = vld [vmem:[%s6163 + $0x114] sm:$0xff]
    %v6986 = vld [vmem:[%s6163 + $0x124] sm:$0xff]
    %v6987 = vld [vmem:[%s6163 + $0x134] sm:$0xff]
    %v6988 = vpack.c.bf16 %v6973, %v6972
    %v6989 = vpack.c.bf16 %v6975, %v6974
    %v6990 = vpack.c.bf16 %v6977, %v6976
    %v6991 = vpack.c.bf16 %v6979, %v6978
    %v6992 = vpack.c.bf16 %v6981, %v6980
    %v6993 = vpack.c.bf16 %v6983, %v6982
    %v6994 = vpack.c.bf16 %v6985, %v6984
    %v6995 = vpack.c.bf16 %v6987, %v6986
    %s6996 = scalar_lea.vmem %s3, 1536
    %v6997 = vld [vmem:[%s6996] sm:$0xf]
    %v6998 = vld [vmem:[%s6996 + $0x4] sm:$0xf]
    %v6999 = vld [vmem:[%s6996 + $0x8] sm:$0xf]
    %v7000 = vld [vmem:[%s6996 + $0xc] sm:$0xf]
    %v7001 = vld [vmem:[%s6996 + $0x10] sm:$0xf]
    %v7002 = vld [vmem:[%s6996 + $0x14] sm:$0xf]
    %v7003 = vld [vmem:[%s6996 + $0x18] sm:$0xf]
    %v7004 = vld [vmem:[%s6996 + $0x1c] sm:$0xf]
    %v7005 = vld [vmem:[%s6996 + $0x20] sm:$0xf]
    %v7006 = vld [vmem:[%s6996 + $0x24] sm:$0xf]
    %v7007 = vld [vmem:[%s6996 + $0x28] sm:$0xf]
    %v7008 = vld [vmem:[%s6996 + $0x2c] sm:$0xf]
    %v7009 = vld [vmem:[%s6996 + $0x30] sm:$0xf]
    %v7010 = vld [vmem:[%s6996 + $0x34] sm:$0xf]
    %v7011 = vld [vmem:[%s6996 + $0x38] sm:$0xf]
    %v7012 = vld [vmem:[%s6996 + $0x3c] sm:$0xf]
    %v7029 = vunpack.c.l.b16 %v6997
    %v7030 = vunpack.c.l.b16 %v6998
    %v7031 = vunpack.c.l.b16 %v6999
    %v7032 = vunpack.c.l.b16 %v7000
    %v7033 = vunpack.c.l.b16 %v7001
    %v7034 = vunpack.c.l.b16 %v7002
    %v7035 = vunpack.c.l.b16 %v7003
    %v7036 = vunpack.c.l.b16 %v7004
    %v7037 = vunpack.c.l.b16 %v7005
    %v7038 = vunpack.c.l.b16 %v7006
    %v7039 = vunpack.c.l.b16 %v7007
    %v7040 = vunpack.c.l.b16 %v7008
    %v7041 = vunpack.c.l.b16 %v7009
    %v7042 = vunpack.c.l.b16 %v7010
    %v7043 = vunpack.c.l.b16 %v7011
    %v7044 = vunpack.c.l.b16 %v7012
    %v7045 = vpack.c.b16 %v7030, %v7029
    %v7046 = vpack.c.b16 %v7032, %v7031
    %v7047 = vpack.c.b16 %v7034, %v7033
    %v7048 = vpack.c.b16 %v7036, %v7035
    %v7049 = vpack.c.b16 %v7038, %v7037
    %v7050 = vpack.c.b16 %v7040, %v7039
    %v7051 = vpack.c.b16 %v7042, %v7041
    %v7052 = vpack.c.b16 %v7044, %v7043
    %7061 = vmatprep.subr.bf16.mxu0 0
    %7062 = vmatpush1.bf16.msra.mxu0 %v7045
    %7063 = vmatprep.subr.bf16.mxu0 0
    %7064 = vmatpush1.bf16.msra.mxu0 %v7046
    %7065 = vmatprep.subr.bf16.mxu0 0
    %7066 = vmatpush1.bf16.msra.mxu0 %v7047
    %7067 = vmatprep.subr.bf16.mxu0 0
    %7068 = vmatpush1.bf16.msra.mxu0 %v7048
    %7069 = vmatprep.subr.bf16.mxu0 0
    %7070 = vmatpush1.bf16.msra.mxu0 %v7049
    %7071 = vmatprep.subr.bf16.mxu0 0
    %7072 = vmatpush1.bf16.msra.mxu0 %v7050
    %7073 = vmatprep.subr.bf16.mxu0 0
    %7074 = vmatpush1.bf16.msra.mxu0 %v7051
    %7075 = vmatprep.subr.bf16.mxu0 0
    %7076 = vmatpush1.bf16.msra.mxu0 %v7052
    %7077 = vmatprep.subr.bf16.mxu0 0
    %7078 = vmatpush1.bf16.msra.mxu0 0
    %7079 = vmatprep.subr.bf16.mxu0 0
    %7080 = vmatpush1.bf16.msra.mxu0 0
    %7081 = vmatprep.subr.bf16.mxu0 0
    %7082 = vmatpush1.bf16.msra.mxu0 0
    %7083 = vmatprep.subr.bf16.mxu0 0
    %7084 = vmatpush1.bf16.msra.mxu0 0
    %7085 = vmatprep.subr.bf16.mxu0 0
    %7086 = vmatpush1.bf16.msra.mxu0 0
    %7087 = vmatprep.subr.bf16.mxu0 0
    %7088 = vmatpush1.bf16.msra.mxu0 0
    %7089 = vmatprep.subr.bf16.mxu0 0
    %7090 = vmatpush1.bf16.msra.mxu0 0
    %7091 = vmatprep.subr.bf16.mxu0 0
    %7092 = vmatpush1.bf16.msra.mxu0 0
    %7093 = vmatprep.mubr.bf16.mxu0 0
    %7094 = vmatmul.mubr.bf16.gmra.mrb[0].mxu0 %v6988
    %v7095 = vpop.f32.mrb[0].mxu0
    %v7096 = vadd.f32 0.0, %v7095
    %v7097 = vpop.f32.mrb[0].mxu0
    %v7098 = vpop.f32.mrb[0].mxu0
    %v7099 = vadd.f32 0.0, %v7098
    %v7100 = vpop.f32.mrb[0].mxu0
    %7101 = vmatprep.mubr.bf16.mxu0 0
    %7102 = vmatmul.mubr.bf16.gmra.mrb[0].mxu0 %v6989
    %v7103 = vpop.f32.mrb[0].mxu0
    %v7104 = vadd.f32 0.0, %v7103
    %v7105 = vpop.f32.mrb[0].mxu0
    %v7106 = vpop.f32.mrb[0].mxu0
    %v7107 = vadd.f32 0.0, %v7106
    %v7108 = vpop.f32.mrb[0].mxu0
    %7109 = vmatprep.mubr.bf16.mxu0 0
    %7110 = vmatmul.mubr.bf16.gmra.mrb[0].mxu0 %v6990
    %v7111 = vpop.f32.mrb[0].mxu0
    %v7112 = vadd.f32 0.0, %v7111
    %v7113 = vpop.f32.mrb[0].mxu0
    %v7114 = vpop.f32.mrb[0].mxu0
    %v7115 = vadd.f32 0.0, %v7114
    %v7116 = vpop.f32.mrb[0].mxu0
    %7117 = vmatprep.mubr.bf16.mxu0 0
    %7118 = vmatmul.mubr.bf16.gmra.mrb[0].mxu0 %v6991
    %v7119 = vpop.f32.mrb[0].mxu0
    %v7120 = vadd.f32 0.0, %v7119
    %v7121 = vpop.f32.mrb[0].mxu0
    %v7122 = vpop.f32.mrb[0].mxu0
    %v7123 = vadd.f32 0.0, %v7122
    %v7124 = vpop.f32.mrb[0].mxu0
    %7125 = vmatprep.mubr.bf16.mxu0 0
    %7126 = vmatmul.mubr.bf16.gmra.mrb[0].mxu0 %v6992
    %v7127 = vpop.f32.mrb[0].mxu0
    %v7128 = vadd.f32 0.0, %v7127
    %v7129 = vpop.f32.mrb[0].mxu0
    %v7130 = vpop.f32.mrb[0].mxu0
    %v7131 = vadd.f32 0.0, %v7130
    %v7132 = vpop.f32.mrb[0].mxu0
    %7133 = vmatprep.mubr.bf16.mxu0 0
    %7134 = vmatmul.mubr.bf16.gmra.mrb[0].mxu0 %v6993
    %v7135 = vpop.f32.mrb[0].mxu0
    %v7136 = vadd.f32 0.0, %v7135
    %v7137 = vpop.f32.mrb[0].mxu0
    %v7138 = vpop.f32.mrb[0].mxu0
    %v7139 = vadd.f32 0.0, %v7138
    %v7140 = vpop.f32.mrb[0].mxu0
    %7141 = vmatprep.mubr.bf16.mxu0 0
    %7142 = vmatmul.mubr.bf16.gmra.mrb[0].mxu0 %v6994
    %v7143 = vpop.f32.mrb[0].mxu0
    %v7144 = vadd.f32 0.0, %v7143
    %v7145 = vpop.f32.mrb[0].mxu0
    %v7146 = vpop.f32.mrb[0].mxu0
    %v7147 = vadd.f32 0.0, %v7146
    %v7148 = vpop.f32.mrb[0].mxu0
    %7149 = vmatprep.mubr.bf16.mxu0 0
    %7150 = vmatmul.mubr.bf16.gmra.mrb[0].mxu0 %v6995
    %v7151 = vpop.f32.mrb[0].mxu0
    %v7152 = vadd.f32 0.0, %v7151
    %v7153 = vpop.f32.mrb[0].mxu0
    %v7154 = vpop.f32.mrb[0].mxu0
    %v7155 = vadd.f32 0.0, %v7154
    %v7156 = vpop.f32.mrb[0].mxu0
    %7157 = vdwg.mxu0
    %v7158 = vadd.f32 %v6956, %v7096
    %v7159 = vadd.f32 %v6957, %v7099
    %v7160 = vadd.f32 %v6958, %v7104
    %v7161 = vadd.f32 %v6959, %v7107
    %v7162 = vadd.f32 %v6960, %v7112
    %v7163 = vadd.f32 %v6961, %v7115
    %v7164 = vadd.f32 %v6962, %v7120
    %v7165 = vadd.f32 %v6963, %v7123
    %v7166 = vadd.f32 %v6964, %v7128
    %v7167 = vadd.f32 %v6965, %v7131
    %v7168 = vadd.f32 %v6966, %v7136
    %v7169 = vadd.f32 %v6967, %v7139
    %v7170 = vadd.f32 %v6968, %v7144
    %v7171 = vadd.f32 %v6969, %v7147
    %v7172 = vadd.f32 %v6970, %v7152
    %v7173 = vadd.f32 %v6971, %v7155
    %v7174 = vld [vmem:[%s4] sm:$0x1]
    %v7176 = vlaneseq
    %v7177 = vshrl.u32 %v7176, 7
    %v7178 = vsub.s32 0, %v7177
    %v7179 = vrot.slane %v7174, %v7178
    %v7181 = vadd.f32 %v7158, %v7179
    %v7182 = vadd.f32 %v7159, %v7179
    %v7183 = vadd.f32 %v7160, %v7179
    %v7184 = vadd.f32 %v7161, %v7179
    %v7185 = vadd.f32 %v7162, %v7179
    %v7186 = vadd.f32 %v7163, %v7179
    %v7187 = vadd.f32 %v7164, %v7179
    %v7188 = vadd.f32 %v7165, %v7179
    %v7189 = vadd.f32 %v7166, %v7179
    %v7190 = vadd.f32 %v7167, %v7179
    %v7191 = vadd.f32 %v7168, %v7179
    %v7192 = vadd.f32 %v7169, %v7179
    %v7193 = vadd.f32 %v7170, %v7179
    %v7194 = vadd.f32 %v7171, %v7179
    %v7195 = vadd.f32 %v7172, %v7179
    %v7196 = vadd.f32 %v7173, %v7179
    %v7197 = vmax.f32 %v7181, 0.0
    %v7198 = vmax.f32 %v7182, 0.0
    %v7199 = vmax.f32 %v7183, 0.0
    %v7200 = vmax.f32 %v7184, 0.0
    %v7201 = vmax.f32 %v7185, 0.0
    %v7202 = vmax.f32 %v7186, 0.0
    %v7203 = vmax.f32 %v7187, 0.0
    %v7204 = vmax.f32 %v7188, 0.0
    %v7205 = vmax.f32 %v7189, 0.0
    %v7206 = vmax.f32 %v7190, 0.0
    %v7207 = vmax.f32 %v7191, 0.0
    %v7208 = vmax.f32 %v7192, 0.0
    %v7209 = vmax.f32 %v7193, 0.0
    %v7210 = vmax.f32 %v7194, 0.0
    %v7211 = vmax.f32 %v7195, 0.0
    %v7212 = vmax.f32 %v7196, 0.0
    %7213 = vst [vmem:[#allocation4] sm:$0xff] %v7197
    %7214 = vst [vmem:[#allocation4 + $0x8] sm:$0xff] %v7198
    %7215 = vst [vmem:[#allocation4 + $0x10] sm:$0xff] %v7199
    %7216 = vst [vmem:[#allocation4 + $0x18] sm:$0xff] %v7200
    %7217 = vst [vmem:[#allocation4 + $0x20] sm:$0xff] %v7201
    %7218 = vst [vmem:[#allocation4 + $0x28] sm:$0xff] %v7202
    %7219 = vst [vmem:[#allocation4 + $0x30] sm:$0xff] %v7203
    %7220 = vst [vmem:[#allocation4 + $0x38] sm:$0xff] %v7204
    %7221 = vst [vmem:[#allocation4 + $0x40] sm:$0xff] %v7205
    %7222 = vst [vmem:[#allocation4 + $0x48] sm:$0xff] %v7206
    %7223 = vst [vmem:[#allocation4 + $0x50] sm:$0xff] %v7207
    %7224 = vst [vmem:[#allocation4 + $0x58] sm:$0xff] %v7208
    %7225 = vst [vmem:[#allocation4 + $0x60] sm:$0xff] %v7209
    %7226 = vst [vmem:[#allocation4 + $0x68] sm:$0xff] %v7210
    %7227 = vst [vmem:[#allocation4 + $0x70] sm:$0xff] %v7211
    %7228 = vst [vmem:[#allocation4 + $0x78] sm:$0xff] %v7212
    %v7229 = vld [vmem:[#allocation4] ss:$2 sm:$0xf]
    %s7230 = scalar_lea.vmem [#allocation4], 8
    %v7231 = vld [vmem:[%s7230] ss:$2 sm:$0xf]
    %s7232 = scalar_lea.vmem [#allocation4], 16
    %v7233 = vld [vmem:[%s7232] ss:$2 sm:$0xf]
    %s7234 = scalar_lea.vmem [#allocation4], 24
    %v7235 = vld [vmem:[%s7234] ss:$2 sm:$0xf]
    %s7236 = scalar_lea.vmem [#allocation4], 32
    %v7237 = vld [vmem:[%s7236] ss:$2 sm:$0xf]
    %s7238 = scalar_lea.vmem [#allocation4], 40
    %v7239 = vld [vmem:[%s7238] ss:$2 sm:$0xf]
    %s7240 = scalar_lea.vmem [#allocation4], 48
    %v7241 = vld [vmem:[%s7240] ss:$2 sm:$0xf]
    %s7242 = scalar_lea.vmem [#allocation4], 56
    %v7243 = vld [vmem:[%s7242] ss:$2 sm:$0xf]
    %s7244 = scalar_lea.vmem [#allocation4], 64
    %v7245 = vld [vmem:[%s7244] ss:$2 sm:$0xf]
    %s7246 = scalar_lea.vmem [#allocation4], 72
    %v7247 = vld [vmem:[%s7246] ss:$2 sm:$0xf]
    %s7248 = scalar_lea.vmem [#allocation4], 80
    %v7249 = vld [vmem:[%s7248] ss:$2 sm:$0xf]
    %s7250 = scalar_lea.vmem [#allocation4], 88
    %v7251 = vld [vmem:[%s7250] ss:$2 sm:$0xf]
    %s7252 = scalar_lea.vmem [#allocation4], 96
    %v7253 = vld [vmem:[%s7252] ss:$2 sm:$0xf]
    %s7254 = scalar_lea.vmem [#allocation4], 104
    %v7255 = vld [vmem:[%s7254] ss:$2 sm:$0xf]
    %s7256 = scalar_lea.vmem [#allocation4], 112
    %v7257 = vld [vmem:[%s7256] ss:$2 sm:$0xf]
    %s7258 = scalar_lea.vmem [#allocation4], 120
    %v7259 = vld [vmem:[%s7258] ss:$2 sm:$0xf]
    %s7260 = scalar_lea.vmem [#allocation4], 1
    %v7261 = vld [vmem:[%s7260] ss:$2 sm:$0xf]
    %s7262 = scalar_lea.vmem [#allocation4], 9
    %v7263 = vld [vmem:[%s7262] ss:$2 sm:$0xf]
    %s7264 = scalar_lea.vmem [#allocation4], 17
    %v7265 = vld [vmem:[%s7264] ss:$2 sm:$0xf]
    %s7266 = scalar_lea.vmem [#allocation4], 25
    %v7267 = vld [vmem:[%s7266] ss:$2 sm:$0xf]
    %s7268 = scalar_lea.vmem [#allocation4], 33
    %v7269 = vld [vmem:[%s7268] ss:$2 sm:$0xf]
    %s7270 = scalar_lea.vmem [#allocation4], 41
    %v7271 = vld [vmem:[%s7270] ss:$2 sm:$0xf]
    %s7272 = scalar_lea.vmem [#allocation4], 49
    %v7273 = vld [vmem:[%s7272] ss:$2 sm:$0xf]
    %s7274 = scalar_lea.vmem [#allocation4], 57
    %v7275 = vld [vmem:[%s7274] ss:$2 sm:$0xf]
    %s7276 = scalar_lea.vmem [#allocation4], 65
    %v7277 = vld [vmem:[%s7276] ss:$2 sm:$0xf]
    %s7278 = scalar_lea.vmem [#allocation4], 73
    %v7279 = vld [vmem:[%s7278] ss:$2 sm:$0xf]
    %s7280 = scalar_lea.vmem [#allocation4], 81
    %v7281 = vld [vmem:[%s7280] ss:$2 sm:$0xf]
    %s7282 = scalar_lea.vmem [#allocation4], 89
    %v7283 = vld [vmem:[%s7282] ss:$2 sm:$0xf]
    %s7284 = scalar_lea.vmem [#allocation4], 97
    %v7285 = vld [vmem:[%s7284] ss:$2 sm:$0xf]
    %s7286 = scalar_lea.vmem [#allocation4], 105
    %v7287 = vld [vmem:[%s7286] ss:$2 sm:$0xf]
    %s7288 = scalar_lea.vmem [#allocation4], 113
    %v7289 = vld [vmem:[%s7288] ss:$2 sm:$0xf]
    %s7290 = scalar_lea.vmem [#allocation4], 121
    %v7291 = vld [vmem:[%s7290] ss:$2 sm:$0xf]
    %v7292 = vmax.f32 %v7229, %v7261
    %v7293 = vmax.f32 %v7231, %v7263
    %v7294 = vmax.f32 %v7233, %v7265
    %v7295 = vmax.f32 %v7235, %v7267
    %v7296 = vmax.f32 %v7237, %v7269
    %v7297 = vmax.f32 %v7239, %v7271
    %v7298 = vmax.f32 %v7241, %v7273
    %v7299 = vmax.f32 %v7243, %v7275
    %v7300 = vmax.f32 %v7245, %v7277
    %v7301 = vmax.f32 %v7247, %v7279
    %v7302 = vmax.f32 %v7249, %v7281
    %v7303 = vmax.f32 %v7251, %v7283
    %v7304 = vmax.f32 %v7253, %v7285
    %v7305 = vmax.f32 %v7255, %v7287
    %v7306 = vmax.f32 %v7257, %v7289
    %v7307 = vmax.f32 %v7259, %v7291
    %v7308 = vmax.f32 %v7292, %v7293
    %v7309 = vmax.f32 %v7294, %v7295
    %v7310 = vmax.f32 %v7296, %v7297
    %v7311 = vmax.f32 %v7298, %v7299
    %v7312 = vmax.f32 %v7300, %v7301
    %v7313 = vmax.f32 %v7302, %v7303
    %v7314 = vmax.f32 %v7304, %v7305
    %v7315 = vmax.f32 %v7306, %v7307
    %7316 = vst [vmem:[#allocation5] sm:$0xf] %v7308
    %7317 = vst [vmem:[#allocation5 + $0x4] sm:$0xf] %v7309
    %7318 = vst [vmem:[#allocation5 + $0x8] sm:$0xf] %v7310
    %7319 = vst [vmem:[#allocation5 + $0xc] sm:$0xf] %v7311
    %7320 = vst [vmem:[#allocation5 + $0x10] sm:$0xf] %v7312
    %7321 = vst [vmem:[#allocation5 + $0x14] sm:$0xf] %v7313
    %7322 = vst [vmem:[#allocation5 + $0x18] sm:$0xf] %v7314
    %7323 = vst [vmem:[#allocation5 + $0x1c] sm:$0xf] %v7315
    %v7324 = vld [vmem:[#allocation5] sm:$0x1]
    %v7325 = vld [vmem:[#allocation5 + $0x10] sm:$0x1]
    %v7326 = vpack.c.bf16 %v7324, %v7324
    %v7327 = vpack.c.bf16 %v7325, %v7325
    %v7328 = vld [vmem:[%s5] sm:$0xf]
    %v7329 = vld [vmem:[%s5 + $0x4] sm:$0xf]
    %v7330 = vld [vmem:[%s5 + $0x8] sm:$0xf]
    %v7331 = vld [vmem:[%s5 + $0xc] sm:$0xf]
    %v7332 = vld [vmem:[%s5 + $0x10] sm:$0xf]
    %v7333 = vld [vmem:[%s5 + $0x14] sm:$0xf]
    %v7334 = vld [vmem:[%s5 + $0x18] sm:$0xf]
    %v7335 = vld [vmem:[%s5 + $0x1c] sm:$0xf]
    %v7336 = vld [vmem:[%s5 + $0x20] sm:$0xf]
    %v7337 = vld [vmem:[%s5 + $0x24] sm:$0xf]
    %v7338 = vld [vmem:[%s5 + $0x28] sm:$0xf]
    %v7339 = vld [vmem:[%s5 + $0x2c] sm:$0xf]
    %v7340 = vld [vmem:[%s5 + $0x30] sm:$0xf]
    %v7341 = vld [vmem:[%s5 + $0x34] sm:$0xf]
    %v7342 = vld [vmem:[%s5 + $0x38] sm:$0xf]
    %v7343 = vld [vmem:[%s5 + $0x3c] sm:$0xf]
    %v7344 = vld [vmem:[#allocation5 + $0x1] sm:$0x1]
    %v7345 = vld [vmem:[#allocation5 + $0x11] sm:$0x1]
    %v7346 = vpack.c.bf16 %v7344, %v7344
    %v7347 = vpack.c.bf16 %v7345, %v7345
    %s7348 = scalar_lea.vmem %s5, 64
    %v7349 = vld [vmem:[%s7348] sm:$0xf]
    %v7350 = vld [vmem:[%s7348 + $0x4] sm:$0xf]
    %v7351 = vld [vmem:[%s7348 + $0x8] sm:$0xf]
    %v7352 = vld [vmem:[%s7348 + $0xc] sm:$0xf]
    %v7353 = vld [vmem:[%s7348 + $0x10] sm:$0xf]
    %v7354 = vld [vmem:[%s7348 + $0x14] sm:$0xf]
    %v7355 = vld [vmem:[%s7348 + $0x18] sm:$0xf]
    %v7356 = vld [vmem:[%s7348 + $0x1c] sm:$0xf]
    %v7357 = vld [vmem:[%s7348 + $0x20] sm:$0xf]
    %v7358 = vld [vmem:[%s7348 + $0x24] sm:$0xf]
    %v7359 = vld [vmem:[%s7348 + $0x28] sm:$0xf]
    %v7360 = vld [vmem:[%s7348 + $0x2c] sm:$0xf]
    %v7361 = vld [vmem:[%s7348 + $0x30] sm:$0xf]
    %v7362 = vld [vmem:[%s7348 + $0x34] sm:$0xf]
    %v7363 = vld [vmem:[%s7348 + $0x38] sm:$0xf]
    %v7364 = vld [vmem:[%s7348 + $0x3c] sm:$0xf]
    %v7367 = vunpack.c.l.b16 %v7346
    %v7368 = vunpack.c.l.b16 %v7347
    %v7369 = vrot.slane %v7368, 7
    %vm7370 = vcmask 1041409
    %v7371 = vsel %vm7370, %v7369, %v7367
    %v7372 = vpack.c.b16 %v7371, %v7371
    %v7390 = vunpack.c.l.b16 %v7349
    %v7391 = vunpack.c.l.b16 %v7350
    %v7392 = vunpack.c.l.b16 %v7351
    %v7393 = vunpack.c.l.b16 %v7352
    %v7394 = vunpack.c.l.b16 %v7353
    %v7395 = vunpack.c.l.b16 %v7354
    %v7396 = vunpack.c.l.b16 %v7355
    %v7397 = vunpack.c.l.b16 %v7356
    %v7398 = vunpack.c.l.b16 %v7357
    %v7399 = vunpack.c.l.b16 %v7358
    %v7400 = vunpack.c.l.b16 %v7359
    %v7401 = vunpack.c.l.b16 %v7360
    %v7402 = vunpack.c.l.b16 %v7361
    %v7403 = vunpack.c.l.b16 %v7362
    %v7404 = vunpack.c.l.b16 %v7363
    %v7405 = vunpack.c.l.b16 %v7364
    %v7406 = vpack.c.b16 %v7391, %v7390
    %v7407 = vpack.c.b16 %v7393, %v7392
    %v7408 = vpack.c.b16 %v7395, %v7394
    %v7409 = vpack.c.b16 %v7397, %v7396
    %v7410 = vpack.c.b16 %v7399, %v7398
    %v7411 = vpack.c.b16 %v7401, %v7400
    %v7412 = vpack.c.b16 %v7403, %v7402
    %v7413 = vpack.c.b16 %v7405, %v7404
    %7422 = vmatprep.subr.bf16.mxu0 0
    %7423 = vmatpush1.bf16.msra.mxu0 %v7406
    %7424 = vmatprep.subr.bf16.mxu0 0
    %7425 = vmatpush1.bf16.msra.mxu0 %v7407
    %7426 = vmatprep.subr.bf16.mxu0 0
    %7427 = vmatpush1.bf16.msra.mxu0 %v7408
    %7428 = vmatprep.subr.bf16.mxu0 0
    %7429 = vmatpush1.bf16.msra.mxu0 %v7409
    %7430 = vmatprep.subr.bf16.mxu0 0
    %7431 = vmatpush1.bf16.msra.mxu0 %v7410
    %7432 = vmatprep.subr.bf16.mxu0 0
    %7433 = vmatpush1.bf16.msra.mxu0 %v7411
    %7434 = vmatprep.subr.bf16.mxu0 0
    %7435 = vmatpush1.bf16.msra.mxu0 %v7412
    %7436 = vmatprep.subr.bf16.mxu0 0
    %7437 = vmatpush1.bf16.msra.mxu0 %v7413
    %7438 = vmatprep.subr.bf16.mxu0 0
    %7439 = vmatpush1.bf16.msra.mxu0 0
    %7440 = vmatprep.subr.bf16.mxu0 0
    %7441 = vmatpush1.bf16.msra.mxu0 0
    %7442 = vmatprep.subr.bf16.mxu0 0
    %7443 = vmatpush1.bf16.msra.mxu0 0
    %7444 = vmatprep.subr.bf16.mxu0 0
    %7445 = vmatpush1.bf16.msra.mxu0 0
    %7446 = vmatprep.subr.bf16.mxu0 0
    %7447 = vmatpush1.bf16.msra.mxu0 0
    %7448 = vmatprep.subr.bf16.mxu0 0
    %7449 = vmatpush1.bf16.msra.mxu0 0
    %7450 = vmatprep.subr.bf16.mxu0 0
    %7451 = vmatpush1.bf16.msra.mxu0 0
    %7452 = vmatprep.subr.bf16.mxu0 0
    %7453 = vmatpush1.bf16.msra.mxu0 0
    %7454 = vmatprep.mubr.bf16.mxu0 0
    %7455 = vmatmul.mubr.bf16.gmra.mrb[0].mxu0 %v7372
    %v7456 = vpop.f32.mrb[0].mxu0
    %v7457 = vadd.f32 0.0, %v7456
    %v7458 = vpop.f32.mrb[0].mxu0
    %v7459 = vpop.f32.mrb[0].mxu0
    %v7460 = vpop.f32.mrb[0].mxu0
    %7461 = vdwg.mxu0
    %v7464 = vunpack.c.l.b16 %v7326
    %v7465 = vunpack.c.l.b16 %v7327
    %v7466 = vrot.slane %v7465, 7
    %v7467 = vsel %vm7370, %v7466, %v7464
    %v7468 = vpack.c.b16 %v7467, %v7467
    %v7486 = vunpack.c.l.b16 %v7328
    %v7487 = vunpack.c.l.b16 %v7329
    %v7488 = vunpack.c.l.b16 %v7330
    %v7489 = vunpack.c.l.b16 %v7331
    %v7490 = vunpack.c.l.b16 %v7332
    %v7491 = vunpack.c.l.b16 %v7333
    %v7492 = vunpack.c.l.b16 %v7334
    %v7493 = vunpack.c.l.b16 %v7335
    %v7494 = vunpack.c.l.b16 %v7336
    %v7495 = vunpack.c.l.b16 %v7337
    %v7496 = vunpack.c.l.b16 %v7338
    %v7497 = vunpack.c.l.b16 %v7339
    %v7498 = vunpack.c.l.b16 %v7340
    %v7499 = vunpack.c.l.b16 %v7341
    %v7500 = vunpack.c.l.b16 %v7342
    %v7501 = vunpack.c.l.b16 %v7343
    %v7502 = vpack.c.b16 %v7487, %v7486
    %v7503 = vpack.c.b16 %v7489, %v7488
    %v7504 = vpack.c.b16 %v7491, %v7490
    %v7505 = vpack.c.b16 %v7493, %v7492
    %v7506 = vpack.c.b16 %v7495, %v7494
    %v7507 = vpack.c.b16 %v7497, %v7496
    %v7508 = vpack.c.b16 %v7499, %v7498
    %v7509 = vpack.c.b16 %v7501, %v7500
    %7518 = vmatprep.subr.bf16.mxu0 0
    %7519 = vmatpush1.bf16.msra.mxu0 %v7502
    %7520 = vmatprep.subr.bf16.mxu0 0
    %7521 = vmatpush1.bf16.msra.mxu0 %v7503
    %7522 = vmatprep.subr.bf16.mxu0 0
    %7523 = vmatpush1.bf16.msra.mxu0 %v7504
    %7524 = vmatprep.subr.bf16.mxu0 0
    %7525 = vmatpush1.bf16.msra.mxu0 %v7505
    %7526 = vmatprep.subr.bf16.mxu0 0
    %7527 = vmatpush1.bf16.msra.mxu0 %v7506
    %7528 = vmatprep.subr.bf16.mxu0 0
    %7529 = vmatpush1.bf16.msra.mxu0 %v7507
    %7530 = vmatprep.subr.bf16.mxu0 0
    %7531 = vmatpush1.bf16.msra.mxu0 %v7508
    %7532 = vmatprep.subr.bf16.mxu0 0
    %7533 = vmatpush1.bf16.msra.mxu0 %v7509
    %7534 = vmatprep.subr.bf16.mxu0 0
    %7535 = vmatpush1.bf16.msra.mxu0 0
    %7536 = vmatprep.subr.bf16.mxu0 0
    %7537 = vmatpush1.bf16.msra.mxu0 0
    %7538 = vmatprep.subr.bf16.mxu0 0
    %7539 = vmatpush1.bf16.msra.mxu0 0
    %7540 = vmatprep.subr.bf16.mxu0 0
    %7541 = vmatpush1.bf16.msra.mxu0 0
    %7542 = vmatprep.subr.bf16.mxu0 0
    %7543 = vmatpush1.bf16.msra.mxu0 0
    %7544 = vmatprep.subr.bf16.mxu0 0
    %7545 = vmatpush1.bf16.msra.mxu0 0
    %7546 = vmatprep.subr.bf16.mxu0 0
    %7547 = vmatpush1.bf16.msra.mxu0 0
    %7548 = vmatprep.subr.bf16.mxu0 0
    %7549 = vmatpush1.bf16.msra.mxu0 0
    %7550 = vmatprep.mubr.bf16.mxu0 0
    %7551 = vmatmul.mubr.bf16.gmra.mrb[0].mxu0 %v7468
    %v7552 = vpop.f32.mrb[0].mxu0
    %v7553 = vadd.f32 %v7457, %v7552
    %v7554 = vpop.f32.mrb[0].mxu0
    %v7555 = vpop.f32.mrb[0].mxu0
    %v7556 = vpop.f32.mrb[0].mxu0
    %7557 = vdwg.mxu0
    %v7558 = vld [vmem:[#allocation5 + $0x2] sm:$0x1]
    %v7559 = vld [vmem:[#allocation5 + $0x12] sm:$0x1]
    %v7560 = vpack.c.bf16 %v7558, %v7558
    %v7561 = vpack.c.bf16 %v7559, %v7559
    %s7562 = scalar_lea.vmem %s5, 128
    %v7563 = vld [vmem:[%s7562] sm:$0xf]
    %v7564 = vld [vmem:[%s7562 + $0x4] sm:$0xf]
    %v7565 = vld [vmem:[%s7562 + $0x8] sm:$0xf]
    %v7566 = vld [vmem:[%s7562 + $0xc] sm:$0xf]
    %v7567 = vld [vmem:[%s7562 + $0x10] sm:$0xf]
    %v7568 = vld [vmem:[%s7562 + $0x14] sm:$0xf]
    %v7569 = vld [vmem:[%s7562 + $0x18] sm:$0xf]
    %v7570 = vld [vmem:[%s7562 + $0x1c] sm:$0xf]
    %v7571 = vld [vmem:[%s7562 + $0x20] sm:$0xf]
    %v7572 = vld [vmem:[%s7562 + $0x24] sm:$0xf]
    %v7573 = vld [vmem:[%s7562 + $0x28] sm:$0xf]
    %v7574 = vld [vmem:[%s7562 + $0x2c] sm:$0xf]
    %v7575 = vld [vmem:[%s7562 + $0x30] sm:$0xf]
    %v7576 = vld [vmem:[%s7562 + $0x34] sm:$0xf]
    %v7577 = vld [vmem:[%s7562 + $0x38] sm:$0xf]
    %v7578 = vld [vmem:[%s7562 + $0x3c] sm:$0xf]
    %v7581 = vunpack.c.l.b16 %v7560
    %v7582 = vunpack.c.l.b16 %v7561
    %v7583 = vrot.slane %v7582, 7
    %v7584 = vsel %vm7370, %v7583, %v7581
    %v7585 = vpack.c.b16 %v7584, %v7584
    %v7603 = vunpack.c.l.b16 %v7563
    %v7604 = vunpack.c.l.b16 %v7564
    %v7605 = vunpack.c.l.b16 %v7565
    %v7606 = vunpack.c.l.b16 %v7566
    %v7607 = vunpack.c.l.b16 %v7567
    %v7608 = vunpack.c.l.b16 %v7568
    %v7609 = vunpack.c.l.b16 %v7569
    %v7610 = vunpack.c.l.b16 %v7570
    %v7611 = vunpack.c.l.b16 %v7571
    %v7612 = vunpack.c.l.b16 %v7572
    %v7613 = vunpack.c.l.b16 %v7573
    %v7614 = vunpack.c.l.b16 %v7574
    %v7615 = vunpack.c.l.b16 %v7575
    %v7616 = vunpack.c.l.b16 %v7576
    %v7617 = vunpack.c.l.b16 %v7577
    %v7618 = vunpack.c.l.b16 %v7578
    %v7619 = vpack.c.b16 %v7604, %v7603
    %v7620 = vpack.c.b16 %v7606, %v7605
    %v7621 = vpack.c.b16 %v7608, %v7607
    %v7622 = vpack.c.b16 %v7610, %v7609
    %v7623 = vpack.c.b16 %v7612, %v7611
    %v7624 = vpack.c.b16 %v7614, %v7613
    %v7625 = vpack.c.b16 %v7616, %v7615
    %v7626 = vpack.c.b16 %v7618, %v7617
    %7635 = vmatprep.subr.bf16.mxu0 0
    %7636 = vmatpush1.bf16.msra.mxu0 %v7619
    %7637 = vmatprep.subr.bf16.mxu0 0
    %7638 = vmatpush1.bf16.msra.mxu0 %v7620
    %7639 = vmatprep.subr.bf16.mxu0 0
    %7640 = vmatpush1.bf16.msra.mxu0 %v7621
    %7641 = vmatprep.subr.bf16.mxu0 0
    %7642 = vmatpush1.bf16.msra.mxu0 %v7622
    %7643 = vmatprep.subr.bf16.mxu0 0
    %7644 = vmatpush1.bf16.msra.mxu0 %v7623
    %7645 = vmatprep.subr.bf16.mxu0 0
    %7646 = vmatpush1.bf16.msra.mxu0 %v7624
    %7647 = vmatprep.subr.bf16.mxu0 0
    %7648 = vmatpush1.bf16.msra.mxu0 %v7625
    %7649 = vmatprep.subr.bf16.mxu0 0
    %7650 = vmatpush1.bf16.msra.mxu0 %v7626
    %7651 = vmatprep.subr.bf16.mxu0 0
    %7652 = vmatpush1.bf16.msra.mxu0 0
    %7653 = vmatprep.subr.bf16.mxu0 0
    %7654 = vmatpush1.bf16.msra.mxu0 0
    %7655 = vmatprep.subr.bf16.mxu0 0
    %7656 = vmatpush1.bf16.msra.mxu0 0
    %7657 = vmatprep.subr.bf16.mxu0 0
    %7658 = vmatpush1.bf16.msra.mxu0 0
    %7659 = vmatprep.subr.bf16.mxu0 0
    %7660 = vmatpush1.bf16.msra.mxu0 0
    %7661 = vmatprep.subr.bf16.mxu0 0
    %7662 = vmatpush1.bf16.msra.mxu0 0
    %7663 = vmatprep.subr.bf16.mxu0 0
    %7664 = vmatpush1.bf16.msra.mxu0 0
    %7665 = vmatprep.subr.bf16.mxu0 0
    %7666 = vmatpush1.bf16.msra.mxu0 0
    %7667 = vmatprep.mubr.bf16.mxu0 0
    %7668 = vmatmul.mubr.bf16.gmra.mrb[0].mxu0 %v7585
    %v7669 = vpop.f32.mrb[0].mxu0
    %v7670 = vadd.f32 0.0, %v7669
    %v7671 = vpop.f32.mrb[0].mxu0
    %v7672 = vpop.f32.mrb[0].mxu0
    %v7673 = vpop.f32.mrb[0].mxu0
    %7674 = vdwg.mxu0
    %v7675 = vadd.f32 %v7553, %v7670
    %v7676 = vld [vmem:[#allocation5 + $0x3] sm:$0x1]
    %v7677 = vld [vmem:[#allocation5 + $0x13] sm:$0x1]
    %v7678 = vpack.c.bf16 %v7676, %v7676
    %v7679 = vpack.c.bf16 %v7677, %v7677
    %s7680 = scalar_lea.vmem %s5, 192
    %v7681 = vld [vmem:[%s7680] sm:$0xf]
    %v7682 = vld [vmem:[%s7680 + $0x4] sm:$0xf]
    %v7683 = vld [vmem:[%s7680 + $0x8] sm:$0xf]
    %v7684 = vld [vmem:[%s7680 + $0xc] sm:$0xf]
    %v7685 = vld [vmem:[%s7680 + $0x10] sm:$0xf]
    %v7686 = vld [vmem:[%s7680 + $0x14] sm:$0xf]
    %v7687 = vld [vmem:[%s7680 + $0x18] sm:$0xf]
    %v7688 = vld [vmem:[%s7680 + $0x1c] sm:$0xf]
    %v7689 = vld [vmem:[%s7680 + $0x20] sm:$0xf]
    %v7690 = vld [vmem:[%s7680 + $0x24] sm:$0xf]
    %v7691 = vld [vmem:[%s7680 + $0x28] sm:$0xf]
    %v7692 = vld [vmem:[%s7680 + $0x2c] sm:$0xf]
    %v7693 = vld [vmem:[%s7680 + $0x30] sm:$0xf]
    %v7694 = vld [vmem:[%s7680 + $0x34] sm:$0xf]
    %v7695 = vld [vmem:[%s7680 + $0x38] sm:$0xf]
    %v7696 = vld [vmem:[%s7680 + $0x3c] sm:$0xf]
    %v7699 = vunpack.c.l.b16 %v7678
    %v7700 = vunpack.c.l.b16 %v7679
    %v7701 = vrot.slane %v7700, 7
    %v7702 = vsel %vm7370, %v7701, %v7699
    %v7703 = vpack.c.b16 %v7702, %v7702
    %v7721 = vunpack.c.l.b16 %v7681
    %v7722 = vunpack.c.l.b16 %v7682
    %v7723 = vunpack.c.l.b16 %v7683
    %v7724 = vunpack.c.l.b16 %v7684
    %v7725 = vunpack.c.l.b16 %v7685
    %v7726 = vunpack.c.l.b16 %v7686
    %v7727 = vunpack.c.l.b16 %v7687
    %v7728 = vunpack.c.l.b16 %v7688
    %v7729 = vunpack.c.l.b16 %v7689
    %v7730 = vunpack.c.l.b16 %v7690
    %v7731 = vunpack.c.l.b16 %v7691
    %v7732 = vunpack.c.l.b16 %v7692
    %v7733 = vunpack.c.l.b16 %v7693
    %v7734 = vunpack.c.l.b16 %v7694
    %v7735 = vunpack.c.l.b16 %v7695
    %v7736 = vunpack.c.l.b16 %v7696
    %v7737 = vpack.c.b16 %v7722, %v7721
    %v7738 = vpack.c.b16 %v7724, %v7723
    %v7739 = vpack.c.b16 %v7726, %v7725
    %v7740 = vpack.c.b16 %v7728, %v7727
    %v7741 = vpack.c.b16 %v7730, %v7729
    %v7742 = vpack.c.b16 %v7732, %v7731
    %v7743 = vpack.c.b16 %v7734, %v7733
    %v7744 = vpack.c.b16 %v7736, %v7735
    %7753 = vmatprep.subr.bf16.mxu0 0
    %7754 = vmatpush1.bf16.msra.mxu0 %v7737
    %7755 = vmatprep.subr.bf16.mxu0 0
    %7756 = vmatpush1.bf16.msra.mxu0 %v7738
    %7757 = vmatprep.subr.bf16.mxu0 0
    %7758 = vmatpush1.bf16.msra.mxu0 %v7739
    %7759 = vmatprep.subr.bf16.mxu0 0
    %7760 = vmatpush1.bf16.msra.mxu0 %v7740
    %7761 = vmatprep.subr.bf16.mxu0 0
    %7762 = vmatpush1.bf16.msra.mxu0 %v7741
    %7763 = vmatprep.subr.bf16.mxu0 0
    %7764 = vmatpush1.bf16.msra.mxu0 %v7742
    %7765 = vmatprep.subr.bf16.mxu0 0
    %7766 = vmatpush1.bf16.msra.mxu0 %v7743
    %7767 = vmatprep.subr.bf16.mxu0 0
    %7768 = vmatpush1.bf16.msra.mxu0 %v7744
    %7769 = vmatprep.subr.bf16.mxu0 0
    %7770 = vmatpush1.bf16.msra.mxu0 0
    %7771 = vmatprep.subr.bf16.mxu0 0
    %7772 = vmatpush1.bf16.msra.mxu0 0
    %7773 = vmatprep.subr.bf16.mxu0 0
    %7774 = vmatpush1.bf16.msra.mxu0 0
    %7775 = vmatprep.subr.bf16.mxu0 0
    %7776 = vmatpush1.bf16.msra.mxu0 0
    %7777 = vmatprep.subr.bf16.mxu0 0
    %7778 = vmatpush1.bf16.msra.mxu0 0
    %7779 = vmatprep.subr.bf16.mxu0 0
    %7780 = vmatpush1.bf16.msra.mxu0 0
    %7781 = vmatprep.subr.bf16.mxu0 0
    %7782 = vmatpush1.bf16.msra.mxu0 0
    %7783 = vmatprep.subr.bf16.mxu0 0
    %7784 = vmatpush1.bf16.msra.mxu0 0
    %7785 = vmatprep.mubr.bf16.mxu0 0
    %7786 = vmatmul.mubr.bf16.gmra.mrb[0].mxu0 %v7703
    %v7787 = vpop.f32.mrb[0].mxu0
    %v7788 = vadd.f32 0.0, %v7787
    %v7789 = vpop.f32.mrb[0].mxu0
    %v7790 = vpop.f32.mrb[0].mxu0
    %v7791 = vpop.f32.mrb[0].mxu0
    %7792 = vdwg.mxu0
    %v7793 = vadd.f32 %v7675, %v7788
    %s7794 = scalar_lea.vmem [#allocation5], 4
    %v7795 = vld [vmem:[%s7794] sm:$0x1]
    %v7796 = vld [vmem:[%s7794 + $0x10] sm:$0x1]
    %v7797 = vpack.c.bf16 %v7795, %v7795
    %v7798 = vpack.c.bf16 %v7796, %v7796
    %s7799 = scalar_lea.vmem %s5, 256
    %v7800 = vld [vmem:[%s7799] sm:$0xf]
    %v7801 = vld [vmem:[%s7799 + $0x4] sm:$0xf]
    %v7802 = vld [vmem:[%s7799 + $0x8] sm:$0xf]
    %v7803 = vld [vmem:[%s7799 + $0xc] sm:$0xf]
    %v7804 = vld [vmem:[%s7799 + $0x10] sm:$0xf]
    %v7805 = vld [vmem:[%s7799 + $0x14] sm:$0xf]
    %v7806 = vld [vmem:[%s7799 + $0x18] sm:$0xf]
    %v7807 = vld [vmem:[%s7799 + $0x1c] sm:$0xf]
    %v7808 = vld [vmem:[%s7799 + $0x20] sm:$0xf]
    %v7809 = vld [vmem:[%s7799 + $0x24] sm:$0xf]
    %v7810 = vld [vmem:[%s7799 + $0x28] sm:$0xf]
    %v7811 = vld [vmem:[%s7799 + $0x2c] sm:$0xf]
    %v7812 = vld [vmem:[%s7799 + $0x30] sm:$0xf]
    %v7813 = vld [vmem:[%s7799 + $0x34] sm:$0xf]
    %v7814 = vld [vmem:[%s7799 + $0x38] sm:$0xf]
    %v7815 = vld [vmem:[%s7799 + $0x3c] sm:$0xf]
    %v7818 = vunpack.c.l.b16 %v7797
    %v7819 = vunpack.c.l.b16 %v7798
    %v7820 = vrot.slane %v7819, 7
    %v7821 = vsel %vm7370, %v7820, %v7818
    %v7822 = vpack.c.b16 %v7821, %v7821
    %v7840 = vunpack.c.l.b16 %v7800
    %v7841 = vunpack.c.l.b16 %v7801
    %v7842 = vunpack.c.l.b16 %v7802
    %v7843 = vunpack.c.l.b16 %v7803
    %v7844 = vunpack.c.l.b16 %v7804
    %v7845 = vunpack.c.l.b16 %v7805
    %v7846 = vunpack.c.l.b16 %v7806
    %v7847 = vunpack.c.l.b16 %v7807
    %v7848 = vunpack.c.l.b16 %v7808
    %v7849 = vunpack.c.l.b16 %v7809
    %v7850 = vunpack.c.l.b16 %v7810
    %v7851 = vunpack.c.l.b16 %v7811
    %v7852 = vunpack.c.l.b16 %v7812
    %v7853 = vunpack.c.l.b16 %v7813
    %v7854 = vunpack.c.l.b16 %v7814
    %v7855 = vunpack.c.l.b16 %v7815
    %v7856 = vpack.c.b16 %v7841, %v7840
    %v7857 = vpack.c.b16 %v7843, %v7842
    %v7858 = vpack.c.b16 %v7845, %v7844
    %v7859 = vpack.c.b16 %v7847, %v7846
    %v7860 = vpack.c.b16 %v7849, %v7848
    %v7861 = vpack.c.b16 %v7851, %v7850
    %v7862 = vpack.c.b16 %v7853, %v7852
    %v7863 = vpack.c.b16 %v7855, %v7854
    %7872 = vmatprep.subr.bf16.mxu0 0
    %7873 = vmatpush1.bf16.msra.mxu0 %v7856
    %7874 = vmatprep.subr.bf16.mxu0 0
    %7875 = vmatpush1.bf16.msra.mxu0 %v7857
    %7876 = vmatprep.subr.bf16.mxu0 0
    %7877 = vmatpush1.bf16.msra.mxu0 %v7858
    %7878 = vmatprep.subr.bf16.mxu0 0
    %7879 = vmatpush1.bf16.msra.mxu0 %v7859
    %7880 = vmatprep.subr.bf16.mxu0 0
    %7881 = vmatpush1.bf16.msra.mxu0 %v7860
    %7882 = vmatprep.subr.bf16.mxu0 0
    %7883 = vmatpush1.bf16.msra.mxu0 %v7861
    %7884 = vmatprep.subr.bf16.mxu0 0
    %7885 = vmatpush1.bf16.msra.mxu0 %v7862
    %7886 = vmatprep.subr.bf16.mxu0 0
    %7887 = vmatpush1.bf16.msra.mxu0 %v7863
    %7888 = vmatprep.subr.bf16.mxu0 0
    %7889 = vmatpush1.bf16.msra.mxu0 0
    %7890 = vmatprep.subr.bf16.mxu0 0
    %7891 = vmatpush1.bf16.msra.mxu0 0
    %7892 = vmatprep.subr.bf16.mxu0 0
    %7893 = vmatpush1.bf16.msra.mxu0 0
    %7894 = vmatprep.subr.bf16.mxu0 0
    %7895 = vmatpush1.bf16.msra.mxu0 0
    %7896 = vmatprep.subr.bf16.mxu0 0
    %7897 = vmatpush1.bf16.msra.mxu0 0
    %7898 = vmatprep.subr.bf16.mxu0 0
    %7899 = vmatpush1.bf16.msra.mxu0 0
    %7900 = vmatprep.subr.bf16.mxu0 0
    %7901 = vmatpush1.bf16.msra.mxu0 0
    %7902 = vmatprep.subr.bf16.mxu0 0
    %7903 = vmatpush1.bf16.msra.mxu0 0
    %7904 = vmatprep.mubr.bf16.mxu0 0
    %7905 = vmatmul.mubr.bf16.gmra.mrb[0].mxu0 %v7822
    %v7906 = vpop.f32.mrb[0].mxu0
    %v7907 = vadd.f32 0.0, %v7906
    %v7908 = vpop.f32.mrb[0].mxu0
    %v7909 = vpop.f32.mrb[0].mxu0
    %v7910 = vpop.f32.mrb[0].mxu0
    %7911 = vdwg.mxu0
    %v7912 = vadd.f32 %v7793, %v7907
    %v7913 = vld [vmem:[%s7794 + $0x1] sm:$0x1]
    %v7914 = vld [vmem:[%s7794 + $0x11] sm:$0x1]
    %v7915 = vpack.c.bf16 %v7913, %v7913
    %v7916 = vpack.c.bf16 %v7914, %v7914
    %s7917 = scalar_lea.vmem %s5, 320
    %v7918 = vld [vmem:[%s7917] sm:$0xf]
    %v7919 = vld [vmem:[%s7917 + $0x4] sm:$0xf]
    %v7920 = vld [vmem:[%s7917 + $0x8] sm:$0xf]
    %v7921 = vld [vmem:[%s7917 + $0xc] sm:$0xf]
    %v7922 = vld [vmem:[%s7917 + $0x10] sm:$0xf]
    %v7923 = vld [vmem:[%s7917 + $0x14] sm:$0xf]
    %v7924 = vld [vmem:[%s7917 + $0x18] sm:$0xf]
    %v7925 = vld [vmem:[%s7917 + $0x1c] sm:$0xf]
    %v7926 = vld [vmem:[%s7917 + $0x20] sm:$0xf]
    %v7927 = vld [vmem:[%s7917 + $0x24] sm:$0xf]
    %v7928 = vld [vmem:[%s7917 + $0x28] sm:$0xf]
    %v7929 = vld [vmem:[%s7917 + $0x2c] sm:$0xf]
    %v7930 = vld [vmem:[%s7917 + $0x30] sm:$0xf]
    %v7931 = vld [vmem:[%s7917 + $0x34] sm:$0xf]
    %v7932 = vld [vmem:[%s7917 + $0x38] sm:$0xf]
    %v7933 = vld [vmem:[%s7917 + $0x3c] sm:$0xf]
    %v7936 = vunpack.c.l.b16 %v7915
    %v7937 = vunpack.c.l.b16 %v7916
    %v7938 = vrot.slane %v7937, 7
    %v7939 = vsel %vm7370, %v7938, %v7936
    %v7940 = vpack.c.b16 %v7939, %v7939
    %v7958 = vunpack.c.l.b16 %v7918
    %v7959 = vunpack.c.l.b16 %v7919
    %v7960 = vunpack.c.l.b16 %v7920
    %v7961 = vunpack.c.l.b16 %v7921
    %v7962 = vunpack.c.l.b16 %v7922
    %v7963 = vunpack.c.l.b16 %v7923
    %v7964 = vunpack.c.l.b16 %v7924
    %v7965 = vunpack.c.l.b16 %v7925
    %v7966 = vunpack.c.l.b16 %v7926
    %v7967 = vunpack.c.l.b16 %v7927
    %v7968 = vunpack.c.l.b16 %v7928
    %v7969 = vunpack.c.l.b16 %v7929
    %v7970 = vunpack.c.l.b16 %v7930
    %v7971 = vunpack.c.l.b16 %v7931
    %v7972 = vunpack.c.l.b16 %v7932
    %v7973 = vunpack.c.l.b16 %v7933
    %v7974 = vpack.c.b16 %v7959, %v7958
    %v7975 = vpack.c.b16 %v7961, %v7960
    %v7976 = vpack.c.b16 %v7963, %v7962
    %v7977 = vpack.c.b16 %v7965, %v7964
    %v7978 = vpack.c.b16 %v7967, %v7966
    %v7979 = vpack.c.b16 %v7969, %v7968
    %v7980 = vpack.c.b16 %v7971, %v7970
    %v7981 = vpack.c.b16 %v7973, %v7972
    %7990 = vmatprep.subr.bf16.mxu0 0
    %7991 = vmatpush1.bf16.msra.mxu0 %v7974
    %7992 = vmatprep.subr.bf16.mxu0 0
    %7993 = vmatpush1.bf16.msra.mxu0 %v7975
    %7994 = vmatprep.subr.bf16.mxu0 0
    %7995 = vmatpush1.bf16.msra.mxu0 %v7976
    %7996 = vmatprep.subr.bf16.mxu0 0
    %7997 = vmatpush1.bf16.msra.mxu0 %v7977
    %7998 = vmatprep.subr.bf16.mxu0 0
    %7999 = vmatpush1.bf16.msra.mxu0 %v7978
    %8000 = vmatprep.subr.bf16.mxu0 0
    %8001 = vmatpush1.bf16.msra.mxu0 %v7979
    %8002 = vmatprep.subr.bf16.mxu0 0
    %8003 = vmatpush1.bf16.msra.mxu0 %v7980
    %8004 = vmatprep.subr.bf16.mxu0 0
    %8005 = vmatpush1.bf16.msra.mxu0 %v7981
    %8006 = vmatprep.subr.bf16.mxu0 0
    %8007 = vmatpush1.bf16.msra.mxu0 0
    %8008 = vmatprep.subr.bf16.mxu0 0
    %8009 = vmatpush1.bf16.msra.mxu0 0
    %8010 = vmatprep.subr.bf16.mxu0 0
    %8011 = vmatpush1.bf16.msra.mxu0 0
    %8012 = vmatprep.subr.bf16.mxu0 0
    %8013 = vmatpush1.bf16.msra.mxu0 0
    %8014 = vmatprep.subr.bf16.mxu0 0
    %8015 = vmatpush1.bf16.msra.mxu0 0
    %8016 = vmatprep.subr.bf16.mxu0 0
    %8017 = vmatpush1.bf16.msra.mxu0 0
    %8018 = vmatprep.subr.bf16.mxu0 0
    %8019 = vmatpush1.bf16.msra.mxu0 0
    %8020 = vmatprep.subr.bf16.mxu0 0
    %8021 = vmatpush1.bf16.msra.mxu0 0
    %8022 = vmatprep.mubr.bf16.mxu0 0
    %8023 = vmatmul.mubr.bf16.gmra.mrb[0].mxu0 %v7940
    %v8024 = vpop.f32.mrb[0].mxu0
    %v8025 = vadd.f32 0.0, %v8024
    %v8026 = vpop.f32.mrb[0].mxu0
    %v8027 = vpop.f32.mrb[0].mxu0
    %v8028 = vpop.f32.mrb[0].mxu0
    %8029 = vdwg.mxu0
    %v8030 = vadd.f32 %v7912, %v8025
    %v8031 = vld [vmem:[%s7794 + $0x2] sm:$0x1]
    %v8032 = vld [vmem:[%s7794 + $0x12] sm:$0x1]
    %v8033 = vpack.c.bf16 %v8031, %v8031
    %v8034 = vpack.c.bf16 %v8032, %v8032
    %s8035 = scalar_lea.vmem %s5, 384
    %v8036 = vld [vmem:[%s8035] sm:$0xf]
    %v8037 = vld [vmem:[%s8035 + $0x4] sm:$0xf]
    %v8038 = vld [vmem:[%s8035 + $0x8] sm:$0xf]
    %v8039 = vld [vmem:[%s8035 + $0xc] sm:$0xf]
    %v8040 = vld [vmem:[%s8035 + $0x10] sm:$0xf]
    %v8041 = vld [vmem:[%s8035 + $0x14] sm:$0xf]
    %v8042 = vld [vmem:[%s8035 + $0x18] sm:$0xf]
    %v8043 = vld [vmem:[%s8035 + $0x1c] sm:$0xf]
    %v8044 = vld [vmem:[%s8035 + $0x20] sm:$0xf]
    %v8045 = vld [vmem:[%s8035 + $0x24] sm:$0xf]
    %v8046 = vld [vmem:[%s8035 + $0x28] sm:$0xf]
    %v8047 = vld [vmem:[%s8035 + $0x2c] sm:$0xf]
    %v8048 = vld [vmem:[%s8035 + $0x30] sm:$0xf]
    %v8049 = vld [vmem:[%s8035 + $0x34] sm:$0xf]
    %v8050 = vld [vmem:[%s8035 + $0x38] sm:$0xf]
    %v8051 = vld [vmem:[%s8035 + $0x3c] sm:$0xf]
    %v8054 = vunpack.c.l.b16 %v8033
    %v8055 = vunpack.c.l.b16 %v8034
    %v8056 = vrot.slane %v8055, 7
    %v8057 = vsel %vm7370, %v8056, %v8054
    %v8058 = vpack.c.b16 %v8057, %v8057
    %v8076 = vunpack.c.l.b16 %v8036
    %v8077 = vunpack.c.l.b16 %v8037
    %v8078 = vunpack.c.l.b16 %v8038
    %v8079 = vunpack.c.l.b16 %v8039
    %v8080 = vunpack.c.l.b16 %v8040
    %v8081 = vunpack.c.l.b16 %v8041
    %v8082 = vunpack.c.l.b16 %v8042
    %v8083 = vunpack.c.l.b16 %v8043
    %v8084 = vunpack.c.l.b16 %v8044
    %v8085 = vunpack.c.l.b16 %v8045
    %v8086 = vunpack.c.l.b16 %v8046
    %v8087 = vunpack.c.l.b16 %v8047
    %v8088 = vunpack.c.l.b16 %v8048
    %v8089 = vunpack.c.l.b16 %v8049
    %v8090 = vunpack.c.l.b16 %v8050
    %v8091 = vunpack.c.l.b16 %v8051
    %v8092 = vpack.c.b16 %v8077, %v8076
    %v8093 = vpack.c.b16 %v8079, %v8078
    %v8094 = vpack.c.b16 %v8081, %v8080
    %v8095 = vpack.c.b16 %v8083, %v8082
    %v8096 = vpack.c.b16 %v8085, %v8084
    %v8097 = vpack.c.b16 %v8087, %v8086
    %v8098 = vpack.c.b16 %v8089, %v8088
    %v8099 = vpack.c.b16 %v8091, %v8090
    %8108 = vmatprep.subr.bf16.mxu0 0
    %8109 = vmatpush1.bf16.msra.mxu0 %v8092
    %8110 = vmatprep.subr.bf16.mxu0 0
    %8111 = vmatpush1.bf16.msra.mxu0 %v8093
    %8112 = vmatprep.subr.bf16.mxu0 0
    %8113 = vmatpush1.bf16.msra.mxu0 %v8094
    %8114 = vmatprep.subr.bf16.mxu0 0
    %8115 = vmatpush1.bf16.msra.mxu0 %v8095
    %8116 = vmatprep.subr.bf16.mxu0 0
    %8117 = vmatpush1.bf16.msra.mxu0 %v8096
    %8118 = vmatprep.subr.bf16.mxu0 0
    %8119 = vmatpush1.bf16.msra.mxu0 %v8097
    %8120 = vmatprep.subr.bf16.mxu0 0
    %8121 = vmatpush1.bf16.msra.mxu0 %v8098
    %8122 = vmatprep.subr.bf16.mxu0 0
    %8123 = vmatpush1.bf16.msra.mxu0 %v8099
    %8124 = vmatprep.subr.bf16.mxu0 0
    %8125 = vmatpush1.bf16.msra.mxu0 0
    %8126 = vmatprep.subr.bf16.mxu0 0
    %8127 = vmatpush1.bf16.msra.mxu0 0
    %8128 = vmatprep.subr.bf16.mxu0 0
    %8129 = vmatpush1.bf16.msra.mxu0 0
    %8130 = vmatprep.subr.bf16.mxu0 0
    %8131 = vmatpush1.bf16.msra.mxu0 0
    %8132 = vmatprep.subr.bf16.mxu0 0
    %8133 = vmatpush1.bf16.msra.mxu0 0
    %8134 = vmatprep.subr.bf16.mxu0 0
    %8135 = vmatpush1.bf16.msra.mxu0 0
    %8136 = vmatprep.subr.bf16.mxu0 0
    %8137 = vmatpush1.bf16.msra.mxu0 0
    %8138 = vmatprep.subr.bf16.mxu0 0
    %8139 = vmatpush1.bf16.msra.mxu0 0
    %8140 = vmatprep.mubr.bf16.mxu0 0
    %8141 = vmatmul.mubr.bf16.gmra.mrb[0].mxu0 %v8058
    %v8142 = vpop.f32.mrb[0].mxu0
    %v8143 = vadd.f32 0.0, %v8142
    %v8144 = vpop.f32.mrb[0].mxu0
    %v8145 = vpop.f32.mrb[0].mxu0
    %v8146 = vpop.f32.mrb[0].mxu0
    %8147 = vdwg.mxu0
    %v8148 = vadd.f32 %v8030, %v8143
    %v8149 = vld [vmem:[%s7794 + $0x3] sm:$0x1]
    %v8150 = vld [vmem:[%s7794 + $0x13] sm:$0x1]
    %v8151 = vpack.c.bf16 %v8149, %v8149
    %v8152 = vpack.c.bf16 %v8150, %v8150
    %s8153 = scalar_lea.vmem %s5, 448
    %v8154 = vld [vmem:[%s8153] sm:$0xf]
    %v8155 = vld [vmem:[%s8153 + $0x4] sm:$0xf]
    %v8156 = vld [vmem:[%s8153 + $0x8] sm:$0xf]
    %v8157 = vld [vmem:[%s8153 + $0xc] sm:$0xf]
    %v8158 = vld [vmem:[%s8153 + $0x10] sm:$0xf]
    %v8159 = vld [vmem:[%s8153 + $0x14] sm:$0xf]
    %v8160 = vld [vmem:[%s8153 + $0x18] sm:$0xf]
    %v8161 = vld [vmem:[%s8153 + $0x1c] sm:$0xf]
    %v8162 = vld [vmem:[%s8153 + $0x20] sm:$0xf]
    %v8163 = vld [vmem:[%s8153 + $0x24] sm:$0xf]
    %v8164 = vld [vmem:[%s8153 + $0x28] sm:$0xf]
    %v8165 = vld [vmem:[%s8153 + $0x2c] sm:$0xf]
    %v8166 = vld [vmem:[%s8153 + $0x30] sm:$0xf]
    %v8167 = vld [vmem:[%s8153 + $0x34] sm:$0xf]
    %v8168 = vld [vmem:[%s8153 + $0x38] sm:$0xf]
    %v8169 = vld [vmem:[%s8153 + $0x3c] sm:$0xf]
    %v8172 = vunpack.c.l.b16 %v8151
    %v8173 = vunpack.c.l.b16 %v8152
    %v8174 = vrot.slane %v8173, 7
    %v8175 = vsel %vm7370, %v8174, %v8172
    %v8176 = vpack.c.b16 %v8175, %v8175
    %v8194 = vunpack.c.l.b16 %v8154
    %v8195 = vunpack.c.l.b16 %v8155
    %v8196 = vunpack.c.l.b16 %v8156
    %v8197 = vunpack.c.l.b16 %v8157
    %v8198 = vunpack.c.l.b16 %v8158
    %v8199 = vunpack.c.l.b16 %v8159
    %v8200 = vunpack.c.l.b16 %v8160
    %v8201 = vunpack.c.l.b16 %v8161
    %v8202 = vunpack.c.l.b16 %v8162
    %v8203 = vunpack.c.l.b16 %v8163
    %v8204 = vunpack.c.l.b16 %v8164
    %v8205 = vunpack.c.l.b16 %v8165
    %v8206 = vunpack.c.l.b16 %v8166
    %v8207 = vunpack.c.l.b16 %v8167
    %v8208 = vunpack.c.l.b16 %v8168
    %v8209 = vunpack.c.l.b16 %v8169
    %v8210 = vpack.c.b16 %v8195, %v8194
    %v8211 = vpack.c.b16 %v8197, %v8196
    %v8212 = vpack.c.b16 %v8199, %v8198
    %v8213 = vpack.c.b16 %v8201, %v8200
    %v8214 = vpack.c.b16 %v8203, %v8202
    %v8215 = vpack.c.b16 %v8205, %v8204
    %v8216 = vpack.c.b16 %v8207, %v8206
    %v8217 = vpack.c.b16 %v8209, %v8208
    %8226 = vmatprep.subr.bf16.mxu0 0
    %8227 = vmatpush1.bf16.msra.mxu0 %v8210
    %8228 = vmatprep.subr.bf16.mxu0 0
    %8229 = vmatpush1.bf16.msra.mxu0 %v8211
    %8230 = vmatprep.subr.bf16.mxu0 0
    %8231 = vmatpush1.bf16.msra.mxu0 %v8212
    %8232 = vmatprep.subr.bf16.mxu0 0
    %8233 = vmatpush1.bf16.msra.mxu0 %v8213
    %8234 = vmatprep.subr.bf16.mxu0 0
    %8235 = vmatpush1.bf16.msra.mxu0 %v8214
    %8236 = vmatprep.subr.bf16.mxu0 0
    %8237 = vmatpush1.bf16.msra.mxu0 %v8215
    %8238 = vmatprep.subr.bf16.mxu0 0
    %8239 = vmatpush1.bf16.msra.mxu0 %v8216
    %8240 = vmatprep.subr.bf16.mxu0 0
    %8241 = vmatpush1.bf16.msra.mxu0 %v8217
    %8242 = vmatprep.subr.bf16.mxu0 0
    %8243 = vmatpush1.bf16.msra.mxu0 0
    %8244 = vmatprep.subr.bf16.mxu0 0
    %8245 = vmatpush1.bf16.msra.mxu0 0
    %8246 = vmatprep.subr.bf16.mxu0 0
    %8247 = vmatpush1.bf16.msra.mxu0 0
    %8248 = vmatprep.subr.bf16.mxu0 0
    %8249 = vmatpush1.bf16.msra.mxu0 0
    %8250 = vmatprep.subr.bf16.mxu0 0
    %8251 = vmatpush1.bf16.msra.mxu0 0
    %8252 = vmatprep.subr.bf16.mxu0 0
    %8253 = vmatpush1.bf16.msra.mxu0 0
    %8254 = vmatprep.subr.bf16.mxu0 0
    %8255 = vmatpush1.bf16.msra.mxu0 0
    %8256 = vmatprep.subr.bf16.mxu0 0
    %8257 = vmatpush1.bf16.msra.mxu0 0
    %8258 = vmatprep.mubr.bf16.mxu0 0
    %8259 = vmatmul.mubr.bf16.gmra.mrb[0].mxu0 %v8176
    %v8260 = vpop.f32.mrb[0].mxu0
    %v8261 = vadd.f32 0.0, %v8260
    %v8262 = vpop.f32.mrb[0].mxu0
    %v8263 = vpop.f32.mrb[0].mxu0
    %v8264 = vpop.f32.mrb[0].mxu0
    %8265 = vdwg.mxu0
    %v8266 = vadd.f32 %v8148, %v8261
    %s8267 = scalar_lea.vmem [#allocation5], 8
    %v8268 = vld [vmem:[%s8267] sm:$0x1]
    %v8269 = vld [vmem:[%s8267 + $0x10] sm:$0x1]
    %v8270 = vpack.c.bf16 %v8268, %v8268
    %v8271 = vpack.c.bf16 %v8269, %v8269
    %s8272 = scalar_lea.vmem %s5, 512
    %v8273 = vld [vmem:[%s8272] sm:$0xf]
    %v8274 = vld [vmem:[%s8272 + $0x4] sm:$0xf]
    %v8275 = vld [vmem:[%s8272 + $0x8] sm:$0xf]
    %v8276 = vld [vmem:[%s8272 + $0xc] sm:$0xf]
    %v8277 = vld [vmem:[%s8272 + $0x10] sm:$0xf]
    %v8278 = vld [vmem:[%s8272 + $0x14] sm:$0xf]
    %v8279 = vld [vmem:[%s8272 + $0x18] sm:$0xf]
    %v8280 = vld [vmem:[%s8272 + $0x1c] sm:$0xf]
    %v8281 = vld [vmem:[%s8272 + $0x20] sm:$0xf]
    %v8282 = vld [vmem:[%s8272 + $0x24] sm:$0xf]
    %v8283 = vld [vmem:[%s8272 + $0x28] sm:$0xf]
    %v8284 = vld [vmem:[%s8272 + $0x2c] sm:$0xf]
    %v8285 = vld [vmem:[%s8272 + $0x30] sm:$0xf]
    %v8286 = vld [vmem:[%s8272 + $0x34] sm:$0xf]
    %v8287 = vld [vmem:[%s8272 + $0x38] sm:$0xf]
    %v8288 = vld [vmem:[%s8272 + $0x3c] sm:$0xf]
    %v8291 = vunpack.c.l.b16 %v8270
    %v8292 = vunpack.c.l.b16 %v8271
    %v8293 = vrot.slane %v8292, 7
    %v8294 = vsel %vm7370, %v8293, %v8291
    %v8295 = vpack.c.b16 %v8294, %v8294
    %v8313 = vunpack.c.l.b16 %v8273
    %v8314 = vunpack.c.l.b16 %v8274
    %v8315 = vunpack.c.l.b16 %v8275
    %v8316 = vunpack.c.l.b16 %v8276
    %v8317 = vunpack.c.l.b16 %v8277
    %v8318 = vunpack.c.l.b16 %v8278
    %v8319 = vunpack.c.l.b16 %v8279
    %v8320 = vunpack.c.l.b16 %v8280
    %v8321 = vunpack.c.l.b16 %v8281
    %v8322 = vunpack.c.l.b16 %v8282
    %v8323 = vunpack.c.l.b16 %v8283
    %v8324 = vunpack.c.l.b16 %v8284
    %v8325 = vunpack.c.l.b16 %v8285
    %v8326 = vunpack.c.l.b16 %v8286
    %v8327 = vunpack.c.l.b16 %v8287
    %v8328 = vunpack.c.l.b16 %v8288
    %v8329 = vpack.c.b16 %v8314, %v8313
    %v8330 = vpack.c.b16 %v8316, %v8315
    %v8331 = vpack.c.b16 %v8318, %v8317
    %v8332 = vpack.c.b16 %v8320, %v8319
    %v8333 = vpack.c.b16 %v8322, %v8321
    %v8334 = vpack.c.b16 %v8324, %v8323
    %v8335 = vpack.c.b16 %v8326, %v8325
    %v8336 = vpack.c.b16 %v8328, %v8327
    %8345 = vmatprep.subr.bf16.mxu0 0
    %8346 = vmatpush1.bf16.msra.mxu0 %v8329
    %8347 = vmatprep.subr.bf16.mxu0 0
    %8348 = vmatpush1.bf16.msra.mxu0 %v8330
    %8349 = vmatprep.subr.bf16.mxu0 0
    %8350 = vmatpush1.bf16.msra.mxu0 %v8331
    %8351 = vmatprep.subr.bf16.mxu0 0
    %8352 = vmatpush1.bf16.msra.mxu0 %v8332
    %8353 = vmatprep.subr.bf16.mxu0 0
    %8354 = vmatpush1.bf16.msra.mxu0 %v8333
    %8355 = vmatprep.subr.bf16.mxu0 0
    %8356 = vmatpush1.bf16.msra.mxu0 %v8334
    %8357 = vmatprep.subr.bf16.mxu0 0
    %8358 = vmatpush1.bf16.msra.mxu0 %v8335
    %8359 = vmatprep.subr.bf16.mxu0 0
    %8360 = vmatpush1.bf16.msra.mxu0 %v8336
    %8361 = vmatprep.subr.bf16.mxu0 0
    %8362 = vmatpush1.bf16.msra.mxu0 0
    %8363 = vmatprep.subr.bf16.mxu0 0
    %8364 = vmatpush1.bf16.msra.mxu0 0
    %8365 = vmatprep.subr.bf16.mxu0 0
    %8366 = vmatpush1.bf16.msra.mxu0 0
    %8367 = vmatprep.subr.bf16.mxu0 0
    %8368 = vmatpush1.bf16.msra.mxu0 0
    %8369 = vmatprep.subr.bf16.mxu0 0
    %8370 = vmatpush1.bf16.msra.mxu0 0
    %8371 = vmatprep.subr.bf16.mxu0 0
    %8372 = vmatpush1.bf16.msra.mxu0 0
    %8373 = vmatprep.subr.bf16.mxu0 0
    %8374 = vmatpush1.bf16.msra.mxu0 0
    %8375 = vmatprep.subr.bf16.mxu0 0
    %8376 = vmatpush1.bf16.msra.mxu0 0
    %8377 = vmatprep.mubr.bf16.mxu0 0
    %8378 = vmatmul.mubr.bf16.gmra.mrb[0].mxu0 %v8295
    %v8379 = vpop.f32.mrb[0].mxu0
    %v8380 = vadd.f32 0.0, %v8379
    %v8381 = vpop.f32.mrb[0].mxu0
    %v8382 = vpop.f32.mrb[0].mxu0
    %v8383 = vpop.f32.mrb[0].mxu0
    %8384 = vdwg.mxu0
    %v8385 = vadd.f32 %v8266, %v8380
    %v8386 = vld [vmem:[%s8267 + $0x1] sm:$0x1]
    %v8387 = vld [vmem:[%s8267 + $0x11] sm:$0x1]
    %v8388 = vpack.c.bf16 %v8386, %v8386
    %v8389 = vpack.c.bf16 %v8387, %v8387
    %s8390 = scalar_lea.vmem %s5, 576
    %v8391 = vld [vmem:[%s8390] sm:$0xf]
    %v8392 = vld [vmem:[%s8390 + $0x4] sm:$0xf]
    %v8393 = vld [vmem:[%s8390 + $0x8] sm:$0xf]
    %v8394 = vld [vmem:[%s8390 + $0xc] sm:$0xf]
    %v8395 = vld [vmem:[%s8390 + $0x10] sm:$0xf]
    %v8396 = vld [vmem:[%s8390 + $0x14] sm:$0xf]
    %v8397 = vld [vmem:[%s8390 + $0x18] sm:$0xf]
    %v8398 = vld [vmem:[%s8390 + $0x1c] sm:$0xf]
    %v8399 = vld [vmem:[%s8390 + $0x20] sm:$0xf]
    %v8400 = vld [vmem:[%s8390 + $0x24] sm:$0xf]
    %v8401 = vld [vmem:[%s8390 + $0x28] sm:$0xf]
    %v8402 = vld [vmem:[%s8390 + $0x2c] sm:$0xf]
    %v8403 = vld [vmem:[%s8390 + $0x30] sm:$0xf]
    %v8404 = vld [vmem:[%s8390 + $0x34] sm:$0xf]
    %v8405 = vld [vmem:[%s8390 + $0x38] sm:$0xf]
    %v8406 = vld [vmem:[%s8390 + $0x3c] sm:$0xf]
    %v8409 = vunpack.c.l.b16 %v8388
    %v8410 = vunpack.c.l.b16 %v8389
    %v8411 = vrot.slane %v8410, 7
    %v8412 = vsel %vm7370, %v8411, %v8409
    %v8413 = vpack.c.b16 %v8412, %v8412
    %v8431 = vunpack.c.l.b16 %v8391
    %v8432 = vunpack.c.l.b16 %v8392
    %v8433 = vunpack.c.l.b16 %v8393
    %v8434 = vunpack.c.l.b16 %v8394
    %v8435 = vunpack.c.l.b16 %v8395
    %v8436 = vunpack.c.l.b16 %v8396
    %v8437 = vunpack.c.l.b16 %v8397
    %v8438 = vunpack.c.l.b16 %v8398
    %v8439 = vunpack.c.l.b16 %v8399
    %v8440 = vunpack.c.l.b16 %v8400
    %v8441 = vunpack.c.l.b16 %v8401
    %v8442 = vunpack.c.l.b16 %v8402
    %v8443 = vunpack.c.l.b16 %v8403
    %v8444 = vunpack.c.l.b16 %v8404
    %v8445 = vunpack.c.l.b16 %v8405
    %v8446 = vunpack.c.l.b16 %v8406
    %v8447 = vpack.c.b16 %v8432, %v8431
    %v8448 = vpack.c.b16 %v8434, %v8433
    %v8449 = vpack.c.b16 %v8436, %v8435
    %v8450 = vpack.c.b16 %v8438, %v8437
    %v8451 = vpack.c.b16 %v8440, %v8439
    %v8452 = vpack.c.b16 %v8442, %v8441
    %v8453 = vpack.c.b16 %v8444, %v8443
    %v8454 = vpack.c.b16 %v8446, %v8445
    %8463 = vmatprep.subr.bf16.mxu0 0
    %8464 = vmatpush1.bf16.msra.mxu0 %v8447
    %8465 = vmatprep.subr.bf16.mxu0 0
    %8466 = vmatpush1.bf16.msra.mxu0 %v8448
    %8467 = vmatprep.subr.bf16.mxu0 0
    %8468 = vmatpush1.bf16.msra.mxu0 %v8449
    %8469 = vmatprep.subr.bf16.mxu0 0
    %8470 = vmatpush1.bf16.msra.mxu0 %v8450
    %8471 = vmatprep.subr.bf16.mxu0 0
    %8472 = vmatpush1.bf16.msra.mxu0 %v8451
    %8473 = vmatprep.subr.bf16.mxu0 0
    %8474 = vmatpush1.bf16.msra.mxu0 %v8452
    %8475 = vmatprep.subr.bf16.mxu0 0
    %8476 = vmatpush1.bf16.msra.mxu0 %v8453
    %8477 = vmatprep.subr.bf16.mxu0 0
    %8478 = vmatpush1.bf16.msra.mxu0 %v8454
    %8479 = vmatprep.subr.bf16.mxu0 0
    %8480 = vmatpush1.bf16.msra.mxu0 0
    %8481 = vmatprep.subr.bf16.mxu0 0
    %8482 = vmatpush1.bf16.msra.mxu0 0
    %8483 = vmatprep.subr.bf16.mxu0 0
    %8484 = vmatpush1.bf16.msra.mxu0 0
    %8485 = vmatprep.subr.bf16.mxu0 0
    %8486 = vmatpush1.bf16.msra.mxu0 0
    %8487 = vmatprep.subr.bf16.mxu0 0
    %8488 = vmatpush1.bf16.msra.mxu0 0
    %8489 = vmatprep.subr.bf16.mxu0 0
    %8490 = vmatpush1.bf16.msra.mxu0 0
    %8491 = vmatprep.subr.bf16.mxu0 0
    %8492 = vmatpush1.bf16.msra.mxu0 0
    %8493 = vmatprep.subr.bf16.mxu0 0
    %8494 = vmatpush1.bf16.msra.mxu0 0
    %8495 = vmatprep.mubr.bf16.mxu0 0
    %8496 = vmatmul.mubr.bf16.gmra.mrb[0].mxu0 %v8413
    %v8497 = vpop.f32.mrb[0].mxu0
    %v8498 = vadd.f32 0.0, %v8497
    %v8499 = vpop.f32.mrb[0].mxu0
    %v8500 = vpop.f32.mrb[0].mxu0
    %v8501 = vpop.f32.mrb[0].mxu0
    %8502 = vdwg.mxu0
    %v8503 = vadd.f32 %v8385, %v8498
    %v8504 = vld [vmem:[%s8267 + $0x2] sm:$0x1]
    %v8505 = vld [vmem:[%s8267 + $0x12] sm:$0x1]
    %v8506 = vpack.c.bf16 %v8504, %v8504
    %v8507 = vpack.c.bf16 %v8505, %v8505
    %s8508 = scalar_lea.vmem %s5, 640
    %v8509 = vld [vmem:[%s8508] sm:$0xf]
    %v8510 = vld [vmem:[%s8508 + $0x4] sm:$0xf]
    %v8511 = vld [vmem:[%s8508 + $0x8] sm:$0xf]
    %v8512 = vld [vmem:[%s8508 + $0xc] sm:$0xf]
    %v8513 = vld [vmem:[%s8508 + $0x10] sm:$0xf]
    %v8514 = vld [vmem:[%s8508 + $0x14] sm:$0xf]
    %v8515 = vld [vmem:[%s8508 + $0x18] sm:$0xf]
    %v8516 = vld [vmem:[%s8508 + $0x1c] sm:$0xf]
    %v8517 = vld [vmem:[%s8508 + $0x20] sm:$0xf]
    %v8518 = vld [vmem:[%s8508 + $0x24] sm:$0xf]
    %v8519 = vld [vmem:[%s8508 + $0x28] sm:$0xf]
    %v8520 = vld [vmem:[%s8508 + $0x2c] sm:$0xf]
    %v8521 = vld [vmem:[%s8508 + $0x30] sm:$0xf]
    %v8522 = vld [vmem:[%s8508 + $0x34] sm:$0xf]
    %v8523 = vld [vmem:[%s8508 + $0x38] sm:$0xf]
    %v8524 = vld [vmem:[%s8508 + $0x3c] sm:$0xf]
    %v8527 = vunpack.c.l.b16 %v8506
    %v8528 = vunpack.c.l.b16 %v8507
    %v8529 = vrot.slane %v8528, 7
    %v8530 = vsel %vm7370, %v8529, %v8527
    %v8531 = vpack.c.b16 %v8530, %v8530
    %v8549 = vunpack.c.l.b16 %v8509
    %v8550 = vunpack.c.l.b16 %v8510
    %v8551 = vunpack.c.l.b16 %v8511
    %v8552 = vunpack.c.l.b16 %v8512
    %v8553 = vunpack.c.l.b16 %v8513
    %v8554 = vunpack.c.l.b16 %v8514
    %v8555 = vunpack.c.l.b16 %v8515
    %v8556 = vunpack.c.l.b16 %v8516
    %v8557 = vunpack.c.l.b16 %v8517
    %v8558 = vunpack.c.l.b16 %v8518
    %v8559 = vunpack.c.l.b16 %v8519
    %v8560 = vunpack.c.l.b16 %v8520
    %v8561 = vunpack.c.l.b16 %v8521
    %v8562 = vunpack.c.l.b16 %v8522
    %v8563 = vunpack.c.l.b16 %v8523
    %v8564 = vunpack.c.l.b16 %v8524
    %v8565 = vpack.c.b16 %v8550, %v8549
    %v8566 = vpack.c.b16 %v8552, %v8551
    %v8567 = vpack.c.b16 %v8554, %v8553
    %v8568 = vpack.c.b16 %v8556, %v8555
    %v8569 = vpack.c.b16 %v8558, %v8557
    %v8570 = vpack.c.b16 %v8560, %v8559
    %v8571 = vpack.c.b16 %v8562, %v8561
    %v8572 = vpack.c.b16 %v8564, %v8563
    %8581 = vmatprep.subr.bf16.mxu0 0
    %8582 = vmatpush1.bf16.msra.mxu0 %v8565
    %8583 = vmatprep.subr.bf16.mxu0 0
    %8584 = vmatpush1.bf16.msra.mxu0 %v8566
    %8585 = vmatprep.subr.bf16.mxu0 0
    %8586 = vmatpush1.bf16.msra.mxu0 %v8567
    %8587 = vmatprep.subr.bf16.mxu0 0
    %8588 = vmatpush1.bf16.msra.mxu0 %v8568
    %8589 = vmatprep.subr.bf16.mxu0 0
    %8590 = vmatpush1.bf16.msra.mxu0 %v8569
    %8591 = vmatprep.subr.bf16.mxu0 0
    %8592 = vmatpush1.bf16.msra.mxu0 %v8570
    %8593 = vmatprep.subr.bf16.mxu0 0
    %8594 = vmatpush1.bf16.msra.mxu0 %v8571
    %8595 = vmatprep.subr.bf16.mxu0 0
    %8596 = vmatpush1.bf16.msra.mxu0 %v8572
    %8597 = vmatprep.subr.bf16.mxu0 0
    %8598 = vmatpush1.bf16.msra.mxu0 0
    %8599 = vmatprep.subr.bf16.mxu0 0
    %8600 = vmatpush1.bf16.msra.mxu0 0
    %8601 = vmatprep.subr.bf16.mxu0 0
    %8602 = vmatpush1.bf16.msra.mxu0 0
    %8603 = vmatprep.subr.bf16.mxu0 0
    %8604 = vmatpush1.bf16.msra.mxu0 0
    %8605 = vmatprep.subr.bf16.mxu0 0
    %8606 = vmatpush1.bf16.msra.mxu0 0
    %8607 = vmatprep.subr.bf16.mxu0 0
    %8608 = vmatpush1.bf16.msra.mxu0 0
    %8609 = vmatprep.subr.bf16.mxu0 0
    %8610 = vmatpush1.bf16.msra.mxu0 0
    %8611 = vmatprep.subr.bf16.mxu0 0
    %8612 = vmatpush1.bf16.msra.mxu0 0
    %8613 = vmatprep.mubr.bf16.mxu0 0
    %8614 = vmatmul.mubr.bf16.gmra.mrb[0].mxu0 %v8531
    %v8615 = vpop.f32.mrb[0].mxu0
    %v8616 = vadd.f32 0.0, %v8615
    %v8617 = vpop.f32.mrb[0].mxu0
    %v8618 = vpop.f32.mrb[0].mxu0
    %v8619 = vpop.f32.mrb[0].mxu0
    %8620 = vdwg.mxu0
    %v8621 = vadd.f32 %v8503, %v8616
    %v8622 = vld [vmem:[%s8267 + $0x3] sm:$0x1]
    %v8623 = vld [vmem:[%s8267 + $0x13] sm:$0x1]
    %v8624 = vpack.c.bf16 %v8622, %v8622
    %v8625 = vpack.c.bf16 %v8623, %v8623
    %s8626 = scalar_lea.vmem %s5, 704
    %v8627 = vld [vmem:[%s8626] sm:$0xf]
    %v8628 = vld [vmem:[%s8626 + $0x4] sm:$0xf]
    %v8629 = vld [vmem:[%s8626 + $0x8] sm:$0xf]
    %v8630 = vld [vmem:[%s8626 + $0xc] sm:$0xf]
    %v8631 = vld [vmem:[%s8626 + $0x10] sm:$0xf]
    %v8632 = vld [vmem:[%s8626 + $0x14] sm:$0xf]
    %v8633 = vld [vmem:[%s8626 + $0x18] sm:$0xf]
    %v8634 = vld [vmem:[%s8626 + $0x1c] sm:$0xf]
    %v8635 = vld [vmem:[%s8626 + $0x20] sm:$0xf]
    %v8636 = vld [vmem:[%s8626 + $0x24] sm:$0xf]
    %v8637 = vld [vmem:[%s8626 + $0x28] sm:$0xf]
    %v8638 = vld [vmem:[%s8626 + $0x2c] sm:$0xf]
    %v8639 = vld [vmem:[%s8626 + $0x30] sm:$0xf]
    %v8640 = vld [vmem:[%s8626 + $0x34] sm:$0xf]
    %v8641 = vld [vmem:[%s8626 + $0x38] sm:$0xf]
    %v8642 = vld [vmem:[%s8626 + $0x3c] sm:$0xf]
    %v8645 = vunpack.c.l.b16 %v8624
    %v8646 = vunpack.c.l.b16 %v8625
    %v8647 = vrot.slane %v8646, 7
    %v8648 = vsel %vm7370, %v8647, %v8645
    %v8649 = vpack.c.b16 %v8648, %v8648
    %v8667 = vunpack.c.l.b16 %v8627
    %v8668 = vunpack.c.l.b16 %v8628
    %v8669 = vunpack.c.l.b16 %v8629
    %v8670 = vunpack.c.l.b16 %v8630
    %v8671 = vunpack.c.l.b16 %v8631
    %v8672 = vunpack.c.l.b16 %v8632
    %v8673 = vunpack.c.l.b16 %v8633
    %v8674 = vunpack.c.l.b16 %v8634
    %v8675 = vunpack.c.l.b16 %v8635
    %v8676 = vunpack.c.l.b16 %v8636
    %v8677 = vunpack.c.l.b16 %v8637
    %v8678 = vunpack.c.l.b16 %v8638
    %v8679 = vunpack.c.l.b16 %v8639
    %v8680 = vunpack.c.l.b16 %v8640
    %v8681 = vunpack.c.l.b16 %v8641
    %v8682 = vunpack.c.l.b16 %v8642
    %v8683 = vpack.c.b16 %v8668, %v8667
    %v8684 = vpack.c.b16 %v8670, %v8669
    %v8685 = vpack.c.b16 %v8672, %v8671
    %v8686 = vpack.c.b16 %v8674, %v8673
    %v8687 = vpack.c.b16 %v8676, %v8675
    %v8688 = vpack.c.b16 %v8678, %v8677
    %v8689 = vpack.c.b16 %v8680, %v8679
    %v8690 = vpack.c.b16 %v8682, %v8681
    %8699 = vmatprep.subr.bf16.mxu0 0
    %8700 = vmatpush1.bf16.msra.mxu0 %v8683
    %8701 = vmatprep.subr.bf16.mxu0 0
    %8702 = vmatpush1.bf16.msra.mxu0 %v8684
    %8703 = vmatprep.subr.bf16.mxu0 0
    %8704 = vmatpush1.bf16.msra.mxu0 %v8685
    %8705 = vmatprep.subr.bf16.mxu0 0
    %8706 = vmatpush1.bf16.msra.mxu0 %v8686
    %8707 = vmatprep.subr.bf16.mxu0 0
    %8708 = vmatpush1.bf16.msra.mxu0 %v8687
    %8709 = vmatprep.subr.bf16.mxu0 0
    %8710 = vmatpush1.bf16.msra.mxu0 %v8688
    %8711 = vmatprep.subr.bf16.mxu0 0
    %8712 = vmatpush1.bf16.msra.mxu0 %v8689
    %8713 = vmatprep.subr.bf16.mxu0 0
    %8714 = vmatpush1.bf16.msra.mxu0 %v8690
    %8715 = vmatprep.subr.bf16.mxu0 0
    %8716 = vmatpush1.bf16.msra.mxu0 0
    %8717 = vmatprep.subr.bf16.mxu0 0
    %8718 = vmatpush1.bf16.msra.mxu0 0
    %8719 = vmatprep.subr.bf16.mxu0 0
    %8720 = vmatpush1.bf16.msra.mxu0 0
    %8721 = vmatprep.subr.bf16.mxu0 0
    %8722 = vmatpush1.bf16.msra.mxu0 0
    %8723 = vmatprep.subr.bf16.mxu0 0
    %8724 = vmatpush1.bf16.msra.mxu0 0
    %8725 = vmatprep.subr.bf16.mxu0 0
    %8726 = vmatpush1.bf16.msra.mxu0 0
    %8727 = vmatprep.subr.bf16.mxu0 0
    %8728 = vmatpush1.bf16.msra.mxu0 0
    %8729 = vmatprep.subr.bf16.mxu0 0
    %8730 = vmatpush1.bf16.msra.mxu0 0
    %8731 = vmatprep.mubr.bf16.mxu0 0
    %8732 = vmatmul.mubr.bf16.gmra.mrb[0].mxu0 %v8649
    %v8733 = vpop.f32.mrb[0].mxu0
    %v8734 = vadd.f32 0.0, %v8733
    %v8735 = vpop.f32.mrb[0].mxu0
    %v8736 = vpop.f32.mrb[0].mxu0
    %v8737 = vpop.f32.mrb[0].mxu0
    %8738 = vdwg.mxu0
    %v8739 = vadd.f32 %v8621, %v8734
    %s8740 = scalar_lea.vmem [#allocation5], 12
    %v8741 = vld [vmem:[%s8740] sm:$0x1]
    %v8742 = vld [vmem:[%s8740 + $0x10] sm:$0x1]
    %v8743 = vpack.c.bf16 %v8741, %v8741
    %v8744 = vpack.c.bf16 %v8742, %v8742
    %s8745 = scalar_lea.vmem %s5, 768
    %v8746 = vld [vmem:[%s8745] sm:$0xf]
    %v8747 = vld [vmem:[%s8745 + $0x4] sm:$0xf]
    %v8748 = vld [vmem:[%s8745 + $0x8] sm:$0xf]
    %v8749 = vld [vmem:[%s8745 + $0xc] sm:$0xf]
    %v8750 = vld [vmem:[%s8745 + $0x10] sm:$0xf]
    %v8751 = vld [vmem:[%s8745 + $0x14] sm:$0xf]
    %v8752 = vld [vmem:[%s8745 + $0x18] sm:$0xf]
    %v8753 = vld [vmem:[%s8745 + $0x1c] sm:$0xf]
    %v8754 = vld [vmem:[%s8745 + $0x20] sm:$0xf]
    %v8755 = vld [vmem:[%s8745 + $0x24] sm:$0xf]
    %v8756 = vld [vmem:[%s8745 + $0x28] sm:$0xf]
    %v8757 = vld [vmem:[%s8745 + $0x2c] sm:$0xf]
    %v8758 = vld [vmem:[%s8745 + $0x30] sm:$0xf]
    %v8759 = vld [vmem:[%s8745 + $0x34] sm:$0xf]
    %v8760 = vld [vmem:[%s8745 + $0x38] sm:$0xf]
    %v8761 = vld [vmem:[%s8745 + $0x3c] sm:$0xf]
    %v8764 = vunpack.c.l.b16 %v8743
    %v8765 = vunpack.c.l.b16 %v8744
    %v8766 = vrot.slane %v8765, 7
    %v8767 = vsel %vm7370, %v8766, %v8764
    %v8768 = vpack.c.b16 %v8767, %v8767
    %v8786 = vunpack.c.l.b16 %v8746
    %v8787 = vunpack.c.l.b16 %v8747
    %v8788 = vunpack.c.l.b16 %v8748
    %v8789 = vunpack.c.l.b16 %v8749
    %v8790 = vunpack.c.l.b16 %v8750
    %v8791 = vunpack.c.l.b16 %v8751
    %v8792 = vunpack.c.l.b16 %v8752
    %v8793 = vunpack.c.l.b16 %v8753
    %v8794 = vunpack.c.l.b16 %v8754
    %v8795 = vunpack.c.l.b16 %v8755
    %v8796 = vunpack.c.l.b16 %v8756
    %v8797 = vunpack.c.l.b16 %v8757
    %v8798 = vunpack.c.l.b16 %v8758
    %v8799 = vunpack.c.l.b16 %v8759
    %v8800 = vunpack.c.l.b16 %v8760
    %v8801 = vunpack.c.l.b16 %v8761
    %v8802 = vpack.c.b16 %v8787, %v8786
    %v8803 = vpack.c.b16 %v8789, %v8788
    %v8804 = vpack.c.b16 %v8791, %v8790
    %v8805 = vpack.c.b16 %v8793, %v8792
    %v8806 = vpack.c.b16 %v8795, %v8794
    %v8807 = vpack.c.b16 %v8797, %v8796
    %v8808 = vpack.c.b16 %v8799, %v8798
    %v8809 = vpack.c.b16 %v8801, %v8800
    %8818 = vmatprep.subr.bf16.mxu0 0
    %8819 = vmatpush1.bf16.msra.mxu0 %v8802
    %8820 = vmatprep.subr.bf16.mxu0 0
    %8821 = vmatpush1.bf16.msra.mxu0 %v8803
    %8822 = vmatprep.subr.bf16.mxu0 0
    %8823 = vmatpush1.bf16.msra.mxu0 %v8804
    %8824 = vmatprep.subr.bf16.mxu0 0
    %8825 = vmatpush1.bf16.msra.mxu0 %v8805
    %8826 = vmatprep.subr.bf16.mxu0 0
    %8827 = vmatpush1.bf16.msra.mxu0 %v8806
    %8828 = vmatprep.subr.bf16.mxu0 0
    %8829 = vmatpush1.bf16.msra.mxu0 %v8807
    %8830 = vmatprep.subr.bf16.mxu0 0
    %8831 = vmatpush1.bf16.msra.mxu0 %v8808
    %8832 = vmatprep.subr.bf16.mxu0 0
    %8833 = vmatpush1.bf16.msra.mxu0 %v8809
    %8834 = vmatprep.subr.bf16.mxu0 0
    %8835 = vmatpush1.bf16.msra.mxu0 0
    %8836 = vmatprep.subr.bf16.mxu0 0
    %8837 = vmatpush1.bf16.msra.mxu0 0
    %8838 = vmatprep.subr.bf16.mxu0 0
    %8839 = vmatpush1.bf16.msra.mxu0 0
    %8840 = vmatprep.subr.bf16.mxu0 0
    %8841 = vmatpush1.bf16.msra.mxu0 0
    %8842 = vmatprep.subr.bf16.mxu0 0
    %8843 = vmatpush1.bf16.msra.mxu0 0
    %8844 = vmatprep.subr.bf16.mxu0 0
    %8845 = vmatpush1.bf16.msra.mxu0 0
    %8846 = vmatprep.subr.bf16.mxu0 0
    %8847 = vmatpush1.bf16.msra.mxu0 0
    %8848 = vmatprep.subr.bf16.mxu0 0
    %8849 = vmatpush1.bf16.msra.mxu0 0
    %8850 = vmatprep.mubr.bf16.mxu0 0
    %8851 = vmatmul.mubr.bf16.gmra.mrb[0].mxu0 %v8768
    %v8852 = vpop.f32.mrb[0].mxu0
    %v8853 = vadd.f32 0.0, %v8852
    %v8854 = vpop.f32.mrb[0].mxu0
    %v8855 = vpop.f32.mrb[0].mxu0
    %v8856 = vpop.f32.mrb[0].mxu0
    %8857 = vdwg.mxu0
    %v8858 = vadd.f32 %v8739, %v8853
    %v8859 = vld [vmem:[%s8740 + $0x1] sm:$0x1]
    %v8860 = vld [vmem:[%s8740 + $0x11] sm:$0x1]
    %v8861 = vpack.c.bf16 %v8859, %v8859
    %v8862 = vpack.c.bf16 %v8860, %v8860
    %s8863 = scalar_lea.vmem %s5, 832
    %v8864 = vld [vmem:[%s8863] sm:$0xf]
    %v8865 = vld [vmem:[%s8863 + $0x4] sm:$0xf]
    %v8866 = vld [vmem:[%s8863 + $0x8] sm:$0xf]
    %v8867 = vld [vmem:[%s8863 + $0xc] sm:$0xf]
    %v8868 = vld [vmem:[%s8863 + $0x10] sm:$0xf]
    %v8869 = vld [vmem:[%s8863 + $0x14] sm:$0xf]
    %v8870 = vld [vmem:[%s8863 + $0x18] sm:$0xf]
    %v8871 = vld [vmem:[%s8863 + $0x1c] sm:$0xf]
    %v8872 = vld [vmem:[%s8863 + $0x20] sm:$0xf]
    %v8873 = vld [vmem:[%s8863 + $0x24] sm:$0xf]
    %v8874 = vld [vmem:[%s8863 + $0x28] sm:$0xf]
    %v8875 = vld [vmem:[%s8863 + $0x2c] sm:$0xf]
    %v8876 = vld [vmem:[%s8863 + $0x30] sm:$0xf]
    %v8877 = vld [vmem:[%s8863 + $0x34] sm:$0xf]
    %v8878 = vld [vmem:[%s8863 + $0x38] sm:$0xf]
    %v8879 = vld [vmem:[%s8863 + $0x3c] sm:$0xf]
    %v8882 = vunpack.c.l.b16 %v8861
    %v8883 = vunpack.c.l.b16 %v8862
    %v8884 = vrot.slane %v8883, 7
    %v8885 = vsel %vm7370, %v8884, %v8882
    %v8886 = vpack.c.b16 %v8885, %v8885
    %v8904 = vunpack.c.l.b16 %v8864
    %v8905 = vunpack.c.l.b16 %v8865
    %v8906 = vunpack.c.l.b16 %v8866
    %v8907 = vunpack.c.l.b16 %v8867
    %v8908 = vunpack.c.l.b16 %v8868
    %v8909 = vunpack.c.l.b16 %v8869
    %v8910 = vunpack.c.l.b16 %v8870
    %v8911 = vunpack.c.l.b16 %v8871
    %v8912 = vunpack.c.l.b16 %v8872
    %v8913 = vunpack.c.l.b16 %v8873
    %v8914 = vunpack.c.l.b16 %v8874
    %v8915 = vunpack.c.l.b16 %v8875
    %v8916 = vunpack.c.l.b16 %v8876
    %v8917 = vunpack.c.l.b16 %v8877
    %v8918 = vunpack.c.l.b16 %v8878
    %v8919 = vunpack.c.l.b16 %v8879
    %v8920 = vpack.c.b16 %v8905, %v8904
    %v8921 = vpack.c.b16 %v8907, %v8906
    %v8922 = vpack.c.b16 %v8909, %v8908
    %v8923 = vpack.c.b16 %v8911, %v8910
    %v8924 = vpack.c.b16 %v8913, %v8912
    %v8925 = vpack.c.b16 %v8915, %v8914
    %v8926 = vpack.c.b16 %v8917, %v8916
    %v8927 = vpack.c.b16 %v8919, %v8918
    %8936 = vmatprep.subr.bf16.mxu0 0
    %8937 = vmatpush1.bf16.msra.mxu0 %v8920
    %8938 = vmatprep.subr.bf16.mxu0 0
    %8939 = vmatpush1.bf16.msra.mxu0 %v8921
    %8940 = vmatprep.subr.bf16.mxu0 0
    %8941 = vmatpush1.bf16.msra.mxu0 %v8922
    %8942 = vmatprep.subr.bf16.mxu0 0
    %8943 = vmatpush1.bf16.msra.mxu0 %v8923
    %8944 = vmatprep.subr.bf16.mxu0 0
    %8945 = vmatpush1.bf16.msra.mxu0 %v8924
    %8946 = vmatprep.subr.bf16.mxu0 0
    %8947 = vmatpush1.bf16.msra.mxu0 %v8925
    %8948 = vmatprep.subr.bf16.mxu0 0
    %8949 = vmatpush1.bf16.msra.mxu0 %v8926
    %8950 = vmatprep.subr.bf16.mxu0 0
    %8951 = vmatpush1.bf16.msra.mxu0 %v8927
    %8952 = vmatprep.subr.bf16.mxu0 0
    %8953 = vmatpush1.bf16.msra.mxu0 0
    %8954 = vmatprep.subr.bf16.mxu0 0
    %8955 = vmatpush1.bf16.msra.mxu0 0
    %8956 = vmatprep.subr.bf16.mxu0 0
    %8957 = vmatpush1.bf16.msra.mxu0 0
    %8958 = vmatprep.subr.bf16.mxu0 0
    %8959 = vmatpush1.bf16.msra.mxu0 0
    %8960 = vmatprep.subr.bf16.mxu0 0
    %8961 = vmatpush1.bf16.msra.mxu0 0
    %8962 = vmatprep.subr.bf16.mxu0 0
    %8963 = vmatpush1.bf16.msra.mxu0 0
    %8964 = vmatprep.subr.bf16.mxu0 0
    %8965 = vmatpush1.bf16.msra.mxu0 0
    %8966 = vmatprep.subr.bf16.mxu0 0
    %8967 = vmatpush1.bf16.msra.mxu0 0
    %8968 = vmatprep.mubr.bf16.mxu0 0
    %8969 = vmatmul.mubr.bf16.gmra.mrb[0].mxu0 %v8886
    %v8970 = vpop.f32.mrb[0].mxu0
    %v8971 = vadd.f32 0.0, %v8970
    %v8972 = vpop.f32.mrb[0].mxu0
    %v8973 = vpop.f32.mrb[0].mxu0
    %v8974 = vpop.f32.mrb[0].mxu0
    %8975 = vdwg.mxu0
    %v8976 = vadd.f32 %v8858, %v8971
    %v8977 = vld [vmem:[%s8740 + $0x2] sm:$0x1]
    %v8978 = vld [vmem:[%s8740 + $0x12] sm:$0x1]
    %v8979 = vpack.c.bf16 %v8977, %v8977
    %v8980 = vpack.c.bf16 %v8978, %v8978
    %s8981 = scalar_lea.vmem %s5, 896
    %v8982 = vld [vmem:[%s8981] sm:$0xf]
    %v8983 = vld [vmem:[%s8981 + $0x4] sm:$0xf]
    %v8984 = vld [vmem:[%s8981 + $0x8] sm:$0xf]
    %v8985 = vld [vmem:[%s8981 + $0xc] sm:$0xf]
    %v8986 = vld [vmem:[%s8981 + $0x10] sm:$0xf]
    %v8987 = vld [vmem:[%s8981 + $0x14] sm:$0xf]
    %v8988 = vld [vmem:[%s8981 + $0x18] sm:$0xf]
    %v8989 = vld [vmem:[%s8981 + $0x1c] sm:$0xf]
    %v8990 = vld [vmem:[%s8981 + $0x20] sm:$0xf]
    %v8991 = vld [vmem:[%s8981 + $0x24] sm:$0xf]
    %v8992 = vld [vmem:[%s8981 + $0x28] sm:$0xf]
    %v8993 = vld [vmem:[%s8981 + $0x2c] sm:$0xf]
    %v8994 = vld [vmem:[%s8981 + $0x30] sm:$0xf]
    %v8995 = vld [vmem:[%s8981 + $0x34] sm:$0xf]
    %v8996 = vld [vmem:[%s8981 + $0x38] sm:$0xf]
    %v8997 = vld [vmem:[%s8981 + $0x3c] sm:$0xf]
    %v9000 = vunpack.c.l.b16 %v8979
    %v9001 = vunpack.c.l.b16 %v8980
    %v9002 = vrot.slane %v9001, 7
    %v9003 = vsel %vm7370, %v9002, %v9000
    %v9004 = vpack.c.b16 %v9003, %v9003
    %v9022 = vunpack.c.l.b16 %v8982
    %v9023 = vunpack.c.l.b16 %v8983
    %v9024 = vunpack.c.l.b16 %v8984
    %v9025 = vunpack.c.l.b16 %v8985
    %v9026 = vunpack.c.l.b16 %v8986
    %v9027 = vunpack.c.l.b16 %v8987
    %v9028 = vunpack.c.l.b16 %v8988
    %v9029 = vunpack.c.l.b16 %v8989
    %v9030 = vunpack.c.l.b16 %v8990
    %v9031 = vunpack.c.l.b16 %v8991
    %v9032 = vunpack.c.l.b16 %v8992
    %v9033 = vunpack.c.l.b16 %v8993
    %v9034 = vunpack.c.l.b16 %v8994
    %v9035 = vunpack.c.l.b16 %v8995
    %v9036 = vunpack.c.l.b16 %v8996
    %v9037 = vunpack.c.l.b16 %v8997
    %v9038 = vpack.c.b16 %v9023, %v9022
    %v9039 = vpack.c.b16 %v9025, %v9024
    %v9040 = vpack.c.b16 %v9027, %v9026
    %v9041 = vpack.c.b16 %v9029, %v9028
    %v9042 = vpack.c.b16 %v9031, %v9030
    %v9043 = vpack.c.b16 %v9033, %v9032
    %v9044 = vpack.c.b16 %v9035, %v9034
    %v9045 = vpack.c.b16 %v9037, %v9036
    %9054 = vmatprep.subr.bf16.mxu0 0
    %9055 = vmatpush1.bf16.msra.mxu0 %v9038
    %9056 = vmatprep.subr.bf16.mxu0 0
    %9057 = vmatpush1.bf16.msra.mxu0 %v9039
    %9058 = vmatprep.subr.bf16.mxu0 0
    %9059 = vmatpush1.bf16.msra.mxu0 %v9040
    %9060 = vmatprep.subr.bf16.mxu0 0
    %9061 = vmatpush1.bf16.msra.mxu0 %v9041
    %9062 = vmatprep.subr.bf16.mxu0 0
    %9063 = vmatpush1.bf16.msra.mxu0 %v9042
    %9064 = vmatprep.subr.bf16.mxu0 0
    %9065 = vmatpush1.bf16.msra.mxu0 %v9043
    %9066 = vmatprep.subr.bf16.mxu0 0
    %9067 = vmatpush1.bf16.msra.mxu0 %v9044
    %9068 = vmatprep.subr.bf16.mxu0 0
    %9069 = vmatpush1.bf16.msra.mxu0 %v9045
    %9070 = vmatprep.subr.bf16.mxu0 0
    %9071 = vmatpush1.bf16.msra.mxu0 0
    %9072 = vmatprep.subr.bf16.mxu0 0
    %9073 = vmatpush1.bf16.msra.mxu0 0
    %9074 = vmatprep.subr.bf16.mxu0 0
    %9075 = vmatpush1.bf16.msra.mxu0 0
    %9076 = vmatprep.subr.bf16.mxu0 0
    %9077 = vmatpush1.bf16.msra.mxu0 0
    %9078 = vmatprep.subr.bf16.mxu0 0
    %9079 = vmatpush1.bf16.msra.mxu0 0
    %9080 = vmatprep.subr.bf16.mxu0 0
    %9081 = vmatpush1.bf16.msra.mxu0 0
    %9082 = vmatprep.subr.bf16.mxu0 0
    %9083 = vmatpush1.bf16.msra.mxu0 0
    %9084 = vmatprep.subr.bf16.mxu0 0
    %9085 = vmatpush1.bf16.msra.mxu0 0
    %9086 = vmatprep.mubr.bf16.mxu0 0
    %9087 = vmatmul.mubr.bf16.gmra.mrb[0].mxu0 %v9004
    %v9088 = vpop.f32.mrb[0].mxu0
    %v9089 = vadd.f32 0.0, %v9088
    %v9090 = vpop.f32.mrb[0].mxu0
    %v9091 = vpop.f32.mrb[0].mxu0
    %v9092 = vpop.f32.mrb[0].mxu0
    %9093 = vdwg.mxu0
    %v9094 = vadd.f32 %v8976, %v9089
    %v9095 = vld [vmem:[%s8740 + $0x3] sm:$0x1]
    %v9096 = vld [vmem:[%s8740 + $0x13] sm:$0x1]
    %v9097 = vpack.c.bf16 %v9095, %v9095
    %v9098 = vpack.c.bf16 %v9096, %v9096
    %s9099 = scalar_lea.vmem %s5, 960
    %v9100 = vld [vmem:[%s9099] sm:$0xf]
    %v9101 = vld [vmem:[%s9099 + $0x4] sm:$0xf]
    %v9102 = vld [vmem:[%s9099 + $0x8] sm:$0xf]
    %v9103 = vld [vmem:[%s9099 + $0xc] sm:$0xf]
    %v9104 = vld [vmem:[%s9099 + $0x10] sm:$0xf]
    %v9105 = vld [vmem:[%s9099 + $0x14] sm:$0xf]
    %v9106 = vld [vmem:[%s9099 + $0x18] sm:$0xf]
    %v9107 = vld [vmem:[%s9099 + $0x1c] sm:$0xf]
    %v9108 = vld [vmem:[%s9099 + $0x20] sm:$0xf]
    %v9109 = vld [vmem:[%s9099 + $0x24] sm:$0xf]
    %v9110 = vld [vmem:[%s9099 + $0x28] sm:$0xf]
    %v9111 = vld [vmem:[%s9099 + $0x2c] sm:$0xf]
    %v9112 = vld [vmem:[%s9099 + $0x30] sm:$0xf]
    %v9113 = vld [vmem:[%s9099 + $0x34] sm:$0xf]
    %v9114 = vld [vmem:[%s9099 + $0x38] sm:$0xf]
    %v9115 = vld [vmem:[%s9099 + $0x3c] sm:$0xf]
    %v9118 = vunpack.c.l.b16 %v9097
    %v9119 = vunpack.c.l.b16 %v9098
    %v9120 = vrot.slane %v9119, 7
    %v9121 = vsel %vm7370, %v9120, %v9118
    %v9122 = vpack.c.b16 %v9121, %v9121
    %v9140 = vunpack.c.l.b16 %v9100
    %v9141 = vunpack.c.l.b16 %v9101
    %v9142 = vunpack.c.l.b16 %v9102
    %v9143 = vunpack.c.l.b16 %v9103
    %v9144 = vunpack.c.l.b16 %v9104
    %v9145 = vunpack.c.l.b16 %v9105
    %v9146 = vunpack.c.l.b16 %v9106
    %v9147 = vunpack.c.l.b16 %v9107
    %v9148 = vunpack.c.l.b16 %v9108
    %v9149 = vunpack.c.l.b16 %v9109
    %v9150 = vunpack.c.l.b16 %v9110
    %v9151 = vunpack.c.l.b16 %v9111
    %v9152 = vunpack.c.l.b16 %v9112
    %v9153 = vunpack.c.l.b16 %v9113
    %v9154 = vunpack.c.l.b16 %v9114
    %v9155 = vunpack.c.l.b16 %v9115
    %v9156 = vpack.c.b16 %v9141, %v9140
    %v9157 = vpack.c.b16 %v9143, %v9142
    %v9158 = vpack.c.b16 %v9145, %v9144
    %v9159 = vpack.c.b16 %v9147, %v9146
    %v9160 = vpack.c.b16 %v9149, %v9148
    %v9161 = vpack.c.b16 %v9151, %v9150
    %v9162 = vpack.c.b16 %v9153, %v9152
    %v9163 = vpack.c.b16 %v9155, %v9154
    %9172 = vmatprep.subr.bf16.mxu0 0
    %9173 = vmatpush1.bf16.msra.mxu0 %v9156
    %9174 = vmatprep.subr.bf16.mxu0 0
    %9175 = vmatpush1.bf16.msra.mxu0 %v9157
    %9176 = vmatprep.subr.bf16.mxu0 0
    %9177 = vmatpush1.bf16.msra.mxu0 %v9158
    %9178 = vmatprep.subr.bf16.mxu0 0
    %9179 = vmatpush1.bf16.msra.mxu0 %v9159
    %9180 = vmatprep.subr.bf16.mxu0 0
    %9181 = vmatpush1.bf16.msra.mxu0 %v9160
    %9182 = vmatprep.subr.bf16.mxu0 0
    %9183 = vmatpush1.bf16.msra.mxu0 %v9161
    %9184 = vmatprep.subr.bf16.mxu0 0
    %9185 = vmatpush1.bf16.msra.mxu0 %v9162
    %9186 = vmatprep.subr.bf16.mxu0 0
    %9187 = vmatpush1.bf16.msra.mxu0 %v9163
    %9188 = vmatprep.subr.bf16.mxu0 0
    %9189 = vmatpush1.bf16.msra.mxu0 0
    %9190 = vmatprep.subr.bf16.mxu0 0
    %9191 = vmatpush1.bf16.msra.mxu0 0
    %9192 = vmatprep.subr.bf16.mxu0 0
    %9193 = vmatpush1.bf16.msra.mxu0 0
    %9194 = vmatprep.subr.bf16.mxu0 0
    %9195 = vmatpush1.bf16.msra.mxu0 0
    %9196 = vmatprep.subr.bf16.mxu0 0
    %9197 = vmatpush1.bf16.msra.mxu0 0
    %9198 = vmatprep.subr.bf16.mxu0 0
    %9199 = vmatpush1.bf16.msra.mxu0 0
    %9200 = vmatprep.subr.bf16.mxu0 0
    %9201 = vmatpush1.bf16.msra.mxu0 0
    %9202 = vmatprep.subr.bf16.mxu0 0
    %9203 = vmatpush1.bf16.msra.mxu0 0
    %9204 = vmatprep.mubr.bf16.mxu0 0
    %9205 = vmatmul.mubr.bf16.gmra.mrb[0].mxu0 %v9122
    %v9206 = vpop.f32.mrb[0].mxu0
    %v9207 = vadd.f32 0.0, %v9206
    %v9208 = vpop.f32.mrb[0].mxu0
    %v9209 = vpop.f32.mrb[0].mxu0
    %v9210 = vpop.f32.mrb[0].mxu0
    %9211 = vdwg.mxu0
    %v9212 = vadd.f32 %v9094, %v9207
    %v9213 = vld [vmem:[%s6] sm:$0x1]
    %v9215 = vlaneseq
    %v9216 = vshrl.u32 %v9215, 7
    %v9217 = vsub.s32 0, %v9216
    %v9218 = vrot.slane %v9213, %v9217
    %v9220 = vadd.f32 %v9212, %v9218
    %v9221 = vmax.f32 %v9220, 0.0
    %v9222 = vpack.c.bf16 %v9221, %v9221
    %v9223 = vld [vmem:[%s7] sm:$0xf]
    %v9224 = vld [vmem:[%s7 + $0x4] sm:$0xf]
    %v9225 = vld [vmem:[%s7 + $0x8] sm:$0xf]
    %v9226 = vld [vmem:[%s7 + $0xc] sm:$0xf]
    %v9227 = vld [vmem:[%s7 + $0x10] sm:$0xf]
    %v9228 = vld [vmem:[%s7 + $0x14] sm:$0xf]
    %v9229 = vld [vmem:[%s7 + $0x18] sm:$0xf]
    %v9230 = vld [vmem:[%s7 + $0x1c] sm:$0xf]
    %v9231 = vld [vmem:[%s7 + $0x20] sm:$0xf]
    %v9232 = vld [vmem:[%s7 + $0x24] sm:$0xf]
    %v9233 = vld [vmem:[%s7 + $0x28] sm:$0xf]
    %v9234 = vld [vmem:[%s7 + $0x2c] sm:$0xf]
    %v9235 = vld [vmem:[%s7 + $0x30] sm:$0xf]
    %v9236 = vld [vmem:[%s7 + $0x34] sm:$0xf]
    %v9237 = vld [vmem:[%s7 + $0x38] sm:$0xf]
    %v9238 = vld [vmem:[%s7 + $0x3c] sm:$0xf]
    %v9239 = vld [vmem:[%s8] sm:$0x1]
    %v9241 = vlaneseq
    %v9242 = vshrl.u32 %v9241, 7
    %v9243 = vsub.s32 0, %v9242
    %v9244 = vrot.slane %v9239, %v9243
    %v9262 = vunpack.c.l.b16 %v9223
    %v9263 = vunpack.c.l.b16 %v9224
    %v9264 = vunpack.c.l.b16 %v9225
    %v9265 = vunpack.c.l.b16 %v9226
    %v9266 = vunpack.c.l.b16 %v9227
    %v9267 = vunpack.c.l.b16 %v9228
    %v9268 = vunpack.c.l.b16 %v9229
    %v9269 = vunpack.c.l.b16 %v9230
    %v9270 = vunpack.c.l.b16 %v9231
    %v9271 = vunpack.c.l.b16 %v9232
    %v9272 = vunpack.c.l.b16 %v9233
    %v9273 = vunpack.c.l.b16 %v9234
    %v9274 = vunpack.c.l.b16 %v9235
    %v9275 = vunpack.c.l.b16 %v9236
    %v9276 = vunpack.c.l.b16 %v9237
    %v9277 = vunpack.c.l.b16 %v9238
    %v9278 = vpack.c.b16 %v9263, %v9262
    %v9279 = vpack.c.b16 %v9265, %v9264
    %v9280 = vpack.c.b16 %v9267, %v9266
    %v9281 = vpack.c.b16 %v9269, %v9268
    %v9282 = vpack.c.b16 %v9271, %v9270
    %v9283 = vpack.c.b16 %v9273, %v9272
    %v9284 = vpack.c.b16 %v9275, %v9274
    %v9285 = vpack.c.b16 %v9277, %v9276
    %9294 = vmatprep.subr.bf16.mxu0 0
    %9295 = vmatpush1.bf16.msra.mxu0 %v9278
    %9296 = vmatprep.subr.bf16.mxu0 0
    %9297 = vmatpush1.bf16.msra.mxu0 %v9279
    %9298 = vmatprep.subr.bf16.mxu0 0
    %9299 = vmatpush1.bf16.msra.mxu0 %v9280
    %9300 = vmatprep.subr.bf16.mxu0 0
    %9301 = vmatpush1.bf16.msra.mxu0 %v9281
    %9302 = vmatprep.subr.bf16.mxu0 0
    %9303 = vmatpush1.bf16.msra.mxu0 %v9282
    %9304 = vmatprep.subr.bf16.mxu0 0
    %9305 = vmatpush1.bf16.msra.mxu0 %v9283
    %9306 = vmatprep.subr.bf16.mxu0 0
    %9307 = vmatpush1.bf16.msra.mxu0 %v9284
    %9308 = vmatprep.subr.bf16.mxu0 0
    %9309 = vmatpush1.bf16.msra.mxu0 %v9285
    %9310 = vmatprep.subr.bf16.mxu0 0
    %9311 = vmatpush1.bf16.msra.mxu0 0
    %9312 = vmatprep.subr.bf16.mxu0 0
    %9313 = vmatpush1.bf16.msra.mxu0 0
    %9314 = vmatprep.subr.bf16.mxu0 0
    %9315 = vmatpush1.bf16.msra.mxu0 0
    %9316 = vmatprep.subr.bf16.mxu0 0
    %9317 = vmatpush1.bf16.msra.mxu0 0
    %9318 = vmatprep.subr.bf16.mxu0 0
    %9319 = vmatpush1.bf16.msra.mxu0 0
    %9320 = vmatprep.subr.bf16.mxu0 0
    %9321 = vmatpush1.bf16.msra.mxu0 0
    %9322 = vmatprep.subr.bf16.mxu0 0
    %9323 = vmatpush1.bf16.msra.mxu0 0
    %9324 = vmatprep.subr.bf16.mxu0 0
    %9325 = vmatpush1.bf16.msra.mxu0 0
    %9326 = vmatprep.mubr.bf16.mxu0 0
    %9327 = vmatmul.mubr.bf16.gmra.mrb[0].mxu0 %v9222
    %v9328 = vpop.f32.mrb[0].mxu0
    %v9329 = vadd.f32 %v9244, %v9328
    %v9330 = vpop.f32.mrb[0].mxu0
    %v9331 = vpop.f32.mrb[0].mxu0
    %v9332 = vpop.f32.mrb[0].mxu0
    %9333 = vdwg.mxu0
    %v9334 = vlaneseq
    %v9335 = vand.u32 %v9334, 127
    %vm9336 = vcmp.lt.s32.totalorder %v9335, 10
    %v9337 = vsel %vm9336, %v9329, -1e+30
    %vm9338 = vcmask 1041408
    %v9339 = vsel %vm9338, %v9337, -inf
    %9340 = vmax.xlane.f32.xlu0 %v9339
    %v9341 = vpop.xlane.xlu0 %9340
    %v9342 = vsub.f32 %v9337, %v9341
    %v9343 = vmul.f32 %v9342, 1.442695
    %v9344 = vpow.pop %v9343
    %v9345 = vsel %vm9338, %v9344, 0.0
    %9346 = vadd.xlane.f32.xlu0 %v9345
    %v9347 = vpop.xlane.xlu0 %9346
    %v9348 = vlog2.pop %v9347
    %v9349 = vmul.f32 %v9348, 0.6931472
    %v9350 = vsub.f32 %v9342, %v9349
    %9351 = vst [vmem:[#allocation6] sm:$0x3] %v9350
    // Predicated region
    $region38: #{net_forward.1} parent=1 // pred_check
      _
    $region39: #{net_forward.1} parent=1 // pred_check_branch
      %9353 = sbr.rel (0) target = $region41
    $region40: #{net_forward.1} parent=1 // pred_region
      %s9355 = ssub.s32 32, 32
      %9356 = vsyncadd [#allocation7], %s9355
      %s9358 = sshll.u32 [#allocation6], 4
      %s9359 = int_to_ptr.vmem [resolvable:$true] %s9358
      %9361 = dma.vmem_to_hbm [thread:$0]  %s9359, 32, %s9, [#allocation7]
    $region41: #{net_forward.1} parent=1 // pred_fallthru
      _
    // Predicated region
    $region42: #{net_forward.1} parent=1 // pred_check
      _
    $region43: #{net_forward.1} parent=1 // pred_check_branch
      %9363 = sbr.rel (0) target = $region45
    $region44: #{net_forward.1} parent=1 // pred_region
      %9364 = dma.done [#allocation7], 32
    $region45: #{net_forward.1} parent=1 // pred_fallthru
      _
    %9365 = vsyncpa [#allocation7], 1

</llo_original>
